<compile_context>
chip_gen: v5e
topology: v5e:2x2
jax: 0.10.0
libtpu: 0.0.40
codegen_flags: <defaults>
</compile_context>

<pallas_src>
from functools import partial

import jax
import jax.numpy as jnp
from jax.experimental import pallas as pl
from jax.experimental.pallas import tpu as pltpu

LANES = 128  # TPU lane width: output/intermediate channel dims are padded to this.


def _round_up(v, m):
    return -(-v // m) * m


# ------------------------------- fused kernel --------------------------------

def _make_dmfunit_kernel(*, WP, MP, HALO, d0, d1, has_shortcut, cin):
    BASE = HALO  # first interior row of the staging buffer (multiple of 8)

    def conv3x3_acc(acc, buf_ref, w_ref, dil):
        """Accumulate a 3x3 'SAME' dilated conv of the staged activation.

        The zero-padded staging layout (zero halo rows + zero pad columns, row
        stride WP) makes boundary handling implicit: every tap is a contiguous
        (MP, 128) slice -- no masks, no iotas, no selects.
        """
        for ki in range(3):
            for kj in range(3):
                off = (ki - 1) * dil * WP + (kj - 1) * dil
                tap = buf_ref[BASE + off:BASE + off + MP, :].astype(jnp.bfloat16)
                d = jnp.dot(tap, w_ref[ki * 3 + kj],
                            preferred_element_type=jnp.float32)
                # Clean dot -> add chain (nothing between the dot and the add)
                # so v7x's MRB can absorb the accumulation.
                acc = d if acc is None else acc + d
        return acc

    def kernel(x_ref, w1sc_ref, w2_ref, w3a_ref, w3b_ref, w4_ref, cmask_ref,
               o_ref, buf_ref):
        # Zero ONLY the halo rows; the interior is fully overwritten below.
        # (Not gated on program_id: with "parallel" megacore split each core
        # owns its own scratch.)
        buf_ref[0:BASE, :] = jnp.zeros((BASE, LANES), jnp.float32)
        buf_ref[BASE + MP:BASE + MP + HALO, :] = jnp.zeros((HALO, LANES),
                                                           jnp.float32)

        x = x_ref[...]                                  # (MP, cin) f32, pad cols = 0
        hx = jnp.maximum(x, 0.0).astype(jnp.bfloat16)   # relu(x), bf16 MXU operand

        # conv1x1_in1 (+ packed conv1x1_shortcut in lanes [128:256)).
        y = jnp.dot(hx, w1sc_ref[...], preferred_element_type=jnp.float32)
        x1 = y[:, :LANES]
        if has_shortcut:
            o_ref[...] = y[:, LANES:]          # park shortcut in o_ref (VMEM)
        else:
            # identity shortcut, padded out to the 128-lane output layout
            o_ref[...] = jnp.concatenate(
                [x, jnp.zeros((MP, LANES - cin), jnp.float32)], axis=1)

        # conv1x1_in2
        x2 = jnp.dot(jnp.maximum(x1, 0.0).astype(jnp.bfloat16), w2_ref[...],
                     preferred_element_type=jnp.float32)

        # Stage relu(x2): its pad columns are already exact zeros (x's pad
        # columns are zero and 1x1 convs preserve that), so no masking needed.
        buf_ref[BASE:BASE + MP, :] = jnp.maximum(x2, 0.0)

        # Dual-dilation stage.  weight1/weight2 are folded into w3a/w3b on the
        # host, so both branches accumulate into ONE f32 accumulator.
        acc = conv3x3_acc(None, buf_ref, w3a_ref, d0)
        acc = conv3x3_acc(acc, buf_ref, w3b_ref, d1)

        # Stage relu(x3); a single broadcast multiply re-zeroes the pad columns
        # so the final conv's implicit zero-padding stays exact.
        buf_ref[BASE:BASE + MP, :] = jnp.maximum(acc, 0.0) * cmask_ref[...]

        # Final 3x3, dilation 1.
        x4 = conv3x3_acc(None, buf_ref, w4_ref, 1)

        # Residual add: the shortcut was written to o_ref right after the 1x1
        # stage, so x/hx/sc were not kept live across the conv stages.
        o_ref[...] = o_ref[...] + x4

    return kernel


# ------------------------------ host wrappers ---------------------------------

def pad_params(params):
    """Prepare weights ONCE on the host (outside the hot path):

      * fold the learnable scalars weight1/weight2 into the dilated 3x3 weights,
      * flatten 3x3 kernels to (9, Cin, Cout) so each tap is a 2D MXU operand,
      * zero-pad intermediate channel dims to 128 lanes,
      * pack [conv1x1_in1 | conv1x1_shortcut] along the output-lane dim (256),
      * cast everything to bf16 (f32 accumulation happens in-kernel).
    """
    num_in = params["w1"].shape[0]
    cin_pad = _round_up(num_in, 8)

    def pad2(w, rows, cols):
        return jnp.pad(w, ((0, rows - w.shape[0]), (0, cols - w.shape[1])))

    def prep_3x3(w, scale=1.0):
        kh, kw, ci, co = w.shape
        w = (w * scale).reshape(kh * kw, ci, co)
        w = jnp.pad(w, ((0, 0), (0, LANES - ci), (0, LANES - co)))
        return w.astype(jnp.bfloat16)

    w1 = pad2(params["w1"], cin_pad, LANES)
    padded = {
        "w2": pad2(params["w2"], LANES, LANES).astype(jnp.bfloat16),
        "w3a": prep_3x3(params["w3a"], params["weight1"][0]),
        "w3b": prep_3x3(params["w3b"], params["weight2"][0]),
        "w4": prep_3x3(params["w4"]),
    }
    if "w_sc" in params:
        w_sc = pad2(params["w_sc"], cin_pad, LANES)
        padded["w1sc"] = jnp.concatenate([w1, w_sc], axis=1).astype(jnp.bfloat16)
    else:
        padded["w1sc"] = w1.astype(jnp.bfloat16)
    return padded


def dmfunit_forward(x_nchw, padded, *, num_out, stride=1, dilation=(1, 2)):
    """Fused DMFUnit forward. x_nchw: (N, Cin, H, W) float32; returns NCHW."""
    if stride != 1:
        # TODO(synk): stride=2 path not implemented in the fused kernel.
        raise NotImplementedError("fused DMFUnit kernel supports stride=1 only")
    d0, d1 = dilation
    N, Cin, H, W = x_nchw.shape
    assert Cin <= LANES and num_out <= LANES

    cin_pad = _round_up(Cin, 8)
    dmax = max(d0, d1, 1)
    WP = _round_up(W + dmax, 8)           # padded row stride (>= W + dmax, mult of 8)
    MP = H * WP                           # rows per image in the padded layout
    HALO = _round_up(dmax * (WP + 1), 8)  # zero halo above/below the interior
    BUF_ROWS = HALO + MP + HALO

    has_shortcut = padded["w1sc"].shape[1] == 2 * LANES
    assert padded["w1sc"].shape[0] == cin_pad

    # NHWC, zero-pad W -> WP and C -> cin_pad, flatten spatial to rows.  Only
    # cin_pad (not 128) channels are shipped to the kernel: input DMA stays tiny.
    x = jnp.transpose(x_nchw, (0, 2, 3, 1)).astype(jnp.float32)
    x = jnp.pad(x, ((0, 0), (0, 0), (0, WP - W), (0, cin_pad - Cin)))
    x = x.reshape(N, MP, cin_pad)

    # Column mask (1 for real columns, 0 for pad columns), broadcast over lanes
    # in-kernel.  Used once per image to re-zero relu(x3)'s pad columns.
    colmask = jnp.tile((jnp.arange(WP) < W).astype(jnp.float32), H).reshape(MP, 1)

    kernel = _make_dmfunit_kernel(WP=WP, MP=MP, HALO=HALO, d0=d0, d1=d1,
                                  has_shortcut=has_shortcut, cin=cin_pad)

    def bcast(shape):
        return pl.BlockSpec(shape, lambda b: (0,) * len(shape))

    in_specs = [
        pl.BlockSpec((None, MP, cin_pad), lambda b: (b, 0, 0)),   # x
        bcast(padded["w1sc"].shape),                              # [w1 | w_sc]
        bcast((LANES, LANES)),                                    # w2 (1x1)
        bcast((9, LANES, LANES)),                                 # w3a (weight1 folded)
        bcast((9, LANES, LANES)),                                 # w3b (weight2 folded)
        bcast((9, LANES, LANES)),                                 # w4  (3x3, d=1)
        bcast((MP, 1)),                                           # column mask
    ]

    out = pl.pallas_call(
        kernel,
        out_shape=jax.ShapeDtypeStruct((N, MP, LANES), jnp.float32),
        grid=(N,),
        in_specs=in_specs,
        out_specs=pl.BlockSpec((None, MP, LANES), lambda b: (b, 0, 0)),
        scratch_shapes=[pltpu.VMEM((BUF_ROWS, LANES), jnp.float32)],
        compiler_params=pltpu.CompilerParams(
            dimension_semantics=("parallel",)),
    )(x, padded["w1sc"], padded["w2"], padded["w3a"], padded["w3b"],
      padded["w4"], colmask)

    # Drop pad columns / pad output lanes on the host (output stays lane-dense
    # at 128 inside the kernel to avoid masked partial stores).
    out = out.reshape(N, H, WP, LANES)[:, :, :W, :num_out]
    return jnp.transpose(out, (0, 3, 1, 2))


# ------------------------------ params / reference ----------------------------

def init_dmfunit_params(key, num_in, num_out):
    """Synthetic DMFUnit parameters (stride=1). 1x1 weights: (Cin, Cout);
    3x3 weights: HWIO (3, 3, Cin, Cout)."""
    num_mid = num_in if num_in <= num_out else num_out
    ks = jax.random.split(key, 6)

    def init(k, shape):
        fan_in = 1
        for s in shape[:-1]:
            fan_in *= s
        return jax.random.normal(k, shape, jnp.float32) / jnp.sqrt(fan_in)

    p = {
        # learnable scalars (PyTorch initializes to 1; non-unit values exercise
        # the weighted-sum / host-folding path)
        "weight1": jnp.full((1,), 1.25, jnp.float32),
        "weight2": jnp.full((1,), 0.75, jnp.float32),
        "w1": init(ks[0], (num_in, num_in // 4)),      # conv1x1_in1
        "w2": init(ks[1], (num_in // 4, num_mid)),     # conv1x1_in2
        "w3a": init(ks[2], (3, 3, num_mid, num_out)),  # conv3x3_m1[0]
        "w3b": init(ks[3], (3, 3, num_mid, num_out)),  # conv3x3_m1[1]
        "w4": init(ks[4], (3, 3, num_out, num_out)),   # conv3x3_m2
    }
    if num_in != num_out:                              # stride==1: conv1x1_shortcut
        p["w_sc"] = init(ks[5], (num_in, num_out))
    return p


def _conv_ref(h, w_hwio, padding, dilation):
    return jax.lax.conv_general_dilated(
        h, w_hwio, window_strides=(1, 1), padding=padding,
        rhs_dilation=dilation, dimension_numbers=("NHWC", "HWIO", "NHWC"),
        precision=jax.lax.Precision.HIGHEST)


def dmfunit_reference(x_nchw, params, dilation=(1, 2)):
    x = jnp.transpose(x_nchw, (0, 2, 3, 1)).astype(jnp.float32)

    def block1x1(h, w):      # Conv2d_Block(k=1): conv1x1(relu(h)), pad 0
        return _conv_ref(jnp.maximum(h, 0.0), w[None, None],
                         padding=((0, 0), (0, 0)), dilation=(1, 1))

    def block3x3(h, w, d):   # DilatedConv2DBlock(k=3, d): conv3x3(relu(h)), pad d
        return _conv_ref(jnp.maximum(h, 0.0), w,
                         padding=((d, d), (d, d)), dilation=(d, d))

    x1 = block1x1(x, params["w1"])
    x2 = block1x1(x1, params["w2"])
    a = block3x3(x2, params["w3a"], dilation[0])
    b = block3x3(x2, params["w3b"], dilation[1])
    x3 = params["weight1"][0] * a + params["weight2"][0] * b
    x4 = block3x3(x3, params["w4"], 1)
    sc = block1x1(x, params["w_sc"]) if "w_sc" in params else x
    return jnp.transpose(x4 + sc, (0, 3, 1, 2))


# ------------------------------------ main ------------------------------------

if __name__ == "__main__":
    key = jax.random.PRNGKey(0)
    kx, kp = jax.random.split(key)

    num_in, num_out = 8, 16
    N, H, W = 2, 16, 16
    dilation = (1, 2)        # DMFUnit default dilation=[1, 2]

    x = jax.random.normal(kx, (N, num_in, H, W), jnp.float32)   # NCHW
    params = init_dmfunit_params(kp, num_in, num_out)
    padded = pad_params(params)   # weight prep (fold scalars, pad, bf16) done once

    fwd = jax.jit(partial(dmfunit_forward, num_out=num_out, stride=1,
                          dilation=dilation))
    out = jax.block_until_ready(fwd(x, padded))
    assert out.shape == (N, num_out, H, W), out.shape

    ref = dmfunit_reference(x, params, dilation=dilation)
    max_err = float(jnp.max(jnp.abs(out - ref)))
    # Tolerance covers bf16 MXU operands (f32 accumulation) vs the
    # HIGHEST-precision f32 XLA reference conv.
    assert jnp.allclose(out, ref, rtol=2e-2, atol=3e-2), max_err

    print("KERNEL_OK")
</pallas_src>

<mosaic_0001>
module attributes {stable_mosaic.version = 11 : i64} {
  func.func @kernel(%arg0: i32, %arg1: memref<1x384x8xf32, #tpu.memory_space<vmem>>, %arg2: memref<8x256xbf16, #tpu.memory_space<vmem>>, %arg3: memref<128x128xbf16, #tpu.memory_space<vmem>>, %arg4: memref<9x128x128xbf16, #tpu.memory_space<vmem>>, %arg5: memref<9x128x128xbf16, #tpu.memory_space<vmem>>, %arg6: memref<9x128x128xbf16, #tpu.memory_space<vmem>>, %arg7: memref<384x1xf32, #tpu.memory_space<vmem>>, %arg8: memref<1x384x128xf32, #tpu.memory_space<vmem>>, %arg9: memref<496x128xf32, #tpu.memory_space<vmem>>) attributes {dimension_semantics = [#tpu.dimension_semantics<parallel>], iteration_bounds = array<i64: 2>, scalar_prefetch = 0 : i64, scratch_operands = 1 : i64, tpu.core_type = #tpu.core_type<tc>, window_params = [{transform_indices = @transform_0, window_bounds = array<i64: 1, 384, 8>}, {pipeline_mode = #tpu.pipeline_mode<synchronous>, transform_indices = @transform_1, window_bounds = array<i64: 8, 256>}, {pipeline_mode = #tpu.pipeline_mode<synchronous>, transform_indices = @transform_2, window_bounds = array<i64: 128, 128>}, {pipeline_mode = #tpu.pipeline_mode<synchronous>, transform_indices = @transform_3, window_bounds = array<i64: 9, 128, 128>}, {pipeline_mode = #tpu.pipeline_mode<synchronous>, transform_indices = @transform_4, window_bounds = array<i64: 9, 128, 128>}, {pipeline_mode = #tpu.pipeline_mode<synchronous>, transform_indices = @transform_5, window_bounds = array<i64: 9, 128, 128>}, {pipeline_mode = #tpu.pipeline_mode<synchronous>, transform_indices = @transform_6, window_bounds = array<i64: 384, 1>}, {transform_indices = @transform_7, window_bounds = array<i64: 1, 384, 128>}]} {
    %cst = arith.constant 0.000000e+00 : f32
    %0 = vector.broadcast %cst : f32 to vector<56x128xf32>
    %c0 = arith.constant 0 : index
    %c0_0 = arith.constant 0 : index
    %1 = vector.load %arg9[%c0, %c0_0] : memref<496x128xf32, #tpu.memory_space<vmem>>, vector<56x128xf32>
    tpu.vector_store %arg9[%c0, %c0_0], %0 {strides = array<i32>} : memref<496x128xf32, #tpu.memory_space<vmem>>, vector<56x128xf32>,
    %cst_1 = arith.constant 0.000000e+00 : f32
    %2 = vector.broadcast %cst_1 : f32 to vector<56x128xf32>
    %c440 = arith.constant 440 : index
    %c0_2 = arith.constant 0 : index
    %3 = vector.load %arg9[%c440, %c0_2] : memref<496x128xf32, #tpu.memory_space<vmem>>, vector<56x128xf32>
    tpu.vector_store %arg9[%c440, %c0_2], %2 {strides = array<i32>} : memref<496x128xf32, #tpu.memory_space<vmem>>, vector<56x128xf32>,
    %c0_3 = arith.constant 0 : index
    %c0_4 = arith.constant 0 : index
    %c0_5 = arith.constant 0 : index
    %4 = vector.load %arg1[%c0_3, %c0_4, %c0_5] : memref<1x384x8xf32, #tpu.memory_space<vmem>>, vector<1x384x8xf32>
    %5 = vector.shape_cast %4 : vector<1x384x8xf32> to vector<384x8xf32>
    %cst_6 = arith.constant 0.000000e+00 : f32
    %6 = vector.broadcast %cst_6 : f32 to vector<384x8xf32>
    %7 = arith.maximumf %5, %6 : vector<384x8xf32>
    %8 = arith.truncf %7 : vector<384x8xf32> to vector<384x8xbf16>
    %c0_7 = arith.constant 0 : index
    %c0_8 = arith.constant 0 : index
    %9 = vector.load %arg2[%c0_7, %c0_8] : memref<8x256xbf16, #tpu.memory_space<vmem>>, vector<8x256xbf16>
    %cst_9 = arith.constant dense<0.000000e+00> : vector<384x256xf32>
    %10 = tpu.matmul %8, %9, %cst_9 {dimension_numbers = #tpu.dot_dimension_numbers<[1], [0], [0], [1], [0, 0, 1, 1], [], []>} : vector<384x8xbf16>, vector<8x256xbf16>, vector<384x256xf32> -> vector<384x256xf32>
    %11 = vector.extract_strided_slice %10 {offsets = [0, 0], sizes = [384, 128], strides = [1, 1]} : vector<384x256xf32> to vector<384x128xf32>
    %12 = vector.extract_strided_slice %10 {offsets = [0, 128], sizes = [384, 128], strides = [1, 1]} : vector<384x256xf32> to vector<384x128xf32>
    %c0_10 = arith.constant 0 : index
    %c0_11 = arith.constant 0 : index
    %c0_12 = arith.constant 0 : index
    %13 = vector.load %arg8[%c0_10, %c0_11, %c0_12] : memref<1x384x128xf32, #tpu.memory_space<vmem>>, vector<1x384x128xf32>
    %14 = vector.shape_cast %13 : vector<1x384x128xf32> to vector<384x128xf32>
    %15 = vector.shape_cast %12 : vector<384x128xf32> to vector<1x384x128xf32>
    tpu.vector_store %arg8[%c0_10, %c0_11, %c0_12], %15 {strides = array<i32>} : memref<1x384x128xf32, #tpu.memory_space<vmem>>, vector<1x384x128xf32>,
    %cst_13 = arith.constant 0.000000e+00 : f32
    %16 = vector.broadcast %cst_13 : f32 to vector<384x128xf32>
    %17 = arith.maximumf %11, %16 : vector<384x128xf32>
    %18 = arith.truncf %17 : vector<384x128xf32> to vector<384x128xbf16>
    %c0_14 = arith.constant 0 : index
    %c0_15 = arith.constant 0 : index
    %19 = vector.load %arg3[%c0_14, %c0_15] : memref<128x128xbf16, #tpu.memory_space<vmem>>, vector<128x128xbf16>
    %cst_16 = arith.constant dense<0.000000e+00> : vector<384x128xf32>
    %20 = tpu.matmul %18, %19, %cst_16 {dimension_numbers = #tpu.dot_dimension_numbers<[1], [0], [0], [1], [0, 0, 1, 1], [], []>} : vector<384x128xbf16>, vector<128x128xbf16>, vector<384x128xf32> -> vector<384x128xf32>
    %cst_17 = arith.constant 0.000000e+00 : f32
    %21 = vector.broadcast %cst_17 : f32 to vector<384x128xf32>
    %22 = arith.maximumf %20, %21 : vector<384x128xf32>
    %c56 = arith.constant 56 : index
    %c0_18 = arith.constant 0 : index
    %23 = vector.load %arg9[%c56, %c0_18] : memref<496x128xf32, #tpu.memory_space<vmem>>, vector<384x128xf32>
    tpu.vector_store %arg9[%c56, %c0_18], %22 {strides = array<i32>} : memref<496x128xf32, #tpu.memory_space<vmem>>, vector<384x128xf32>,
    %c31 = arith.constant 31 : index
    %c0_19 = arith.constant 0 : index
    %24 = vector.load %arg9[%c31, %c0_19] : memref<496x128xf32, #tpu.memory_space<vmem>>, vector<384x128xf32>
    %25 = arith.truncf %24 : vector<384x128xf32> to vector<384x128xbf16>
    %c0_20 = arith.constant 0 : index
    %c0_21 = arith.constant 0 : index
    %c0_22 = arith.constant 0 : index
    %26 = vector.load %arg4[%c0_20, %c0_21, %c0_22] : memref<9x128x128xbf16, #tpu.memory_space<vmem>>, vector<1x128x128xbf16>
    %27 = vector.shape_cast %26 : vector<1x128x128xbf16> to vector<128x128xbf16>
    %cst_23 = arith.constant dense<0.000000e+00> : vector<384x128xf32>
    %28 = tpu.matmul %25, %27, %cst_23 {dimension_numbers = #tpu.dot_dimension_numbers<[1], [0], [0], [1], [0, 0, 1, 1], [], []>} : vector<384x128xbf16>, vector<128x128xbf16>, vector<384x128xf32> -> vector<384x128xf32>
    %c32 = arith.constant 32 : index
    %c0_24 = arith.constant 0 : index
    %29 = vector.load %arg9[%c32, %c0_24] : memref<496x128xf32, #tpu.memory_space<vmem>>, vector<384x128xf32>
    %30 = arith.truncf %29 : vector<384x128xf32> to vector<384x128xbf16>
    %c1 = arith.constant 1 : index
    %c0_25 = arith.constant 0 : index
    %c0_26 = arith.constant 0 : index
    %31 = vector.load %arg4[%c1, %c0_25, %c0_26] : memref<9x128x128xbf16, #tpu.memory_space<vmem>>, vector<1x128x128xbf16>
    %32 = vector.shape_cast %31 : vector<1x128x128xbf16> to vector<128x128xbf16>
    %cst_27 = arith.constant dense<0.000000e+00> : vector<384x128xf32>
    %33 = tpu.matmul %30, %32, %cst_27 {dimension_numbers = #tpu.dot_dimension_numbers<[1], [0], [0], [1], [0, 0, 1, 1], [], []>} : vector<384x128xbf16>, vector<128x128xbf16>, vector<384x128xf32> -> vector<384x128xf32>
    %34 = arith.addf %28, %33 : vector<384x128xf32>
    %c33 = arith.constant 33 : index
    %c0_28 = arith.constant 0 : index
    %35 = vector.load %arg9[%c33, %c0_28] : memref<496x128xf32, #tpu.memory_space<vmem>>, vector<384x128xf32>
    %36 = arith.truncf %35 : vector<384x128xf32> to vector<384x128xbf16>
    %c2 = arith.constant 2 : index
    %c0_29 = arith.constant 0 : index
    %c0_30 = arith.constant 0 : index
    %37 = vector.load %arg4[%c2, %c0_29, %c0_30] : memref<9x128x128xbf16, #tpu.memory_space<vmem>>, vector<1x128x128xbf16>
    %38 = vector.shape_cast %37 : vector<1x128x128xbf16> to vector<128x128xbf16>
    %cst_31 = arith.constant dense<0.000000e+00> : vector<384x128xf32>
    %39 = tpu.matmul %36, %38, %cst_31 {dimension_numbers = #tpu.dot_dimension_numbers<[1], [0], [0], [1], [0, 0, 1, 1], [], []>} : vector<384x128xbf16>, vector<128x128xbf16>, vector<384x128xf32> -> vector<384x128xf32>
    %40 = arith.addf %34, %39 : vector<384x128xf32>
    %c55 = arith.constant 55 : index
    %c0_32 = arith.constant 0 : index
    %41 = vector.load %arg9[%c55, %c0_32] : memref<496x128xf32, #tpu.memory_space<vmem>>, vector<384x128xf32>
    %42 = arith.truncf %41 : vector<384x128xf32> to vector<384x128xbf16>
    %c3 = arith.constant 3 : index
    %c0_33 = arith.constant 0 : index
    %c0_34 = arith.constant 0 : index
    %43 = vector.load %arg4[%c3, %c0_33, %c0_34] : memref<9x128x128xbf16, #tpu.memory_space<vmem>>, vector<1x128x128xbf16>
    %44 = vector.shape_cast %43 : vector<1x128x128xbf16> to vector<128x128xbf16>
    %cst_35 = arith.constant dense<0.000000e+00> : vector<384x128xf32>
    %45 = tpu.matmul %42, %44, %cst_35 {dimension_numbers = #tpu.dot_dimension_numbers<[1], [0], [0], [1], [0, 0, 1, 1], [], []>} : vector<384x128xbf16>, vector<128x128xbf16>, vector<384x128xf32> -> vector<384x128xf32>
    %46 = arith.addf %40, %45 : vector<384x128xf32>
    %c56_36 = arith.constant 56 : index
    %c0_37 = arith.constant 0 : index
    %47 = vector.load %arg9[%c56_36, %c0_37] : memref<496x128xf32, #tpu.memory_space<vmem>>, vector<384x128xf32>
    %48 = arith.truncf %47 : vector<384x128xf32> to vector<384x128xbf16>
    %c4 = arith.constant 4 : index
    %c0_38 = arith.constant 0 : index
    %c0_39 = arith.constant 0 : index
    %49 = vector.load %arg4[%c4, %c0_38, %c0_39] : memref<9x128x128xbf16, #tpu.memory_space<vmem>>, vector<1x128x128xbf16>
    %50 = vector.shape_cast %49 : vector<1x128x128xbf16> to vector<128x128xbf16>
    %cst_40 = arith.constant dense<0.000000e+00> : vector<384x128xf32>
    %51 = tpu.matmul %48, %50, %cst_40 {dimension_numbers = #tpu.dot_dimension_numbers<[1], [0], [0], [1], [0, 0, 1, 1], [], []>} : vector<384x128xbf16>, vector<128x128xbf16>, vector<384x128xf32> -> vector<384x128xf32>
    %52 = arith.addf %46, %51 : vector<384x128xf32>
    %c57 = arith.constant 57 : index
    %c0_41 = arith.constant 0 : index
    %53 = vector.load %arg9[%c57, %c0_41] : memref<496x128xf32, #tpu.memory_space<vmem>>, vector<384x128xf32>
    %54 = arith.truncf %53 : vector<384x128xf32> to vector<384x128xbf16>
    %c5 = arith.constant 5 : index
    %c0_42 = arith.constant 0 : index
    %c0_43 = arith.constant 0 : index
    %55 = vector.load %arg4[%c5, %c0_42, %c0_43] : memref<9x128x128xbf16, #tpu.memory_space<vmem>>, vector<1x128x128xbf16>
    %56 = vector.shape_cast %55 : vector<1x128x128xbf16> to vector<128x128xbf16>
    %cst_44 = arith.constant dense<0.000000e+00> : vector<384x128xf32>
    %57 = tpu.matmul %54, %56, %cst_44 {dimension_numbers = #tpu.dot_dimension_numbers<[1], [0], [0], [1], [0, 0, 1, 1], [], []>} : vector<384x128xbf16>, vector<128x128xbf16>, vector<384x128xf32> -> vector<384x128xf32>
    %58 = arith.addf %52, %57 : vector<384x128xf32>
    %c79 = arith.constant 79 : index
    %c0_45 = arith.constant 0 : index
    %59 = vector.load %arg9[%c79, %c0_45] : memref<496x128xf32, #tpu.memory_space<vmem>>, vector<384x128xf32>
    %60 = arith.truncf %59 : vector<384x128xf32> to vector<384x128xbf16>
    %c6 = arith.constant 6 : index
    %c0_46 = arith.constant 0 : index
    %c0_47 = arith.constant 0 : index
    %61 = vector.load %arg4[%c6, %c0_46, %c0_47] : memref<9x128x128xbf16, #tpu.memory_space<vmem>>, vector<1x128x128xbf16>
    %62 = vector.shape_cast %61 : vector<1x128x128xbf16> to vector<128x128xbf16>
    %cst_48 = arith.constant dense<0.000000e+00> : vector<384x128xf32>
    %63 = tpu.matmul %60, %62, %cst_48 {dimension_numbers = #tpu.dot_dimension_numbers<[1], [0], [0], [1], [0, 0, 1, 1], [], []>} : vector<384x128xbf16>, vector<128x128xbf16>, vector<384x128xf32> -> vector<384x128xf32>
    %64 = arith.addf %58, %63 : vector<384x128xf32>
    %c80 = arith.constant 80 : index
    %c0_49 = arith.constant 0 : index
    %65 = vector.load %arg9[%c80, %c0_49] : memref<496x128xf32, #tpu.memory_space<vmem>>, vector<384x128xf32>
    %66 = arith.truncf %65 : vector<384x128xf32> to vector<384x128xbf16>
    %c7 = arith.constant 7 : index
    %c0_50 = arith.constant 0 : index
    %c0_51 = arith.constant 0 : index
    %67 = vector.load %arg4[%c7, %c0_50, %c0_51] : memref<9x128x128xbf16, #tpu.memory_space<vmem>>, vector<1x128x128xbf16>
    %68 = vector.shape_cast %67 : vector<1x128x128xbf16> to vector<128x128xbf16>
    %cst_52 = arith.constant dense<0.000000e+00> : vector<384x128xf32>
    %69 = tpu.matmul %66, %68, %cst_52 {dimension_numbers = #tpu.dot_dimension_numbers<[1], [0], [0], [1], [0, 0, 1, 1], [], []>} : vector<384x128xbf16>, vector<128x128xbf16>, vector<384x128xf32> -> vector<384x128xf32>
    %70 = arith.addf %64, %69 : vector<384x128xf32>
    %c81 = arith.constant 81 : index
    %c0_53 = arith.constant 0 : index
    %71 = vector.load %arg9[%c81, %c0_53] : memref<496x128xf32, #tpu.memory_space<vmem>>, vector<384x128xf32>
    %72 = arith.truncf %71 : vector<384x128xf32> to vector<384x128xbf16>
    %c8 = arith.constant 8 : index
    %c0_54 = arith.constant 0 : index
    %c0_55 = arith.constant 0 : index
    %73 = vector.load %arg4[%c8, %c0_54, %c0_55] : memref<9x128x128xbf16, #tpu.memory_space<vmem>>, vector<1x128x128xbf16>
    %74 = vector.shape_cast %73 : vector<1x128x128xbf16> to vector<128x128xbf16>
    %cst_56 = arith.constant dense<0.000000e+00> : vector<384x128xf32>
    %75 = tpu.matmul %72, %74, %cst_56 {dimension_numbers = #tpu.dot_dimension_numbers<[1], [0], [0], [1], [0, 0, 1, 1], [], []>} : vector<384x128xbf16>, vector<128x128xbf16>, vector<384x128xf32> -> vector<384x128xf32>
    %76 = arith.addf %70, %75 : vector<384x128xf32>
    %c6_57 = arith.constant 6 : index
    %c0_58 = arith.constant 0 : index
    %77 = vector.load %arg9[%c6_57, %c0_58] : memref<496x128xf32, #tpu.memory_space<vmem>>, vector<384x128xf32>
    %78 = arith.truncf %77 : vector<384x128xf32> to vector<384x128xbf16>
    %c0_59 = arith.constant 0 : index
    %c0_60 = arith.constant 0 : index
    %c0_61 = arith.constant 0 : index
    %79 = vector.load %arg5[%c0_59, %c0_60, %c0_61] : memref<9x128x128xbf16, #tpu.memory_space<vmem>>, vector<1x128x128xbf16>
    %80 = vector.shape_cast %79 : vector<1x128x128xbf16> to vector<128x128xbf16>
    %cst_62 = arith.constant dense<0.000000e+00> : vector<384x128xf32>
    %81 = tpu.matmul %78, %80, %cst_62 {dimension_numbers = #tpu.dot_dimension_numbers<[1], [0], [0], [1], [0, 0, 1, 1], [], []>} : vector<384x128xbf16>, vector<128x128xbf16>, vector<384x128xf32> -> vector<384x128xf32>
    %82 = arith.addf %76, %81 : vector<384x128xf32>
    %c8_63 = arith.constant 8 : index
    %c0_64 = arith.constant 0 : index
    %83 = vector.load %arg9[%c8_63, %c0_64] : memref<496x128xf32, #tpu.memory_space<vmem>>, vector<384x128xf32>
    %84 = arith.truncf %83 : vector<384x128xf32> to vector<384x128xbf16>
    %c1_65 = arith.constant 1 : index
    %c0_66 = arith.constant 0 : index
    %c0_67 = arith.constant 0 : index
    %85 = vector.load %arg5[%c1_65, %c0_66, %c0_67] : memref<9x128x128xbf16, #tpu.memory_space<vmem>>, vector<1x128x128xbf16>
    %86 = vector.shape_cast %85 : vector<1x128x128xbf16> to vector<128x128xbf16>
    %cst_68 = arith.constant dense<0.000000e+00> : vector<384x128xf32>
    %87 = tpu.matmul %84, %86, %cst_68 {dimension_numbers = #tpu.dot_dimension_numbers<[1], [0], [0], [1], [0, 0, 1, 1], [], []>} : vector<384x128xbf16>, vector<128x128xbf16>, vector<384x128xf32> -> vector<384x128xf32>
    %88 = arith.addf %82, %87 : vector<384x128xf32>
    %c10 = arith.constant 10 : index
    %c0_69 = arith.constant 0 : index
    %89 = vector.load %arg9[%c10, %c0_69] : memref<496x128xf32, #tpu.memory_space<vmem>>, vector<384x128xf32>
    %90 = arith.truncf %89 : vector<384x128xf32> to vector<384x128xbf16>
    %c2_70 = arith.constant 2 : index
    %c0_71 = arith.constant 0 : index
    %c0_72 = arith.constant 0 : index
    %91 = vector.load %arg5[%c2_70, %c0_71, %c0_72] : memref<9x128x128xbf16, #tpu.memory_space<vmem>>, vector<1x128x128xbf16>
    %92 = vector.shape_cast %91 : vector<1x128x128xbf16> to vector<128x128xbf16>
    %cst_73 = arith.constant dense<0.000000e+00> : vector<384x128xf32>
    %93 = tpu.matmul %90, %92, %cst_73 {dimension_numbers = #tpu.dot_dimension_numbers<[1], [0], [0], [1], [0, 0, 1, 1], [], []>} : vector<384x128xbf16>, vector<128x128xbf16>, vector<384x128xf32> -> vector<384x128xf32>
    %94 = arith.addf %88, %93 : vector<384x128xf32>
    %c54 = arith.constant 54 : index
    %c0_74 = arith.constant 0 : index
    %95 = vector.load %arg9[%c54, %c0_74] : memref<496x128xf32, #tpu.memory_space<vmem>>, vector<384x128xf32>
    %96 = arith.truncf %95 : vector<384x128xf32> to vector<384x128xbf16>
    %c3_75 = arith.constant 3 : index
    %c0_76 = arith.constant 0 : index
    %c0_77 = arith.constant 0 : index
    %97 = vector.load %arg5[%c3_75, %c0_76, %c0_77] : memref<9x128x128xbf16, #tpu.memory_space<vmem>>, vector<1x128x128xbf16>
    %98 = vector.shape_cast %97 : vector<1x128x128xbf16> to vector<128x128xbf16>
    %cst_78 = arith.constant dense<0.000000e+00> : vector<384x128xf32>
    %99 = tpu.matmul %96, %98, %cst_78 {dimension_numbers = #tpu.dot_dimension_numbers<[1], [0], [0], [1], [0, 0, 1, 1], [], []>} : vector<384x128xbf16>, vector<128x128xbf16>, vector<384x128xf32> -> vector<384x128xf32>
    %100 = arith.addf %94, %99 : vector<384x128xf32>
    %c56_79 = arith.constant 56 : index
    %c0_80 = arith.constant 0 : index
    %101 = vector.load %arg9[%c56_79, %c0_80] : memref<496x128xf32, #tpu.memory_space<vmem>>, vector<384x128xf32>
    %102 = arith.truncf %101 : vector<384x128xf32> to vector<384x128xbf16>
    %c4_81 = arith.constant 4 : index
    %c0_82 = arith.constant 0 : index
    %c0_83 = arith.constant 0 : index
    %103 = vector.load %arg5[%c4_81, %c0_82, %c0_83] : memref<9x128x128xbf16, #tpu.memory_space<vmem>>, vector<1x128x128xbf16>
    %104 = vector.shape_cast %103 : vector<1x128x128xbf16> to vector<128x128xbf16>
    %cst_84 = arith.constant dense<0.000000e+00> : vector<384x128xf32>
    %105 = tpu.matmul %102, %104, %cst_84 {dimension_numbers = #tpu.dot_dimension_numbers<[1], [0], [0], [1], [0, 0, 1, 1], [], []>} : vector<384x128xbf16>, vector<128x128xbf16>, vector<384x128xf32> -> vector<384x128xf32>
    %106 = arith.addf %100, %105 : vector<384x128xf32>
    %c58 = arith.constant 58 : index
    %c0_85 = arith.constant 0 : index
    %107 = vector.load %arg9[%c58, %c0_85] : memref<496x128xf32, #tpu.memory_space<vmem>>, vector<384x128xf32>
    %108 = arith.truncf %107 : vector<384x128xf32> to vector<384x128xbf16>
    %c5_86 = arith.constant 5 : index
    %c0_87 = arith.constant 0 : index
    %c0_88 = arith.constant 0 : index
    %109 = vector.load %arg5[%c5_86, %c0_87, %c0_88] : memref<9x128x128xbf16, #tpu.memory_space<vmem>>, vector<1x128x128xbf16>
    %110 = vector.shape_cast %109 : vector<1x128x128xbf16> to vector<128x128xbf16>
    %cst_89 = arith.constant dense<0.000000e+00> : vector<384x128xf32>
    %111 = tpu.matmul %108, %110, %cst_89 {dimension_numbers = #tpu.dot_dimension_numbers<[1], [0], [0], [1], [0, 0, 1, 1], [], []>} : vector<384x128xbf16>, vector<128x128xbf16>, vector<384x128xf32> -> vector<384x128xf32>
    %112 = arith.addf %106, %111 : vector<384x128xf32>
    %c102 = arith.constant 102 : index
    %c0_90 = arith.constant 0 : index
    %113 = vector.load %arg9[%c102, %c0_90] : memref<496x128xf32, #tpu.memory_space<vmem>>, vector<384x128xf32>
    %114 = arith.truncf %113 : vector<384x128xf32> to vector<384x128xbf16>
    %c6_91 = arith.constant 6 : index
    %c0_92 = arith.constant 0 : index
    %c0_93 = arith.constant 0 : index
    %115 = vector.load %arg5[%c6_91, %c0_92, %c0_93] : memref<9x128x128xbf16, #tpu.memory_space<vmem>>, vector<1x128x128xbf16>
    %116 = vector.shape_cast %115 : vector<1x128x128xbf16> to vector<128x128xbf16>
    %cst_94 = arith.constant dense<0.000000e+00> : vector<384x128xf32>
    %117 = tpu.matmul %114, %116, %cst_94 {dimension_numbers = #tpu.dot_dimension_numbers<[1], [0], [0], [1], [0, 0, 1, 1], [], []>} : vector<384x128xbf16>, vector<128x128xbf16>, vector<384x128xf32> -> vector<384x128xf32>
    %118 = arith.addf %112, %117 : vector<384x128xf32>
    %c104 = arith.constant 104 : index
    %c0_95 = arith.constant 0 : index
    %119 = vector.load %arg9[%c104, %c0_95] : memref<496x128xf32, #tpu.memory_space<vmem>>, vector<384x128xf32>
    %120 = arith.truncf %119 : vector<384x128xf32> to vector<384x128xbf16>
    %c7_96 = arith.constant 7 : index
    %c0_97 = arith.constant 0 : index
    %c0_98 = arith.constant 0 : index
    %121 = vector.load %arg5[%c7_96, %c0_97, %c0_98] : memref<9x128x128xbf16, #tpu.memory_space<vmem>>, vector<1x128x128xbf16>
    %122 = vector.shape_cast %121 : vector<1x128x128xbf16> to vector<128x128xbf16>
    %cst_99 = arith.constant dense<0.000000e+00> : vector<384x128xf32>
    %123 = tpu.matmul %120, %122, %cst_99 {dimension_numbers = #tpu.dot_dimension_numbers<[1], [0], [0], [1], [0, 0, 1, 1], [], []>} : vector<384x128xbf16>, vector<128x128xbf16>, vector<384x128xf32> -> vector<384x128xf32>
    %124 = arith.addf %118, %123 : vector<384x128xf32>
    %c106 = arith.constant 106 : index
    %c0_100 = arith.constant 0 : index
    %125 = vector.load %arg9[%c106, %c0_100] : memref<496x128xf32, #tpu.memory_space<vmem>>, vector<384x128xf32>
    %126 = arith.truncf %125 : vector<384x128xf32> to vector<384x128xbf16>
    %c8_101 = arith.constant 8 : index
    %c0_102 = arith.constant 0 : index
    %c0_103 = arith.constant 0 : index
    %127 = vector.load %arg5[%c8_101, %c0_102, %c0_103] : memref<9x128x128xbf16, #tpu.memory_space<vmem>>, vector<1x128x128xbf16>
    %128 = vector.shape_cast %127 : vector<1x128x128xbf16> to vector<128x128xbf16>
    %cst_104 = arith.constant dense<0.000000e+00> : vector<384x128xf32>
    %129 = tpu.matmul %126, %128, %cst_104 {dimension_numbers = #tpu.dot_dimension_numbers<[1], [0], [0], [1], [0, 0, 1, 1], [], []>} : vector<384x128xbf16>, vector<128x128xbf16>, vector<384x128xf32> -> vector<384x128xf32>
    %130 = arith.addf %124, %129 : vector<384x128xf32>
    %cst_105 = arith.constant 0.000000e+00 : f32
    %131 = vector.broadcast %cst_105 : f32 to vector<384x128xf32>
    %132 = arith.maximumf %130, %131 : vector<384x128xf32>
    %c0_106 = arith.constant 0 : index
    %c0_107 = arith.constant 0 : index
    %133 = vector.load %arg7[%c0_106, %c0_107] : memref<384x1xf32, #tpu.memory_space<vmem>>, vector<384x1xf32>
    %134 = vector.broadcast %133 : vector<384x1xf32> to vector<384x128xf32>
    %135 = arith.mulf %132, %134 : vector<384x128xf32>
    %c56_108 = arith.constant 56 : index
    %c0_109 = arith.constant 0 : index
    %136 = vector.load %arg9[%c56_108, %c0_109] : memref<496x128xf32, #tpu.memory_space<vmem>>, vector<384x128xf32>
    tpu.vector_store %arg9[%c56_108, %c0_109], %135 {strides = array<i32>} : memref<496x128xf32, #tpu.memory_space<vmem>>, vector<384x128xf32>,
    %c31_110 = arith.constant 31 : index
    %c0_111 = arith.constant 0 : index
    %137 = vector.load %arg9[%c31_110, %c0_111] : memref<496x128xf32, #tpu.memory_space<vmem>>, vector<384x128xf32>
    %138 = arith.truncf %137 : vector<384x128xf32> to vector<384x128xbf16>
    %c0_112 = arith.constant 0 : index
    %c0_113 = arith.constant 0 : index
    %c0_114 = arith.constant 0 : index
    %139 = vector.load %arg6[%c0_112, %c0_113, %c0_114] : memref<9x128x128xbf16, #tpu.memory_space<vmem>>, vector<1x128x128xbf16>
    %140 = vector.shape_cast %139 : vector<1x128x128xbf16> to vector<128x128xbf16>
    %cst_115 = arith.constant dense<0.000000e+00> : vector<384x128xf32>
    %141 = tpu.matmul %138, %140, %cst_115 {dimension_numbers = #tpu.dot_dimension_numbers<[1], [0], [0], [1], [0, 0, 1, 1], [], []>} : vector<384x128xbf16>, vector<128x128xbf16>, vector<384x128xf32> -> vector<384x128xf32>
    %c32_116 = arith.constant 32 : index
    %c0_117 = arith.constant 0 : index
    %142 = vector.load %arg9[%c32_116, %c0_117] : memref<496x128xf32, #tpu.memory_space<vmem>>, vector<384x128xf32>
    %143 = arith.truncf %142 : vector<384x128xf32> to vector<384x128xbf16>
    %c1_118 = arith.constant 1 : index
    %c0_119 = arith.constant 0 : index
    %c0_120 = arith.constant 0 : index
    %144 = vector.load %arg6[%c1_118, %c0_119, %c0_120] : memref<9x128x128xbf16, #tpu.memory_space<vmem>>, vector<1x128x128xbf16>
    %145 = vector.shape_cast %144 : vector<1x128x128xbf16> to vector<128x128xbf16>
    %cst_121 = arith.constant dense<0.000000e+00> : vector<384x128xf32>
    %146 = tpu.matmul %143, %145, %cst_121 {dimension_numbers = #tpu.dot_dimension_numbers<[1], [0], [0], [1], [0, 0, 1, 1], [], []>} : vector<384x128xbf16>, vector<128x128xbf16>, vector<384x128xf32> -> vector<384x128xf32>
    %147 = arith.addf %141, %146 : vector<384x128xf32>
    %c33_122 = arith.constant 33 : index
    %c0_123 = arith.constant 0 : index
    %148 = vector.load %arg9[%c33_122, %c0_123] : memref<496x128xf32, #tpu.memory_space<vmem>>, vector<384x128xf32>
    %149 = arith.truncf %148 : vector<384x128xf32> to vector<384x128xbf16>
    %c2_124 = arith.constant 2 : index
    %c0_125 = arith.constant 0 : index
    %c0_126 = arith.constant 0 : index
    %150 = vector.load %arg6[%c2_124, %c0_125, %c0_126] : memref<9x128x128xbf16, #tpu.memory_space<vmem>>, vector<1x128x128xbf16>
    %151 = vector.shape_cast %150 : vector<1x128x128xbf16> to vector<128x128xbf16>
    %cst_127 = arith.constant dense<0.000000e+00> : vector<384x128xf32>
    %152 = tpu.matmul %149, %151, %cst_127 {dimension_numbers = #tpu.dot_dimension_numbers<[1], [0], [0], [1], [0, 0, 1, 1], [], []>} : vector<384x128xbf16>, vector<128x128xbf16>, vector<384x128xf32> -> vector<384x128xf32>
    %153 = arith.addf %147, %152 : vector<384x128xf32>
    %c55_128 = arith.constant 55 : index
    %c0_129 = arith.constant 0 : index
    %154 = vector.load %arg9[%c55_128, %c0_129] : memref<496x128xf32, #tpu.memory_space<vmem>>, vector<384x128xf32>
    %155 = arith.truncf %154 : vector<384x128xf32> to vector<384x128xbf16>
    %c3_130 = arith.constant 3 : index
    %c0_131 = arith.constant 0 : index
    %c0_132 = arith.constant 0 : index
    %156 = vector.load %arg6[%c3_130, %c0_131, %c0_132] : memref<9x128x128xbf16, #tpu.memory_space<vmem>>, vector<1x128x128xbf16>
    %157 = vector.shape_cast %156 : vector<1x128x128xbf16> to vector<128x128xbf16>
    %cst_133 = arith.constant dense<0.000000e+00> : vector<384x128xf32>
    %158 = tpu.matmul %155, %157, %cst_133 {dimension_numbers = #tpu.dot_dimension_numbers<[1], [0], [0], [1], [0, 0, 1, 1], [], []>} : vector<384x128xbf16>, vector<128x128xbf16>, vector<384x128xf32> -> vector<384x128xf32>
    %159 = arith.addf %153, %158 : vector<384x128xf32>
    %c56_134 = arith.constant 56 : index
    %c0_135 = arith.constant 0 : index
    %160 = vector.load %arg9[%c56_134, %c0_135] : memref<496x128xf32, #tpu.memory_space<vmem>>, vector<384x128xf32>
    %161 = arith.truncf %160 : vector<384x128xf32> to vector<384x128xbf16>
    %c4_136 = arith.constant 4 : index
    %c0_137 = arith.constant 0 : index
    %c0_138 = arith.constant 0 : index
    %162 = vector.load %arg6[%c4_136, %c0_137, %c0_138] : memref<9x128x128xbf16, #tpu.memory_space<vmem>>, vector<1x128x128xbf16>
    %163 = vector.shape_cast %162 : vector<1x128x128xbf16> to vector<128x128xbf16>
    %cst_139 = arith.constant dense<0.000000e+00> : vector<384x128xf32>
    %164 = tpu.matmul %161, %163, %cst_139 {dimension_numbers = #tpu.dot_dimension_numbers<[1], [0], [0], [1], [0, 0, 1, 1], [], []>} : vector<384x128xbf16>, vector<128x128xbf16>, vector<384x128xf32> -> vector<384x128xf32>
    %165 = arith.addf %159, %164 : vector<384x128xf32>
    %c57_140 = arith.constant 57 : index
    %c0_141 = arith.constant 0 : index
    %166 = vector.load %arg9[%c57_140, %c0_141] : memref<496x128xf32, #tpu.memory_space<vmem>>, vector<384x128xf32>
    %167 = arith.truncf %166 : vector<384x128xf32> to vector<384x128xbf16>
    %c5_142 = arith.constant 5 : index
    %c0_143 = arith.constant 0 : index
    %c0_144 = arith.constant 0 : index
    %168 = vector.load %arg6[%c5_142, %c0_143, %c0_144] : memref<9x128x128xbf16, #tpu.memory_space<vmem>>, vector<1x128x128xbf16>
    %169 = vector.shape_cast %168 : vector<1x128x128xbf16> to vector<128x128xbf16>
    %cst_145 = arith.constant dense<0.000000e+00> : vector<384x128xf32>
    %170 = tpu.matmul %167, %169, %cst_145 {dimension_numbers = #tpu.dot_dimension_numbers<[1], [0], [0], [1], [0, 0, 1, 1], [], []>} : vector<384x128xbf16>, vector<128x128xbf16>, vector<384x128xf32> -> vector<384x128xf32>
    %171 = arith.addf %165, %170 : vector<384x128xf32>
    %c79_146 = arith.constant 79 : index
    %c0_147 = arith.constant 0 : index
    %172 = vector.load %arg9[%c79_146, %c0_147] : memref<496x128xf32, #tpu.memory_space<vmem>>, vector<384x128xf32>
    %173 = arith.truncf %172 : vector<384x128xf32> to vector<384x128xbf16>
    %c6_148 = arith.constant 6 : index
    %c0_149 = arith.constant 0 : index
    %c0_150 = arith.constant 0 : index
    %174 = vector.load %arg6[%c6_148, %c0_149, %c0_150] : memref<9x128x128xbf16, #tpu.memory_space<vmem>>, vector<1x128x128xbf16>
    %175 = vector.shape_cast %174 : vector<1x128x128xbf16> to vector<128x128xbf16>
    %cst_151 = arith.constant dense<0.000000e+00> : vector<384x128xf32>
    %176 = tpu.matmul %173, %175, %cst_151 {dimension_numbers = #tpu.dot_dimension_numbers<[1], [0], [0], [1], [0, 0, 1, 1], [], []>} : vector<384x128xbf16>, vector<128x128xbf16>, vector<384x128xf32> -> vector<384x128xf32>
    %177 = arith.addf %171, %176 : vector<384x128xf32>
    %c80_152 = arith.constant 80 : index
    %c0_153 = arith.constant 0 : index
    %178 = vector.load %arg9[%c80_152, %c0_153] : memref<496x128xf32, #tpu.memory_space<vmem>>, vector<384x128xf32>
    %179 = arith.truncf %178 : vector<384x128xf32> to vector<384x128xbf16>
    %c7_154 = arith.constant 7 : index
    %c0_155 = arith.constant 0 : index
    %c0_156 = arith.constant 0 : index
    %180 = vector.load %arg6[%c7_154, %c0_155, %c0_156] : memref<9x128x128xbf16, #tpu.memory_space<vmem>>, vector<1x128x128xbf16>
    %181 = vector.shape_cast %180 : vector<1x128x128xbf16> to vector<128x128xbf16>
    %cst_157 = arith.constant dense<0.000000e+00> : vector<384x128xf32>
    %182 = tpu.matmul %179, %181, %cst_157 {dimension_numbers = #tpu.dot_dimension_numbers<[1], [0], [0], [1], [0, 0, 1, 1], [], []>} : vector<384x128xbf16>, vector<128x128xbf16>, vector<384x128xf32> -> vector<384x128xf32>
    %183 = arith.addf %177, %182 : vector<384x128xf32>
    %c81_158 = arith.constant 81 : index
    %c0_159 = arith.constant 0 : index
    %184 = vector.load %arg9[%c81_158, %c0_159] : memref<496x128xf32, #tpu.memory_space<vmem>>, vector<384x128xf32>
    %185 = arith.truncf %184 : vector<384x128xf32> to vector<384x128xbf16>
    %c8_160 = arith.constant 8 : index
    %c0_161 = arith.constant 0 : index
    %c0_162 = arith.constant 0 : index
    %186 = vector.load %arg6[%c8_160, %c0_161, %c0_162] : memref<9x128x128xbf16, #tpu.memory_space<vmem>>, vector<1x128x128xbf16>
    %187 = vector.shape_cast %186 : vector<1x128x128xbf16> to vector<128x128xbf16>
    %cst_163 = arith.constant dense<0.000000e+00> : vector<384x128xf32>
    %188 = tpu.matmul %185, %187, %cst_163 {dimension_numbers = #tpu.dot_dimension_numbers<[1], [0], [0], [1], [0, 0, 1, 1], [], []>} : vector<384x128xbf16>, vector<128x128xbf16>, vector<384x128xf32> -> vector<384x128xf32>
    %189 = arith.addf %183, %188 : vector<384x128xf32>
    %c0_164 = arith.constant 0 : index
    %c0_165 = arith.constant 0 : index
    %c0_166 = arith.constant 0 : index
    %190 = vector.load %arg8[%c0_164, %c0_165, %c0_166] : memref<1x384x128xf32, #tpu.memory_space<vmem>>, vector<1x384x128xf32>
    %191 = vector.shape_cast %190 : vector<1x384x128xf32> to vector<384x128xf32>
    %192 = arith.addf %191, %189 : vector<384x128xf32>
    %c0_167 = arith.constant 0 : index
    %c0_168 = arith.constant 0 : index
    %c0_169 = arith.constant 0 : index
    %193 = vector.load %arg8[%c0_167, %c0_168, %c0_169] : memref<1x384x128xf32, #tpu.memory_space<vmem>>, vector<1x384x128xf32>
    %194 = vector.shape_cast %193 : vector<1x384x128xf32> to vector<384x128xf32>
    %195 = vector.shape_cast %192 : vector<384x128xf32> to vector<1x384x128xf32>
    tpu.vector_store %arg8[%c0_167, %c0_168, %c0_169], %195 {strides = array<i32>} : memref<1x384x128xf32, #tpu.memory_space<vmem>>, vector<1x384x128xf32>,
    return
  }
  func.func @transform_0(%arg0: i32) -> (i32, i32, i32) {
    %c0_i32 = arith.constant 0 : i32
    %c0_i32_0 = arith.constant 0 : i32
    %c0_i32_1 = arith.constant 0 : i32
    return %arg0, %c0_i32, %c0_i32_0 : i32, i32, i32
  }
  func.func @transform_1(%arg0: i32) -> (i32, i32) {
    %c0_i32 = arith.constant 0 : i32
    %c0_i32_0 = arith.constant 0 : i32
    %c0_i32_1 = arith.constant 0 : i32
    return %c0_i32, %c0_i32_0 : i32, i32
  }
  func.func @transform_2(%arg0: i32) -> (i32, i32) {
    %c0_i32 = arith.constant 0 : i32
    %c0_i32_0 = arith.constant 0 : i32
    %c0_i32_1 = arith.constant 0 : i32
    return %c0_i32, %c0_i32_0 : i32, i32
  }
  func.func @transform_3(%arg0: i32) -> (i32, i32, i32) {
    %c0_i32 = arith.constant 0 : i32
    %c0_i32_0 = arith.constant 0 : i32
    %c0_i32_1 = arith.constant 0 : i32
    %c0_i32_2 = arith.constant 0 : i32
    return %c0_i32, %c0_i32_0, %c0_i32_1 : i32, i32, i32
  }
  func.func @transform_4(%arg0: i32) -> (i32, i32, i32) {
    %c0_i32 = arith.constant 0 : i32
    %c0_i32_0 = arith.constant 0 : i32
    %c0_i32_1 = arith.constant 0 : i32
    %c0_i32_2 = arith.constant 0 : i32
    return %c0_i32, %c0_i32_0, %c0_i32_1 : i32, i32, i32
  }
  func.func @transform_5(%arg0: i32) -> (i32, i32, i32) {
    %c0_i32 = arith.constant 0 : i32
    %c0_i32_0 = arith.constant 0 : i32
    %c0_i32_1 = arith.constant 0 : i32
    %c0_i32_2 = arith.constant 0 : i32
    return %c0_i32, %c0_i32_0, %c0_i32_1 : i32, i32, i32
  }
  func.func @transform_6(%arg0: i32) -> (i32, i32) {
    %c0_i32 = arith.constant 0 : i32
    %c0_i32_0 = arith.constant 0 : i32
    %c0_i32_1 = arith.constant 0 : i32
    return %c0_i32, %c0_i32_0 : i32, i32
  }
  func.func @transform_7(%arg0: i32) -> (i32, i32, i32) {
    %c0_i32 = arith.constant 0 : i32
    %c0_i32_0 = arith.constant 0 : i32
    %c0_i32_1 = arith.constant 0 : i32
    return %arg0, %c0_i32, %c0_i32_0 : i32, i32, i32
  }
}

</mosaic_0001>

<llo_original>
// kernel: tile.8
$region0: #{tile.8}
  #allocation0 [shape = 's32[1]{0}', space=sflag, size = 0x4, scoped, tag = 'scoped memory for tile.8']
  %s0 = inlined_call_operand.vmem [shape: f32[24], index: 0, kind: input, shape index: {}]
  %s1 = inlined_call_operand.vmem [shape: f32[16,24], index: 1, kind: output, shape index: {}]
  // Predicated region
  $region2: #{tile.8} parent=0 // pred_check
    _
  $region3: #{tile.8} parent=0 // pred_check_branch
    %3 = sbr.rel (0) target = $region5
  $region4: #{tile.8} parent=0 // pred_region
    _
  $region5: #{tile.8} parent=0 // pred_fallthru
    _
  %v4 = vld [vmem:[%s0] ss:$0 sm:$0xff]
  %5 = vst [vmem:[%s1] sm:$0xff] %v4
  %s6 = scalar_lea.vmem %s1, 8
  %7 = vst [vmem:[%s6] sm:$0xff] %v4

// kernel: tile.0
$region0: #{tile.0}
  %s0 = inlined_call_operand.vmem [shape: f32[16,24], index: 0, kind: input, shape index: {}]
  %s1 = inlined_call_operand.vmem [shape: f32[384,1], index: 1, kind: output, shape index: {}]
  %v2 = vld [vmem:[%s0] sm:$0xff]
  %vm3 = vcmask 7168
  %4 = vst.msk [vmem:[%s1] ss:$24 sm:$0xf] %vm3, %v2
  %5 = vst.msk [vmem:[%s1] ss:$24 sm:$0xf0] %vm3, %v2
  %s6 = scalar_lea.vmem %s0, 8
  %v7 = vld [vmem:[%s6] sm:$0xff]
  %vm8 = vcmask 7168
  %s9 = scalar_lea.vmem %s1, 192
  %10 = vst.msk [vmem:[%s9] ss:$24 sm:$0xf] %vm8, %v7
  %s11 = scalar_lea.vmem %s1, 192
  %12 = vst.msk [vmem:[%s11] ss:$24 sm:$0xf0] %vm8, %v7
  %v13 = vld.sshfl [vmem:[%s0] sm:$0xff pattern:$0x56741230]
  %14 = vrot.lane.b32.xlu0 %v13, 127
  %v15 = vpop.permute.xlu0 %14
  %vm16 = vcmask 7168
  %s17 = scalar_lea.vmem %s1, 1
  %18 = vst.msk [vmem:[%s17] ss:$72 sm:$0x3] %vm16, %v15
  %s19 = scalar_lea.vmem %s1, 97
  %20 = vst.msk [vmem:[%s19] ss:$-24 sm:$0xc] %vm16, %v15
  %s21 = scalar_lea.vmem %s1, 4294967105
  %22 = vst.msk [vmem:[%s21] ss:$72 sm:$0x30] %vm16, %v15
  %s23 = scalar_lea.vmem %s1, 289
  %24 = vst.msk [vmem:[%s23] ss:$-24 sm:$0xc0] %vm16, %v15
  %s25 = scalar_lea.vmem %s0, 8
  %v26 = vld.sshfl [vmem:[%s25] sm:$0xff pattern:$0x56741230]
  %27 = vrot.lane.b32.xlu0 %v26, 127
  %v28 = vpop.permute.xlu0 %27
  %vm29 = vcmask 7168
  %s30 = scalar_lea.vmem %s1, 193
  %31 = vst.msk [vmem:[%s30] ss:$72 sm:$0x3] %vm29, %v28
  %s32 = scalar_lea.vmem %s1, 289
  %33 = vst.msk [vmem:[%s32] ss:$-24 sm:$0xc] %vm29, %v28
  %s34 = scalar_lea.vmem %s1, 1
  %35 = vst.msk [vmem:[%s34] ss:$72 sm:$0x30] %vm29, %v28
  %s36 = scalar_lea.vmem %s1, 481
  %37 = vst.msk [vmem:[%s36] ss:$-24 sm:$0xc0] %vm29, %v28
  %v38 = vld.sshfl [vmem:[%s0] sm:$0xff pattern:$0x56741230]
  %39 = vrot.lane.b32.xlu0 %v38, 126
  %v40 = vpop.permute.xlu0 %39
  %vm41 = vcmask 7168
  %s42 = scalar_lea.vmem %s1, 2
  %43 = vst.msk [vmem:[%s42] ss:$72 sm:$0x3] %vm41, %v40
  %s44 = scalar_lea.vmem %s1, 98
  %45 = vst.msk [vmem:[%s44] ss:$-24 sm:$0xc] %vm41, %v40
  %s46 = scalar_lea.vmem %s1, 4294967106
  %47 = vst.msk [vmem:[%s46] ss:$72 sm:$0x30] %vm41, %v40
  %s48 = scalar_lea.vmem %s1, 290
  %49 = vst.msk [vmem:[%s48] ss:$-24 sm:$0xc0] %vm41, %v40
  %s50 = scalar_lea.vmem %s0, 8
  %v51 = vld.sshfl [vmem:[%s50] sm:$0xff pattern:$0x56741230]
  %52 = vrot.lane.b32.xlu0 %v51, 126
  %v53 = vpop.permute.xlu0 %52
  %vm54 = vcmask 7168
  %s55 = scalar_lea.vmem %s1, 194
  %56 = vst.msk [vmem:[%s55] ss:$72 sm:$0x3] %vm54, %v53
  %s57 = scalar_lea.vmem %s1, 290
  %58 = vst.msk [vmem:[%s57] ss:$-24 sm:$0xc] %vm54, %v53
  %s59 = scalar_lea.vmem %s1, 2
  %60 = vst.msk [vmem:[%s59] ss:$72 sm:$0x30] %vm54, %v53
  %s61 = scalar_lea.vmem %s1, 482
  %62 = vst.msk [vmem:[%s61] ss:$-24 sm:$0xc0] %vm54, %v53
  %v63 = vld.sshfl [vmem:[%s0] sm:$0xff pattern:$0x56741230]
  %64 = vrot.lane.b32.xlu0 %v63, 125
  %v65 = vpop.permute.xlu0 %64
  %vm66 = vcmask 7168
  %s67 = scalar_lea.vmem %s1, 3
  %68 = vst.msk [vmem:[%s67] ss:$72 sm:$0x3] %vm66, %v65
  %s69 = scalar_lea.vmem %s1, 99
  %70 = vst.msk [vmem:[%s69] ss:$-24 sm:$0xc] %vm66, %v65
  %s71 = scalar_lea.vmem %s1, 4294967107
  %72 = vst.msk [vmem:[%s71] ss:$72 sm:$0x30] %vm66, %v65
  %s73 = scalar_lea.vmem %s1, 291
  %74 = vst.msk [vmem:[%s73] ss:$-24 sm:$0xc0] %vm66, %v65
  %s75 = scalar_lea.vmem %s0, 8
  %v76 = vld.sshfl [vmem:[%s75] sm:$0xff pattern:$0x56741230]
  %77 = vrot.lane.b32.xlu0 %v76, 125
  %v78 = vpop.permute.xlu0 %77
  %vm79 = vcmask 7168
  %s80 = scalar_lea.vmem %s1, 195
  %81 = vst.msk [vmem:[%s80] ss:$72 sm:$0x3] %vm79, %v78
  %s82 = scalar_lea.vmem %s1, 291
  %83 = vst.msk [vmem:[%s82] ss:$-24 sm:$0xc] %vm79, %v78
  %s84 = scalar_lea.vmem %s1, 3
  %85 = vst.msk [vmem:[%s84] ss:$72 sm:$0x30] %vm79, %v78
  %s86 = scalar_lea.vmem %s1, 483
  %87 = vst.msk [vmem:[%s86] ss:$-24 sm:$0xc0] %vm79, %v78
  %v88 = vld.sshfl [vmem:[%s0] sm:$0xff pattern:$0x56741230]
  %89 = vrot.lane.b32.xlu0 %v88, 124
  %v90 = vpop.permute.xlu0 %89
  %vm91 = vcmask 7168
  %s92 = scalar_lea.vmem %s1, 4
  %93 = vst.msk [vmem:[%s92] ss:$72 sm:$0x3] %vm91, %v90
  %s94 = scalar_lea.vmem %s1, 100
  %95 = vst.msk [vmem:[%s94] ss:$-24 sm:$0xc] %vm91, %v90
  %s96 = scalar_lea.vmem %s1, 4294967108
  %97 = vst.msk [vmem:[%s96] ss:$72 sm:$0x30] %vm91, %v90
  %s98 = scalar_lea.vmem %s1, 292
  %99 = vst.msk [vmem:[%s98] ss:$-24 sm:$0xc0] %vm91, %v90
  %s100 = scalar_lea.vmem %s0, 8
  %v101 = vld.sshfl [vmem:[%s100] sm:$0xff pattern:$0x56741230]
  %102 = vrot.lane.b32.xlu0 %v101, 124
  %v103 = vpop.permute.xlu0 %102
  %vm104 = vcmask 7168
  %s105 = scalar_lea.vmem %s1, 196
  %106 = vst.msk [vmem:[%s105] ss:$72 sm:$0x3] %vm104, %v103
  %s107 = scalar_lea.vmem %s1, 292
  %108 = vst.msk [vmem:[%s107] ss:$-24 sm:$0xc] %vm104, %v103
  %s109 = scalar_lea.vmem %s1, 4
  %110 = vst.msk [vmem:[%s109] ss:$72 sm:$0x30] %vm104, %v103
  %s111 = scalar_lea.vmem %s1, 484
  %112 = vst.msk [vmem:[%s111] ss:$-24 sm:$0xc0] %vm104, %v103
  %v113 = vld.sshfl [vmem:[%s0] sm:$0xff pattern:$0x56741230]
  %114 = vrot.lane.b32.xlu0 %v113, 123
  %v115 = vpop.permute.xlu0 %114
  %vm116 = vcmask 7168
  %s117 = scalar_lea.vmem %s1, 5
  %118 = vst.msk [vmem:[%s117] ss:$72 sm:$0x3] %vm116, %v115
  %s119 = scalar_lea.vmem %s1, 101
  %120 = vst.msk [vmem:[%s119] ss:$-24 sm:$0xc] %vm116, %v115
  %s121 = scalar_lea.vmem %s1, 4294967109
  %122 = vst.msk [vmem:[%s121] ss:$72 sm:$0x30] %vm116, %v115
  %s123 = scalar_lea.vmem %s1, 293
  %124 = vst.msk [vmem:[%s123] ss:$-24 sm:$0xc0] %vm116, %v115
  %s125 = scalar_lea.vmem %s0, 8
  %v126 = vld.sshfl [vmem:[%s125] sm:$0xff pattern:$0x56741230]
  %127 = vrot.lane.b32.xlu0 %v126, 123
  %v128 = vpop.permute.xlu0 %127
  %vm129 = vcmask 7168
  %s130 = scalar_lea.vmem %s1, 197
  %131 = vst.msk [vmem:[%s130] ss:$72 sm:$0x3] %vm129, %v128
  %s132 = scalar_lea.vmem %s1, 293
  %133 = vst.msk [vmem:[%s132] ss:$-24 sm:$0xc] %vm129, %v128
  %s134 = scalar_lea.vmem %s1, 5
  %135 = vst.msk [vmem:[%s134] ss:$72 sm:$0x30] %vm129, %v128
  %s136 = scalar_lea.vmem %s1, 485
  %137 = vst.msk [vmem:[%s136] ss:$-24 sm:$0xc0] %vm129, %v128
  %v138 = vld.sshfl [vmem:[%s0] sm:$0xff pattern:$0x56741230]
  %139 = vrot.lane.b32.xlu0 %v138, 122
  %v140 = vpop.permute.xlu0 %139
  %vm141 = vcmask 7168
  %s142 = scalar_lea.vmem %s1, 6
  %143 = vst.msk [vmem:[%s142] ss:$72 sm:$0x3] %vm141, %v140
  %s144 = scalar_lea.vmem %s1, 102
  %145 = vst.msk [vmem:[%s144] ss:$-24 sm:$0xc] %vm141, %v140
  %s146 = scalar_lea.vmem %s1, 4294967110
  %147 = vst.msk [vmem:[%s146] ss:$72 sm:$0x30] %vm141, %v140
  %s148 = scalar_lea.vmem %s1, 294
  %149 = vst.msk [vmem:[%s148] ss:$-24 sm:$0xc0] %vm141, %v140
  %s150 = scalar_lea.vmem %s0, 8
  %v151 = vld.sshfl [vmem:[%s150] sm:$0xff pattern:$0x56741230]
  %152 = vrot.lane.b32.xlu0 %v151, 122
  %v153 = vpop.permute.xlu0 %152
  %vm154 = vcmask 7168
  %s155 = scalar_lea.vmem %s1, 198
  %156 = vst.msk [vmem:[%s155] ss:$72 sm:$0x3] %vm154, %v153
  %s157 = scalar_lea.vmem %s1, 294
  %158 = vst.msk [vmem:[%s157] ss:$-24 sm:$0xc] %vm154, %v153
  %s159 = scalar_lea.vmem %s1, 6
  %160 = vst.msk [vmem:[%s159] ss:$72 sm:$0x30] %vm154, %v153
  %s161 = scalar_lea.vmem %s1, 486
  %162 = vst.msk [vmem:[%s161] ss:$-24 sm:$0xc0] %vm154, %v153
  %v163 = vld.sshfl [vmem:[%s0] sm:$0xff pattern:$0x56741230]
  %164 = vrot.lane.b32.xlu0 %v163, 121
  %v165 = vpop.permute.xlu0 %164
  %vm166 = vcmask 7168
  %s167 = scalar_lea.vmem %s1, 7
  %168 = vst.msk [vmem:[%s167] ss:$72 sm:$0x3] %vm166, %v165
  %s169 = scalar_lea.vmem %s1, 103
  %170 = vst.msk [vmem:[%s169] ss:$-24 sm:$0xc] %vm166, %v165
  %s171 = scalar_lea.vmem %s1, 4294967111
  %172 = vst.msk [vmem:[%s171] ss:$72 sm:$0x30] %vm166, %v165
  %s173 = scalar_lea.vmem %s1, 295
  %174 = vst.msk [vmem:[%s173] ss:$-24 sm:$0xc0] %vm166, %v165
  %s175 = scalar_lea.vmem %s0, 8
  %v176 = vld.sshfl [vmem:[%s175] sm:$0xff pattern:$0x56741230]
  %177 = vrot.lane.b32.xlu0 %v176, 121
  %v178 = vpop.permute.xlu0 %177
  %vm179 = vcmask 7168
  %s180 = scalar_lea.vmem %s1, 199
  %181 = vst.msk [vmem:[%s180] ss:$72 sm:$0x3] %vm179, %v178
  %s182 = scalar_lea.vmem %s1, 295
  %183 = vst.msk [vmem:[%s182] ss:$-24 sm:$0xc] %vm179, %v178
  %s184 = scalar_lea.vmem %s1, 7
  %185 = vst.msk [vmem:[%s184] ss:$72 sm:$0x30] %vm179, %v178
  %s186 = scalar_lea.vmem %s1, 487
  %187 = vst.msk [vmem:[%s186] ss:$-24 sm:$0xc0] %vm179, %v178
  %v188 = vld.sshfl [vmem:[%s0] sm:$0xff pattern:$0x67452301]
  %189 = vrot.lane.b32.xlu0 %v188, 120
  %v190 = vpop.permute.xlu0 %189
  %vm191 = vcmask 7168
  %s192 = scalar_lea.vmem %s1, 32
  %193 = vst.msk [vmem:[%s192] ss:$-24 sm:$0x3] %vm191, %v190
  %s194 = scalar_lea.vmem %s1, 128
  %195 = vst.msk [vmem:[%s194] ss:$-24 sm:$0xc] %vm191, %v190
  %s196 = scalar_lea.vmem %s1, 224
  %197 = vst.msk [vmem:[%s196] ss:$-24 sm:$0x30] %vm191, %v190
  %s198 = scalar_lea.vmem %s1, 320
  %199 = vst.msk [vmem:[%s198] ss:$-24 sm:$0xc0] %vm191, %v190
  %s200 = scalar_lea.vmem %s0, 8
  %v201 = vld.sshfl [vmem:[%s200] sm:$0xff pattern:$0x67452301]
  %202 = vrot.lane.b32.xlu0 %v201, 120
  %v203 = vpop.permute.xlu0 %202
  %vm204 = vcmask 7168
  %s205 = scalar_lea.vmem %s1, 224
  %206 = vst.msk [vmem:[%s205] ss:$-24 sm:$0x3] %vm204, %v203
  %s207 = scalar_lea.vmem %s1, 320
  %208 = vst.msk [vmem:[%s207] ss:$-24 sm:$0xc] %vm204, %v203
  %s209 = scalar_lea.vmem %s1, 416
  %210 = vst.msk [vmem:[%s209] ss:$-24 sm:$0x30] %vm204, %v203
  %s211 = scalar_lea.vmem %s1, 512
  %212 = vst.msk [vmem:[%s211] ss:$-24 sm:$0xc0] %vm204, %v203
  %v213 = vld.sshfl [vmem:[%s0] sm:$0xff pattern:$0x67452301]
  %214 = vrot.lane.b32.xlu0 %v213, 119
  %v215 = vpop.permute.xlu0 %214
  %vm216 = vcmask 7168
  %s217 = scalar_lea.vmem %s1, 33
  %218 = vst.msk [vmem:[%s217] ss:$-24 sm:$0x3] %vm216, %v215
  %s219 = scalar_lea.vmem %s1, 129
  %220 = vst.msk [vmem:[%s219] ss:$-24 sm:$0xc] %vm216, %v215
  %s221 = scalar_lea.vmem %s1, 225
  %222 = vst.msk [vmem:[%s221] ss:$-24 sm:$0x30] %vm216, %v215
  %s223 = scalar_lea.vmem %s1, 321
  %224 = vst.msk [vmem:[%s223] ss:$-24 sm:$0xc0] %vm216, %v215
  %s225 = scalar_lea.vmem %s0, 8
  %v226 = vld.sshfl [vmem:[%s225] sm:$0xff pattern:$0x67452301]
  %227 = vrot.lane.b32.xlu0 %v226, 119
  %v228 = vpop.permute.xlu0 %227
  %vm229 = vcmask 7168
  %s230 = scalar_lea.vmem %s1, 225
  %231 = vst.msk [vmem:[%s230] ss:$-24 sm:$0x3] %vm229, %v228
  %s232 = scalar_lea.vmem %s1, 321
  %233 = vst.msk [vmem:[%s232] ss:$-24 sm:$0xc] %vm229, %v228
  %s234 = scalar_lea.vmem %s1, 417
  %235 = vst.msk [vmem:[%s234] ss:$-24 sm:$0x30] %vm229, %v228
  %s236 = scalar_lea.vmem %s1, 513
  %237 = vst.msk [vmem:[%s236] ss:$-24 sm:$0xc0] %vm229, %v228
  %v238 = vld.sshfl [vmem:[%s0] sm:$0xff pattern:$0x67452301]
  %239 = vrot.lane.b32.xlu0 %v238, 118
  %v240 = vpop.permute.xlu0 %239
  %vm241 = vcmask 7168
  %s242 = scalar_lea.vmem %s1, 34
  %243 = vst.msk [vmem:[%s242] ss:$-24 sm:$0x3] %vm241, %v240
  %s244 = scalar_lea.vmem %s1, 130
  %245 = vst.msk [vmem:[%s244] ss:$-24 sm:$0xc] %vm241, %v240
  %s246 = scalar_lea.vmem %s1, 226
  %247 = vst.msk [vmem:[%s246] ss:$-24 sm:$0x30] %vm241, %v240
  %s248 = scalar_lea.vmem %s1, 322
  %249 = vst.msk [vmem:[%s248] ss:$-24 sm:$0xc0] %vm241, %v240
  %s250 = scalar_lea.vmem %s0, 8
  %v251 = vld.sshfl [vmem:[%s250] sm:$0xff pattern:$0x67452301]
  %252 = vrot.lane.b32.xlu0 %v251, 118
  %v253 = vpop.permute.xlu0 %252
  %vm254 = vcmask 7168
  %s255 = scalar_lea.vmem %s1, 226
  %256 = vst.msk [vmem:[%s255] ss:$-24 sm:$0x3] %vm254, %v253
  %s257 = scalar_lea.vmem %s1, 322
  %258 = vst.msk [vmem:[%s257] ss:$-24 sm:$0xc] %vm254, %v253
  %s259 = scalar_lea.vmem %s1, 418
  %260 = vst.msk [vmem:[%s259] ss:$-24 sm:$0x30] %vm254, %v253
  %s261 = scalar_lea.vmem %s1, 514
  %262 = vst.msk [vmem:[%s261] ss:$-24 sm:$0xc0] %vm254, %v253
  %v263 = vld.sshfl [vmem:[%s0] sm:$0xff pattern:$0x67452301]
  %264 = vrot.lane.b32.xlu0 %v263, 117
  %v265 = vpop.permute.xlu0 %264
  %vm266 = vcmask 7168
  %s267 = scalar_lea.vmem %s1, 35
  %268 = vst.msk [vmem:[%s267] ss:$-24 sm:$0x3] %vm266, %v265
  %s269 = scalar_lea.vmem %s1, 131
  %270 = vst.msk [vmem:[%s269] ss:$-24 sm:$0xc] %vm266, %v265
  %s271 = scalar_lea.vmem %s1, 227
  %272 = vst.msk [vmem:[%s271] ss:$-24 sm:$0x30] %vm266, %v265
  %s273 = scalar_lea.vmem %s1, 323
  %274 = vst.msk [vmem:[%s273] ss:$-24 sm:$0xc0] %vm266, %v265
  %s275 = scalar_lea.vmem %s0, 8
  %v276 = vld.sshfl [vmem:[%s275] sm:$0xff pattern:$0x67452301]
  %277 = vrot.lane.b32.xlu0 %v276, 117
  %v278 = vpop.permute.xlu0 %277
  %vm279 = vcmask 7168
  %s280 = scalar_lea.vmem %s1, 227
  %281 = vst.msk [vmem:[%s280] ss:$-24 sm:$0x3] %vm279, %v278
  %s282 = scalar_lea.vmem %s1, 323
  %283 = vst.msk [vmem:[%s282] ss:$-24 sm:$0xc] %vm279, %v278
  %s284 = scalar_lea.vmem %s1, 419
  %285 = vst.msk [vmem:[%s284] ss:$-24 sm:$0x30] %vm279, %v278
  %s286 = scalar_lea.vmem %s1, 515
  %287 = vst.msk [vmem:[%s286] ss:$-24 sm:$0xc0] %vm279, %v278
  %v288 = vld.sshfl [vmem:[%s0] sm:$0xff pattern:$0x67452301]
  %289 = vrot.lane.b32.xlu0 %v288, 116
  %v290 = vpop.permute.xlu0 %289
  %vm291 = vcmask 7168
  %s292 = scalar_lea.vmem %s1, 36
  %293 = vst.msk [vmem:[%s292] ss:$-24 sm:$0x3] %vm291, %v290
  %s294 = scalar_lea.vmem %s1, 132
  %295 = vst.msk [vmem:[%s294] ss:$-24 sm:$0xc] %vm291, %v290
  %s296 = scalar_lea.vmem %s1, 228
  %297 = vst.msk [vmem:[%s296] ss:$-24 sm:$0x30] %vm291, %v290
  %s298 = scalar_lea.vmem %s1, 324
  %299 = vst.msk [vmem:[%s298] ss:$-24 sm:$0xc0] %vm291, %v290
  %s300 = scalar_lea.vmem %s0, 8
  %v301 = vld.sshfl [vmem:[%s300] sm:$0xff pattern:$0x67452301]
  %302 = vrot.lane.b32.xlu0 %v301, 116
  %v303 = vpop.permute.xlu0 %302
  %vm304 = vcmask 7168
  %s305 = scalar_lea.vmem %s1, 228
  %306 = vst.msk [vmem:[%s305] ss:$-24 sm:$0x3] %vm304, %v303
  %s307 = scalar_lea.vmem %s1, 324
  %308 = vst.msk [vmem:[%s307] ss:$-24 sm:$0xc] %vm304, %v303
  %s309 = scalar_lea.vmem %s1, 420
  %310 = vst.msk [vmem:[%s309] ss:$-24 sm:$0x30] %vm304, %v303
  %s311 = scalar_lea.vmem %s1, 516
  %312 = vst.msk [vmem:[%s311] ss:$-24 sm:$0xc0] %vm304, %v303
  %v313 = vld.sshfl [vmem:[%s0] sm:$0xff pattern:$0x67452301]
  %314 = vrot.lane.b32.xlu0 %v313, 115
  %v315 = vpop.permute.xlu0 %314
  %vm316 = vcmask 7168
  %s317 = scalar_lea.vmem %s1, 37
  %318 = vst.msk [vmem:[%s317] ss:$-24 sm:$0x3] %vm316, %v315
  %s319 = scalar_lea.vmem %s1, 133
  %320 = vst.msk [vmem:[%s319] ss:$-24 sm:$0xc] %vm316, %v315
  %s321 = scalar_lea.vmem %s1, 229
  %322 = vst.msk [vmem:[%s321] ss:$-24 sm:$0x30] %vm316, %v315
  %s323 = scalar_lea.vmem %s1, 325
  %324 = vst.msk [vmem:[%s323] ss:$-24 sm:$0xc0] %vm316, %v315
  %s325 = scalar_lea.vmem %s0, 8
  %v326 = vld.sshfl [vmem:[%s325] sm:$0xff pattern:$0x67452301]
  %327 = vrot.lane.b32.xlu0 %v326, 115
  %v328 = vpop.permute.xlu0 %327
  %vm329 = vcmask 7168
  %s330 = scalar_lea.vmem %s1, 229
  %331 = vst.msk [vmem:[%s330] ss:$-24 sm:$0x3] %vm329, %v328
  %s332 = scalar_lea.vmem %s1, 325
  %333 = vst.msk [vmem:[%s332] ss:$-24 sm:$0xc] %vm329, %v328
  %s334 = scalar_lea.vmem %s1, 421
  %335 = vst.msk [vmem:[%s334] ss:$-24 sm:$0x30] %vm329, %v328
  %s336 = scalar_lea.vmem %s1, 517
  %337 = vst.msk [vmem:[%s336] ss:$-24 sm:$0xc0] %vm329, %v328
  %v338 = vld.sshfl [vmem:[%s0] sm:$0xff pattern:$0x67452301]
  %339 = vrot.lane.b32.xlu0 %v338, 114
  %v340 = vpop.permute.xlu0 %339
  %vm341 = vcmask 7168
  %s342 = scalar_lea.vmem %s1, 38
  %343 = vst.msk [vmem:[%s342] ss:$-24 sm:$0x3] %vm341, %v340
  %s344 = scalar_lea.vmem %s1, 134
  %345 = vst.msk [vmem:[%s344] ss:$-24 sm:$0xc] %vm341, %v340
  %s346 = scalar_lea.vmem %s1, 230
  %347 = vst.msk [vmem:[%s346] ss:$-24 sm:$0x30] %vm341, %v340
  %s348 = scalar_lea.vmem %s1, 326
  %349 = vst.msk [vmem:[%s348] ss:$-24 sm:$0xc0] %vm341, %v340
  %s350 = scalar_lea.vmem %s0, 8
  %v351 = vld.sshfl [vmem:[%s350] sm:$0xff pattern:$0x67452301]
  %352 = vrot.lane.b32.xlu0 %v351, 114
  %v353 = vpop.permute.xlu0 %352
  %vm354 = vcmask 7168
  %s355 = scalar_lea.vmem %s1, 230
  %356 = vst.msk [vmem:[%s355] ss:$-24 sm:$0x3] %vm354, %v353
  %s357 = scalar_lea.vmem %s1, 326
  %358 = vst.msk [vmem:[%s357] ss:$-24 sm:$0xc] %vm354, %v353
  %s359 = scalar_lea.vmem %s1, 422
  %360 = vst.msk [vmem:[%s359] ss:$-24 sm:$0x30] %vm354, %v353
  %s361 = scalar_lea.vmem %s1, 518
  %362 = vst.msk [vmem:[%s361] ss:$-24 sm:$0xc0] %vm354, %v353
  %v363 = vld.sshfl [vmem:[%s0] sm:$0xff pattern:$0x67452301]
  %364 = vrot.lane.b32.xlu0 %v363, 113
  %v365 = vpop.permute.xlu0 %364
  %vm366 = vcmask 7168
  %s367 = scalar_lea.vmem %s1, 39
  %368 = vst.msk [vmem:[%s367] ss:$-24 sm:$0x3] %vm366, %v365
  %s369 = scalar_lea.vmem %s1, 135
  %370 = vst.msk [vmem:[%s369] ss:$-24 sm:$0xc] %vm366, %v365
  %s371 = scalar_lea.vmem %s1, 231
  %372 = vst.msk [vmem:[%s371] ss:$-24 sm:$0x30] %vm366, %v365
  %s373 = scalar_lea.vmem %s1, 327
  %374 = vst.msk [vmem:[%s373] ss:$-24 sm:$0xc0] %vm366, %v365
  %s375 = scalar_lea.vmem %s0, 8
  %v376 = vld.sshfl [vmem:[%s375] sm:$0xff pattern:$0x67452301]
  %377 = vrot.lane.b32.xlu0 %v376, 113
  %v378 = vpop.permute.xlu0 %377
  %vm379 = vcmask 7168
  %s380 = scalar_lea.vmem %s1, 231
  %381 = vst.msk [vmem:[%s380] ss:$-24 sm:$0x3] %vm379, %v378
  %s382 = scalar_lea.vmem %s1, 327
  %383 = vst.msk [vmem:[%s382] ss:$-24 sm:$0xc] %vm379, %v378
  %s384 = scalar_lea.vmem %s1, 423
  %385 = vst.msk [vmem:[%s384] ss:$-24 sm:$0x30] %vm379, %v378
  %s386 = scalar_lea.vmem %s1, 519
  %387 = vst.msk [vmem:[%s386] ss:$-24 sm:$0xc0] %vm379, %v378
  %v388 = vld.sshfl [vmem:[%s0] sm:$0xff pattern:$0x74563012]
  %389 = vrot.lane.b32.xlu0 %v388, 112
  %v390 = vpop.permute.xlu0 %389
  %vm391 = vcmask 7168
  %s392 = scalar_lea.vmem %s1, 64
  %393 = vst.msk [vmem:[%s392] ss:$-24 sm:$0x7] %vm391, %v390
  %s394 = scalar_lea.vmem %s1, 4294967168
  %395 = vst.msk [vmem:[%s394] ss:$72 sm:$0x18] %vm391, %v390
  %s396 = scalar_lea.vmem %s1, 256
  %397 = vst.msk [vmem:[%s396] ss:$-24 sm:$0x60] %vm391, %v390
  %s398 = scalar_lea.vmem %s1, 177
  %399 = vst.msk [vmem:[%s398] sm:$0x80] %vm391, %v390
  %s400 = scalar_lea.vmem %s0, 8
  %v401 = vld.sshfl [vmem:[%s400] sm:$0xff pattern:$0x74563012]
  %402 = vrot.lane.b32.xlu0 %v401, 112
  %v403 = vpop.permute.xlu0 %402
  %vm404 = vcmask 7168
  %s405 = scalar_lea.vmem %s1, 256
  %406 = vst.msk [vmem:[%s405] ss:$-24 sm:$0x7] %vm404, %v403
  %s407 = scalar_lea.vmem %s1, 64
  %408 = vst.msk [vmem:[%s407] ss:$72 sm:$0x18] %vm404, %v403
  %s409 = scalar_lea.vmem %s1, 448
  %410 = vst.msk [vmem:[%s409] ss:$-24 sm:$0x60] %vm404, %v403
  %s411 = scalar_lea.vmem %s1, 369
  %412 = vst.msk [vmem:[%s411] sm:$0x80] %vm404, %v403
  %v413 = vld.sshfl [vmem:[%s0] sm:$0xff pattern:$0x74563012]
  %414 = vrot.lane.b32.xlu0 %v413, 111
  %v415 = vpop.permute.xlu0 %414
  %vm416 = vcmask 7168
  %s417 = scalar_lea.vmem %s1, 65
  %418 = vst.msk [vmem:[%s417] ss:$-24 sm:$0x7] %vm416, %v415
  %s419 = scalar_lea.vmem %s1, 4294967169
  %420 = vst.msk [vmem:[%s419] ss:$72 sm:$0x18] %vm416, %v415
  %s421 = scalar_lea.vmem %s1, 257
  %422 = vst.msk [vmem:[%s421] ss:$-24 sm:$0x60] %vm416, %v415
  %s423 = scalar_lea.vmem %s1, 178
  %424 = vst.msk [vmem:[%s423] sm:$0x80] %vm416, %v415
  %s425 = scalar_lea.vmem %s0, 8
  %v426 = vld.sshfl [vmem:[%s425] sm:$0xff pattern:$0x74563012]
  %427 = vrot.lane.b32.xlu0 %v426, 111
  %v428 = vpop.permute.xlu0 %427
  %vm429 = vcmask 7168
  %s430 = scalar_lea.vmem %s1, 257
  %431 = vst.msk [vmem:[%s430] ss:$-24 sm:$0x7] %vm429, %v428
  %s432 = scalar_lea.vmem %s1, 65
  %433 = vst.msk [vmem:[%s432] ss:$72 sm:$0x18] %vm429, %v428
  %s434 = scalar_lea.vmem %s1, 449
  %435 = vst.msk [vmem:[%s434] ss:$-24 sm:$0x60] %vm429, %v428
  %s436 = scalar_lea.vmem %s1, 370
  %437 = vst.msk [vmem:[%s436] sm:$0x80] %vm429, %v428
  %v438 = vld.sshfl [vmem:[%s0] sm:$0xff pattern:$0x74563012]
  %439 = vrot.lane.b32.xlu0 %v438, 110
  %v440 = vpop.permute.xlu0 %439
  %vm441 = vcmask 7168
  %s442 = scalar_lea.vmem %s1, 66
  %443 = vst.msk [vmem:[%s442] ss:$-24 sm:$0x7] %vm441, %v440
  %s444 = scalar_lea.vmem %s1, 4294967170
  %445 = vst.msk [vmem:[%s444] ss:$72 sm:$0x18] %vm441, %v440
  %s446 = scalar_lea.vmem %s1, 258
  %447 = vst.msk [vmem:[%s446] ss:$-24 sm:$0x60] %vm441, %v440
  %s448 = scalar_lea.vmem %s1, 179
  %449 = vst.msk [vmem:[%s448] sm:$0x80] %vm441, %v440
  %s450 = scalar_lea.vmem %s0, 8
  %v451 = vld.sshfl [vmem:[%s450] sm:$0xff pattern:$0x74563012]
  %452 = vrot.lane.b32.xlu0 %v451, 110
  %v453 = vpop.permute.xlu0 %452
  %vm454 = vcmask 7168
  %s455 = scalar_lea.vmem %s1, 258
  %456 = vst.msk [vmem:[%s455] ss:$-24 sm:$0x7] %vm454, %v453
  %s457 = scalar_lea.vmem %s1, 66
  %458 = vst.msk [vmem:[%s457] ss:$72 sm:$0x18] %vm454, %v453
  %s459 = scalar_lea.vmem %s1, 450
  %460 = vst.msk [vmem:[%s459] ss:$-24 sm:$0x60] %vm454, %v453
  %s461 = scalar_lea.vmem %s1, 371
  %462 = vst.msk [vmem:[%s461] sm:$0x80] %vm454, %v453
  %v463 = vld.sshfl [vmem:[%s0] sm:$0xff pattern:$0x74563012]
  %464 = vrot.lane.b32.xlu0 %v463, 109
  %v465 = vpop.permute.xlu0 %464
  %vm466 = vcmask 7168
  %s467 = scalar_lea.vmem %s1, 67
  %468 = vst.msk [vmem:[%s467] ss:$-24 sm:$0x7] %vm466, %v465
  %s469 = scalar_lea.vmem %s1, 4294967171
  %470 = vst.msk [vmem:[%s469] ss:$72 sm:$0x18] %vm466, %v465
  %s471 = scalar_lea.vmem %s1, 259
  %472 = vst.msk [vmem:[%s471] ss:$-24 sm:$0x60] %vm466, %v465
  %s473 = scalar_lea.vmem %s1, 180
  %474 = vst.msk [vmem:[%s473] sm:$0x80] %vm466, %v465
  %s475 = scalar_lea.vmem %s0, 8
  %v476 = vld.sshfl [vmem:[%s475] sm:$0xff pattern:$0x74563012]
  %477 = vrot.lane.b32.xlu0 %v476, 109
  %v478 = vpop.permute.xlu0 %477
  %vm479 = vcmask 7168
  %s480 = scalar_lea.vmem %s1, 259
  %481 = vst.msk [vmem:[%s480] ss:$-24 sm:$0x7] %vm479, %v478
  %s482 = scalar_lea.vmem %s1, 67
  %483 = vst.msk [vmem:[%s482] ss:$72 sm:$0x18] %vm479, %v478
  %s484 = scalar_lea.vmem %s1, 451
  %485 = vst.msk [vmem:[%s484] ss:$-24 sm:$0x60] %vm479, %v478
  %s486 = scalar_lea.vmem %s1, 372
  %487 = vst.msk [vmem:[%s486] sm:$0x80] %vm479, %v478
  %v488 = vld.sshfl [vmem:[%s0] sm:$0xff pattern:$0x74563012]
  %489 = vrot.lane.b32.xlu0 %v488, 108
  %v490 = vpop.permute.xlu0 %489
  %vm491 = vcmask 7168
  %s492 = scalar_lea.vmem %s1, 68
  %493 = vst.msk [vmem:[%s492] ss:$-24 sm:$0x7] %vm491, %v490
  %s494 = scalar_lea.vmem %s1, 4294967172
  %495 = vst.msk [vmem:[%s494] ss:$72 sm:$0x18] %vm491, %v490
  %s496 = scalar_lea.vmem %s1, 260
  %497 = vst.msk [vmem:[%s496] ss:$-24 sm:$0x60] %vm491, %v490
  %s498 = scalar_lea.vmem %s1, 181
  %499 = vst.msk [vmem:[%s498] sm:$0x80] %vm491, %v490
  %s500 = scalar_lea.vmem %s0, 8
  %v501 = vld.sshfl [vmem:[%s500] sm:$0xff pattern:$0x74563012]
  %502 = vrot.lane.b32.xlu0 %v501, 108
  %v503 = vpop.permute.xlu0 %502
  %vm504 = vcmask 7168
  %s505 = scalar_lea.vmem %s1, 260
  %506 = vst.msk [vmem:[%s505] ss:$-24 sm:$0x7] %vm504, %v503
  %s507 = scalar_lea.vmem %s1, 68
  %508 = vst.msk [vmem:[%s507] ss:$72 sm:$0x18] %vm504, %v503
  %s509 = scalar_lea.vmem %s1, 452
  %510 = vst.msk [vmem:[%s509] ss:$-24 sm:$0x60] %vm504, %v503
  %s511 = scalar_lea.vmem %s1, 373
  %512 = vst.msk [vmem:[%s511] sm:$0x80] %vm504, %v503
  %v513 = vld.sshfl [vmem:[%s0] sm:$0xff pattern:$0x74563012]
  %514 = vrot.lane.b32.xlu0 %v513, 107
  %v515 = vpop.permute.xlu0 %514
  %vm516 = vcmask 7168
  %s517 = scalar_lea.vmem %s1, 69
  %518 = vst.msk [vmem:[%s517] ss:$-24 sm:$0x7] %vm516, %v515
  %s519 = scalar_lea.vmem %s1, 4294967173
  %520 = vst.msk [vmem:[%s519] ss:$72 sm:$0x18] %vm516, %v515
  %s521 = scalar_lea.vmem %s1, 261
  %522 = vst.msk [vmem:[%s521] ss:$-24 sm:$0x60] %vm516, %v515
  %s523 = scalar_lea.vmem %s1, 182
  %524 = vst.msk [vmem:[%s523] sm:$0x80] %vm516, %v515
  %s525 = scalar_lea.vmem %s0, 8
  %v526 = vld.sshfl [vmem:[%s525] sm:$0xff pattern:$0x74563012]
  %527 = vrot.lane.b32.xlu0 %v526, 107
  %v528 = vpop.permute.xlu0 %527
  %vm529 = vcmask 7168
  %s530 = scalar_lea.vmem %s1, 261
  %531 = vst.msk [vmem:[%s530] ss:$-24 sm:$0x7] %vm529, %v528
  %s532 = scalar_lea.vmem %s1, 69
  %533 = vst.msk [vmem:[%s532] ss:$72 sm:$0x18] %vm529, %v528
  %s534 = scalar_lea.vmem %s1, 453
  %535 = vst.msk [vmem:[%s534] ss:$-24 sm:$0x60] %vm529, %v528
  %s536 = scalar_lea.vmem %s1, 374
  %537 = vst.msk [vmem:[%s536] sm:$0x80] %vm529, %v528
  %v538 = vld.sshfl [vmem:[%s0] sm:$0xff pattern:$0x74563012]
  %539 = vrot.lane.b32.xlu0 %v538, 106
  %v540 = vpop.permute.xlu0 %539
  %vm541 = vcmask 7168
  %s542 = scalar_lea.vmem %s1, 70
  %543 = vst.msk [vmem:[%s542] ss:$-24 sm:$0x7] %vm541, %v540
  %s544 = scalar_lea.vmem %s1, 4294967174
  %545 = vst.msk [vmem:[%s544] ss:$72 sm:$0x18] %vm541, %v540
  %s546 = scalar_lea.vmem %s1, 262
  %547 = vst.msk [vmem:[%s546] ss:$-24 sm:$0x60] %vm541, %v540
  %s548 = scalar_lea.vmem %s1, 183
  %549 = vst.msk [vmem:[%s548] sm:$0x80] %vm541, %v540
  %s550 = scalar_lea.vmem %s0, 8
  %v551 = vld.sshfl [vmem:[%s550] sm:$0xff pattern:$0x74563012]
  %552 = vrot.lane.b32.xlu0 %v551, 106
  %v553 = vpop.permute.xlu0 %552
  %vm554 = vcmask 7168
  %s555 = scalar_lea.vmem %s1, 262
  %556 = vst.msk [vmem:[%s555] ss:$-24 sm:$0x7] %vm554, %v553
  %s557 = scalar_lea.vmem %s1, 70
  %558 = vst.msk [vmem:[%s557] ss:$72 sm:$0x18] %vm554, %v553
  %s559 = scalar_lea.vmem %s1, 454
  %560 = vst.msk [vmem:[%s559] ss:$-24 sm:$0x60] %vm554, %v553
  %s561 = scalar_lea.vmem %s1, 375
  %562 = vst.msk [vmem:[%s561] sm:$0x80] %vm554, %v553
  %v563 = vld.sshfl [vmem:[%s0] sm:$0xff pattern:$0x74563012]
  %564 = vrot.lane.b32.xlu0 %v563, 105
  %v565 = vpop.permute.xlu0 %564
  %vm566 = vcmask 7168
  %s567 = scalar_lea.vmem %s1, 71
  %568 = vst.msk [vmem:[%s567] ss:$-24 sm:$0x7] %vm566, %v565
  %s569 = scalar_lea.vmem %s1, 4294967175
  %570 = vst.msk [vmem:[%s569] ss:$72 sm:$0x18] %vm566, %v565
  %s571 = scalar_lea.vmem %s1, 263
  %572 = vst.msk [vmem:[%s571] ss:$-24 sm:$0x60] %vm566, %v565
  %s573 = scalar_lea.vmem %s1, 184
  %574 = vst.msk [vmem:[%s573] sm:$0x80] %vm566, %v565
  %s575 = scalar_lea.vmem %s0, 8
  %v576 = vld.sshfl [vmem:[%s575] sm:$0xff pattern:$0x74563012]
  %577 = vrot.lane.b32.xlu0 %v576, 105
  %v578 = vpop.permute.xlu0 %577
  %vm579 = vcmask 7168
  %s580 = scalar_lea.vmem %s1, 263
  %581 = vst.msk [vmem:[%s580] ss:$-24 sm:$0x7] %vm579, %v578
  %s582 = scalar_lea.vmem %s1, 71
  %583 = vst.msk [vmem:[%s582] ss:$72 sm:$0x18] %vm579, %v578
  %s584 = scalar_lea.vmem %s1, 455
  %585 = vst.msk [vmem:[%s584] ss:$-24 sm:$0x60] %vm579, %v578
  %s586 = scalar_lea.vmem %s1, 376
  %587 = vst.msk [vmem:[%s586] sm:$0x80] %vm579, %v578

// kernel: dmfunit_forward.1
$region0: #{dmfunit_forward.1}
  #allocation0 [shape = 'u32[]', space=smem, size = 0x4, offset = 0x4, fixed_abs, tag = 'smem constant byte address 0x4 - core index']
  #allocation1 [shape = 'u32[72,128]{1,0:T(1,128)}', space=vmem, size = 0x9000, scoped, tag = 'internal scratch']
  #allocation2 [shape = 'f32[496,128]{1,0:T(8,128)}', space=vmem, size = 0x3e000, scoped, tag = 'scratch operand']
  %s0 = inlined_call_operand.vmem [shape: f32[2,384,8], index: 0, kind: input, shape index: {}]
  %s1 = inlined_call_operand.vmem [shape: bf16[8,256], index: 1, kind: input, shape index: {}]
  %s2 = inlined_call_operand.vmem [shape: bf16[128,128], index: 2, kind: input, shape index: {}]
  %s3 = inlined_call_operand.vmem [shape: bf16[9,128,128], index: 3, kind: input, shape index: {}]
  %s4 = inlined_call_operand.vmem [shape: bf16[9,128,128], index: 4, kind: input, shape index: {}]
  %s5 = inlined_call_operand.vmem [shape: bf16[9,128,128], index: 5, kind: input, shape index: {}]
  %s6 = inlined_call_operand.vmem [shape: f32[384,1], index: 6, kind: input, shape index: {}]
  %s7 = inlined_call_operand.vmem [shape: f32[2,384,128], index: 7, kind: output, shape index: {}]
  %s8 = sld [smem:[#allocation0]]
  $region61: #{dmfunit_forward.1} parent=0
    _
  %s10 = ssub.s32 1, %s8
  %s11 = scalar_select 0, %s10, %s8
  loop: start=0, step=1, limit=4
  $region2: #{dmfunit_forward.1} parent=0 // loop_pre_header
    _
  $region3: #{dmfunit_forward.1} parent=0 // loop_header
    %s13 = sphi 0, %s17
    %p14 = scmp.ge.s32.totalorder %s13, 4
    %s23 = sphi 0, %s25
    %s26 = sphi 0, %s23
    %s27 = sphi 0, %s26
    %s43 = sphi 0, %s27
    %s47 = sphi 0, %s47
    %s49 = sphi 0, %s47
    %s50 = sphi 0, %s49
    %s64 = sphi 0, %s50
    %s68 = sphi 0, %s68
    %s70 = sphi 0, %s68
    %s71 = sphi 0, %s70
    %s85 = sphi 0, %s71
    %s89 = sphi 0, %s89
    %s91 = sphi 0, %s89
    %s92 = sphi 0, %s91
    %s106 = sphi 0, %s92
    %s110 = sphi 0, %s110
    %s112 = sphi 0, %s110
    %s113 = sphi 0, %s112
    %s127 = sphi 0, %s113
    %s131 = sphi 0, %s131
    %s133 = sphi 0, %s131
    %s134 = sphi 0, %s133
    %s148 = sphi 0, %s134
    %s152 = sphi 0, %s152
    %s154 = sphi 0, %s152
    %s155 = sphi 0, %s154
    %s169 = sphi 0, %s155
    %s175 = sphi 0, %s177
    %s178 = sphi 0, %s175
    %s179 = sphi 0, %s178
    %s195 = sphi 0, %s179
  $region4: #{dmfunit_forward.1} parent=0 // loop_header_branch
    %16 = sbr.rel (%p14) target = $region8
  $region5: #{dmfunit_forward.1} parent=0 // loop_body
    %s18 = ssub.s32 %s13, 1
    %s19 = ssub.s32 %s13, 2
    %s20 = sadd.s32 %s13, 1
    %s21 = ssub.s32 %s13, %s20
    %p22 = scmp.eq.s32.totalorder %s21, 0
    %s24 = sadd.s32 %s23, 1
    %s25 = scalar_select %p22, %s23, %s24
    %p28 = pneg %p22
    %p29 = scmp.eq.s32.totalorder %s13, 1
    %p30 = por %p28, %p29
    %p31 = scmp.ne.s32.totalorder %s23, %s26
    %p32 = scmp.eq.s32.totalorder %s13, 0
    %p33 = por %p31, %p32
    %p34 = scmp.ne.s32.totalorder %s23, %s26
    %p35 = scmp.eq.s32.totalorder %s18, 1
    %p36 = por %p34, %p35
    %p37 = scmp.ne.s32.totalorder %s26, %s27
    %p38 = scmp.eq.s32.totalorder %s18, 0
    %p39 = por %p37, %p38
    %p40 = scmp.ne.s32.totalorder %s26, %s27
    %p41 = scmp.eq.s32.totalorder %s19, 1
    %p42 = por %p40, %p41
    %p44 = scmp.ne.s32.totalorder %s27, %s43
    %p45 = scmp.eq.s32.totalorder %s19, 0
    %p46 = por %p44, %p45
    %s48 = sadd.s32 %s47, 1
    %p51 = scmp.eq.s32.totalorder %s13, 1
    %p52 = scmp.ne.s32.totalorder %s47, %s49
    %p53 = scmp.eq.s32.totalorder %s13, 0
    %p54 = por %p52, %p53
    %p55 = scmp.ne.s32.totalorder %s47, %s49
    %p56 = scmp.eq.s32.totalorder %s18, 1
    %p57 = por %p55, %p56
    %p58 = scmp.ne.s32.totalorder %s49, %s50
    %p59 = scmp.eq.s32.totalorder %s18, 0
    %p60 = por %p58, %p59
    %p61 = scmp.ne.s32.totalorder %s49, %s50
    %p62 = scmp.eq.s32.totalorder %s19, 1
    %p63 = por %p61, %p62
    %p65 = scmp.ne.s32.totalorder %s50, %s64
    %p66 = scmp.eq.s32.totalorder %s19, 0
    %p67 = por %p65, %p66
    %s69 = sadd.s32 %s68, 1
    %p72 = scmp.eq.s32.totalorder %s13, 1
    %p73 = scmp.ne.s32.totalorder %s68, %s70
    %p74 = scmp.eq.s32.totalorder %s13, 0
    %p75 = por %p73, %p74
    %p76 = scmp.ne.s32.totalorder %s68, %s70
    %p77 = scmp.eq.s32.totalorder %s18, 1
    %p78 = por %p76, %p77
    %p79 = scmp.ne.s32.totalorder %s70, %s71
    %p80 = scmp.eq.s32.totalorder %s18, 0
    %p81 = por %p79, %p80
    %p82 = scmp.ne.s32.totalorder %s70, %s71
    %p83 = scmp.eq.s32.totalorder %s19, 1
    %p84 = por %p82, %p83
    %p86 = scmp.ne.s32.totalorder %s71, %s85
    %p87 = scmp.eq.s32.totalorder %s19, 0
    %p88 = por %p86, %p87
    %s90 = sadd.s32 %s89, 1
    %p93 = scmp.eq.s32.totalorder %s13, 1
    %p94 = scmp.ne.s32.totalorder %s89, %s91
    %p95 = scmp.eq.s32.totalorder %s13, 0
    %p96 = por %p94, %p95
    %p97 = scmp.ne.s32.totalorder %s89, %s91
    %p98 = scmp.eq.s32.totalorder %s18, 1
    %p99 = por %p97, %p98
    %p100 = scmp.ne.s32.totalorder %s91, %s92
    %p101 = scmp.eq.s32.totalorder %s18, 0
    %p102 = por %p100, %p101
    %p103 = scmp.ne.s32.totalorder %s91, %s92
    %p104 = scmp.eq.s32.totalorder %s19, 1
    %p105 = por %p103, %p104
    %p107 = scmp.ne.s32.totalorder %s92, %s106
    %p108 = scmp.eq.s32.totalorder %s19, 0
    %p109 = por %p107, %p108
    %s111 = sadd.s32 %s110, 1
    %p114 = scmp.eq.s32.totalorder %s13, 1
    %p115 = scmp.ne.s32.totalorder %s110, %s112
    %p116 = scmp.eq.s32.totalorder %s13, 0
    %p117 = por %p115, %p116
    %p118 = scmp.ne.s32.totalorder %s110, %s112
    %p119 = scmp.eq.s32.totalorder %s18, 1
    %p120 = por %p118, %p119
    %p121 = scmp.ne.s32.totalorder %s112, %s113
    %p122 = scmp.eq.s32.totalorder %s18, 0
    %p123 = por %p121, %p122
    %p124 = scmp.ne.s32.totalorder %s112, %s113
    %p125 = scmp.eq.s32.totalorder %s19, 1
    %p126 = por %p124, %p125
    %p128 = scmp.ne.s32.totalorder %s113, %s127
    %p129 = scmp.eq.s32.totalorder %s19, 0
    %p130 = por %p128, %p129
    %s132 = sadd.s32 %s131, 1
    %p135 = scmp.eq.s32.totalorder %s13, 1
    %p136 = scmp.ne.s32.totalorder %s131, %s133
    %p137 = scmp.eq.s32.totalorder %s13, 0
    %p138 = por %p136, %p137
    %p139 = scmp.ne.s32.totalorder %s131, %s133
    %p140 = scmp.eq.s32.totalorder %s18, 1
    %p141 = por %p139, %p140
    %p142 = scmp.ne.s32.totalorder %s133, %s134
    %p143 = scmp.eq.s32.totalorder %s18, 0
    %p144 = por %p142, %p143
    %p145 = scmp.ne.s32.totalorder %s133, %s134
    %p146 = scmp.eq.s32.totalorder %s19, 1
    %p147 = por %p145, %p146
    %p149 = scmp.ne.s32.totalorder %s134, %s148
    %p150 = scmp.eq.s32.totalorder %s19, 0
    %p151 = por %p149, %p150
    %s153 = sadd.s32 %s152, 1
    %p156 = scmp.eq.s32.totalorder %s13, 1
    %p157 = scmp.ne.s32.totalorder %s152, %s154
    %p158 = scmp.eq.s32.totalorder %s13, 0
    %p159 = por %p157, %p158
    %p160 = scmp.ne.s32.totalorder %s152, %s154
    %p161 = scmp.eq.s32.totalorder %s18, 1
    %p162 = por %p160, %p161
    %p163 = scmp.ne.s32.totalorder %s154, %s155
    %p164 = scmp.eq.s32.totalorder %s18, 0
    %p165 = por %p163, %p164
    %p166 = scmp.ne.s32.totalorder %s154, %s155
    %p167 = scmp.eq.s32.totalorder %s19, 1
    %p168 = por %p166, %p167
    %p170 = scmp.ne.s32.totalorder %s155, %s169
    %p171 = scmp.eq.s32.totalorder %s19, 0
    %p172 = por %p170, %p171
    %s173 = ssub.s32 %s13, %s20
    %p174 = scmp.eq.s32.totalorder %s173, 0
    %s176 = sadd.s32 %s175, 1
    %s177 = scalar_select %p174, %s175, %s176
    %p180 = pneg %p174
    %p181 = scmp.eq.s32.totalorder %s13, 1
    %p182 = por %p180, %p181
    %p183 = scmp.ne.s32.totalorder %s175, %s178
    %p184 = scmp.eq.s32.totalorder %s13, 0
    %p185 = por %p183, %p184
    %p186 = scmp.ne.s32.totalorder %s175, %s178
    %p187 = scmp.eq.s32.totalorder %s18, 1
    %p188 = por %p186, %p187
    %p189 = scmp.ne.s32.totalorder %s178, %s179
    %p190 = scmp.eq.s32.totalorder %s18, 0
    %p191 = por %p189, %p190
    %p192 = scmp.ne.s32.totalorder %s178, %s179
    %p193 = scmp.eq.s32.totalorder %s19, 1
    %p194 = por %p192, %p193
    %p196 = scmp.ne.s32.totalorder %s179, %s195
    %p197 = scmp.eq.s32.totalorder %s19, 0
    %p198 = por %p196, %p197
    %p199 = scmp.le.s32.totalorder 1, %s13
    %p200 = scmp.lt.s32.totalorder %s13, 3
    %p201 = pnand %p199, %p200
    %p202 = pneg %p201
    // Predicated region
    $region9: #{dmfunit_forward.1} parent=5 // pred_check
      _
    $region10: #{dmfunit_forward.1} parent=5 // pred_check_branch
      %204 = sbr.rel (%p201) target = $region12
    $region11: #{dmfunit_forward.1} parent=5 // pred_region
      %s205 = ssub.s32 %s13, 1
      // Predicated region
      $region13: #{dmfunit_forward.1} parent=11 // pred_check
        %p206 = pneg %p60
      $region14: #{dmfunit_forward.1} parent=11 // pred_check_branch
        %208 = sbr.rel (%p206) target = $region16
      $region15: #{dmfunit_forward.1} parent=11 // pred_region
        _
      $region16: #{dmfunit_forward.1} parent=11 // pred_fallthru
        _
      // Predicated region
      $region17: #{dmfunit_forward.1} parent=11 // pred_check
        %p209 = pneg %p81
      $region18: #{dmfunit_forward.1} parent=11 // pred_check_branch
        %211 = sbr.rel (%p209) target = $region20
      $region19: #{dmfunit_forward.1} parent=11 // pred_region
        _
      $region20: #{dmfunit_forward.1} parent=11 // pred_fallthru
        _
      // Predicated region
      $region21: #{dmfunit_forward.1} parent=11 // pred_check
        %p212 = pneg %p102
      $region22: #{dmfunit_forward.1} parent=11 // pred_check_branch
        %214 = sbr.rel (%p212) target = $region24
      $region23: #{dmfunit_forward.1} parent=11 // pred_region
        _
      $region24: #{dmfunit_forward.1} parent=11 // pred_fallthru
        _
      // Predicated region
      $region25: #{dmfunit_forward.1} parent=11 // pred_check
        %p215 = pneg %p123
      $region26: #{dmfunit_forward.1} parent=11 // pred_check_branch
        %217 = sbr.rel (%p215) target = $region28
      $region27: #{dmfunit_forward.1} parent=11 // pred_region
        _
      $region28: #{dmfunit_forward.1} parent=11 // pred_fallthru
        _
      // Predicated region
      $region29: #{dmfunit_forward.1} parent=11 // pred_check
        %p218 = pneg %p144
      $region30: #{dmfunit_forward.1} parent=11 // pred_check_branch
        %220 = sbr.rel (%p218) target = $region32
      $region31: #{dmfunit_forward.1} parent=11 // pred_region
        _
      $region32: #{dmfunit_forward.1} parent=11 // pred_fallthru
        _
      // Predicated region
      $region33: #{dmfunit_forward.1} parent=11 // pred_check
        %p221 = pneg %p165
      $region34: #{dmfunit_forward.1} parent=11 // pred_check_branch
        %223 = sbr.rel (%p221) target = $region36
      $region35: #{dmfunit_forward.1} parent=11 // pred_region
        _
      $region36: #{dmfunit_forward.1} parent=11 // pred_fallthru
        _
    $region12: #{dmfunit_forward.1} parent=5 // pred_fallthru
      _
    %p224 = scmp.lt.s32.totalorder %s13, 2
    // Predicated region
    $region37: #{dmfunit_forward.1} parent=5 // pred_check
      %p225 = pneg %p224
    $region38: #{dmfunit_forward.1} parent=5 // pred_check_branch
      %227 = sbr.rel (%p225) target = $region40
    $region39: #{dmfunit_forward.1} parent=5 // pred_region
      // Predicated region
      $region41: #{dmfunit_forward.1} parent=39 // pred_check
        %p228 = pneg %p33
      $region42: #{dmfunit_forward.1} parent=39 // pred_check_branch
        %230 = sbr.rel (%p228) target = $region44
      $region43: #{dmfunit_forward.1} parent=39 // pred_region
        %p231 = scmp.lt.s32.totalorder %s13, 1
        %s232 = scalar_select %p231, %s13, 1
        %s233 = smul.addr %s232, 48
        %s234 = smul.addr %s233, 8
        %s235 = scalar_lea.vmem %s0, %s234
      $region44: #{dmfunit_forward.1} parent=39 // pred_fallthru
        _
    $region40: #{dmfunit_forward.1} parent=5 // pred_fallthru
      _
    %p236 = scmp.le.s32.totalorder 1, %s13
    %p237 = scmp.lt.s32.totalorder %s13, 3
    %p238 = pnand %p236, %p237
    %p239 = pneg %p238
    // Predicated region
    $region45: #{dmfunit_forward.1} parent=5 // pred_check
      _
    $region46: #{dmfunit_forward.1} parent=5 // pred_check_branch
      %241 = sbr.rel (%p238) target = $region48
    $region47: #{dmfunit_forward.1} parent=5 // pred_region
      %s242 = ssub.s32 %s13, 1
      %p243 = scmp.lt.s32.totalorder %s18, 1
      %s244 = scalar_select %p243, %s18, 1
      %s245 = smul.addr %s244, 48
      %s246 = smul.addr %s245, 8
      %s247 = scalar_lea.vmem %s0, %s246
      %p248 = pneg %p39
      %p249 = pneg %p36
      %p250 = pneg %p60
      %p251 = pneg %p57
      %p252 = pneg %p81
      %p253 = pneg %p78
      %p254 = pneg %p102
      %p255 = pneg %p99
      %p256 = pneg %p123
      %p257 = pneg %p120
      %p258 = pneg %p144
      %p259 = pneg %p141
      %p260 = pneg %p165
      %p261 = pneg %p162
      %p262 = pneg %p191
      %p263 = pneg %p188
      %p264 = scmp.lt.s32.totalorder %s18, 1
      %s265 = scalar_select %p264, %s18, 1
      %s266 = smul.addr %s265, 48
      %s267 = smul.addr %s266, 8
      %s268 = scalar_lea.vmem %s7, %s267
      %p269 = scmp.lt.s32.totalorder %s18, 1
      %s270 = scalar_select %p269, %s18, 1
      %s271 = smul.addr %s270, 48
      %s272 = smul.addr %s271, 8
      %s273 = scalar_lea.vmem %s0, %s272
      %p274 = scmp.lt.s32.totalorder %s18, 1
      %s275 = scalar_select %p274, %s18, 1
      %s276 = smul.addr %s275, 48
      %s277 = smul.addr %s276, 8
      %s278 = scalar_lea.vmem %s7, %s277
      %280 = vst [vmem:[#allocation2] sm:$0xff] 0.0
      %281 = vst [vmem:[#allocation2 + $0x8] sm:$0xff] 0.0
      %282 = vst [vmem:[#allocation2 + $0x10] sm:$0xff] 0.0
      %283 = vst [vmem:[#allocation2 + $0x18] sm:$0xff] 0.0
      %284 = vst [vmem:[#allocation2 + $0x20] sm:$0xff] 0.0
      %285 = vst [vmem:[#allocation2 + $0x28] sm:$0xff] 0.0
      %286 = vst [vmem:[#allocation2 + $0x30] sm:$0xff] 0.0
      %287 = vst [vmem:[#allocation2 + $0x1b8] sm:$0xff] 0.0
      %288 = vst [vmem:[#allocation2 + $0x1c0] sm:$0xff] 0.0
      %289 = vst [vmem:[#allocation2 + $0x1c8] sm:$0xff] 0.0
      %290 = vst [vmem:[#allocation2 + $0x1d0] sm:$0xff] 0.0
      %291 = vst [vmem:[#allocation2 + $0x1d8] sm:$0xff] 0.0
      %292 = vst [vmem:[#allocation2 + $0x1e0] sm:$0xff] 0.0
      %293 = vst [vmem:[#allocation2 + $0x1e8] sm:$0xff] 0.0
      %v294 = vld [vmem:[%s273] sm:$0xff]
      %v295 = vld [vmem:[%s273 + $0x8] sm:$0xff]
      %v296 = vld [vmem:[%s273 + $0x10] sm:$0xff]
      %v297 = vld [vmem:[%s273 + $0x18] sm:$0xff]
      %v298 = vld [vmem:[%s273 + $0x20] sm:$0xff]
      %v299 = vld [vmem:[%s273 + $0x28] sm:$0xff]
      %v300 = vld [vmem:[%s273 + $0x30] sm:$0xff]
      %v301 = vld [vmem:[%s273 + $0x38] sm:$0xff]
      %v302 = vld [vmem:[%s273 + $0x40] sm:$0xff]
      %v303 = vld [vmem:[%s273 + $0x48] sm:$0xff]
      %v304 = vld [vmem:[%s273 + $0x50] sm:$0xff]
      %v305 = vld [vmem:[%s273 + $0x58] sm:$0xff]
      %v306 = vld [vmem:[%s273 + $0x60] sm:$0xff]
      %v307 = vld [vmem:[%s273 + $0x68] sm:$0xff]
      %v308 = vld [vmem:[%s273 + $0x70] sm:$0xff]
      %v309 = vld [vmem:[%s273 + $0x78] sm:$0xff]
      %v310 = vld [vmem:[%s273 + $0x80] sm:$0xff]
      %v311 = vld [vmem:[%s273 + $0x88] sm:$0xff]
      %v312 = vld [vmem:[%s273 + $0x90] sm:$0xff]
      %v313 = vld [vmem:[%s273 + $0x98] sm:$0xff]
      %v314 = vld [vmem:[%s273 + $0xa0] sm:$0xff]
      %v315 = vld [vmem:[%s273 + $0xa8] sm:$0xff]
      %v316 = vld [vmem:[%s273 + $0xb0] sm:$0xff]
      %v317 = vld [vmem:[%s273 + $0xb8] sm:$0xff]
      %v318 = vld [vmem:[%s273 + $0xc0] sm:$0xff]
      %v319 = vld [vmem:[%s273 + $0xc8] sm:$0xff]
      %v320 = vld [vmem:[%s273 + $0xd0] sm:$0xff]
      %v321 = vld [vmem:[%s273 + $0xd8] sm:$0xff]
      %v322 = vld [vmem:[%s273 + $0xe0] sm:$0xff]
      %v323 = vld [vmem:[%s273 + $0xe8] sm:$0xff]
      %v324 = vld [vmem:[%s273 + $0xf0] sm:$0xff]
      %v325 = vld [vmem:[%s273 + $0xf8] sm:$0xff]
      %v326 = vld [vmem:[%s273 + $0x100] sm:$0xff]
      %v327 = vld [vmem:[%s273 + $0x108] sm:$0xff]
      %v328 = vld [vmem:[%s273 + $0x110] sm:$0xff]
      %v329 = vld [vmem:[%s273 + $0x118] sm:$0xff]
      %v330 = vld [vmem:[%s273 + $0x120] sm:$0xff]
      %v331 = vld [vmem:[%s273 + $0x128] sm:$0xff]
      %v332 = vld [vmem:[%s273 + $0x130] sm:$0xff]
      %v333 = vld [vmem:[%s273 + $0x138] sm:$0xff]
      %v334 = vld [vmem:[%s273 + $0x140] sm:$0xff]
      %v335 = vld [vmem:[%s273 + $0x148] sm:$0xff]
      %v336 = vld [vmem:[%s273 + $0x150] sm:$0xff]
      %v337 = vld [vmem:[%s273 + $0x158] sm:$0xff]
      %v338 = vld [vmem:[%s273 + $0x160] sm:$0xff]
      %v339 = vld [vmem:[%s273 + $0x168] sm:$0xff]
      %v340 = vld [vmem:[%s273 + $0x170] sm:$0xff]
      %v341 = vld [vmem:[%s273 + $0x178] sm:$0xff]
      %v342 = vmax.f32 %v294, 0.0
      %v343 = vmax.f32 %v295, 0.0
      %v344 = vmax.f32 %v296, 0.0
      %v345 = vmax.f32 %v297, 0.0
      %v346 = vmax.f32 %v298, 0.0
      %v347 = vmax.f32 %v299, 0.0
      %v348 = vmax.f32 %v300, 0.0
      %v349 = vmax.f32 %v301, 0.0
      %v350 = vmax.f32 %v302, 0.0
      %v351 = vmax.f32 %v303, 0.0
      %v352 = vmax.f32 %v304, 0.0
      %v353 = vmax.f32 %v305, 0.0
      %v354 = vmax.f32 %v306, 0.0
      %v355 = vmax.f32 %v307, 0.0
      %v356 = vmax.f32 %v308, 0.0
      %v357 = vmax.f32 %v309, 0.0
      %v358 = vmax.f32 %v310, 0.0
      %v359 = vmax.f32 %v311, 0.0
      %v360 = vmax.f32 %v312, 0.0
      %v361 = vmax.f32 %v313, 0.0
      %v362 = vmax.f32 %v314, 0.0
      %v363 = vmax.f32 %v315, 0.0
      %v364 = vmax.f32 %v316, 0.0
      %v365 = vmax.f32 %v317, 0.0
      %v366 = vmax.f32 %v318, 0.0
      %v367 = vmax.f32 %v319, 0.0
      %v368 = vmax.f32 %v320, 0.0
      %v369 = vmax.f32 %v321, 0.0
      %v370 = vmax.f32 %v322, 0.0
      %v371 = vmax.f32 %v323, 0.0
      %v372 = vmax.f32 %v324, 0.0
      %v373 = vmax.f32 %v325, 0.0
      %v374 = vmax.f32 %v326, 0.0
      %v375 = vmax.f32 %v327, 0.0
      %v376 = vmax.f32 %v328, 0.0
      %v377 = vmax.f32 %v329, 0.0
      %v378 = vmax.f32 %v330, 0.0
      %v379 = vmax.f32 %v331, 0.0
      %v380 = vmax.f32 %v332, 0.0
      %v381 = vmax.f32 %v333, 0.0
      %v382 = vmax.f32 %v334, 0.0
      %v383 = vmax.f32 %v335, 0.0
      %v384 = vmax.f32 %v336, 0.0
      %v385 = vmax.f32 %v337, 0.0
      %v386 = vmax.f32 %v338, 0.0
      %v387 = vmax.f32 %v339, 0.0
      %v388 = vmax.f32 %v340, 0.0
      %v389 = vmax.f32 %v341, 0.0
      %v390 = vpack.c.bf16 %v343, %v342
      %v391 = vpack.c.bf16 %v345, %v344
      %v392 = vpack.c.bf16 %v347, %v346
      %v393 = vpack.c.bf16 %v349, %v348
      %v394 = vpack.c.bf16 %v351, %v350
      %v395 = vpack.c.bf16 %v353, %v352
      %v396 = vpack.c.bf16 %v355, %v354
      %v397 = vpack.c.bf16 %v357, %v356
      %v398 = vpack.c.bf16 %v359, %v358
      %v399 = vpack.c.bf16 %v361, %v360
      %v400 = vpack.c.bf16 %v363, %v362
      %v401 = vpack.c.bf16 %v365, %v364
      %v402 = vpack.c.bf16 %v367, %v366
      %v403 = vpack.c.bf16 %v369, %v368
      %v404 = vpack.c.bf16 %v371, %v370
      %v405 = vpack.c.bf16 %v373, %v372
      %v406 = vpack.c.bf16 %v375, %v374
      %v407 = vpack.c.bf16 %v377, %v376
      %v408 = vpack.c.bf16 %v379, %v378
      %v409 = vpack.c.bf16 %v381, %v380
      %v410 = vpack.c.bf16 %v383, %v382
      %v411 = vpack.c.bf16 %v385, %v384
      %v412 = vpack.c.bf16 %v387, %v386
      %v413 = vpack.c.bf16 %v389, %v388
      %v414 = vld [vmem:[%s1] sm:$0xff]
      %v416 = vunpack.c.l.b16 %v414
      %v417 = vunpack.c.h.b16 %v414
      %v418 = vpack.c.b16 %v416, %v416
      %v419 = vpack.c.b16 %v417, %v417
      %vm420 = vcmask 64512
      %v422 = vsel %vm420, %v390, 0
      %v425 = vsel %vm420, %v391, 0
      %v428 = vsel %vm420, %v392, 0
      %v431 = vsel %vm420, %v393, 0
      %v434 = vsel %vm420, %v394, 0
      %v437 = vsel %vm420, %v395, 0
      %v440 = vsel %vm420, %v396, 0
      %v443 = vsel %vm420, %v397, 0
      %v446 = vsel %vm420, %v398, 0
      %v449 = vsel %vm420, %v399, 0
      %v452 = vsel %vm420, %v400, 0
      %v455 = vsel %vm420, %v401, 0
      %v458 = vsel %vm420, %v402, 0
      %v461 = vsel %vm420, %v403, 0
      %v464 = vsel %vm420, %v404, 0
      %v467 = vsel %vm420, %v405, 0
      %v470 = vsel %vm420, %v406, 0
      %v473 = vsel %vm420, %v407, 0
      %v476 = vsel %vm420, %v408, 0
      %v479 = vsel %vm420, %v409, 0
      %v482 = vsel %vm420, %v410, 0
      %v485 = vsel %vm420, %v411, 0
      %v488 = vsel %vm420, %v412, 0
      %v491 = vsel %vm420, %v413, 0
      %vm493 = vcmask 1043456
      %v495 = vsel %vm493, %v418, 0
      %v498 = vsel %vm493, %v419, 0
      %500 = vmatpush.bf16.msra.mxu0 0
      %501 = vmatpush.bf16.msra.mxu0 0
      %502 = vmatpush.bf16.msra.mxu0 0
      %503 = vmatpush.bf16.msra.mxu0 0
      %504 = vmatpush.bf16.msra.mxu0 0
      %505 = vmatpush.bf16.msra.mxu0 0
      %506 = vmatpush.bf16.msra.mxu0 0
      %507 = vmatpush.bf16.msra.mxu0 %v495
      %508 = vmatmul.bf16.gmra.mxu0 %v422
      %v509 = vpop.f32.mrf.mxu0
      %v510 = vadd.f32 0.0, %v509
      %v511 = vpop.f32.mrf.mxu0
      %v512 = vadd.f32 0.0, %v511
      %513 = vmatmul.bf16.gmra.mxu0 %v425
      %v514 = vpop.f32.mrf.mxu0
      %v515 = vadd.f32 0.0, %v514
      %v516 = vpop.f32.mrf.mxu0
      %v517 = vadd.f32 0.0, %v516
      %518 = vmatmul.bf16.gmra.mxu0 %v428
      %v519 = vpop.f32.mrf.mxu0
      %v520 = vadd.f32 0.0, %v519
      %v521 = vpop.f32.mrf.mxu0
      %v522 = vadd.f32 0.0, %v521
      %523 = vmatmul.bf16.gmra.mxu0 %v431
      %v524 = vpop.f32.mrf.mxu0
      %v525 = vadd.f32 0.0, %v524
      %v526 = vpop.f32.mrf.mxu0
      %v527 = vadd.f32 0.0, %v526
      %528 = vmatmul.bf16.gmra.mxu0 %v434
      %v529 = vpop.f32.mrf.mxu0
      %v530 = vadd.f32 0.0, %v529
      %v531 = vpop.f32.mrf.mxu0
      %v532 = vadd.f32 0.0, %v531
      %533 = vmatmul.bf16.gmra.mxu0 %v437
      %v534 = vpop.f32.mrf.mxu0
      %v535 = vadd.f32 0.0, %v534
      %v536 = vpop.f32.mrf.mxu0
      %v537 = vadd.f32 0.0, %v536
      %538 = vmatmul.bf16.gmra.mxu0 %v440
      %v539 = vpop.f32.mrf.mxu0
      %v540 = vadd.f32 0.0, %v539
      %v541 = vpop.f32.mrf.mxu0
      %v542 = vadd.f32 0.0, %v541
      %543 = vmatmul.bf16.gmra.mxu0 %v443
      %v544 = vpop.f32.mrf.mxu0
      %v545 = vadd.f32 0.0, %v544
      %v546 = vpop.f32.mrf.mxu0
      %v547 = vadd.f32 0.0, %v546
      %548 = vmatmul.bf16.gmra.mxu0 %v446
      %v549 = vpop.f32.mrf.mxu0
      %v550 = vadd.f32 0.0, %v549
      %v551 = vpop.f32.mrf.mxu0
      %v552 = vadd.f32 0.0, %v551
      %553 = vmatmul.bf16.gmra.mxu0 %v449
      %v554 = vpop.f32.mrf.mxu0
      %v555 = vadd.f32 0.0, %v554
      %v556 = vpop.f32.mrf.mxu0
      %v557 = vadd.f32 0.0, %v556
      %558 = vmatmul.bf16.gmra.mxu0 %v452
      %v559 = vpop.f32.mrf.mxu0
      %v560 = vadd.f32 0.0, %v559
      %v561 = vpop.f32.mrf.mxu0
      %v562 = vadd.f32 0.0, %v561
      %563 = vmatmul.bf16.gmra.mxu0 %v455
      %v564 = vpop.f32.mrf.mxu0
      %v565 = vadd.f32 0.0, %v564
      %v566 = vpop.f32.mrf.mxu0
      %v567 = vadd.f32 0.0, %v566
      %568 = vmatmul.bf16.gmra.mxu0 %v458
      %v569 = vpop.f32.mrf.mxu0
      %v570 = vadd.f32 0.0, %v569
      %v571 = vpop.f32.mrf.mxu0
      %v572 = vadd.f32 0.0, %v571
      %573 = vmatmul.bf16.gmra.mxu0 %v461
      %v574 = vpop.f32.mrf.mxu0
      %v575 = vadd.f32 0.0, %v574
      %v576 = vpop.f32.mrf.mxu0
      %v577 = vadd.f32 0.0, %v576
      %578 = vmatmul.bf16.gmra.mxu0 %v464
      %v579 = vpop.f32.mrf.mxu0
      %v580 = vadd.f32 0.0, %v579
      %v581 = vpop.f32.mrf.mxu0
      %v582 = vadd.f32 0.0, %v581
      %583 = vmatmul.bf16.gmra.mxu0 %v467
      %v584 = vpop.f32.mrf.mxu0
      %v585 = vadd.f32 0.0, %v584
      %v586 = vpop.f32.mrf.mxu0
      %v587 = vadd.f32 0.0, %v586
      %588 = vmatmul.bf16.gmra.mxu0 %v470
      %v589 = vpop.f32.mrf.mxu0
      %v590 = vadd.f32 0.0, %v589
      %v591 = vpop.f32.mrf.mxu0
      %v592 = vadd.f32 0.0, %v591
      %593 = vmatmul.bf16.gmra.mxu0 %v473
      %v594 = vpop.f32.mrf.mxu0
      %v595 = vadd.f32 0.0, %v594
      %v596 = vpop.f32.mrf.mxu0
      %v597 = vadd.f32 0.0, %v596
      %598 = vmatmul.bf16.gmra.mxu0 %v476
      %v599 = vpop.f32.mrf.mxu0
      %v600 = vadd.f32 0.0, %v599
      %v601 = vpop.f32.mrf.mxu0
      %v602 = vadd.f32 0.0, %v601
      %603 = vmatmul.bf16.gmra.mxu0 %v479
      %v604 = vpop.f32.mrf.mxu0
      %v605 = vadd.f32 0.0, %v604
      %v606 = vpop.f32.mrf.mxu0
      %v607 = vadd.f32 0.0, %v606
      %608 = vmatmul.bf16.gmra.mxu0 %v482
      %v609 = vpop.f32.mrf.mxu0
      %v610 = vadd.f32 0.0, %v609
      %v611 = vpop.f32.mrf.mxu0
      %v612 = vadd.f32 0.0, %v611
      %613 = vmatmul.bf16.gmra.mxu0 %v485
      %v614 = vpop.f32.mrf.mxu0
      %v615 = vadd.f32 0.0, %v614
      %v616 = vpop.f32.mrf.mxu0
      %v617 = vadd.f32 0.0, %v616
      %618 = vmatmul.bf16.gmra.mxu0 %v488
      %v619 = vpop.f32.mrf.mxu0
      %v620 = vadd.f32 0.0, %v619
      %v621 = vpop.f32.mrf.mxu0
      %v622 = vadd.f32 0.0, %v621
      %623 = vmatmul.bf16.gmra.mxu0 %v491
      %v624 = vpop.f32.mrf.mxu0
      %v625 = vadd.f32 0.0, %v624
      %v626 = vpop.f32.mrf.mxu0
      %v627 = vadd.f32 0.0, %v626
      %628 = vdwg.mxu0
      %629 = vmatpush.bf16.msra.mxu0 0
      %630 = vmatpush.bf16.msra.mxu0 0
      %631 = vmatpush.bf16.msra.mxu0 0
      %632 = vmatpush.bf16.msra.mxu0 0
      %633 = vmatpush.bf16.msra.mxu0 0
      %634 = vmatpush.bf16.msra.mxu0 0
      %635 = vmatpush.bf16.msra.mxu0 0
      %636 = vmatpush.bf16.msra.mxu0 %v498
      %637 = vmatmul.bf16.gmra.mxu0 %v422
      %v638 = vpop.f32.mrf.mxu0
      %v639 = vadd.f32 0.0, %v638
      %v640 = vpop.f32.mrf.mxu0
      %v641 = vadd.f32 0.0, %v640
      %642 = vmatmul.bf16.gmra.mxu0 %v425
      %v643 = vpop.f32.mrf.mxu0
      %v644 = vadd.f32 0.0, %v643
      %v645 = vpop.f32.mrf.mxu0
      %v646 = vadd.f32 0.0, %v645
      %647 = vmatmul.bf16.gmra.mxu0 %v428
      %v648 = vpop.f32.mrf.mxu0
      %v649 = vadd.f32 0.0, %v648
      %v650 = vpop.f32.mrf.mxu0
      %v651 = vadd.f32 0.0, %v650
      %652 = vmatmul.bf16.gmra.mxu0 %v431
      %v653 = vpop.f32.mrf.mxu0
      %v654 = vadd.f32 0.0, %v653
      %v655 = vpop.f32.mrf.mxu0
      %v656 = vadd.f32 0.0, %v655
      %657 = vmatmul.bf16.gmra.mxu0 %v434
      %v658 = vpop.f32.mrf.mxu0
      %v659 = vadd.f32 0.0, %v658
      %v660 = vpop.f32.mrf.mxu0
      %v661 = vadd.f32 0.0, %v660
      %662 = vmatmul.bf16.gmra.mxu0 %v437
      %v663 = vpop.f32.mrf.mxu0
      %v664 = vadd.f32 0.0, %v663
      %v665 = vpop.f32.mrf.mxu0
      %v666 = vadd.f32 0.0, %v665
      %667 = vmatmul.bf16.gmra.mxu0 %v440
      %v668 = vpop.f32.mrf.mxu0
      %v669 = vadd.f32 0.0, %v668
      %v670 = vpop.f32.mrf.mxu0
      %v671 = vadd.f32 0.0, %v670
      %672 = vmatmul.bf16.gmra.mxu0 %v443
      %v673 = vpop.f32.mrf.mxu0
      %v674 = vadd.f32 0.0, %v673
      %v675 = vpop.f32.mrf.mxu0
      %v676 = vadd.f32 0.0, %v675
      %677 = vmatmul.bf16.gmra.mxu0 %v446
      %v678 = vpop.f32.mrf.mxu0
      %v679 = vadd.f32 0.0, %v678
      %v680 = vpop.f32.mrf.mxu0
      %v681 = vadd.f32 0.0, %v680
      %682 = vmatmul.bf16.gmra.mxu0 %v449
      %v683 = vpop.f32.mrf.mxu0
      %v684 = vadd.f32 0.0, %v683
      %v685 = vpop.f32.mrf.mxu0
      %v686 = vadd.f32 0.0, %v685
      %687 = vmatmul.bf16.gmra.mxu0 %v452
      %v688 = vpop.f32.mrf.mxu0
      %v689 = vadd.f32 0.0, %v688
      %v690 = vpop.f32.mrf.mxu0
      %v691 = vadd.f32 0.0, %v690
      %692 = vmatmul.bf16.gmra.mxu0 %v455
      %v693 = vpop.f32.mrf.mxu0
      %v694 = vadd.f32 0.0, %v693
      %v695 = vpop.f32.mrf.mxu0
      %v696 = vadd.f32 0.0, %v695
      %697 = vmatmul.bf16.gmra.mxu0 %v458
      %v698 = vpop.f32.mrf.mxu0
      %v699 = vadd.f32 0.0, %v698
      %v700 = vpop.f32.mrf.mxu0
      %v701 = vadd.f32 0.0, %v700
      %702 = vmatmul.bf16.gmra.mxu0 %v461
      %v703 = vpop.f32.mrf.mxu0
      %v704 = vadd.f32 0.0, %v703
      %v705 = vpop.f32.mrf.mxu0
      %v706 = vadd.f32 0.0, %v705
      %707 = vmatmul.bf16.gmra.mxu0 %v464
      %v708 = vpop.f32.mrf.mxu0
      %v709 = vadd.f32 0.0, %v708
      %v710 = vpop.f32.mrf.mxu0
      %v711 = vadd.f32 0.0, %v710
      %712 = vmatmul.bf16.gmra.mxu0 %v467
      %v713 = vpop.f32.mrf.mxu0
      %v714 = vadd.f32 0.0, %v713
      %v715 = vpop.f32.mrf.mxu0
      %v716 = vadd.f32 0.0, %v715
      %717 = vmatmul.bf16.gmra.mxu0 %v470
      %v718 = vpop.f32.mrf.mxu0
      %v719 = vadd.f32 0.0, %v718
      %v720 = vpop.f32.mrf.mxu0
      %v721 = vadd.f32 0.0, %v720
      %722 = vmatmul.bf16.gmra.mxu0 %v473
      %v723 = vpop.f32.mrf.mxu0
      %v724 = vadd.f32 0.0, %v723
      %v725 = vpop.f32.mrf.mxu0
      %v726 = vadd.f32 0.0, %v725
      %727 = vmatmul.bf16.gmra.mxu0 %v476
      %v728 = vpop.f32.mrf.mxu0
      %v729 = vadd.f32 0.0, %v728
      %v730 = vpop.f32.mrf.mxu0
      %v731 = vadd.f32 0.0, %v730
      %732 = vmatmul.bf16.gmra.mxu0 %v479
      %v733 = vpop.f32.mrf.mxu0
      %v734 = vadd.f32 0.0, %v733
      %v735 = vpop.f32.mrf.mxu0
      %v736 = vadd.f32 0.0, %v735
      %737 = vmatmul.bf16.gmra.mxu0 %v482
      %v738 = vpop.f32.mrf.mxu0
      %v739 = vadd.f32 0.0, %v738
      %v740 = vpop.f32.mrf.mxu0
      %v741 = vadd.f32 0.0, %v740
      %742 = vmatmul.bf16.gmra.mxu0 %v485
      %v743 = vpop.f32.mrf.mxu0
      %v744 = vadd.f32 0.0, %v743
      %v745 = vpop.f32.mrf.mxu0
      %v746 = vadd.f32 0.0, %v745
      %747 = vmatmul.bf16.gmra.mxu0 %v488
      %v748 = vpop.f32.mrf.mxu0
      %v749 = vadd.f32 0.0, %v748
      %v750 = vpop.f32.mrf.mxu0
      %v751 = vadd.f32 0.0, %v750
      %752 = vmatmul.bf16.gmra.mxu0 %v491
      %v753 = vpop.f32.mrf.mxu0
      %v754 = vadd.f32 0.0, %v753
      %v755 = vpop.f32.mrf.mxu0
      %v756 = vadd.f32 0.0, %v755
      %757 = vdwg.mxu0
      %758 = vst [vmem:[%s278] sm:$0xff] %v639
      %759 = vst [vmem:[%s278 + $0x8] sm:$0xff] %v641
      %760 = vst [vmem:[%s278 + $0x10] sm:$0xff] %v644
      %761 = vst [vmem:[%s278 + $0x18] sm:$0xff] %v646
      %762 = vst [vmem:[%s278 + $0x20] sm:$0xff] %v649
      %763 = vst [vmem:[%s278 + $0x28] sm:$0xff] %v651
      %764 = vst [vmem:[%s278 + $0x30] sm:$0xff] %v654
      %765 = vst [vmem:[%s278 + $0x38] sm:$0xff] %v656
      %766 = vst [vmem:[%s278 + $0x40] sm:$0xff] %v659
      %767 = vst [vmem:[%s278 + $0x48] sm:$0xff] %v661
      %768 = vst [vmem:[%s278 + $0x50] sm:$0xff] %v664
      %769 = vst [vmem:[%s278 + $0x58] sm:$0xff] %v666
      %770 = vst [vmem:[%s278 + $0x60] sm:$0xff] %v669
      %771 = vst [vmem:[%s278 + $0x68] sm:$0xff] %v671
      %772 = vst [vmem:[%s278 + $0x70] sm:$0xff] %v674
      %773 = vst [vmem:[%s278 + $0x78] sm:$0xff] %v676
      %774 = vst [vmem:[%s278 + $0x80] sm:$0xff] %v679
      %775 = vst [vmem:[%s278 + $0x88] sm:$0xff] %v681
      %776 = vst [vmem:[%s278 + $0x90] sm:$0xff] %v684
      %777 = vst [vmem:[%s278 + $0x98] sm:$0xff] %v686
      %778 = vst [vmem:[%s278 + $0xa0] sm:$0xff] %v689
      %779 = vst [vmem:[%s278 + $0xa8] sm:$0xff] %v691
      %780 = vst [vmem:[%s278 + $0xb0] sm:$0xff] %v694
      %781 = vst [vmem:[%s278 + $0xb8] sm:$0xff] %v696
      %782 = vst [vmem:[%s278 + $0xc0] sm:$0xff] %v699
      %783 = vst [vmem:[%s278 + $0xc8] sm:$0xff] %v701
      %784 = vst [vmem:[%s278 + $0xd0] sm:$0xff] %v704
      %785 = vst [vmem:[%s278 + $0xd8] sm:$0xff] %v706
      %786 = vst [vmem:[%s278 + $0xe0] sm:$0xff] %v709
      %787 = vst [vmem:[%s278 + $0xe8] sm:$0xff] %v711
      %788 = vst [vmem:[%s278 + $0xf0] sm:$0xff] %v714
      %789 = vst [vmem:[%s278 + $0xf8] sm:$0xff] %v716
      %790 = vst [vmem:[%s278 + $0x100] sm:$0xff] %v719
      %791 = vst [vmem:[%s278 + $0x108] sm:$0xff] %v721
      %792 = vst [vmem:[%s278 + $0x110] sm:$0xff] %v724
      %793 = vst [vmem:[%s278 + $0x118] sm:$0xff] %v726
      %794 = vst [vmem:[%s278 + $0x120] sm:$0xff] %v729
      %795 = vst [vmem:[%s278 + $0x128] sm:$0xff] %v731
      %796 = vst [vmem:[%s278 + $0x130] sm:$0xff] %v734
      %797 = vst [vmem:[%s278 + $0x138] sm:$0xff] %v736
      %798 = vst [vmem:[%s278 + $0x140] sm:$0xff] %v739
      %799 = vst [vmem:[%s278 + $0x148] sm:$0xff] %v741
      %800 = vst [vmem:[%s278 + $0x150] sm:$0xff] %v744
      %801 = vst [vmem:[%s278 + $0x158] sm:$0xff] %v746
      %802 = vst [vmem:[%s278 + $0x160] sm:$0xff] %v749
      %803 = vst [vmem:[%s278 + $0x168] sm:$0xff] %v751
      %804 = vst [vmem:[%s278 + $0x170] sm:$0xff] %v754
      %805 = vst [vmem:[%s278 + $0x178] sm:$0xff] %v756
      %v806 = vmax.f32 %v510, 0.0
      %v807 = vmax.f32 %v512, 0.0
      %v808 = vmax.f32 %v515, 0.0
      %v809 = vmax.f32 %v517, 0.0
      %v810 = vmax.f32 %v520, 0.0
      %v811 = vmax.f32 %v522, 0.0
      %v812 = vmax.f32 %v525, 0.0
      %v813 = vmax.f32 %v527, 0.0
      %v814 = vmax.f32 %v530, 0.0
      %v815 = vmax.f32 %v532, 0.0
      %v816 = vmax.f32 %v535, 0.0
      %v817 = vmax.f32 %v537, 0.0
      %v818 = vmax.f32 %v540, 0.0
      %v819 = vmax.f32 %v542, 0.0
      %v820 = vmax.f32 %v545, 0.0
      %v821 = vmax.f32 %v547, 0.0
      %v822 = vmax.f32 %v550, 0.0
      %v823 = vmax.f32 %v552, 0.0
      %v824 = vmax.f32 %v555, 0.0
      %v825 = vmax.f32 %v557, 0.0
      %v826 = vmax.f32 %v560, 0.0
      %v827 = vmax.f32 %v562, 0.0
      %v828 = vmax.f32 %v565, 0.0
      %v829 = vmax.f32 %v567, 0.0
      %v830 = vmax.f32 %v570, 0.0
      %v831 = vmax.f32 %v572, 0.0
      %v832 = vmax.f32 %v575, 0.0
      %v833 = vmax.f32 %v577, 0.0
      %v834 = vmax.f32 %v580, 0.0
      %v835 = vmax.f32 %v582, 0.0
      %v836 = vmax.f32 %v585, 0.0
      %v837 = vmax.f32 %v587, 0.0
      %v838 = vmax.f32 %v590, 0.0
      %v839 = vmax.f32 %v592, 0.0
      %v840 = vmax.f32 %v595, 0.0
      %v841 = vmax.f32 %v597, 0.0
      %v842 = vmax.f32 %v600, 0.0
      %v843 = vmax.f32 %v602, 0.0
      %v844 = vmax.f32 %v605, 0.0
      %v845 = vmax.f32 %v607, 0.0
      %v846 = vmax.f32 %v610, 0.0
      %v847 = vmax.f32 %v612, 0.0
      %v848 = vmax.f32 %v615, 0.0
      %v849 = vmax.f32 %v617, 0.0
      %v850 = vmax.f32 %v620, 0.0
      %v851 = vmax.f32 %v622, 0.0
      %v852 = vmax.f32 %v625, 0.0
      %v853 = vmax.f32 %v627, 0.0
      %v854 = vpack.c.bf16 %v807, %v806
      %v855 = vpack.c.bf16 %v809, %v808
      %v856 = vpack.c.bf16 %v811, %v810
      %v857 = vpack.c.bf16 %v813, %v812
      %v858 = vpack.c.bf16 %v815, %v814
      %v859 = vpack.c.bf16 %v817, %v816
      %v860 = vpack.c.bf16 %v819, %v818
      %v861 = vpack.c.bf16 %v821, %v820
      %v862 = vpack.c.bf16 %v823, %v822
      %v863 = vpack.c.bf16 %v825, %v824
      %v864 = vpack.c.bf16 %v827, %v826
      %v865 = vpack.c.bf16 %v829, %v828
      %v866 = vpack.c.bf16 %v831, %v830
      %v867 = vpack.c.bf16 %v833, %v832
      %v868 = vpack.c.bf16 %v835, %v834
      %v869 = vpack.c.bf16 %v837, %v836
      %v870 = vpack.c.bf16 %v839, %v838
      %v871 = vpack.c.bf16 %v841, %v840
      %v872 = vpack.c.bf16 %v843, %v842
      %v873 = vpack.c.bf16 %v845, %v844
      %v874 = vpack.c.bf16 %v847, %v846
      %v875 = vpack.c.bf16 %v849, %v848
      %v876 = vpack.c.bf16 %v851, %v850
      %v877 = vpack.c.bf16 %v853, %v852
      %v878 = vld [vmem:[%s2] sm:$0xf]
      %v879 = vld [vmem:[%s2 + $0x4] sm:$0xf]
      %v880 = vld [vmem:[%s2 + $0x8] sm:$0xf]
      %v881 = vld [vmem:[%s2 + $0xc] sm:$0xf]
      %v882 = vld [vmem:[%s2 + $0x10] sm:$0xf]
      %v883 = vld [vmem:[%s2 + $0x14] sm:$0xf]
      %v884 = vld [vmem:[%s2 + $0x18] sm:$0xf]
      %v885 = vld [vmem:[%s2 + $0x1c] sm:$0xf]
      %v886 = vld [vmem:[%s2 + $0x20] sm:$0xf]
      %v887 = vld [vmem:[%s2 + $0x24] sm:$0xf]
      %v888 = vld [vmem:[%s2 + $0x28] sm:$0xf]
      %v889 = vld [vmem:[%s2 + $0x2c] sm:$0xf]
      %v890 = vld [vmem:[%s2 + $0x30] sm:$0xf]
      %v891 = vld [vmem:[%s2 + $0x34] sm:$0xf]
      %v892 = vld [vmem:[%s2 + $0x38] sm:$0xf]
      %v893 = vld [vmem:[%s2 + $0x3c] sm:$0xf]
      %v910 = vunpack.c.l.b16 %v878
      %v911 = vunpack.c.l.b16 %v879
      %v912 = vunpack.c.l.b16 %v880
      %v913 = vunpack.c.l.b16 %v881
      %v914 = vunpack.c.l.b16 %v882
      %v915 = vunpack.c.l.b16 %v883
      %v916 = vunpack.c.l.b16 %v884
      %v917 = vunpack.c.l.b16 %v885
      %v918 = vunpack.c.l.b16 %v886
      %v919 = vunpack.c.l.b16 %v887
      %v920 = vunpack.c.l.b16 %v888
      %v921 = vunpack.c.l.b16 %v889
      %v922 = vunpack.c.l.b16 %v890
      %v923 = vunpack.c.l.b16 %v891
      %v924 = vunpack.c.l.b16 %v892
      %v925 = vunpack.c.l.b16 %v893
      %v926 = vpack.c.b16 %v911, %v910
      %v927 = vpack.c.b16 %v913, %v912
      %v928 = vpack.c.b16 %v915, %v914
      %v929 = vpack.c.b16 %v917, %v916
      %v930 = vpack.c.b16 %v919, %v918
      %v931 = vpack.c.b16 %v921, %v920
      %v932 = vpack.c.b16 %v923, %v922
      %v933 = vpack.c.b16 %v925, %v924
      %942 = vmatpush.bf16.msra.mxu0 %v933
      %943 = vmatpush.bf16.msra.mxu0 %v932
      %944 = vmatpush.bf16.msra.mxu0 %v931
      %945 = vmatpush.bf16.msra.mxu0 %v930
      %946 = vmatpush.bf16.msra.mxu0 %v929
      %947 = vmatpush.bf16.msra.mxu0 %v928
      %948 = vmatpush.bf16.msra.mxu0 %v927
      %949 = vmatpush.bf16.msra.mxu0 %v926
      %950 = vmatmul.bf16.gmra.mxu0 %v854
      %v951 = vpop.f32.mrf.mxu0
      %v952 = vadd.f32 0.0, %v951
      %v953 = vpop.f32.mrf.mxu0
      %v954 = vadd.f32 0.0, %v953
      %955 = vmatmul.bf16.gmra.mxu0 %v855
      %v956 = vpop.f32.mrf.mxu0
      %v957 = vadd.f32 0.0, %v956
      %v958 = vpop.f32.mrf.mxu0
      %v959 = vadd.f32 0.0, %v958
      %960 = vmatmul.bf16.gmra.mxu0 %v856
      %v961 = vpop.f32.mrf.mxu0
      %v962 = vadd.f32 0.0, %v961
      %v963 = vpop.f32.mrf.mxu0
      %v964 = vadd.f32 0.0, %v963
      %965 = vmatmul.bf16.gmra.mxu0 %v857
      %v966 = vpop.f32.mrf.mxu0
      %v967 = vadd.f32 0.0, %v966
      %v968 = vpop.f32.mrf.mxu0
      %v969 = vadd.f32 0.0, %v968
      %970 = vmatmul.bf16.gmra.mxu0 %v858
      %v971 = vpop.f32.mrf.mxu0
      %v972 = vadd.f32 0.0, %v971
      %v973 = vpop.f32.mrf.mxu0
      %v974 = vadd.f32 0.0, %v973
      %975 = vmatmul.bf16.gmra.mxu0 %v859
      %v976 = vpop.f32.mrf.mxu0
      %v977 = vadd.f32 0.0, %v976
      %v978 = vpop.f32.mrf.mxu0
      %v979 = vadd.f32 0.0, %v978
      %980 = vmatmul.bf16.gmra.mxu0 %v860
      %v981 = vpop.f32.mrf.mxu0
      %v982 = vadd.f32 0.0, %v981
      %v983 = vpop.f32.mrf.mxu0
      %v984 = vadd.f32 0.0, %v983
      %985 = vmatmul.bf16.gmra.mxu0 %v861
      %v986 = vpop.f32.mrf.mxu0
      %v987 = vadd.f32 0.0, %v986
      %v988 = vpop.f32.mrf.mxu0
      %v989 = vadd.f32 0.0, %v988
      %990 = vmatmul.bf16.gmra.mxu0 %v862
      %v991 = vpop.f32.mrf.mxu0
      %v992 = vadd.f32 0.0, %v991
      %v993 = vpop.f32.mrf.mxu0
      %v994 = vadd.f32 0.0, %v993
      %995 = vmatmul.bf16.gmra.mxu0 %v863
      %v996 = vpop.f32.mrf.mxu0
      %v997 = vadd.f32 0.0, %v996
      %v998 = vpop.f32.mrf.mxu0
      %v999 = vadd.f32 0.0, %v998
      %1000 = vmatmul.bf16.gmra.mxu0 %v864
      %v1001 = vpop.f32.mrf.mxu0
      %v1002 = vadd.f32 0.0, %v1001
      %v1003 = vpop.f32.mrf.mxu0
      %v1004 = vadd.f32 0.0, %v1003
      %1005 = vmatmul.bf16.gmra.mxu0 %v865
      %v1006 = vpop.f32.mrf.mxu0
      %v1007 = vadd.f32 0.0, %v1006
      %v1008 = vpop.f32.mrf.mxu0
      %v1009 = vadd.f32 0.0, %v1008
      %1010 = vmatmul.bf16.gmra.mxu0 %v866
      %v1011 = vpop.f32.mrf.mxu0
      %v1012 = vadd.f32 0.0, %v1011
      %v1013 = vpop.f32.mrf.mxu0
      %v1014 = vadd.f32 0.0, %v1013
      %1015 = vmatmul.bf16.gmra.mxu0 %v867
      %v1016 = vpop.f32.mrf.mxu0
      %v1017 = vadd.f32 0.0, %v1016
      %v1018 = vpop.f32.mrf.mxu0
      %v1019 = vadd.f32 0.0, %v1018
      %1020 = vmatmul.bf16.gmra.mxu0 %v868
      %v1021 = vpop.f32.mrf.mxu0
      %v1022 = vadd.f32 0.0, %v1021
      %v1023 = vpop.f32.mrf.mxu0
      %v1024 = vadd.f32 0.0, %v1023
      %1025 = vmatmul.bf16.gmra.mxu0 %v869
      %v1026 = vpop.f32.mrf.mxu0
      %v1027 = vadd.f32 0.0, %v1026
      %v1028 = vpop.f32.mrf.mxu0
      %v1029 = vadd.f32 0.0, %v1028
      %1030 = vmatmul.bf16.gmra.mxu0 %v870
      %v1031 = vpop.f32.mrf.mxu0
      %v1032 = vadd.f32 0.0, %v1031
      %v1033 = vpop.f32.mrf.mxu0
      %v1034 = vadd.f32 0.0, %v1033
      %1035 = vmatmul.bf16.gmra.mxu0 %v871
      %v1036 = vpop.f32.mrf.mxu0
      %v1037 = vadd.f32 0.0, %v1036
      %v1038 = vpop.f32.mrf.mxu0
      %v1039 = vadd.f32 0.0, %v1038
      %1040 = vmatmul.bf16.gmra.mxu0 %v872
      %v1041 = vpop.f32.mrf.mxu0
      %v1042 = vadd.f32 0.0, %v1041
      %v1043 = vpop.f32.mrf.mxu0
      %v1044 = vadd.f32 0.0, %v1043
      %1045 = vmatmul.bf16.gmra.mxu0 %v873
      %v1046 = vpop.f32.mrf.mxu0
      %v1047 = vadd.f32 0.0, %v1046
      %v1048 = vpop.f32.mrf.mxu0
      %v1049 = vadd.f32 0.0, %v1048
      %1050 = vmatmul.bf16.gmra.mxu0 %v874
      %v1051 = vpop.f32.mrf.mxu0
      %v1052 = vadd.f32 0.0, %v1051
      %v1053 = vpop.f32.mrf.mxu0
      %v1054 = vadd.f32 0.0, %v1053
      %1055 = vmatmul.bf16.gmra.mxu0 %v875
      %v1056 = vpop.f32.mrf.mxu0
      %v1057 = vadd.f32 0.0, %v1056
      %v1058 = vpop.f32.mrf.mxu0
      %v1059 = vadd.f32 0.0, %v1058
      %1060 = vmatmul.bf16.gmra.mxu0 %v876
      %v1061 = vpop.f32.mrf.mxu0
      %v1062 = vadd.f32 0.0, %v1061
      %v1063 = vpop.f32.mrf.mxu0
      %v1064 = vadd.f32 0.0, %v1063
      %1065 = vmatmul.bf16.gmra.mxu0 %v877
      %v1066 = vpop.f32.mrf.mxu0
      %v1067 = vadd.f32 0.0, %v1066
      %v1068 = vpop.f32.mrf.mxu0
      %v1069 = vadd.f32 0.0, %v1068
      %1070 = vdwg.mxu0
      %v1071 = vmax.f32 %v952, 0.0
      %v1072 = vmax.f32 %v954, 0.0
      %v1073 = vmax.f32 %v957, 0.0
      %v1074 = vmax.f32 %v959, 0.0
      %v1075 = vmax.f32 %v962, 0.0
      %v1076 = vmax.f32 %v964, 0.0
      %v1077 = vmax.f32 %v967, 0.0
      %v1078 = vmax.f32 %v969, 0.0
      %v1079 = vmax.f32 %v972, 0.0
      %v1080 = vmax.f32 %v974, 0.0
      %v1081 = vmax.f32 %v977, 0.0
      %v1082 = vmax.f32 %v979, 0.0
      %v1083 = vmax.f32 %v982, 0.0
      %v1084 = vmax.f32 %v984, 0.0
      %v1085 = vmax.f32 %v987, 0.0
      %v1086 = vmax.f32 %v989, 0.0
      %v1087 = vmax.f32 %v992, 0.0
      %v1088 = vmax.f32 %v994, 0.0
      %v1089 = vmax.f32 %v997, 0.0
      %v1090 = vmax.f32 %v999, 0.0
      %v1091 = vmax.f32 %v1002, 0.0
      %v1092 = vmax.f32 %v1004, 0.0
      %v1093 = vmax.f32 %v1007, 0.0
      %v1094 = vmax.f32 %v1009, 0.0
      %v1095 = vmax.f32 %v1012, 0.0
      %v1096 = vmax.f32 %v1014, 0.0
      %v1097 = vmax.f32 %v1017, 0.0
      %v1098 = vmax.f32 %v1019, 0.0
      %v1099 = vmax.f32 %v1022, 0.0
      %v1100 = vmax.f32 %v1024, 0.0
      %v1101 = vmax.f32 %v1027, 0.0
      %v1102 = vmax.f32 %v1029, 0.0
      %v1103 = vmax.f32 %v1032, 0.0
      %v1104 = vmax.f32 %v1034, 0.0
      %v1105 = vmax.f32 %v1037, 0.0
      %v1106 = vmax.f32 %v1039, 0.0
      %v1107 = vmax.f32 %v1042, 0.0
      %v1108 = vmax.f32 %v1044, 0.0
      %v1109 = vmax.f32 %v1047, 0.0
      %v1110 = vmax.f32 %v1049, 0.0
      %v1111 = vmax.f32 %v1052, 0.0
      %v1112 = vmax.f32 %v1054, 0.0
      %v1113 = vmax.f32 %v1057, 0.0
      %v1114 = vmax.f32 %v1059, 0.0
      %v1115 = vmax.f32 %v1062, 0.0
      %v1116 = vmax.f32 %v1064, 0.0
      %v1117 = vmax.f32 %v1067, 0.0
      %v1118 = vmax.f32 %v1069, 0.0
      %1119 = vst [vmem:[#allocation2 + $0x38] sm:$0xff] %v1071
      %1120 = vst [vmem:[#allocation2 + $0x40] sm:$0xff] %v1072
      %1121 = vst [vmem:[#allocation2 + $0x48] sm:$0xff] %v1073
      %1122 = vst [vmem:[#allocation2 + $0x50] sm:$0xff] %v1074
      %1123 = vst [vmem:[#allocation2 + $0x58] sm:$0xff] %v1075
      %1124 = vst [vmem:[#allocation2 + $0x60] sm:$0xff] %v1076
      %1125 = vst [vmem:[#allocation2 + $0x68] sm:$0xff] %v1077
      %1126 = vst [vmem:[#allocation2 + $0x70] sm:$0xff] %v1078
      %1127 = vst [vmem:[#allocation2 + $0x78] sm:$0xff] %v1079
      %1128 = vst [vmem:[#allocation2 + $0x80] sm:$0xff] %v1080
      %1129 = vst [vmem:[#allocation2 + $0x88] sm:$0xff] %v1081
      %1130 = vst [vmem:[#allocation2 + $0x90] sm:$0xff] %v1082
      %1131 = vst [vmem:[#allocation2 + $0x98] sm:$0xff] %v1083
      %1132 = vst [vmem:[#allocation2 + $0xa0] sm:$0xff] %v1084
      %1133 = vst [vmem:[#allocation2 + $0xa8] sm:$0xff] %v1085
      %1134 = vst [vmem:[#allocation2 + $0xb0] sm:$0xff] %v1086
      %1135 = vst [vmem:[#allocation2 + $0xb8] sm:$0xff] %v1087
      %1136 = vst [vmem:[#allocation2 + $0xc0] sm:$0xff] %v1088
      %1137 = vst [vmem:[#allocation2 + $0xc8] sm:$0xff] %v1089
      %1138 = vst [vmem:[#allocation2 + $0xd0] sm:$0xff] %v1090
      %1139 = vst [vmem:[#allocation2 + $0xd8] sm:$0xff] %v1091
      %1140 = vst [vmem:[#allocation2 + $0xe0] sm:$0xff] %v1092
      %1141 = vst [vmem:[#allocation2 + $0xe8] sm:$0xff] %v1093
      %1142 = vst [vmem:[#allocation2 + $0xf0] sm:$0xff] %v1094
      %1143 = vst [vmem:[#allocation2 + $0xf8] sm:$0xff] %v1095
      %1144 = vst [vmem:[#allocation2 + $0x100] sm:$0xff] %v1096
      %1145 = vst [vmem:[#allocation2 + $0x108] sm:$0xff] %v1097
      %1146 = vst [vmem:[#allocation2 + $0x110] sm:$0xff] %v1098
      %1147 = vst [vmem:[#allocation2 + $0x118] sm:$0xff] %v1099
      %1148 = vst [vmem:[#allocation2 + $0x120] sm:$0xff] %v1100
      %1149 = vst [vmem:[#allocation2 + $0x128] sm:$0xff] %v1101
      %1150 = vst [vmem:[#allocation2 + $0x130] sm:$0xff] %v1102
      %1151 = vst [vmem:[#allocation2 + $0x138] sm:$0xff] %v1103
      %1152 = vst [vmem:[#allocation2 + $0x140] sm:$0xff] %v1104
      %1153 = vst [vmem:[#allocation2 + $0x148] sm:$0xff] %v1105
      %1154 = vst [vmem:[#allocation2 + $0x150] sm:$0xff] %v1106
      %1155 = vst [vmem:[#allocation2 + $0x158] sm:$0xff] %v1107
      %1156 = vst [vmem:[#allocation2 + $0x160] sm:$0xff] %v1108
      %1157 = vst [vmem:[#allocation2 + $0x168] sm:$0xff] %v1109
      %1158 = vst [vmem:[#allocation2 + $0x170] sm:$0xff] %v1110
      %1159 = vst [vmem:[#allocation2 + $0x178] sm:$0xff] %v1111
      %1160 = vst [vmem:[#allocation2 + $0x180] sm:$0xff] %v1112
      %1161 = vst [vmem:[#allocation2 + $0x188] sm:$0xff] %v1113
      %1162 = vst [vmem:[#allocation2 + $0x190] sm:$0xff] %v1114
      %1163 = vst [vmem:[#allocation2 + $0x198] sm:$0xff] %v1115
      %1164 = vst [vmem:[#allocation2 + $0x1a0] sm:$0xff] %v1116
      %1165 = vst [vmem:[#allocation2 + $0x1a8] sm:$0xff] %v1117
      %1166 = vst [vmem:[#allocation2 + $0x1b0] sm:$0xff] %v1118
      %v1167 = vld [vmem:[#allocation2 + $0x1f] sm:$0xff]
      %v1168 = vld [vmem:[#allocation2 + $0x27] sm:$0xff]
      %v1169 = vld [vmem:[#allocation2 + $0x2f] sm:$0xff]
      %v1170 = vld [vmem:[#allocation2 + $0x37] sm:$0xff]
      %v1171 = vld [vmem:[#allocation2 + $0x3f] sm:$0xff]
      %v1172 = vld [vmem:[#allocation2 + $0x47] sm:$0xff]
      %v1173 = vld [vmem:[#allocation2 + $0x4f] sm:$0xff]
      %v1174 = vld [vmem:[#allocation2 + $0x57] sm:$0xff]
      %v1175 = vld [vmem:[#allocation2 + $0x5f] sm:$0xff]
      %v1176 = vld [vmem:[#allocation2 + $0x67] sm:$0xff]
      %v1177 = vld [vmem:[#allocation2 + $0x6f] sm:$0xff]
      %v1178 = vld [vmem:[#allocation2 + $0x77] sm:$0xff]
      %v1179 = vld [vmem:[#allocation2 + $0x7f] sm:$0xff]
      %v1180 = vld [vmem:[#allocation2 + $0x87] sm:$0xff]
      %v1181 = vld [vmem:[#allocation2 + $0x8f] sm:$0xff]
      %v1182 = vld [vmem:[#allocation2 + $0x97] sm:$0xff]
      %v1183 = vld [vmem:[#allocation2 + $0x9f] sm:$0xff]
      %v1184 = vld [vmem:[#allocation2 + $0xa7] sm:$0xff]
      %v1185 = vld [vmem:[#allocation2 + $0xaf] sm:$0xff]
      %v1186 = vld [vmem:[#allocation2 + $0xb7] sm:$0xff]
      %v1187 = vld [vmem:[#allocation2 + $0xbf] sm:$0xff]
      %v1188 = vld [vmem:[#allocation2 + $0xc7] sm:$0xff]
      %v1189 = vld [vmem:[#allocation2 + $0xcf] sm:$0xff]
      %v1190 = vld [vmem:[#allocation2 + $0xd7] sm:$0xff]
      %v1191 = vld [vmem:[#allocation2 + $0xdf] sm:$0xff]
      %v1192 = vld [vmem:[#allocation2 + $0xe7] sm:$0xff]
      %v1193 = vld [vmem:[#allocation2 + $0xef] sm:$0xff]
      %v1194 = vld [vmem:[#allocation2 + $0xf7] sm:$0xff]
      %v1195 = vld [vmem:[#allocation2 + $0xff] sm:$0xff]
      %v1196 = vld [vmem:[#allocation2 + $0x107] sm:$0xff]
      %v1197 = vld [vmem:[#allocation2 + $0x10f] sm:$0xff]
      %v1198 = vld [vmem:[#allocation2 + $0x117] sm:$0xff]
      %v1199 = vld [vmem:[#allocation2 + $0x11f] sm:$0xff]
      %v1200 = vld [vmem:[#allocation2 + $0x127] sm:$0xff]
      %v1201 = vld [vmem:[#allocation2 + $0x12f] sm:$0xff]
      %v1202 = vld [vmem:[#allocation2 + $0x137] sm:$0xff]
      %v1203 = vld [vmem:[#allocation2 + $0x13f] sm:$0xff]
      %v1204 = vld [vmem:[#allocation2 + $0x147] sm:$0xff]
      %v1205 = vld [vmem:[#allocation2 + $0x14f] sm:$0xff]
      %v1206 = vld [vmem:[#allocation2 + $0x157] sm:$0xff]
      %v1207 = vld [vmem:[#allocation2 + $0x15f] sm:$0xff]
      %v1208 = vld [vmem:[#allocation2 + $0x167] sm:$0xff]
      %v1209 = vld [vmem:[#allocation2 + $0x16f] sm:$0xff]
      %v1210 = vld [vmem:[#allocation2 + $0x177] sm:$0xff]
      %v1211 = vld [vmem:[#allocation2 + $0x17f] sm:$0xff]
      %v1212 = vld [vmem:[#allocation2 + $0x187] sm:$0xff]
      %v1213 = vld [vmem:[#allocation2 + $0x18f] sm:$0xff]
      %v1214 = vld [vmem:[#allocation2 + $0x197] sm:$0xff]
      %v1215 = vpack.c.bf16 %v1168, %v1167
      %v1216 = vpack.c.bf16 %v1170, %v1169
      %v1217 = vpack.c.bf16 %v1172, %v1171
      %v1218 = vpack.c.bf16 %v1174, %v1173
      %v1219 = vpack.c.bf16 %v1176, %v1175
      %v1220 = vpack.c.bf16 %v1178, %v1177
      %v1221 = vpack.c.bf16 %v1180, %v1179
      %v1222 = vpack.c.bf16 %v1182, %v1181
      %v1223 = vpack.c.bf16 %v1184, %v1183
      %v1224 = vpack.c.bf16 %v1186, %v1185
      %v1225 = vpack.c.bf16 %v1188, %v1187
      %v1226 = vpack.c.bf16 %v1190, %v1189
      %v1227 = vpack.c.bf16 %v1192, %v1191
      %v1228 = vpack.c.bf16 %v1194, %v1193
      %v1229 = vpack.c.bf16 %v1196, %v1195
      %v1230 = vpack.c.bf16 %v1198, %v1197
      %v1231 = vpack.c.bf16 %v1200, %v1199
      %v1232 = vpack.c.bf16 %v1202, %v1201
      %v1233 = vpack.c.bf16 %v1204, %v1203
      %v1234 = vpack.c.bf16 %v1206, %v1205
      %v1235 = vpack.c.bf16 %v1208, %v1207
      %v1236 = vpack.c.bf16 %v1210, %v1209
      %v1237 = vpack.c.bf16 %v1212, %v1211
      %v1238 = vpack.c.bf16 %v1214, %v1213
      %v1239 = vld [vmem:[%s3] sm:$0xf]
      %v1240 = vld [vmem:[%s3 + $0x4] sm:$0xf]
      %v1241 = vld [vmem:[%s3 + $0x8] sm:$0xf]
      %v1242 = vld [vmem:[%s3 + $0xc] sm:$0xf]
      %v1243 = vld [vmem:[%s3 + $0x10] sm:$0xf]
      %v1244 = vld [vmem:[%s3 + $0x14] sm:$0xf]
      %v1245 = vld [vmem:[%s3 + $0x18] sm:$0xf]
      %v1246 = vld [vmem:[%s3 + $0x1c] sm:$0xf]
      %v1247 = vld [vmem:[%s3 + $0x20] sm:$0xf]
      %v1248 = vld [vmem:[%s3 + $0x24] sm:$0xf]
      %v1249 = vld [vmem:[%s3 + $0x28] sm:$0xf]
      %v1250 = vld [vmem:[%s3 + $0x2c] sm:$0xf]
      %v1251 = vld [vmem:[%s3 + $0x30] sm:$0xf]
      %v1252 = vld [vmem:[%s3 + $0x34] sm:$0xf]
      %v1253 = vld [vmem:[%s3 + $0x38] sm:$0xf]
      %v1254 = vld [vmem:[%s3 + $0x3c] sm:$0xf]
      %v1255 = vld [vmem:[#allocation2 + $0x20] sm:$0xff]
      %v1256 = vld [vmem:[#allocation2 + $0x28] sm:$0xff]
      %v1257 = vld [vmem:[#allocation2 + $0x30] sm:$0xff]
      %v1258 = vld [vmem:[#allocation2 + $0x38] sm:$0xff]
      %v1259 = vld [vmem:[#allocation2 + $0x40] sm:$0xff]
      %v1260 = vld [vmem:[#allocation2 + $0x48] sm:$0xff]
      %v1261 = vld [vmem:[#allocation2 + $0x50] sm:$0xff]
      %v1262 = vld [vmem:[#allocation2 + $0x58] sm:$0xff]
      %v1263 = vld [vmem:[#allocation2 + $0x60] sm:$0xff]
      %v1264 = vld [vmem:[#allocation2 + $0x68] sm:$0xff]
      %v1265 = vld [vmem:[#allocation2 + $0x70] sm:$0xff]
      %v1266 = vld [vmem:[#allocation2 + $0x78] sm:$0xff]
      %v1267 = vld [vmem:[#allocation2 + $0x80] sm:$0xff]
      %v1268 = vld [vmem:[#allocation2 + $0x88] sm:$0xff]
      %v1269 = vld [vmem:[#allocation2 + $0x90] sm:$0xff]
      %v1270 = vld [vmem:[#allocation2 + $0x98] sm:$0xff]
      %v1271 = vld [vmem:[#allocation2 + $0xa0] sm:$0xff]
      %v1272 = vld [vmem:[#allocation2 + $0xa8] sm:$0xff]
      %v1273 = vld [vmem:[#allocation2 + $0xb0] sm:$0xff]
      %v1274 = vld [vmem:[#allocation2 + $0xb8] sm:$0xff]
      %v1275 = vld [vmem:[#allocation2 + $0xc0] sm:$0xff]
      %v1276 = vld [vmem:[#allocation2 + $0xc8] sm:$0xff]
      %v1277 = vld [vmem:[#allocation2 + $0xd0] sm:$0xff]
      %v1278 = vld [vmem:[#allocation2 + $0xd8] sm:$0xff]
      %v1279 = vld [vmem:[#allocation2 + $0xe0] sm:$0xff]
      %v1280 = vld [vmem:[#allocation2 + $0xe8] sm:$0xff]
      %v1281 = vld [vmem:[#allocation2 + $0xf0] sm:$0xff]
      %v1282 = vld [vmem:[#allocation2 + $0xf8] sm:$0xff]
      %v1283 = vld [vmem:[#allocation2 + $0x100] sm:$0xff]
      %v1284 = vld [vmem:[#allocation2 + $0x108] sm:$0xff]
      %v1285 = vld [vmem:[#allocation2 + $0x110] sm:$0xff]
      %v1286 = vld [vmem:[#allocation2 + $0x118] sm:$0xff]
      %v1287 = vld [vmem:[#allocation2 + $0x120] sm:$0xff]
      %v1288 = vld [vmem:[#allocation2 + $0x128] sm:$0xff]
      %v1289 = vld [vmem:[#allocation2 + $0x130] sm:$0xff]
      %v1290 = vld [vmem:[#allocation2 + $0x138] sm:$0xff]
      %v1291 = vld [vmem:[#allocation2 + $0x140] sm:$0xff]
      %v1292 = vld [vmem:[#allocation2 + $0x148] sm:$0xff]
      %v1293 = vld [vmem:[#allocation2 + $0x150] sm:$0xff]
      %v1294 = vld [vmem:[#allocation2 + $0x158] sm:$0xff]
      %v1295 = vld [vmem:[#allocation2 + $0x160] sm:$0xff]
      %v1296 = vld [vmem:[#allocation2 + $0x168] sm:$0xff]
      %v1297 = vld [vmem:[#allocation2 + $0x170] sm:$0xff]
      %v1298 = vld [vmem:[#allocation2 + $0x178] sm:$0xff]
      %v1299 = vld [vmem:[#allocation2 + $0x180] sm:$0xff]
      %v1300 = vld [vmem:[#allocation2 + $0x188] sm:$0xff]
      %v1301 = vld [vmem:[#allocation2 + $0x190] sm:$0xff]
      %v1302 = vld [vmem:[#allocation2 + $0x198] sm:$0xff]
      %v1303 = vpack.c.bf16 %v1256, %v1255
      %v1304 = vpack.c.bf16 %v1258, %v1257
      %v1305 = vpack.c.bf16 %v1260, %v1259
      %v1306 = vpack.c.bf16 %v1262, %v1261
      %v1307 = vpack.c.bf16 %v1264, %v1263
      %v1308 = vpack.c.bf16 %v1266, %v1265
      %v1309 = vpack.c.bf16 %v1268, %v1267
      %v1310 = vpack.c.bf16 %v1270, %v1269
      %v1311 = vpack.c.bf16 %v1272, %v1271
      %v1312 = vpack.c.bf16 %v1274, %v1273
      %v1313 = vpack.c.bf16 %v1276, %v1275
      %v1314 = vpack.c.bf16 %v1278, %v1277
      %v1315 = vpack.c.bf16 %v1280, %v1279
      %v1316 = vpack.c.bf16 %v1282, %v1281
      %v1317 = vpack.c.bf16 %v1284, %v1283
      %v1318 = vpack.c.bf16 %v1286, %v1285
      %v1319 = vpack.c.bf16 %v1288, %v1287
      %v1320 = vpack.c.bf16 %v1290, %v1289
      %v1321 = vpack.c.bf16 %v1292, %v1291
      %v1322 = vpack.c.bf16 %v1294, %v1293
      %v1323 = vpack.c.bf16 %v1296, %v1295
      %v1324 = vpack.c.bf16 %v1298, %v1297
      %v1325 = vpack.c.bf16 %v1300, %v1299
      %v1326 = vpack.c.bf16 %v1302, %v1301
      %s1327 = scalar_lea.vmem %s3, 64
      %v1328 = vld [vmem:[%s1327] sm:$0xf]
      %v1329 = vld [vmem:[%s1327 + $0x4] sm:$0xf]
      %v1330 = vld [vmem:[%s1327 + $0x8] sm:$0xf]
      %v1331 = vld [vmem:[%s1327 + $0xc] sm:$0xf]
      %v1332 = vld [vmem:[%s1327 + $0x10] sm:$0xf]
      %v1333 = vld [vmem:[%s1327 + $0x14] sm:$0xf]
      %v1334 = vld [vmem:[%s1327 + $0x18] sm:$0xf]
      %v1335 = vld [vmem:[%s1327 + $0x1c] sm:$0xf]
      %v1336 = vld [vmem:[%s1327 + $0x20] sm:$0xf]
      %v1337 = vld [vmem:[%s1327 + $0x24] sm:$0xf]
      %v1338 = vld [vmem:[%s1327 + $0x28] sm:$0xf]
      %v1339 = vld [vmem:[%s1327 + $0x2c] sm:$0xf]
      %v1340 = vld [vmem:[%s1327 + $0x30] sm:$0xf]
      %v1341 = vld [vmem:[%s1327 + $0x34] sm:$0xf]
      %v1342 = vld [vmem:[%s1327 + $0x38] sm:$0xf]
      %v1343 = vld [vmem:[%s1327 + $0x3c] sm:$0xf]
      %v1360 = vunpack.c.l.b16 %v1328
      %v1361 = vunpack.c.l.b16 %v1329
      %v1362 = vunpack.c.l.b16 %v1330
      %v1363 = vunpack.c.l.b16 %v1331
      %v1364 = vunpack.c.l.b16 %v1332
      %v1365 = vunpack.c.l.b16 %v1333
      %v1366 = vunpack.c.l.b16 %v1334
      %v1367 = vunpack.c.l.b16 %v1335
      %v1368 = vunpack.c.l.b16 %v1336
      %v1369 = vunpack.c.l.b16 %v1337
      %v1370 = vunpack.c.l.b16 %v1338
      %v1371 = vunpack.c.l.b16 %v1339
      %v1372 = vunpack.c.l.b16 %v1340
      %v1373 = vunpack.c.l.b16 %v1341
      %v1374 = vunpack.c.l.b16 %v1342
      %v1375 = vunpack.c.l.b16 %v1343
      %v1376 = vpack.c.b16 %v1361, %v1360
      %v1377 = vpack.c.b16 %v1363, %v1362
      %v1378 = vpack.c.b16 %v1365, %v1364
      %v1379 = vpack.c.b16 %v1367, %v1366
      %v1380 = vpack.c.b16 %v1369, %v1368
      %v1381 = vpack.c.b16 %v1371, %v1370
      %v1382 = vpack.c.b16 %v1373, %v1372
      %v1383 = vpack.c.b16 %v1375, %v1374
      %1392 = vmatpush.bf16.msra.mxu0 %v1383
      %1393 = vmatpush.bf16.msra.mxu0 %v1382
      %1394 = vmatpush.bf16.msra.mxu0 %v1381
      %1395 = vmatpush.bf16.msra.mxu0 %v1380
      %1396 = vmatpush.bf16.msra.mxu0 %v1379
      %1397 = vmatpush.bf16.msra.mxu0 %v1378
      %1398 = vmatpush.bf16.msra.mxu0 %v1377
      %1399 = vmatpush.bf16.msra.mxu0 %v1376
      %1400 = vmatmul.bf16.gmra.mxu0 %v1303
      %v1401 = vpop.f32.mrf.mxu0
      %v1402 = vadd.f32 0.0, %v1401
      %v1403 = vpop.f32.mrf.mxu0
      %v1404 = vadd.f32 0.0, %v1403
      %1405 = vmatmul.bf16.gmra.mxu0 %v1304
      %v1406 = vpop.f32.mrf.mxu0
      %v1407 = vadd.f32 0.0, %v1406
      %v1408 = vpop.f32.mrf.mxu0
      %v1409 = vadd.f32 0.0, %v1408
      %1410 = vmatmul.bf16.gmra.mxu0 %v1305
      %v1411 = vpop.f32.mrf.mxu0
      %v1412 = vadd.f32 0.0, %v1411
      %v1413 = vpop.f32.mrf.mxu0
      %v1414 = vadd.f32 0.0, %v1413
      %1415 = vmatmul.bf16.gmra.mxu0 %v1306
      %v1416 = vpop.f32.mrf.mxu0
      %v1417 = vadd.f32 0.0, %v1416
      %v1418 = vpop.f32.mrf.mxu0
      %v1419 = vadd.f32 0.0, %v1418
      %1420 = vmatmul.bf16.gmra.mxu0 %v1307
      %v1421 = vpop.f32.mrf.mxu0
      %v1422 = vadd.f32 0.0, %v1421
      %v1423 = vpop.f32.mrf.mxu0
      %v1424 = vadd.f32 0.0, %v1423
      %1425 = vmatmul.bf16.gmra.mxu0 %v1308
      %v1426 = vpop.f32.mrf.mxu0
      %v1427 = vadd.f32 0.0, %v1426
      %v1428 = vpop.f32.mrf.mxu0
      %v1429 = vadd.f32 0.0, %v1428
      %1430 = vmatmul.bf16.gmra.mxu0 %v1309
      %v1431 = vpop.f32.mrf.mxu0
      %v1432 = vadd.f32 0.0, %v1431
      %v1433 = vpop.f32.mrf.mxu0
      %v1434 = vadd.f32 0.0, %v1433
      %1435 = vmatmul.bf16.gmra.mxu0 %v1310
      %v1436 = vpop.f32.mrf.mxu0
      %v1437 = vadd.f32 0.0, %v1436
      %v1438 = vpop.f32.mrf.mxu0
      %v1439 = vadd.f32 0.0, %v1438
      %1440 = vmatmul.bf16.gmra.mxu0 %v1311
      %v1441 = vpop.f32.mrf.mxu0
      %v1442 = vadd.f32 0.0, %v1441
      %v1443 = vpop.f32.mrf.mxu0
      %v1444 = vadd.f32 0.0, %v1443
      %1445 = vmatmul.bf16.gmra.mxu0 %v1312
      %v1446 = vpop.f32.mrf.mxu0
      %v1447 = vadd.f32 0.0, %v1446
      %v1448 = vpop.f32.mrf.mxu0
      %v1449 = vadd.f32 0.0, %v1448
      %1450 = vmatmul.bf16.gmra.mxu0 %v1313
      %v1451 = vpop.f32.mrf.mxu0
      %v1452 = vadd.f32 0.0, %v1451
      %v1453 = vpop.f32.mrf.mxu0
      %v1454 = vadd.f32 0.0, %v1453
      %1455 = vmatmul.bf16.gmra.mxu0 %v1314
      %v1456 = vpop.f32.mrf.mxu0
      %v1457 = vadd.f32 0.0, %v1456
      %v1458 = vpop.f32.mrf.mxu0
      %v1459 = vadd.f32 0.0, %v1458
      %1460 = vmatmul.bf16.gmra.mxu0 %v1315
      %v1461 = vpop.f32.mrf.mxu0
      %v1462 = vadd.f32 0.0, %v1461
      %v1463 = vpop.f32.mrf.mxu0
      %v1464 = vadd.f32 0.0, %v1463
      %1465 = vmatmul.bf16.gmra.mxu0 %v1316
      %v1466 = vpop.f32.mrf.mxu0
      %v1467 = vadd.f32 0.0, %v1466
      %v1468 = vpop.f32.mrf.mxu0
      %v1469 = vadd.f32 0.0, %v1468
      %1470 = vmatmul.bf16.gmra.mxu0 %v1317
      %v1471 = vpop.f32.mrf.mxu0
      %v1472 = vadd.f32 0.0, %v1471
      %v1473 = vpop.f32.mrf.mxu0
      %v1474 = vadd.f32 0.0, %v1473
      %1475 = vmatmul.bf16.gmra.mxu0 %v1318
      %v1476 = vpop.f32.mrf.mxu0
      %v1477 = vadd.f32 0.0, %v1476
      %v1478 = vpop.f32.mrf.mxu0
      %v1479 = vadd.f32 0.0, %v1478
      %1480 = vmatmul.bf16.gmra.mxu0 %v1319
      %v1481 = vpop.f32.mrf.mxu0
      %v1482 = vadd.f32 0.0, %v1481
      %v1483 = vpop.f32.mrf.mxu0
      %v1484 = vadd.f32 0.0, %v1483
      %1485 = vmatmul.bf16.gmra.mxu0 %v1320
      %v1486 = vpop.f32.mrf.mxu0
      %v1487 = vadd.f32 0.0, %v1486
      %v1488 = vpop.f32.mrf.mxu0
      %v1489 = vadd.f32 0.0, %v1488
      %1490 = vmatmul.bf16.gmra.mxu0 %v1321
      %v1491 = vpop.f32.mrf.mxu0
      %v1492 = vadd.f32 0.0, %v1491
      %v1493 = vpop.f32.mrf.mxu0
      %v1494 = vadd.f32 0.0, %v1493
      %1495 = vmatmul.bf16.gmra.mxu0 %v1322
      %v1496 = vpop.f32.mrf.mxu0
      %v1497 = vadd.f32 0.0, %v1496
      %v1498 = vpop.f32.mrf.mxu0
      %v1499 = vadd.f32 0.0, %v1498
      %1500 = vmatmul.bf16.gmra.mxu0 %v1323
      %v1501 = vpop.f32.mrf.mxu0
      %v1502 = vadd.f32 0.0, %v1501
      %v1503 = vpop.f32.mrf.mxu0
      %v1504 = vadd.f32 0.0, %v1503
      %1505 = vmatmul.bf16.gmra.mxu0 %v1324
      %v1506 = vpop.f32.mrf.mxu0
      %v1507 = vadd.f32 0.0, %v1506
      %v1508 = vpop.f32.mrf.mxu0
      %v1509 = vadd.f32 0.0, %v1508
      %1510 = vmatmul.bf16.gmra.mxu0 %v1325
      %v1511 = vpop.f32.mrf.mxu0
      %v1512 = vadd.f32 0.0, %v1511
      %v1513 = vpop.f32.mrf.mxu0
      %v1514 = vadd.f32 0.0, %v1513
      %1515 = vmatmul.bf16.gmra.mxu0 %v1326
      %v1516 = vpop.f32.mrf.mxu0
      %v1517 = vadd.f32 0.0, %v1516
      %v1518 = vpop.f32.mrf.mxu0
      %v1519 = vadd.f32 0.0, %v1518
      %1520 = vdwg.mxu0
      %v1537 = vunpack.c.l.b16 %v1239
      %v1538 = vunpack.c.l.b16 %v1240
      %v1539 = vunpack.c.l.b16 %v1241
      %v1540 = vunpack.c.l.b16 %v1242
      %v1541 = vunpack.c.l.b16 %v1243
      %v1542 = vunpack.c.l.b16 %v1244
      %v1543 = vunpack.c.l.b16 %v1245
      %v1544 = vunpack.c.l.b16 %v1246
      %v1545 = vunpack.c.l.b16 %v1247
      %v1546 = vunpack.c.l.b16 %v1248
      %v1547 = vunpack.c.l.b16 %v1249
      %v1548 = vunpack.c.l.b16 %v1250
      %v1549 = vunpack.c.l.b16 %v1251
      %v1550 = vunpack.c.l.b16 %v1252
      %v1551 = vunpack.c.l.b16 %v1253
      %v1552 = vunpack.c.l.b16 %v1254
      %v1553 = vpack.c.b16 %v1538, %v1537
      %v1554 = vpack.c.b16 %v1540, %v1539
      %v1555 = vpack.c.b16 %v1542, %v1541
      %v1556 = vpack.c.b16 %v1544, %v1543
      %v1557 = vpack.c.b16 %v1546, %v1545
      %v1558 = vpack.c.b16 %v1548, %v1547
      %v1559 = vpack.c.b16 %v1550, %v1549
      %v1560 = vpack.c.b16 %v1552, %v1551
      %1569 = vmatpush.bf16.msra.mxu0 %v1560
      %1570 = vmatpush.bf16.msra.mxu0 %v1559
      %1571 = vmatpush.bf16.msra.mxu0 %v1558
      %1572 = vmatpush.bf16.msra.mxu0 %v1557
      %1573 = vmatpush.bf16.msra.mxu0 %v1556
      %1574 = vmatpush.bf16.msra.mxu0 %v1555
      %1575 = vmatpush.bf16.msra.mxu0 %v1554
      %1576 = vmatpush.bf16.msra.mxu0 %v1553
      %1577 = vmatmul.bf16.gmra.mxu0 %v1215
      %v1578 = vpop.f32.mrf.mxu0
      %v1579 = vadd.f32 %v1402, %v1578
      %v1580 = vpop.f32.mrf.mxu0
      %v1581 = vadd.f32 %v1404, %v1580
      %1582 = vmatmul.bf16.gmra.mxu0 %v1216
      %v1583 = vpop.f32.mrf.mxu0
      %v1584 = vadd.f32 %v1407, %v1583
      %v1585 = vpop.f32.mrf.mxu0
      %v1586 = vadd.f32 %v1409, %v1585
      %1587 = vmatmul.bf16.gmra.mxu0 %v1217
      %v1588 = vpop.f32.mrf.mxu0
      %v1589 = vadd.f32 %v1412, %v1588
      %v1590 = vpop.f32.mrf.mxu0
      %v1591 = vadd.f32 %v1414, %v1590
      %1592 = vmatmul.bf16.gmra.mxu0 %v1218
      %v1593 = vpop.f32.mrf.mxu0
      %v1594 = vadd.f32 %v1417, %v1593
      %v1595 = vpop.f32.mrf.mxu0
      %v1596 = vadd.f32 %v1419, %v1595
      %1597 = vmatmul.bf16.gmra.mxu0 %v1219
      %v1598 = vpop.f32.mrf.mxu0
      %v1599 = vadd.f32 %v1422, %v1598
      %v1600 = vpop.f32.mrf.mxu0
      %v1601 = vadd.f32 %v1424, %v1600
      %1602 = vmatmul.bf16.gmra.mxu0 %v1220
      %v1603 = vpop.f32.mrf.mxu0
      %v1604 = vadd.f32 %v1427, %v1603
      %v1605 = vpop.f32.mrf.mxu0
      %v1606 = vadd.f32 %v1429, %v1605
      %1607 = vmatmul.bf16.gmra.mxu0 %v1221
      %v1608 = vpop.f32.mrf.mxu0
      %v1609 = vadd.f32 %v1432, %v1608
      %v1610 = vpop.f32.mrf.mxu0
      %v1611 = vadd.f32 %v1434, %v1610
      %1612 = vmatmul.bf16.gmra.mxu0 %v1222
      %v1613 = vpop.f32.mrf.mxu0
      %v1614 = vadd.f32 %v1437, %v1613
      %v1615 = vpop.f32.mrf.mxu0
      %v1616 = vadd.f32 %v1439, %v1615
      %1617 = vmatmul.bf16.gmra.mxu0 %v1223
      %v1618 = vpop.f32.mrf.mxu0
      %v1619 = vadd.f32 %v1442, %v1618
      %v1620 = vpop.f32.mrf.mxu0
      %v1621 = vadd.f32 %v1444, %v1620
      %1622 = vmatmul.bf16.gmra.mxu0 %v1224
      %v1623 = vpop.f32.mrf.mxu0
      %v1624 = vadd.f32 %v1447, %v1623
      %v1625 = vpop.f32.mrf.mxu0
      %v1626 = vadd.f32 %v1449, %v1625
      %1627 = vmatmul.bf16.gmra.mxu0 %v1225
      %v1628 = vpop.f32.mrf.mxu0
      %v1629 = vadd.f32 %v1452, %v1628
      %v1630 = vpop.f32.mrf.mxu0
      %v1631 = vadd.f32 %v1454, %v1630
      %1632 = vmatmul.bf16.gmra.mxu0 %v1226
      %v1633 = vpop.f32.mrf.mxu0
      %v1634 = vadd.f32 %v1457, %v1633
      %v1635 = vpop.f32.mrf.mxu0
      %v1636 = vadd.f32 %v1459, %v1635
      %1637 = vmatmul.bf16.gmra.mxu0 %v1227
      %v1638 = vpop.f32.mrf.mxu0
      %v1639 = vadd.f32 %v1462, %v1638
      %v1640 = vpop.f32.mrf.mxu0
      %v1641 = vadd.f32 %v1464, %v1640
      %1642 = vmatmul.bf16.gmra.mxu0 %v1228
      %v1643 = vpop.f32.mrf.mxu0
      %v1644 = vadd.f32 %v1467, %v1643
      %v1645 = vpop.f32.mrf.mxu0
      %v1646 = vadd.f32 %v1469, %v1645
      %1647 = vmatmul.bf16.gmra.mxu0 %v1229
      %v1648 = vpop.f32.mrf.mxu0
      %v1649 = vadd.f32 %v1472, %v1648
      %v1650 = vpop.f32.mrf.mxu0
      %v1651 = vadd.f32 %v1474, %v1650
      %1652 = vmatmul.bf16.gmra.mxu0 %v1230
      %v1653 = vpop.f32.mrf.mxu0
      %v1654 = vadd.f32 %v1477, %v1653
      %v1655 = vpop.f32.mrf.mxu0
      %v1656 = vadd.f32 %v1479, %v1655
      %1657 = vmatmul.bf16.gmra.mxu0 %v1231
      %v1658 = vpop.f32.mrf.mxu0
      %v1659 = vadd.f32 %v1482, %v1658
      %v1660 = vpop.f32.mrf.mxu0
      %v1661 = vadd.f32 %v1484, %v1660
      %1662 = vmatmul.bf16.gmra.mxu0 %v1232
      %v1663 = vpop.f32.mrf.mxu0
      %v1664 = vadd.f32 %v1487, %v1663
      %v1665 = vpop.f32.mrf.mxu0
      %v1666 = vadd.f32 %v1489, %v1665
      %1667 = vmatmul.bf16.gmra.mxu0 %v1233
      %v1668 = vpop.f32.mrf.mxu0
      %v1669 = vadd.f32 %v1492, %v1668
      %v1670 = vpop.f32.mrf.mxu0
      %v1671 = vadd.f32 %v1494, %v1670
      %1672 = vmatmul.bf16.gmra.mxu0 %v1234
      %v1673 = vpop.f32.mrf.mxu0
      %v1674 = vadd.f32 %v1497, %v1673
      %v1675 = vpop.f32.mrf.mxu0
      %v1676 = vadd.f32 %v1499, %v1675
      %1677 = vmatmul.bf16.gmra.mxu0 %v1235
      %v1678 = vpop.f32.mrf.mxu0
      %v1679 = vadd.f32 %v1502, %v1678
      %v1680 = vpop.f32.mrf.mxu0
      %v1681 = vadd.f32 %v1504, %v1680
      %1682 = vmatmul.bf16.gmra.mxu0 %v1236
      %v1683 = vpop.f32.mrf.mxu0
      %v1684 = vadd.f32 %v1507, %v1683
      %v1685 = vpop.f32.mrf.mxu0
      %v1686 = vadd.f32 %v1509, %v1685
      %1687 = vmatmul.bf16.gmra.mxu0 %v1237
      %v1688 = vpop.f32.mrf.mxu0
      %v1689 = vadd.f32 %v1512, %v1688
      %v1690 = vpop.f32.mrf.mxu0
      %v1691 = vadd.f32 %v1514, %v1690
      %1692 = vmatmul.bf16.gmra.mxu0 %v1238
      %v1693 = vpop.f32.mrf.mxu0
      %v1694 = vadd.f32 %v1517, %v1693
      %v1695 = vpop.f32.mrf.mxu0
      %v1696 = vadd.f32 %v1519, %v1695
      %1697 = vdwg.mxu0
      %v1698 = vld [vmem:[#allocation2 + $0x21] sm:$0xff]
      %v1699 = vld [vmem:[#allocation2 + $0x29] sm:$0xff]
      %v1700 = vld [vmem:[#allocation2 + $0x31] sm:$0xff]
      %v1701 = vld [vmem:[#allocation2 + $0x39] sm:$0xff]
      %v1702 = vld [vmem:[#allocation2 + $0x41] sm:$0xff]
      %v1703 = vld [vmem:[#allocation2 + $0x49] sm:$0xff]
      %v1704 = vld [vmem:[#allocation2 + $0x51] sm:$0xff]
      %v1705 = vld [vmem:[#allocation2 + $0x59] sm:$0xff]
      %v1706 = vld [vmem:[#allocation2 + $0x61] sm:$0xff]
      %v1707 = vld [vmem:[#allocation2 + $0x69] sm:$0xff]
      %v1708 = vld [vmem:[#allocation2 + $0x71] sm:$0xff]
      %v1709 = vld [vmem:[#allocation2 + $0x79] sm:$0xff]
      %v1710 = vld [vmem:[#allocation2 + $0x81] sm:$0xff]
      %v1711 = vld [vmem:[#allocation2 + $0x89] sm:$0xff]
      %v1712 = vld [vmem:[#allocation2 + $0x91] sm:$0xff]
      %v1713 = vld [vmem:[#allocation2 + $0x99] sm:$0xff]
      %v1714 = vld [vmem:[#allocation2 + $0xa1] sm:$0xff]
      %v1715 = vld [vmem:[#allocation2 + $0xa9] sm:$0xff]
      %v1716 = vld [vmem:[#allocation2 + $0xb1] sm:$0xff]
      %v1717 = vld [vmem:[#allocation2 + $0xb9] sm:$0xff]
      %v1718 = vld [vmem:[#allocation2 + $0xc1] sm:$0xff]
      %v1719 = vld [vmem:[#allocation2 + $0xc9] sm:$0xff]
      %v1720 = vld [vmem:[#allocation2 + $0xd1] sm:$0xff]
      %v1721 = vld [vmem:[#allocation2 + $0xd9] sm:$0xff]
      %v1722 = vld [vmem:[#allocation2 + $0xe1] sm:$0xff]
      %v1723 = vld [vmem:[#allocation2 + $0xe9] sm:$0xff]
      %v1724 = vld [vmem:[#allocation2 + $0xf1] sm:$0xff]
      %v1725 = vld [vmem:[#allocation2 + $0xf9] sm:$0xff]
      %v1726 = vld [vmem:[#allocation2 + $0x101] sm:$0xff]
      %v1727 = vld [vmem:[#allocation2 + $0x109] sm:$0xff]
      %v1728 = vld [vmem:[#allocation2 + $0x111] sm:$0xff]
      %v1729 = vld [vmem:[#allocation2 + $0x119] sm:$0xff]
      %v1730 = vld [vmem:[#allocation2 + $0x121] sm:$0xff]
      %v1731 = vld [vmem:[#allocation2 + $0x129] sm:$0xff]
      %v1732 = vld [vmem:[#allocation2 + $0x131] sm:$0xff]
      %v1733 = vld [vmem:[#allocation2 + $0x139] sm:$0xff]
      %v1734 = vld [vmem:[#allocation2 + $0x141] sm:$0xff]
      %v1735 = vld [vmem:[#allocation2 + $0x149] sm:$0xff]
      %v1736 = vld [vmem:[#allocation2 + $0x151] sm:$0xff]
      %v1737 = vld [vmem:[#allocation2 + $0x159] sm:$0xff]
      %v1738 = vld [vmem:[#allocation2 + $0x161] sm:$0xff]
      %v1739 = vld [vmem:[#allocation2 + $0x169] sm:$0xff]
      %v1740 = vld [vmem:[#allocation2 + $0x171] sm:$0xff]
      %v1741 = vld [vmem:[#allocation2 + $0x179] sm:$0xff]
      %v1742 = vld [vmem:[#allocation2 + $0x181] sm:$0xff]
      %v1743 = vld [vmem:[#allocation2 + $0x189] sm:$0xff]
      %v1744 = vld [vmem:[#allocation2 + $0x191] sm:$0xff]
      %v1745 = vld [vmem:[#allocation2 + $0x199] sm:$0xff]
      %v1746 = vpack.c.bf16 %v1699, %v1698
      %v1747 = vpack.c.bf16 %v1701, %v1700
      %v1748 = vpack.c.bf16 %v1703, %v1702
      %v1749 = vpack.c.bf16 %v1705, %v1704
      %v1750 = vpack.c.bf16 %v1707, %v1706
      %v1751 = vpack.c.bf16 %v1709, %v1708
      %v1752 = vpack.c.bf16 %v1711, %v1710
      %v1753 = vpack.c.bf16 %v1713, %v1712
      %v1754 = vpack.c.bf16 %v1715, %v1714
      %v1755 = vpack.c.bf16 %v1717, %v1716
      %v1756 = vpack.c.bf16 %v1719, %v1718
      %v1757 = vpack.c.bf16 %v1721, %v1720
      %v1758 = vpack.c.bf16 %v1723, %v1722
      %v1759 = vpack.c.bf16 %v1725, %v1724
      %v1760 = vpack.c.bf16 %v1727, %v1726
      %v1761 = vpack.c.bf16 %v1729, %v1728
      %v1762 = vpack.c.bf16 %v1731, %v1730
      %v1763 = vpack.c.bf16 %v1733, %v1732
      %v1764 = vpack.c.bf16 %v1735, %v1734
      %v1765 = vpack.c.bf16 %v1737, %v1736
      %v1766 = vpack.c.bf16 %v1739, %v1738
      %v1767 = vpack.c.bf16 %v1741, %v1740
      %v1768 = vpack.c.bf16 %v1743, %v1742
      %v1769 = vpack.c.bf16 %v1745, %v1744
      %s1770 = scalar_lea.vmem %s3, 128
      %v1771 = vld [vmem:[%s1770] sm:$0xf]
      %v1772 = vld [vmem:[%s1770 + $0x4] sm:$0xf]
      %v1773 = vld [vmem:[%s1770 + $0x8] sm:$0xf]
      %v1774 = vld [vmem:[%s1770 + $0xc] sm:$0xf]
      %v1775 = vld [vmem:[%s1770 + $0x10] sm:$0xf]
      %v1776 = vld [vmem:[%s1770 + $0x14] sm:$0xf]
      %v1777 = vld [vmem:[%s1770 + $0x18] sm:$0xf]
      %v1778 = vld [vmem:[%s1770 + $0x1c] sm:$0xf]
      %v1779 = vld [vmem:[%s1770 + $0x20] sm:$0xf]
      %v1780 = vld [vmem:[%s1770 + $0x24] sm:$0xf]
      %v1781 = vld [vmem:[%s1770 + $0x28] sm:$0xf]
      %v1782 = vld [vmem:[%s1770 + $0x2c] sm:$0xf]
      %v1783 = vld [vmem:[%s1770 + $0x30] sm:$0xf]
      %v1784 = vld [vmem:[%s1770 + $0x34] sm:$0xf]
      %v1785 = vld [vmem:[%s1770 + $0x38] sm:$0xf]
      %v1786 = vld [vmem:[%s1770 + $0x3c] sm:$0xf]
      %v1803 = vunpack.c.l.b16 %v1771
      %v1804 = vunpack.c.l.b16 %v1772
      %v1805 = vunpack.c.l.b16 %v1773
      %v1806 = vunpack.c.l.b16 %v1774
      %v1807 = vunpack.c.l.b16 %v1775
      %v1808 = vunpack.c.l.b16 %v1776
      %v1809 = vunpack.c.l.b16 %v1777
      %v1810 = vunpack.c.l.b16 %v1778
      %v1811 = vunpack.c.l.b16 %v1779
      %v1812 = vunpack.c.l.b16 %v1780
      %v1813 = vunpack.c.l.b16 %v1781
      %v1814 = vunpack.c.l.b16 %v1782
      %v1815 = vunpack.c.l.b16 %v1783
      %v1816 = vunpack.c.l.b16 %v1784
      %v1817 = vunpack.c.l.b16 %v1785
      %v1818 = vunpack.c.l.b16 %v1786
      %v1819 = vpack.c.b16 %v1804, %v1803
      %v1820 = vpack.c.b16 %v1806, %v1805
      %v1821 = vpack.c.b16 %v1808, %v1807
      %v1822 = vpack.c.b16 %v1810, %v1809
      %v1823 = vpack.c.b16 %v1812, %v1811
      %v1824 = vpack.c.b16 %v1814, %v1813
      %v1825 = vpack.c.b16 %v1816, %v1815
      %v1826 = vpack.c.b16 %v1818, %v1817
      %1835 = vmatpush.bf16.msra.mxu0 %v1826
      %1836 = vmatpush.bf16.msra.mxu0 %v1825
      %1837 = vmatpush.bf16.msra.mxu0 %v1824
      %1838 = vmatpush.bf16.msra.mxu0 %v1823
      %1839 = vmatpush.bf16.msra.mxu0 %v1822
      %1840 = vmatpush.bf16.msra.mxu0 %v1821
      %1841 = vmatpush.bf16.msra.mxu0 %v1820
      %1842 = vmatpush.bf16.msra.mxu0 %v1819
      %1843 = vmatmul.bf16.gmra.mxu0 %v1746
      %v1844 = vpop.f32.mrf.mxu0
      %v1845 = vadd.f32 0.0, %v1844
      %v1846 = vpop.f32.mrf.mxu0
      %v1847 = vadd.f32 0.0, %v1846
      %1848 = vmatmul.bf16.gmra.mxu0 %v1747
      %v1849 = vpop.f32.mrf.mxu0
      %v1850 = vadd.f32 0.0, %v1849
      %v1851 = vpop.f32.mrf.mxu0
      %v1852 = vadd.f32 0.0, %v1851
      %1853 = vmatmul.bf16.gmra.mxu0 %v1748
      %v1854 = vpop.f32.mrf.mxu0
      %v1855 = vadd.f32 0.0, %v1854
      %v1856 = vpop.f32.mrf.mxu0
      %v1857 = vadd.f32 0.0, %v1856
      %1858 = vmatmul.bf16.gmra.mxu0 %v1749
      %v1859 = vpop.f32.mrf.mxu0
      %v1860 = vadd.f32 0.0, %v1859
      %v1861 = vpop.f32.mrf.mxu0
      %v1862 = vadd.f32 0.0, %v1861
      %1863 = vmatmul.bf16.gmra.mxu0 %v1750
      %v1864 = vpop.f32.mrf.mxu0
      %v1865 = vadd.f32 0.0, %v1864
      %v1866 = vpop.f32.mrf.mxu0
      %v1867 = vadd.f32 0.0, %v1866
      %1868 = vmatmul.bf16.gmra.mxu0 %v1751
      %v1869 = vpop.f32.mrf.mxu0
      %v1870 = vadd.f32 0.0, %v1869
      %v1871 = vpop.f32.mrf.mxu0
      %v1872 = vadd.f32 0.0, %v1871
      %1873 = vmatmul.bf16.gmra.mxu0 %v1752
      %v1874 = vpop.f32.mrf.mxu0
      %v1875 = vadd.f32 0.0, %v1874
      %v1876 = vpop.f32.mrf.mxu0
      %v1877 = vadd.f32 0.0, %v1876
      %1878 = vmatmul.bf16.gmra.mxu0 %v1753
      %v1879 = vpop.f32.mrf.mxu0
      %v1880 = vadd.f32 0.0, %v1879
      %v1881 = vpop.f32.mrf.mxu0
      %v1882 = vadd.f32 0.0, %v1881
      %1883 = vmatmul.bf16.gmra.mxu0 %v1754
      %v1884 = vpop.f32.mrf.mxu0
      %v1885 = vadd.f32 0.0, %v1884
      %v1886 = vpop.f32.mrf.mxu0
      %v1887 = vadd.f32 0.0, %v1886
      %1888 = vmatmul.bf16.gmra.mxu0 %v1755
      %v1889 = vpop.f32.mrf.mxu0
      %v1890 = vadd.f32 0.0, %v1889
      %v1891 = vpop.f32.mrf.mxu0
      %v1892 = vadd.f32 0.0, %v1891
      %1893 = vmatmul.bf16.gmra.mxu0 %v1756
      %v1894 = vpop.f32.mrf.mxu0
      %v1895 = vadd.f32 0.0, %v1894
      %v1896 = vpop.f32.mrf.mxu0
      %v1897 = vadd.f32 0.0, %v1896
      %1898 = vmatmul.bf16.gmra.mxu0 %v1757
      %v1899 = vpop.f32.mrf.mxu0
      %v1900 = vadd.f32 0.0, %v1899
      %v1901 = vpop.f32.mrf.mxu0
      %v1902 = vadd.f32 0.0, %v1901
      %1903 = vmatmul.bf16.gmra.mxu0 %v1758
      %v1904 = vpop.f32.mrf.mxu0
      %v1905 = vadd.f32 0.0, %v1904
      %v1906 = vpop.f32.mrf.mxu0
      %v1907 = vadd.f32 0.0, %v1906
      %1908 = vmatmul.bf16.gmra.mxu0 %v1759
      %v1909 = vpop.f32.mrf.mxu0
      %v1910 = vadd.f32 0.0, %v1909
      %v1911 = vpop.f32.mrf.mxu0
      %v1912 = vadd.f32 0.0, %v1911
      %1913 = vmatmul.bf16.gmra.mxu0 %v1760
      %v1914 = vpop.f32.mrf.mxu0
      %v1915 = vadd.f32 0.0, %v1914
      %v1916 = vpop.f32.mrf.mxu0
      %v1917 = vadd.f32 0.0, %v1916
      %1918 = vmatmul.bf16.gmra.mxu0 %v1761
      %v1919 = vpop.f32.mrf.mxu0
      %v1920 = vadd.f32 0.0, %v1919
      %v1921 = vpop.f32.mrf.mxu0
      %v1922 = vadd.f32 0.0, %v1921
      %1923 = vmatmul.bf16.gmra.mxu0 %v1762
      %v1924 = vpop.f32.mrf.mxu0
      %v1925 = vadd.f32 0.0, %v1924
      %v1926 = vpop.f32.mrf.mxu0
      %v1927 = vadd.f32 0.0, %v1926
      %1928 = vmatmul.bf16.gmra.mxu0 %v1763
      %v1929 = vpop.f32.mrf.mxu0
      %v1930 = vadd.f32 0.0, %v1929
      %v1931 = vpop.f32.mrf.mxu0
      %v1932 = vadd.f32 0.0, %v1931
      %1933 = vmatmul.bf16.gmra.mxu0 %v1764
      %v1934 = vpop.f32.mrf.mxu0
      %v1935 = vadd.f32 0.0, %v1934
      %v1936 = vpop.f32.mrf.mxu0
      %v1937 = vadd.f32 0.0, %v1936
      %1938 = vmatmul.bf16.gmra.mxu0 %v1765
      %v1939 = vpop.f32.mrf.mxu0
      %v1940 = vadd.f32 0.0, %v1939
      %v1941 = vpop.f32.mrf.mxu0
      %v1942 = vadd.f32 0.0, %v1941
      %1943 = vmatmul.bf16.gmra.mxu0 %v1766
      %v1944 = vpop.f32.mrf.mxu0
      %v1945 = vadd.f32 0.0, %v1944
      %v1946 = vpop.f32.mrf.mxu0
      %v1947 = vadd.f32 0.0, %v1946
      %1948 = vmatmul.bf16.gmra.mxu0 %v1767
      %v1949 = vpop.f32.mrf.mxu0
      %v1950 = vadd.f32 0.0, %v1949
      %v1951 = vpop.f32.mrf.mxu0
      %v1952 = vadd.f32 0.0, %v1951
      %1953 = vmatmul.bf16.gmra.mxu0 %v1768
      %v1954 = vpop.f32.mrf.mxu0
      %v1955 = vadd.f32 0.0, %v1954
      %v1956 = vpop.f32.mrf.mxu0
      %v1957 = vadd.f32 0.0, %v1956
      %1958 = vmatmul.bf16.gmra.mxu0 %v1769
      %v1959 = vpop.f32.mrf.mxu0
      %v1960 = vadd.f32 0.0, %v1959
      %v1961 = vpop.f32.mrf.mxu0
      %v1962 = vadd.f32 0.0, %v1961
      %1963 = vdwg.mxu0
      %v1964 = vadd.f32 %v1579, %v1845
      %v1965 = vadd.f32 %v1581, %v1847
      %v1966 = vadd.f32 %v1584, %v1850
      %v1967 = vadd.f32 %v1586, %v1852
      %v1968 = vadd.f32 %v1589, %v1855
      %v1969 = vadd.f32 %v1591, %v1857
      %v1970 = vadd.f32 %v1594, %v1860
      %v1971 = vadd.f32 %v1596, %v1862
      %v1972 = vadd.f32 %v1599, %v1865
      %v1973 = vadd.f32 %v1601, %v1867
      %v1974 = vadd.f32 %v1604, %v1870
      %v1975 = vadd.f32 %v1606, %v1872
      %v1976 = vadd.f32 %v1609, %v1875
      %v1977 = vadd.f32 %v1611, %v1877
      %v1978 = vadd.f32 %v1614, %v1880
      %v1979 = vadd.f32 %v1616, %v1882
      %v1980 = vadd.f32 %v1619, %v1885
      %v1981 = vadd.f32 %v1621, %v1887
      %v1982 = vadd.f32 %v1624, %v1890
      %v1983 = vadd.f32 %v1626, %v1892
      %v1984 = vadd.f32 %v1629, %v1895
      %v1985 = vadd.f32 %v1631, %v1897
      %v1986 = vadd.f32 %v1634, %v1900
      %v1987 = vadd.f32 %v1636, %v1902
      %v1988 = vadd.f32 %v1639, %v1905
      %v1989 = vadd.f32 %v1641, %v1907
      %v1990 = vadd.f32 %v1644, %v1910
      %v1991 = vadd.f32 %v1646, %v1912
      %v1992 = vadd.f32 %v1649, %v1915
      %v1993 = vadd.f32 %v1651, %v1917
      %v1994 = vadd.f32 %v1654, %v1920
      %v1995 = vadd.f32 %v1656, %v1922
      %v1996 = vadd.f32 %v1659, %v1925
      %v1997 = vadd.f32 %v1661, %v1927
      %v1998 = vadd.f32 %v1664, %v1930
      %v1999 = vadd.f32 %v1666, %v1932
      %v2000 = vadd.f32 %v1669, %v1935
      %v2001 = vadd.f32 %v1671, %v1937
      %v2002 = vadd.f32 %v1674, %v1940
      %v2003 = vadd.f32 %v1676, %v1942
      %v2004 = vadd.f32 %v1679, %v1945
      %v2005 = vadd.f32 %v1681, %v1947
      %v2006 = vadd.f32 %v1684, %v1950
      %v2007 = vadd.f32 %v1686, %v1952
      %v2008 = vadd.f32 %v1689, %v1955
      %v2009 = vadd.f32 %v1691, %v1957
      %v2010 = vadd.f32 %v1694, %v1960
      %v2011 = vadd.f32 %v1696, %v1962
      %v2012 = vld [vmem:[#allocation2 + $0x37] sm:$0xff]
      %v2013 = vld [vmem:[#allocation2 + $0x3f] sm:$0xff]
      %v2014 = vld [vmem:[#allocation2 + $0x47] sm:$0xff]
      %v2015 = vld [vmem:[#allocation2 + $0x4f] sm:$0xff]
      %v2016 = vld [vmem:[#allocation2 + $0x57] sm:$0xff]
      %v2017 = vld [vmem:[#allocation2 + $0x5f] sm:$0xff]
      %v2018 = vld [vmem:[#allocation2 + $0x67] sm:$0xff]
      %v2019 = vld [vmem:[#allocation2 + $0x6f] sm:$0xff]
      %v2020 = vld [vmem:[#allocation2 + $0x77] sm:$0xff]
      %v2021 = vld [vmem:[#allocation2 + $0x7f] sm:$0xff]
      %v2022 = vld [vmem:[#allocation2 + $0x87] sm:$0xff]
      %v2023 = vld [vmem:[#allocation2 + $0x8f] sm:$0xff]
      %v2024 = vld [vmem:[#allocation2 + $0x97] sm:$0xff]
      %v2025 = vld [vmem:[#allocation2 + $0x9f] sm:$0xff]
      %v2026 = vld [vmem:[#allocation2 + $0xa7] sm:$0xff]
      %v2027 = vld [vmem:[#allocation2 + $0xaf] sm:$0xff]
      %v2028 = vld [vmem:[#allocation2 + $0xb7] sm:$0xff]
      %v2029 = vld [vmem:[#allocation2 + $0xbf] sm:$0xff]
      %v2030 = vld [vmem:[#allocation2 + $0xc7] sm:$0xff]
      %v2031 = vld [vmem:[#allocation2 + $0xcf] sm:$0xff]
      %v2032 = vld [vmem:[#allocation2 + $0xd7] sm:$0xff]
      %v2033 = vld [vmem:[#allocation2 + $0xdf] sm:$0xff]
      %v2034 = vld [vmem:[#allocation2 + $0xe7] sm:$0xff]
      %v2035 = vld [vmem:[#allocation2 + $0xef] sm:$0xff]
      %v2036 = vld [vmem:[#allocation2 + $0xf7] sm:$0xff]
      %v2037 = vld [vmem:[#allocation2 + $0xff] sm:$0xff]
      %v2038 = vld [vmem:[#allocation2 + $0x107] sm:$0xff]
      %v2039 = vld [vmem:[#allocation2 + $0x10f] sm:$0xff]
      %v2040 = vld [vmem:[#allocation2 + $0x117] sm:$0xff]
      %v2041 = vld [vmem:[#allocation2 + $0x11f] sm:$0xff]
      %v2042 = vld [vmem:[#allocation2 + $0x127] sm:$0xff]
      %v2043 = vld [vmem:[#allocation2 + $0x12f] sm:$0xff]
      %v2044 = vld [vmem:[#allocation2 + $0x137] sm:$0xff]
      %v2045 = vld [vmem:[#allocation2 + $0x13f] sm:$0xff]
      %v2046 = vld [vmem:[#allocation2 + $0x147] sm:$0xff]
      %v2047 = vld [vmem:[#allocation2 + $0x14f] sm:$0xff]
      %v2048 = vld [vmem:[#allocation2 + $0x157] sm:$0xff]
      %v2049 = vld [vmem:[#allocation2 + $0x15f] sm:$0xff]
      %v2050 = vld [vmem:[#allocation2 + $0x167] sm:$0xff]
      %v2051 = vld [vmem:[#allocation2 + $0x16f] sm:$0xff]
      %v2052 = vld [vmem:[#allocation2 + $0x177] sm:$0xff]
      %v2053 = vld [vmem:[#allocation2 + $0x17f] sm:$0xff]
      %v2054 = vld [vmem:[#allocation2 + $0x187] sm:$0xff]
      %v2055 = vld [vmem:[#allocation2 + $0x18f] sm:$0xff]
      %v2056 = vld [vmem:[#allocation2 + $0x197] sm:$0xff]
      %v2057 = vld [vmem:[#allocation2 + $0x19f] sm:$0xff]
      %v2058 = vld [vmem:[#allocation2 + $0x1a7] sm:$0xff]
      %v2059 = vld [vmem:[#allocation2 + $0x1af] sm:$0xff]
      %v2060 = vpack.c.bf16 %v2013, %v2012
      %v2061 = vpack.c.bf16 %v2015, %v2014
      %v2062 = vpack.c.bf16 %v2017, %v2016
      %v2063 = vpack.c.bf16 %v2019, %v2018
      %v2064 = vpack.c.bf16 %v2021, %v2020
      %v2065 = vpack.c.bf16 %v2023, %v2022
      %v2066 = vpack.c.bf16 %v2025, %v2024
      %v2067 = vpack.c.bf16 %v2027, %v2026
      %v2068 = vpack.c.bf16 %v2029, %v2028
      %v2069 = vpack.c.bf16 %v2031, %v2030
      %v2070 = vpack.c.bf16 %v2033, %v2032
      %v2071 = vpack.c.bf16 %v2035, %v2034
      %v2072 = vpack.c.bf16 %v2037, %v2036
      %v2073 = vpack.c.bf16 %v2039, %v2038
      %v2074 = vpack.c.bf16 %v2041, %v2040
      %v2075 = vpack.c.bf16 %v2043, %v2042
      %v2076 = vpack.c.bf16 %v2045, %v2044
      %v2077 = vpack.c.bf16 %v2047, %v2046
      %v2078 = vpack.c.bf16 %v2049, %v2048
      %v2079 = vpack.c.bf16 %v2051, %v2050
      %v2080 = vpack.c.bf16 %v2053, %v2052
      %v2081 = vpack.c.bf16 %v2055, %v2054
      %v2082 = vpack.c.bf16 %v2057, %v2056
      %v2083 = vpack.c.bf16 %v2059, %v2058
      %s2084 = scalar_lea.vmem %s3, 192
      %v2085 = vld [vmem:[%s2084] sm:$0xf]
      %v2086 = vld [vmem:[%s2084 + $0x4] sm:$0xf]
      %v2087 = vld [vmem:[%s2084 + $0x8] sm:$0xf]
      %v2088 = vld [vmem:[%s2084 + $0xc] sm:$0xf]
      %v2089 = vld [vmem:[%s2084 + $0x10] sm:$0xf]
      %v2090 = vld [vmem:[%s2084 + $0x14] sm:$0xf]
      %v2091 = vld [vmem:[%s2084 + $0x18] sm:$0xf]
      %v2092 = vld [vmem:[%s2084 + $0x1c] sm:$0xf]
      %v2093 = vld [vmem:[%s2084 + $0x20] sm:$0xf]
      %v2094 = vld [vmem:[%s2084 + $0x24] sm:$0xf]
      %v2095 = vld [vmem:[%s2084 + $0x28] sm:$0xf]
      %v2096 = vld [vmem:[%s2084 + $0x2c] sm:$0xf]
      %v2097 = vld [vmem:[%s2084 + $0x30] sm:$0xf]
      %v2098 = vld [vmem:[%s2084 + $0x34] sm:$0xf]
      %v2099 = vld [vmem:[%s2084 + $0x38] sm:$0xf]
      %v2100 = vld [vmem:[%s2084 + $0x3c] sm:$0xf]
      %v2117 = vunpack.c.l.b16 %v2085
      %v2118 = vunpack.c.l.b16 %v2086
      %v2119 = vunpack.c.l.b16 %v2087
      %v2120 = vunpack.c.l.b16 %v2088
      %v2121 = vunpack.c.l.b16 %v2089
      %v2122 = vunpack.c.l.b16 %v2090
      %v2123 = vunpack.c.l.b16 %v2091
      %v2124 = vunpack.c.l.b16 %v2092
      %v2125 = vunpack.c.l.b16 %v2093
      %v2126 = vunpack.c.l.b16 %v2094
      %v2127 = vunpack.c.l.b16 %v2095
      %v2128 = vunpack.c.l.b16 %v2096
      %v2129 = vunpack.c.l.b16 %v2097
      %v2130 = vunpack.c.l.b16 %v2098
      %v2131 = vunpack.c.l.b16 %v2099
      %v2132 = vunpack.c.l.b16 %v2100
      %v2133 = vpack.c.b16 %v2118, %v2117
      %v2134 = vpack.c.b16 %v2120, %v2119
      %v2135 = vpack.c.b16 %v2122, %v2121
      %v2136 = vpack.c.b16 %v2124, %v2123
      %v2137 = vpack.c.b16 %v2126, %v2125
      %v2138 = vpack.c.b16 %v2128, %v2127
      %v2139 = vpack.c.b16 %v2130, %v2129
      %v2140 = vpack.c.b16 %v2132, %v2131
      %2149 = vmatpush.bf16.msra.mxu0 %v2140
      %2150 = vmatpush.bf16.msra.mxu0 %v2139
      %2151 = vmatpush.bf16.msra.mxu0 %v2138
      %2152 = vmatpush.bf16.msra.mxu0 %v2137
      %2153 = vmatpush.bf16.msra.mxu0 %v2136
      %2154 = vmatpush.bf16.msra.mxu0 %v2135
      %2155 = vmatpush.bf16.msra.mxu0 %v2134
      %2156 = vmatpush.bf16.msra.mxu0 %v2133
      %2157 = vmatmul.bf16.gmra.mxu0 %v2060
      %v2158 = vpop.f32.mrf.mxu0
      %v2159 = vadd.f32 0.0, %v2158
      %v2160 = vpop.f32.mrf.mxu0
      %v2161 = vadd.f32 0.0, %v2160
      %2162 = vmatmul.bf16.gmra.mxu0 %v2061
      %v2163 = vpop.f32.mrf.mxu0
      %v2164 = vadd.f32 0.0, %v2163
      %v2165 = vpop.f32.mrf.mxu0
      %v2166 = vadd.f32 0.0, %v2165
      %2167 = vmatmul.bf16.gmra.mxu0 %v2062
      %v2168 = vpop.f32.mrf.mxu0
      %v2169 = vadd.f32 0.0, %v2168
      %v2170 = vpop.f32.mrf.mxu0
      %v2171 = vadd.f32 0.0, %v2170
      %2172 = vmatmul.bf16.gmra.mxu0 %v2063
      %v2173 = vpop.f32.mrf.mxu0
      %v2174 = vadd.f32 0.0, %v2173
      %v2175 = vpop.f32.mrf.mxu0
      %v2176 = vadd.f32 0.0, %v2175
      %2177 = vmatmul.bf16.gmra.mxu0 %v2064
      %v2178 = vpop.f32.mrf.mxu0
      %v2179 = vadd.f32 0.0, %v2178
      %v2180 = vpop.f32.mrf.mxu0
      %v2181 = vadd.f32 0.0, %v2180
      %2182 = vmatmul.bf16.gmra.mxu0 %v2065
      %v2183 = vpop.f32.mrf.mxu0
      %v2184 = vadd.f32 0.0, %v2183
      %v2185 = vpop.f32.mrf.mxu0
      %v2186 = vadd.f32 0.0, %v2185
      %2187 = vmatmul.bf16.gmra.mxu0 %v2066
      %v2188 = vpop.f32.mrf.mxu0
      %v2189 = vadd.f32 0.0, %v2188
      %v2190 = vpop.f32.mrf.mxu0
      %v2191 = vadd.f32 0.0, %v2190
      %2192 = vmatmul.bf16.gmra.mxu0 %v2067
      %v2193 = vpop.f32.mrf.mxu0
      %v2194 = vadd.f32 0.0, %v2193
      %v2195 = vpop.f32.mrf.mxu0
      %v2196 = vadd.f32 0.0, %v2195
      %2197 = vmatmul.bf16.gmra.mxu0 %v2068
      %v2198 = vpop.f32.mrf.mxu0
      %v2199 = vadd.f32 0.0, %v2198
      %v2200 = vpop.f32.mrf.mxu0
      %v2201 = vadd.f32 0.0, %v2200
      %2202 = vmatmul.bf16.gmra.mxu0 %v2069
      %v2203 = vpop.f32.mrf.mxu0
      %v2204 = vadd.f32 0.0, %v2203
      %v2205 = vpop.f32.mrf.mxu0
      %v2206 = vadd.f32 0.0, %v2205
      %2207 = vmatmul.bf16.gmra.mxu0 %v2070
      %v2208 = vpop.f32.mrf.mxu0
      %v2209 = vadd.f32 0.0, %v2208
      %v2210 = vpop.f32.mrf.mxu0
      %v2211 = vadd.f32 0.0, %v2210
      %2212 = vmatmul.bf16.gmra.mxu0 %v2071
      %v2213 = vpop.f32.mrf.mxu0
      %v2214 = vadd.f32 0.0, %v2213
      %v2215 = vpop.f32.mrf.mxu0
      %v2216 = vadd.f32 0.0, %v2215
      %2217 = vmatmul.bf16.gmra.mxu0 %v2072
      %v2218 = vpop.f32.mrf.mxu0
      %v2219 = vadd.f32 0.0, %v2218
      %v2220 = vpop.f32.mrf.mxu0
      %v2221 = vadd.f32 0.0, %v2220
      %2222 = vmatmul.bf16.gmra.mxu0 %v2073
      %v2223 = vpop.f32.mrf.mxu0
      %v2224 = vadd.f32 0.0, %v2223
      %v2225 = vpop.f32.mrf.mxu0
      %v2226 = vadd.f32 0.0, %v2225
      %2227 = vmatmul.bf16.gmra.mxu0 %v2074
      %v2228 = vpop.f32.mrf.mxu0
      %v2229 = vadd.f32 0.0, %v2228
      %v2230 = vpop.f32.mrf.mxu0
      %v2231 = vadd.f32 0.0, %v2230
      %2232 = vmatmul.bf16.gmra.mxu0 %v2075
      %v2233 = vpop.f32.mrf.mxu0
      %v2234 = vadd.f32 0.0, %v2233
      %v2235 = vpop.f32.mrf.mxu0
      %v2236 = vadd.f32 0.0, %v2235
      %2237 = vmatmul.bf16.gmra.mxu0 %v2076
      %v2238 = vpop.f32.mrf.mxu0
      %v2239 = vadd.f32 0.0, %v2238
      %v2240 = vpop.f32.mrf.mxu0
      %v2241 = vadd.f32 0.0, %v2240
      %2242 = vmatmul.bf16.gmra.mxu0 %v2077
      %v2243 = vpop.f32.mrf.mxu0
      %v2244 = vadd.f32 0.0, %v2243
      %v2245 = vpop.f32.mrf.mxu0
      %v2246 = vadd.f32 0.0, %v2245
      %2247 = vmatmul.bf16.gmra.mxu0 %v2078
      %v2248 = vpop.f32.mrf.mxu0
      %v2249 = vadd.f32 0.0, %v2248
      %v2250 = vpop.f32.mrf.mxu0
      %v2251 = vadd.f32 0.0, %v2250
      %2252 = vmatmul.bf16.gmra.mxu0 %v2079
      %v2253 = vpop.f32.mrf.mxu0
      %v2254 = vadd.f32 0.0, %v2253
      %v2255 = vpop.f32.mrf.mxu0
      %v2256 = vadd.f32 0.0, %v2255
      %2257 = vmatmul.bf16.gmra.mxu0 %v2080
      %v2258 = vpop.f32.mrf.mxu0
      %v2259 = vadd.f32 0.0, %v2258
      %v2260 = vpop.f32.mrf.mxu0
      %v2261 = vadd.f32 0.0, %v2260
      %2262 = vmatmul.bf16.gmra.mxu0 %v2081
      %v2263 = vpop.f32.mrf.mxu0
      %v2264 = vadd.f32 0.0, %v2263
      %v2265 = vpop.f32.mrf.mxu0
      %v2266 = vadd.f32 0.0, %v2265
      %2267 = vmatmul.bf16.gmra.mxu0 %v2082
      %v2268 = vpop.f32.mrf.mxu0
      %v2269 = vadd.f32 0.0, %v2268
      %v2270 = vpop.f32.mrf.mxu0
      %v2271 = vadd.f32 0.0, %v2270
      %2272 = vmatmul.bf16.gmra.mxu0 %v2083
      %v2273 = vpop.f32.mrf.mxu0
      %v2274 = vadd.f32 0.0, %v2273
      %v2275 = vpop.f32.mrf.mxu0
      %v2276 = vadd.f32 0.0, %v2275
      %2277 = vdwg.mxu0
      %v2278 = vadd.f32 %v1964, %v2159
      %v2279 = vadd.f32 %v1965, %v2161
      %v2280 = vadd.f32 %v1966, %v2164
      %v2281 = vadd.f32 %v1967, %v2166
      %v2282 = vadd.f32 %v1968, %v2169
      %v2283 = vadd.f32 %v1969, %v2171
      %v2284 = vadd.f32 %v1970, %v2174
      %v2285 = vadd.f32 %v1971, %v2176
      %v2286 = vadd.f32 %v1972, %v2179
      %v2287 = vadd.f32 %v1973, %v2181
      %v2288 = vadd.f32 %v1974, %v2184
      %v2289 = vadd.f32 %v1975, %v2186
      %v2290 = vadd.f32 %v1976, %v2189
      %v2291 = vadd.f32 %v1977, %v2191
      %v2292 = vadd.f32 %v1978, %v2194
      %v2293 = vadd.f32 %v1979, %v2196
      %v2294 = vadd.f32 %v1980, %v2199
      %v2295 = vadd.f32 %v1981, %v2201
      %v2296 = vadd.f32 %v1982, %v2204
      %v2297 = vadd.f32 %v1983, %v2206
      %v2298 = vadd.f32 %v1984, %v2209
      %v2299 = vadd.f32 %v1985, %v2211
      %v2300 = vadd.f32 %v1986, %v2214
      %v2301 = vadd.f32 %v1987, %v2216
      %v2302 = vadd.f32 %v1988, %v2219
      %v2303 = vadd.f32 %v1989, %v2221
      %v2304 = vadd.f32 %v1990, %v2224
      %v2305 = vadd.f32 %v1991, %v2226
      %v2306 = vadd.f32 %v1992, %v2229
      %v2307 = vadd.f32 %v1993, %v2231
      %v2308 = vadd.f32 %v1994, %v2234
      %v2309 = vadd.f32 %v1995, %v2236
      %v2310 = vadd.f32 %v1996, %v2239
      %v2311 = vadd.f32 %v1997, %v2241
      %v2312 = vadd.f32 %v1998, %v2244
      %v2313 = vadd.f32 %v1999, %v2246
      %v2314 = vadd.f32 %v2000, %v2249
      %v2315 = vadd.f32 %v2001, %v2251
      %v2316 = vadd.f32 %v2002, %v2254
      %v2317 = vadd.f32 %v2003, %v2256
      %v2318 = vadd.f32 %v2004, %v2259
      %v2319 = vadd.f32 %v2005, %v2261
      %v2320 = vadd.f32 %v2006, %v2264
      %v2321 = vadd.f32 %v2007, %v2266
      %v2322 = vadd.f32 %v2008, %v2269
      %v2323 = vadd.f32 %v2009, %v2271
      %v2324 = vadd.f32 %v2010, %v2274
      %v2325 = vadd.f32 %v2011, %v2276
      %v2326 = vld [vmem:[#allocation2 + $0x38] sm:$0xff]
      %v2327 = vld [vmem:[#allocation2 + $0x40] sm:$0xff]
      %v2328 = vld [vmem:[#allocation2 + $0x48] sm:$0xff]
      %v2329 = vld [vmem:[#allocation2 + $0x50] sm:$0xff]
      %v2330 = vld [vmem:[#allocation2 + $0x58] sm:$0xff]
      %v2331 = vld [vmem:[#allocation2 + $0x60] sm:$0xff]
      %v2332 = vld [vmem:[#allocation2 + $0x68] sm:$0xff]
      %v2333 = vld [vmem:[#allocation2 + $0x70] sm:$0xff]
      %v2334 = vld [vmem:[#allocation2 + $0x78] sm:$0xff]
      %v2335 = vld [vmem:[#allocation2 + $0x80] sm:$0xff]
      %v2336 = vld [vmem:[#allocation2 + $0x88] sm:$0xff]
      %v2337 = vld [vmem:[#allocation2 + $0x90] sm:$0xff]
      %v2338 = vld [vmem:[#allocation2 + $0x98] sm:$0xff]
      %v2339 = vld [vmem:[#allocation2 + $0xa0] sm:$0xff]
      %v2340 = vld [vmem:[#allocation2 + $0xa8] sm:$0xff]
      %v2341 = vld [vmem:[#allocation2 + $0xb0] sm:$0xff]
      %v2342 = vld [vmem:[#allocation2 + $0xb8] sm:$0xff]
      %v2343 = vld [vmem:[#allocation2 + $0xc0] sm:$0xff]
      %v2344 = vld [vmem:[#allocation2 + $0xc8] sm:$0xff]
      %v2345 = vld [vmem:[#allocation2 + $0xd0] sm:$0xff]
      %v2346 = vld [vmem:[#allocation2 + $0xd8] sm:$0xff]
      %v2347 = vld [vmem:[#allocation2 + $0xe0] sm:$0xff]
      %v2348 = vld [vmem:[#allocation2 + $0xe8] sm:$0xff]
      %v2349 = vld [vmem:[#allocation2 + $0xf0] sm:$0xff]
      %v2350 = vld [vmem:[#allocation2 + $0xf8] sm:$0xff]
      %v2351 = vld [vmem:[#allocation2 + $0x100] sm:$0xff]
      %v2352 = vld [vmem:[#allocation2 + $0x108] sm:$0xff]
      %v2353 = vld [vmem:[#allocation2 + $0x110] sm:$0xff]
      %v2354 = vld [vmem:[#allocation2 + $0x118] sm:$0xff]
      %v2355 = vld [vmem:[#allocation2 + $0x120] sm:$0xff]
      %v2356 = vld [vmem:[#allocation2 + $0x128] sm:$0xff]
      %v2357 = vld [vmem:[#allocation2 + $0x130] sm:$0xff]
      %v2358 = vld [vmem:[#allocation2 + $0x138] sm:$0xff]
      %v2359 = vld [vmem:[#allocation2 + $0x140] sm:$0xff]
      %v2360 = vld [vmem:[#allocation2 + $0x148] sm:$0xff]
      %v2361 = vld [vmem:[#allocation2 + $0x150] sm:$0xff]
      %v2362 = vld [vmem:[#allocation2 + $0x158] sm:$0xff]
      %v2363 = vld [vmem:[#allocation2 + $0x160] sm:$0xff]
      %v2364 = vld [vmem:[#allocation2 + $0x168] sm:$0xff]
      %v2365 = vld [vmem:[#allocation2 + $0x170] sm:$0xff]
      %v2366 = vld [vmem:[#allocation2 + $0x178] sm:$0xff]
      %v2367 = vld [vmem:[#allocation2 + $0x180] sm:$0xff]
      %v2368 = vld [vmem:[#allocation2 + $0x188] sm:$0xff]
      %v2369 = vld [vmem:[#allocation2 + $0x190] sm:$0xff]
      %v2370 = vld [vmem:[#allocation2 + $0x198] sm:$0xff]
      %v2371 = vld [vmem:[#allocation2 + $0x1a0] sm:$0xff]
      %v2372 = vld [vmem:[#allocation2 + $0x1a8] sm:$0xff]
      %v2373 = vld [vmem:[#allocation2 + $0x1b0] sm:$0xff]
      %v2374 = vpack.c.bf16 %v2327, %v2326
      %v2375 = vpack.c.bf16 %v2329, %v2328
      %v2376 = vpack.c.bf16 %v2331, %v2330
      %v2377 = vpack.c.bf16 %v2333, %v2332
      %v2378 = vpack.c.bf16 %v2335, %v2334
      %v2379 = vpack.c.bf16 %v2337, %v2336
      %v2380 = vpack.c.bf16 %v2339, %v2338
      %v2381 = vpack.c.bf16 %v2341, %v2340
      %v2382 = vpack.c.bf16 %v2343, %v2342
      %v2383 = vpack.c.bf16 %v2345, %v2344
      %v2384 = vpack.c.bf16 %v2347, %v2346
      %v2385 = vpack.c.bf16 %v2349, %v2348
      %v2386 = vpack.c.bf16 %v2351, %v2350
      %v2387 = vpack.c.bf16 %v2353, %v2352
      %v2388 = vpack.c.bf16 %v2355, %v2354
      %v2389 = vpack.c.bf16 %v2357, %v2356
      %v2390 = vpack.c.bf16 %v2359, %v2358
      %v2391 = vpack.c.bf16 %v2361, %v2360
      %v2392 = vpack.c.bf16 %v2363, %v2362
      %v2393 = vpack.c.bf16 %v2365, %v2364
      %v2394 = vpack.c.bf16 %v2367, %v2366
      %v2395 = vpack.c.bf16 %v2369, %v2368
      %v2396 = vpack.c.bf16 %v2371, %v2370
      %v2397 = vpack.c.bf16 %v2373, %v2372
      %s2398 = scalar_lea.vmem %s3, 256
      %v2399 = vld [vmem:[%s2398] sm:$0xf]
      %v2400 = vld [vmem:[%s2398 + $0x4] sm:$0xf]
      %v2401 = vld [vmem:[%s2398 + $0x8] sm:$0xf]
      %v2402 = vld [vmem:[%s2398 + $0xc] sm:$0xf]
      %v2403 = vld [vmem:[%s2398 + $0x10] sm:$0xf]
      %v2404 = vld [vmem:[%s2398 + $0x14] sm:$0xf]
      %v2405 = vld [vmem:[%s2398 + $0x18] sm:$0xf]
      %v2406 = vld [vmem:[%s2398 + $0x1c] sm:$0xf]
      %v2407 = vld [vmem:[%s2398 + $0x20] sm:$0xf]
      %v2408 = vld [vmem:[%s2398 + $0x24] sm:$0xf]
      %v2409 = vld [vmem:[%s2398 + $0x28] sm:$0xf]
      %v2410 = vld [vmem:[%s2398 + $0x2c] sm:$0xf]
      %v2411 = vld [vmem:[%s2398 + $0x30] sm:$0xf]
      %v2412 = vld [vmem:[%s2398 + $0x34] sm:$0xf]
      %v2413 = vld [vmem:[%s2398 + $0x38] sm:$0xf]
      %v2414 = vld [vmem:[%s2398 + $0x3c] sm:$0xf]
      %v2431 = vunpack.c.l.b16 %v2399
      %v2432 = vunpack.c.l.b16 %v2400
      %v2433 = vunpack.c.l.b16 %v2401
      %v2434 = vunpack.c.l.b16 %v2402
      %v2435 = vunpack.c.l.b16 %v2403
      %v2436 = vunpack.c.l.b16 %v2404
      %v2437 = vunpack.c.l.b16 %v2405
      %v2438 = vunpack.c.l.b16 %v2406
      %v2439 = vunpack.c.l.b16 %v2407
      %v2440 = vunpack.c.l.b16 %v2408
      %v2441 = vunpack.c.l.b16 %v2409
      %v2442 = vunpack.c.l.b16 %v2410
      %v2443 = vunpack.c.l.b16 %v2411
      %v2444 = vunpack.c.l.b16 %v2412
      %v2445 = vunpack.c.l.b16 %v2413
      %v2446 = vunpack.c.l.b16 %v2414
      %v2447 = vpack.c.b16 %v2432, %v2431
      %v2448 = vpack.c.b16 %v2434, %v2433
      %v2449 = vpack.c.b16 %v2436, %v2435
      %v2450 = vpack.c.b16 %v2438, %v2437
      %v2451 = vpack.c.b16 %v2440, %v2439
      %v2452 = vpack.c.b16 %v2442, %v2441
      %v2453 = vpack.c.b16 %v2444, %v2443
      %v2454 = vpack.c.b16 %v2446, %v2445
      %2463 = vmatpush.bf16.msra.mxu0 %v2454
      %2464 = vmatpush.bf16.msra.mxu0 %v2453
      %2465 = vmatpush.bf16.msra.mxu0 %v2452
      %2466 = vmatpush.bf16.msra.mxu0 %v2451
      %2467 = vmatpush.bf16.msra.mxu0 %v2450
      %2468 = vmatpush.bf16.msra.mxu0 %v2449
      %2469 = vmatpush.bf16.msra.mxu0 %v2448
      %2470 = vmatpush.bf16.msra.mxu0 %v2447
      %2471 = vmatmul.bf16.gmra.mxu0 %v2374
      %v2472 = vpop.f32.mrf.mxu0
      %v2473 = vadd.f32 0.0, %v2472
      %v2474 = vpop.f32.mrf.mxu0
      %v2475 = vadd.f32 0.0, %v2474
      %2476 = vmatmul.bf16.gmra.mxu0 %v2375
      %v2477 = vpop.f32.mrf.mxu0
      %v2478 = vadd.f32 0.0, %v2477
      %v2479 = vpop.f32.mrf.mxu0
      %v2480 = vadd.f32 0.0, %v2479
      %2481 = vmatmul.bf16.gmra.mxu0 %v2376
      %v2482 = vpop.f32.mrf.mxu0
      %v2483 = vadd.f32 0.0, %v2482
      %v2484 = vpop.f32.mrf.mxu0
      %v2485 = vadd.f32 0.0, %v2484
      %2486 = vmatmul.bf16.gmra.mxu0 %v2377
      %v2487 = vpop.f32.mrf.mxu0
      %v2488 = vadd.f32 0.0, %v2487
      %v2489 = vpop.f32.mrf.mxu0
      %v2490 = vadd.f32 0.0, %v2489
      %2491 = vmatmul.bf16.gmra.mxu0 %v2378
      %v2492 = vpop.f32.mrf.mxu0
      %v2493 = vadd.f32 0.0, %v2492
      %v2494 = vpop.f32.mrf.mxu0
      %v2495 = vadd.f32 0.0, %v2494
      %2496 = vmatmul.bf16.gmra.mxu0 %v2379
      %v2497 = vpop.f32.mrf.mxu0
      %v2498 = vadd.f32 0.0, %v2497
      %v2499 = vpop.f32.mrf.mxu0
      %v2500 = vadd.f32 0.0, %v2499
      %2501 = vmatmul.bf16.gmra.mxu0 %v2380
      %v2502 = vpop.f32.mrf.mxu0
      %v2503 = vadd.f32 0.0, %v2502
      %v2504 = vpop.f32.mrf.mxu0
      %v2505 = vadd.f32 0.0, %v2504
      %2506 = vmatmul.bf16.gmra.mxu0 %v2381
      %v2507 = vpop.f32.mrf.mxu0
      %v2508 = vadd.f32 0.0, %v2507
      %v2509 = vpop.f32.mrf.mxu0
      %v2510 = vadd.f32 0.0, %v2509
      %2511 = vmatmul.bf16.gmra.mxu0 %v2382
      %v2512 = vpop.f32.mrf.mxu0
      %v2513 = vadd.f32 0.0, %v2512
      %v2514 = vpop.f32.mrf.mxu0
      %v2515 = vadd.f32 0.0, %v2514
      %2516 = vmatmul.bf16.gmra.mxu0 %v2383
      %v2517 = vpop.f32.mrf.mxu0
      %v2518 = vadd.f32 0.0, %v2517
      %v2519 = vpop.f32.mrf.mxu0
      %v2520 = vadd.f32 0.0, %v2519
      %2521 = vmatmul.bf16.gmra.mxu0 %v2384
      %v2522 = vpop.f32.mrf.mxu0
      %v2523 = vadd.f32 0.0, %v2522
      %v2524 = vpop.f32.mrf.mxu0
      %v2525 = vadd.f32 0.0, %v2524
      %2526 = vmatmul.bf16.gmra.mxu0 %v2385
      %v2527 = vpop.f32.mrf.mxu0
      %v2528 = vadd.f32 0.0, %v2527
      %v2529 = vpop.f32.mrf.mxu0
      %v2530 = vadd.f32 0.0, %v2529
      %2531 = vmatmul.bf16.gmra.mxu0 %v2386
      %v2532 = vpop.f32.mrf.mxu0
      %v2533 = vadd.f32 0.0, %v2532
      %v2534 = vpop.f32.mrf.mxu0
      %v2535 = vadd.f32 0.0, %v2534
      %2536 = vmatmul.bf16.gmra.mxu0 %v2387
      %v2537 = vpop.f32.mrf.mxu0
      %v2538 = vadd.f32 0.0, %v2537
      %v2539 = vpop.f32.mrf.mxu0
      %v2540 = vadd.f32 0.0, %v2539
      %2541 = vmatmul.bf16.gmra.mxu0 %v2388
      %v2542 = vpop.f32.mrf.mxu0
      %v2543 = vadd.f32 0.0, %v2542
      %v2544 = vpop.f32.mrf.mxu0
      %v2545 = vadd.f32 0.0, %v2544
      %2546 = vmatmul.bf16.gmra.mxu0 %v2389
      %v2547 = vpop.f32.mrf.mxu0
      %v2548 = vadd.f32 0.0, %v2547
      %v2549 = vpop.f32.mrf.mxu0
      %v2550 = vadd.f32 0.0, %v2549
      %2551 = vmatmul.bf16.gmra.mxu0 %v2390
      %v2552 = vpop.f32.mrf.mxu0
      %v2553 = vadd.f32 0.0, %v2552
      %v2554 = vpop.f32.mrf.mxu0
      %v2555 = vadd.f32 0.0, %v2554
      %2556 = vmatmul.bf16.gmra.mxu0 %v2391
      %v2557 = vpop.f32.mrf.mxu0
      %v2558 = vadd.f32 0.0, %v2557
      %v2559 = vpop.f32.mrf.mxu0
      %v2560 = vadd.f32 0.0, %v2559
      %2561 = vmatmul.bf16.gmra.mxu0 %v2392
      %v2562 = vpop.f32.mrf.mxu0
      %v2563 = vadd.f32 0.0, %v2562
      %v2564 = vpop.f32.mrf.mxu0
      %v2565 = vadd.f32 0.0, %v2564
      %2566 = vmatmul.bf16.gmra.mxu0 %v2393
      %v2567 = vpop.f32.mrf.mxu0
      %v2568 = vadd.f32 0.0, %v2567
      %v2569 = vpop.f32.mrf.mxu0
      %v2570 = vadd.f32 0.0, %v2569
      %2571 = vmatmul.bf16.gmra.mxu0 %v2394
      %v2572 = vpop.f32.mrf.mxu0
      %v2573 = vadd.f32 0.0, %v2572
      %v2574 = vpop.f32.mrf.mxu0
      %v2575 = vadd.f32 0.0, %v2574
      %2576 = vmatmul.bf16.gmra.mxu0 %v2395
      %v2577 = vpop.f32.mrf.mxu0
      %v2578 = vadd.f32 0.0, %v2577
      %v2579 = vpop.f32.mrf.mxu0
      %v2580 = vadd.f32 0.0, %v2579
      %2581 = vmatmul.bf16.gmra.mxu0 %v2396
      %v2582 = vpop.f32.mrf.mxu0
      %v2583 = vadd.f32 0.0, %v2582
      %v2584 = vpop.f32.mrf.mxu0
      %v2585 = vadd.f32 0.0, %v2584
      %2586 = vmatmul.bf16.gmra.mxu0 %v2397
      %v2587 = vpop.f32.mrf.mxu0
      %v2588 = vadd.f32 0.0, %v2587
      %v2589 = vpop.f32.mrf.mxu0
      %v2590 = vadd.f32 0.0, %v2589
      %2591 = vdwg.mxu0
      %v2592 = vadd.f32 %v2278, %v2473
      %v2593 = vadd.f32 %v2279, %v2475
      %v2594 = vadd.f32 %v2280, %v2478
      %v2595 = vadd.f32 %v2281, %v2480
      %v2596 = vadd.f32 %v2282, %v2483
      %v2597 = vadd.f32 %v2283, %v2485
      %v2598 = vadd.f32 %v2284, %v2488
      %v2599 = vadd.f32 %v2285, %v2490
      %v2600 = vadd.f32 %v2286, %v2493
      %v2601 = vadd.f32 %v2287, %v2495
      %v2602 = vadd.f32 %v2288, %v2498
      %v2603 = vadd.f32 %v2289, %v2500
      %v2604 = vadd.f32 %v2290, %v2503
      %v2605 = vadd.f32 %v2291, %v2505
      %v2606 = vadd.f32 %v2292, %v2508
      %v2607 = vadd.f32 %v2293, %v2510
      %v2608 = vadd.f32 %v2294, %v2513
      %v2609 = vadd.f32 %v2295, %v2515
      %v2610 = vadd.f32 %v2296, %v2518
      %v2611 = vadd.f32 %v2297, %v2520
      %v2612 = vadd.f32 %v2298, %v2523
      %v2613 = vadd.f32 %v2299, %v2525
      %v2614 = vadd.f32 %v2300, %v2528
      %v2615 = vadd.f32 %v2301, %v2530
      %v2616 = vadd.f32 %v2302, %v2533
      %v2617 = vadd.f32 %v2303, %v2535
      %v2618 = vadd.f32 %v2304, %v2538
      %v2619 = vadd.f32 %v2305, %v2540
      %v2620 = vadd.f32 %v2306, %v2543
      %v2621 = vadd.f32 %v2307, %v2545
      %v2622 = vadd.f32 %v2308, %v2548
      %v2623 = vadd.f32 %v2309, %v2550
      %v2624 = vadd.f32 %v2310, %v2553
      %v2625 = vadd.f32 %v2311, %v2555
      %v2626 = vadd.f32 %v2312, %v2558
      %v2627 = vadd.f32 %v2313, %v2560
      %v2628 = vadd.f32 %v2314, %v2563
      %v2629 = vadd.f32 %v2315, %v2565
      %v2630 = vadd.f32 %v2316, %v2568
      %v2631 = vadd.f32 %v2317, %v2570
      %v2632 = vadd.f32 %v2318, %v2573
      %v2633 = vadd.f32 %v2319, %v2575
      %v2634 = vadd.f32 %v2320, %v2578
      %v2635 = vadd.f32 %v2321, %v2580
      %v2636 = vadd.f32 %v2322, %v2583
      %v2637 = vadd.f32 %v2323, %v2585
      %v2638 = vadd.f32 %v2324, %v2588
      %v2639 = vadd.f32 %v2325, %v2590
      %v2640 = vld [vmem:[#allocation2 + $0x39] sm:$0xff]
      %v2641 = vld [vmem:[#allocation2 + $0x41] sm:$0xff]
      %v2642 = vld [vmem:[#allocation2 + $0x49] sm:$0xff]
      %v2643 = vld [vmem:[#allocation2 + $0x51] sm:$0xff]
      %v2644 = vld [vmem:[#allocation2 + $0x59] sm:$0xff]
      %v2645 = vld [vmem:[#allocation2 + $0x61] sm:$0xff]
      %v2646 = vld [vmem:[#allocation2 + $0x69] sm:$0xff]
      %v2647 = vld [vmem:[#allocation2 + $0x71] sm:$0xff]
      %v2648 = vld [vmem:[#allocation2 + $0x79] sm:$0xff]
      %v2649 = vld [vmem:[#allocation2 + $0x81] sm:$0xff]
      %v2650 = vld [vmem:[#allocation2 + $0x89] sm:$0xff]
      %v2651 = vld [vmem:[#allocation2 + $0x91] sm:$0xff]
      %v2652 = vld [vmem:[#allocation2 + $0x99] sm:$0xff]
      %v2653 = vld [vmem:[#allocation2 + $0xa1] sm:$0xff]
      %v2654 = vld [vmem:[#allocation2 + $0xa9] sm:$0xff]
      %v2655 = vld [vmem:[#allocation2 + $0xb1] sm:$0xff]
      %v2656 = vld [vmem:[#allocation2 + $0xb9] sm:$0xff]
      %v2657 = vld [vmem:[#allocation2 + $0xc1] sm:$0xff]
      %v2658 = vld [vmem:[#allocation2 + $0xc9] sm:$0xff]
      %v2659 = vld [vmem:[#allocation2 + $0xd1] sm:$0xff]
      %v2660 = vld [vmem:[#allocation2 + $0xd9] sm:$0xff]
      %v2661 = vld [vmem:[#allocation2 + $0xe1] sm:$0xff]
      %v2662 = vld [vmem:[#allocation2 + $0xe9] sm:$0xff]
      %v2663 = vld [vmem:[#allocation2 + $0xf1] sm:$0xff]
      %v2664 = vld [vmem:[#allocation2 + $0xf9] sm:$0xff]
      %v2665 = vld [vmem:[#allocation2 + $0x101] sm:$0xff]
      %v2666 = vld [vmem:[#allocation2 + $0x109] sm:$0xff]
      %v2667 = vld [vmem:[#allocation2 + $0x111] sm:$0xff]
      %v2668 = vld [vmem:[#allocation2 + $0x119] sm:$0xff]
      %v2669 = vld [vmem:[#allocation2 + $0x121] sm:$0xff]
      %v2670 = vld [vmem:[#allocation2 + $0x129] sm:$0xff]
      %v2671 = vld [vmem:[#allocation2 + $0x131] sm:$0xff]
      %v2672 = vld [vmem:[#allocation2 + $0x139] sm:$0xff]
      %v2673 = vld [vmem:[#allocation2 + $0x141] sm:$0xff]
      %v2674 = vld [vmem:[#allocation2 + $0x149] sm:$0xff]
      %v2675 = vld [vmem:[#allocation2 + $0x151] sm:$0xff]
      %v2676 = vld [vmem:[#allocation2 + $0x159] sm:$0xff]
      %v2677 = vld [vmem:[#allocation2 + $0x161] sm:$0xff]
      %v2678 = vld [vmem:[#allocation2 + $0x169] sm:$0xff]
      %v2679 = vld [vmem:[#allocation2 + $0x171] sm:$0xff]
      %v2680 = vld [vmem:[#allocation2 + $0x179] sm:$0xff]
      %v2681 = vld [vmem:[#allocation2 + $0x181] sm:$0xff]
      %v2682 = vld [vmem:[#allocation2 + $0x189] sm:$0xff]
      %v2683 = vld [vmem:[#allocation2 + $0x191] sm:$0xff]
      %v2684 = vld [vmem:[#allocation2 + $0x199] sm:$0xff]
      %v2685 = vld [vmem:[#allocation2 + $0x1a1] sm:$0xff]
      %v2686 = vld [vmem:[#allocation2 + $0x1a9] sm:$0xff]
      %v2687 = vld [vmem:[#allocation2 + $0x1b1] sm:$0xff]
      %v2688 = vpack.c.bf16 %v2641, %v2640
      %v2689 = vpack.c.bf16 %v2643, %v2642
      %v2690 = vpack.c.bf16 %v2645, %v2644
      %v2691 = vpack.c.bf16 %v2647, %v2646
      %v2692 = vpack.c.bf16 %v2649, %v2648
      %v2693 = vpack.c.bf16 %v2651, %v2650
      %v2694 = vpack.c.bf16 %v2653, %v2652
      %v2695 = vpack.c.bf16 %v2655, %v2654
      %v2696 = vpack.c.bf16 %v2657, %v2656
      %v2697 = vpack.c.bf16 %v2659, %v2658
      %v2698 = vpack.c.bf16 %v2661, %v2660
      %v2699 = vpack.c.bf16 %v2663, %v2662
      %v2700 = vpack.c.bf16 %v2665, %v2664
      %v2701 = vpack.c.bf16 %v2667, %v2666
      %v2702 = vpack.c.bf16 %v2669, %v2668
      %v2703 = vpack.c.bf16 %v2671, %v2670
      %v2704 = vpack.c.bf16 %v2673, %v2672
      %v2705 = vpack.c.bf16 %v2675, %v2674
      %v2706 = vpack.c.bf16 %v2677, %v2676
      %v2707 = vpack.c.bf16 %v2679, %v2678
      %v2708 = vpack.c.bf16 %v2681, %v2680
      %v2709 = vpack.c.bf16 %v2683, %v2682
      %v2710 = vpack.c.bf16 %v2685, %v2684
      %v2711 = vpack.c.bf16 %v2687, %v2686
      %s2712 = scalar_lea.vmem %s3, 320
      %v2713 = vld [vmem:[%s2712] sm:$0xf]
      %v2714 = vld [vmem:[%s2712 + $0x4] sm:$0xf]
      %v2715 = vld [vmem:[%s2712 + $0x8] sm:$0xf]
      %v2716 = vld [vmem:[%s2712 + $0xc] sm:$0xf]
      %v2717 = vld [vmem:[%s2712 + $0x10] sm:$0xf]
      %v2718 = vld [vmem:[%s2712 + $0x14] sm:$0xf]
      %v2719 = vld [vmem:[%s2712 + $0x18] sm:$0xf]
      %v2720 = vld [vmem:[%s2712 + $0x1c] sm:$0xf]
      %v2721 = vld [vmem:[%s2712 + $0x20] sm:$0xf]
      %v2722 = vld [vmem:[%s2712 + $0x24] sm:$0xf]
      %v2723 = vld [vmem:[%s2712 + $0x28] sm:$0xf]
      %v2724 = vld [vmem:[%s2712 + $0x2c] sm:$0xf]
      %v2725 = vld [vmem:[%s2712 + $0x30] sm:$0xf]
      %v2726 = vld [vmem:[%s2712 + $0x34] sm:$0xf]
      %v2727 = vld [vmem:[%s2712 + $0x38] sm:$0xf]
      %v2728 = vld [vmem:[%s2712 + $0x3c] sm:$0xf]
      %v2745 = vunpack.c.l.b16 %v2713
      %v2746 = vunpack.c.l.b16 %v2714
      %v2747 = vunpack.c.l.b16 %v2715
      %v2748 = vunpack.c.l.b16 %v2716
      %v2749 = vunpack.c.l.b16 %v2717
      %v2750 = vunpack.c.l.b16 %v2718
      %v2751 = vunpack.c.l.b16 %v2719
      %v2752 = vunpack.c.l.b16 %v2720
      %v2753 = vunpack.c.l.b16 %v2721
      %v2754 = vunpack.c.l.b16 %v2722
      %v2755 = vunpack.c.l.b16 %v2723
      %v2756 = vunpack.c.l.b16 %v2724
      %v2757 = vunpack.c.l.b16 %v2725
      %v2758 = vunpack.c.l.b16 %v2726
      %v2759 = vunpack.c.l.b16 %v2727
      %v2760 = vunpack.c.l.b16 %v2728
      %v2761 = vpack.c.b16 %v2746, %v2745
      %v2762 = vpack.c.b16 %v2748, %v2747
      %v2763 = vpack.c.b16 %v2750, %v2749
      %v2764 = vpack.c.b16 %v2752, %v2751
      %v2765 = vpack.c.b16 %v2754, %v2753
      %v2766 = vpack.c.b16 %v2756, %v2755
      %v2767 = vpack.c.b16 %v2758, %v2757
      %v2768 = vpack.c.b16 %v2760, %v2759
      %2777 = vmatpush.bf16.msra.mxu0 %v2768
      %2778 = vmatpush.bf16.msra.mxu0 %v2767
      %2779 = vmatpush.bf16.msra.mxu0 %v2766
      %2780 = vmatpush.bf16.msra.mxu0 %v2765
      %2781 = vmatpush.bf16.msra.mxu0 %v2764
      %2782 = vmatpush.bf16.msra.mxu0 %v2763
      %2783 = vmatpush.bf16.msra.mxu0 %v2762
      %2784 = vmatpush.bf16.msra.mxu0 %v2761
      %2785 = vmatmul.bf16.gmra.mxu0 %v2688
      %v2786 = vpop.f32.mrf.mxu0
      %v2787 = vadd.f32 0.0, %v2786
      %v2788 = vpop.f32.mrf.mxu0
      %v2789 = vadd.f32 0.0, %v2788
      %2790 = vmatmul.bf16.gmra.mxu0 %v2689
      %v2791 = vpop.f32.mrf.mxu0
      %v2792 = vadd.f32 0.0, %v2791
      %v2793 = vpop.f32.mrf.mxu0
      %v2794 = vadd.f32 0.0, %v2793
      %2795 = vmatmul.bf16.gmra.mxu0 %v2690
      %v2796 = vpop.f32.mrf.mxu0
      %v2797 = vadd.f32 0.0, %v2796
      %v2798 = vpop.f32.mrf.mxu0
      %v2799 = vadd.f32 0.0, %v2798
      %2800 = vmatmul.bf16.gmra.mxu0 %v2691
      %v2801 = vpop.f32.mrf.mxu0
      %v2802 = vadd.f32 0.0, %v2801
      %v2803 = vpop.f32.mrf.mxu0
      %v2804 = vadd.f32 0.0, %v2803
      %2805 = vmatmul.bf16.gmra.mxu0 %v2692
      %v2806 = vpop.f32.mrf.mxu0
      %v2807 = vadd.f32 0.0, %v2806
      %v2808 = vpop.f32.mrf.mxu0
      %v2809 = vadd.f32 0.0, %v2808
      %2810 = vmatmul.bf16.gmra.mxu0 %v2693
      %v2811 = vpop.f32.mrf.mxu0
      %v2812 = vadd.f32 0.0, %v2811
      %v2813 = vpop.f32.mrf.mxu0
      %v2814 = vadd.f32 0.0, %v2813
      %2815 = vmatmul.bf16.gmra.mxu0 %v2694
      %v2816 = vpop.f32.mrf.mxu0
      %v2817 = vadd.f32 0.0, %v2816
      %v2818 = vpop.f32.mrf.mxu0
      %v2819 = vadd.f32 0.0, %v2818
      %2820 = vmatmul.bf16.gmra.mxu0 %v2695
      %v2821 = vpop.f32.mrf.mxu0
      %v2822 = vadd.f32 0.0, %v2821
      %v2823 = vpop.f32.mrf.mxu0
      %v2824 = vadd.f32 0.0, %v2823
      %2825 = vmatmul.bf16.gmra.mxu0 %v2696
      %v2826 = vpop.f32.mrf.mxu0
      %v2827 = vadd.f32 0.0, %v2826
      %v2828 = vpop.f32.mrf.mxu0
      %v2829 = vadd.f32 0.0, %v2828
      %2830 = vmatmul.bf16.gmra.mxu0 %v2697
      %v2831 = vpop.f32.mrf.mxu0
      %v2832 = vadd.f32 0.0, %v2831
      %v2833 = vpop.f32.mrf.mxu0
      %v2834 = vadd.f32 0.0, %v2833
      %2835 = vmatmul.bf16.gmra.mxu0 %v2698
      %v2836 = vpop.f32.mrf.mxu0
      %v2837 = vadd.f32 0.0, %v2836
      %v2838 = vpop.f32.mrf.mxu0
      %v2839 = vadd.f32 0.0, %v2838
      %2840 = vmatmul.bf16.gmra.mxu0 %v2699
      %v2841 = vpop.f32.mrf.mxu0
      %v2842 = vadd.f32 0.0, %v2841
      %v2843 = vpop.f32.mrf.mxu0
      %v2844 = vadd.f32 0.0, %v2843
      %2845 = vmatmul.bf16.gmra.mxu0 %v2700
      %v2846 = vpop.f32.mrf.mxu0
      %v2847 = vadd.f32 0.0, %v2846
      %v2848 = vpop.f32.mrf.mxu0
      %v2849 = vadd.f32 0.0, %v2848
      %2850 = vmatmul.bf16.gmra.mxu0 %v2701
      %v2851 = vpop.f32.mrf.mxu0
      %v2852 = vadd.f32 0.0, %v2851
      %v2853 = vpop.f32.mrf.mxu0
      %v2854 = vadd.f32 0.0, %v2853
      %2855 = vmatmul.bf16.gmra.mxu0 %v2702
      %v2856 = vpop.f32.mrf.mxu0
      %v2857 = vadd.f32 0.0, %v2856
      %v2858 = vpop.f32.mrf.mxu0
      %v2859 = vadd.f32 0.0, %v2858
      %2860 = vmatmul.bf16.gmra.mxu0 %v2703
      %v2861 = vpop.f32.mrf.mxu0
      %v2862 = vadd.f32 0.0, %v2861
      %v2863 = vpop.f32.mrf.mxu0
      %v2864 = vadd.f32 0.0, %v2863
      %2865 = vmatmul.bf16.gmra.mxu0 %v2704
      %v2866 = vpop.f32.mrf.mxu0
      %v2867 = vadd.f32 0.0, %v2866
      %v2868 = vpop.f32.mrf.mxu0
      %v2869 = vadd.f32 0.0, %v2868
      %2870 = vmatmul.bf16.gmra.mxu0 %v2705
      %v2871 = vpop.f32.mrf.mxu0
      %v2872 = vadd.f32 0.0, %v2871
      %v2873 = vpop.f32.mrf.mxu0
      %v2874 = vadd.f32 0.0, %v2873
      %2875 = vmatmul.bf16.gmra.mxu0 %v2706
      %v2876 = vpop.f32.mrf.mxu0
      %v2877 = vadd.f32 0.0, %v2876
      %v2878 = vpop.f32.mrf.mxu0
      %v2879 = vadd.f32 0.0, %v2878
      %2880 = vmatmul.bf16.gmra.mxu0 %v2707
      %v2881 = vpop.f32.mrf.mxu0
      %v2882 = vadd.f32 0.0, %v2881
      %v2883 = vpop.f32.mrf.mxu0
      %v2884 = vadd.f32 0.0, %v2883
      %2885 = vmatmul.bf16.gmra.mxu0 %v2708
      %v2886 = vpop.f32.mrf.mxu0
      %v2887 = vadd.f32 0.0, %v2886
      %v2888 = vpop.f32.mrf.mxu0
      %v2889 = vadd.f32 0.0, %v2888
      %2890 = vmatmul.bf16.gmra.mxu0 %v2709
      %v2891 = vpop.f32.mrf.mxu0
      %v2892 = vadd.f32 0.0, %v2891
      %v2893 = vpop.f32.mrf.mxu0
      %v2894 = vadd.f32 0.0, %v2893
      %2895 = vmatmul.bf16.gmra.mxu0 %v2710
      %v2896 = vpop.f32.mrf.mxu0
      %v2897 = vadd.f32 0.0, %v2896
      %v2898 = vpop.f32.mrf.mxu0
      %v2899 = vadd.f32 0.0, %v2898
      %2900 = vmatmul.bf16.gmra.mxu0 %v2711
      %v2901 = vpop.f32.mrf.mxu0
      %v2902 = vadd.f32 0.0, %v2901
      %v2903 = vpop.f32.mrf.mxu0
      %v2904 = vadd.f32 0.0, %v2903
      %2905 = vdwg.mxu0
      %v2906 = vadd.f32 %v2592, %v2787
      %v2907 = vadd.f32 %v2593, %v2789
      %v2908 = vadd.f32 %v2594, %v2792
      %v2909 = vadd.f32 %v2595, %v2794
      %v2910 = vadd.f32 %v2596, %v2797
      %v2911 = vadd.f32 %v2597, %v2799
      %v2912 = vadd.f32 %v2598, %v2802
      %v2913 = vadd.f32 %v2599, %v2804
      %v2914 = vadd.f32 %v2600, %v2807
      %v2915 = vadd.f32 %v2601, %v2809
      %v2916 = vadd.f32 %v2602, %v2812
      %v2917 = vadd.f32 %v2603, %v2814
      %v2918 = vadd.f32 %v2604, %v2817
      %v2919 = vadd.f32 %v2605, %v2819
      %v2920 = vadd.f32 %v2606, %v2822
      %v2921 = vadd.f32 %v2607, %v2824
      %v2922 = vadd.f32 %v2608, %v2827
      %v2923 = vadd.f32 %v2609, %v2829
      %v2924 = vadd.f32 %v2610, %v2832
      %v2925 = vadd.f32 %v2611, %v2834
      %v2926 = vadd.f32 %v2612, %v2837
      %v2927 = vadd.f32 %v2613, %v2839
      %v2928 = vadd.f32 %v2614, %v2842
      %v2929 = vadd.f32 %v2615, %v2844
      %v2930 = vadd.f32 %v2616, %v2847
      %v2931 = vadd.f32 %v2617, %v2849
      %v2932 = vadd.f32 %v2618, %v2852
      %v2933 = vadd.f32 %v2619, %v2854
      %v2934 = vadd.f32 %v2620, %v2857
      %v2935 = vadd.f32 %v2621, %v2859
      %v2936 = vadd.f32 %v2622, %v2862
      %v2937 = vadd.f32 %v2623, %v2864
      %v2938 = vadd.f32 %v2624, %v2867
      %v2939 = vadd.f32 %v2625, %v2869
      %v2940 = vadd.f32 %v2626, %v2872
      %v2941 = vadd.f32 %v2627, %v2874
      %v2942 = vadd.f32 %v2628, %v2877
      %v2943 = vadd.f32 %v2629, %v2879
      %v2944 = vadd.f32 %v2630, %v2882
      %v2945 = vadd.f32 %v2631, %v2884
      %v2946 = vadd.f32 %v2632, %v2887
      %v2947 = vadd.f32 %v2633, %v2889
      %v2948 = vadd.f32 %v2634, %v2892
      %v2949 = vadd.f32 %v2635, %v2894
      %v2950 = vadd.f32 %v2636, %v2897
      %v2951 = vadd.f32 %v2637, %v2899
      %v2952 = vadd.f32 %v2638, %v2902
      %v2953 = vadd.f32 %v2639, %v2904
      %v2954 = vld [vmem:[#allocation2 + $0x4f] sm:$0xff]
      %v2955 = vld [vmem:[#allocation2 + $0x57] sm:$0xff]
      %v2956 = vld [vmem:[#allocation2 + $0x5f] sm:$0xff]
      %v2957 = vld [vmem:[#allocation2 + $0x67] sm:$0xff]
      %v2958 = vld [vmem:[#allocation2 + $0x6f] sm:$0xff]
      %v2959 = vld [vmem:[#allocation2 + $0x77] sm:$0xff]
      %v2960 = vld [vmem:[#allocation2 + $0x7f] sm:$0xff]
      %v2961 = vld [vmem:[#allocation2 + $0x87] sm:$0xff]
      %v2962 = vld [vmem:[#allocation2 + $0x8f] sm:$0xff]
      %v2963 = vld [vmem:[#allocation2 + $0x97] sm:$0xff]
      %v2964 = vld [vmem:[#allocation2 + $0x9f] sm:$0xff]
      %v2965 = vld [vmem:[#allocation2 + $0xa7] sm:$0xff]
      %v2966 = vld [vmem:[#allocation2 + $0xaf] sm:$0xff]
      %v2967 = vld [vmem:[#allocation2 + $0xb7] sm:$0xff]
      %v2968 = vld [vmem:[#allocation2 + $0xbf] sm:$0xff]
      %v2969 = vld [vmem:[#allocation2 + $0xc7] sm:$0xff]
      %v2970 = vld [vmem:[#allocation2 + $0xcf] sm:$0xff]
      %v2971 = vld [vmem:[#allocation2 + $0xd7] sm:$0xff]
      %v2972 = vld [vmem:[#allocation2 + $0xdf] sm:$0xff]
      %v2973 = vld [vmem:[#allocation2 + $0xe7] sm:$0xff]
      %v2974 = vld [vmem:[#allocation2 + $0xef] sm:$0xff]
      %v2975 = vld [vmem:[#allocation2 + $0xf7] sm:$0xff]
      %v2976 = vld [vmem:[#allocation2 + $0xff] sm:$0xff]
      %v2977 = vld [vmem:[#allocation2 + $0x107] sm:$0xff]
      %v2978 = vld [vmem:[#allocation2 + $0x10f] sm:$0xff]
      %v2979 = vld [vmem:[#allocation2 + $0x117] sm:$0xff]
      %v2980 = vld [vmem:[#allocation2 + $0x11f] sm:$0xff]
      %v2981 = vld [vmem:[#allocation2 + $0x127] sm:$0xff]
      %v2982 = vld [vmem:[#allocation2 + $0x12f] sm:$0xff]
      %v2983 = vld [vmem:[#allocation2 + $0x137] sm:$0xff]
      %v2984 = vld [vmem:[#allocation2 + $0x13f] sm:$0xff]
      %v2985 = vld [vmem:[#allocation2 + $0x147] sm:$0xff]
      %v2986 = vld [vmem:[#allocation2 + $0x14f] sm:$0xff]
      %v2987 = vld [vmem:[#allocation2 + $0x157] sm:$0xff]
      %v2988 = vld [vmem:[#allocation2 + $0x15f] sm:$0xff]
      %v2989 = vld [vmem:[#allocation2 + $0x167] sm:$0xff]
      %v2990 = vld [vmem:[#allocation2 + $0x16f] sm:$0xff]
      %v2991 = vld [vmem:[#allocation2 + $0x177] sm:$0xff]
      %v2992 = vld [vmem:[#allocation2 + $0x17f] sm:$0xff]
      %v2993 = vld [vmem:[#allocation2 + $0x187] sm:$0xff]
      %v2994 = vld [vmem:[#allocation2 + $0x18f] sm:$0xff]
      %v2995 = vld [vmem:[#allocation2 + $0x197] sm:$0xff]
      %v2996 = vld [vmem:[#allocation2 + $0x19f] sm:$0xff]
      %v2997 = vld [vmem:[#allocation2 + $0x1a7] sm:$0xff]
      %v2998 = vld [vmem:[#allocation2 + $0x1af] sm:$0xff]
      %v2999 = vld [vmem:[#allocation2 + $0x1b7] sm:$0xff]
      %v3000 = vld [vmem:[#allocation2 + $0x1bf] sm:$0xff]
      %v3001 = vld [vmem:[#allocation2 + $0x1c7] sm:$0xff]
      %v3002 = vpack.c.bf16 %v2955, %v2954
      %v3003 = vpack.c.bf16 %v2957, %v2956
      %v3004 = vpack.c.bf16 %v2959, %v2958
      %v3005 = vpack.c.bf16 %v2961, %v2960
      %v3006 = vpack.c.bf16 %v2963, %v2962
      %v3007 = vpack.c.bf16 %v2965, %v2964
      %v3008 = vpack.c.bf16 %v2967, %v2966
      %v3009 = vpack.c.bf16 %v2969, %v2968
      %v3010 = vpack.c.bf16 %v2971, %v2970
      %v3011 = vpack.c.bf16 %v2973, %v2972
      %v3012 = vpack.c.bf16 %v2975, %v2974
      %v3013 = vpack.c.bf16 %v2977, %v2976
      %v3014 = vpack.c.bf16 %v2979, %v2978
      %v3015 = vpack.c.bf16 %v2981, %v2980
      %v3016 = vpack.c.bf16 %v2983, %v2982
      %v3017 = vpack.c.bf16 %v2985, %v2984
      %v3018 = vpack.c.bf16 %v2987, %v2986
      %v3019 = vpack.c.bf16 %v2989, %v2988
      %v3020 = vpack.c.bf16 %v2991, %v2990
      %v3021 = vpack.c.bf16 %v2993, %v2992
      %v3022 = vpack.c.bf16 %v2995, %v2994
      %v3023 = vpack.c.bf16 %v2997, %v2996
      %v3024 = vpack.c.bf16 %v2999, %v2998
      %v3025 = vpack.c.bf16 %v3001, %v3000
      %s3026 = scalar_lea.vmem %s3, 384
      %v3027 = vld [vmem:[%s3026] sm:$0xf]
      %v3028 = vld [vmem:[%s3026 + $0x4] sm:$0xf]
      %v3029 = vld [vmem:[%s3026 + $0x8] sm:$0xf]
      %v3030 = vld [vmem:[%s3026 + $0xc] sm:$0xf]
      %v3031 = vld [vmem:[%s3026 + $0x10] sm:$0xf]
      %v3032 = vld [vmem:[%s3026 + $0x14] sm:$0xf]
      %v3033 = vld [vmem:[%s3026 + $0x18] sm:$0xf]
      %v3034 = vld [vmem:[%s3026 + $0x1c] sm:$0xf]
      %v3035 = vld [vmem:[%s3026 + $0x20] sm:$0xf]
      %v3036 = vld [vmem:[%s3026 + $0x24] sm:$0xf]
      %v3037 = vld [vmem:[%s3026 + $0x28] sm:$0xf]
      %v3038 = vld [vmem:[%s3026 + $0x2c] sm:$0xf]
      %v3039 = vld [vmem:[%s3026 + $0x30] sm:$0xf]
      %v3040 = vld [vmem:[%s3026 + $0x34] sm:$0xf]
      %v3041 = vld [vmem:[%s3026 + $0x38] sm:$0xf]
      %v3042 = vld [vmem:[%s3026 + $0x3c] sm:$0xf]
      %v3059 = vunpack.c.l.b16 %v3027
      %v3060 = vunpack.c.l.b16 %v3028
      %v3061 = vunpack.c.l.b16 %v3029
      %v3062 = vunpack.c.l.b16 %v3030
      %v3063 = vunpack.c.l.b16 %v3031
      %v3064 = vunpack.c.l.b16 %v3032
      %v3065 = vunpack.c.l.b16 %v3033
      %v3066 = vunpack.c.l.b16 %v3034
      %v3067 = vunpack.c.l.b16 %v3035
      %v3068 = vunpack.c.l.b16 %v3036
      %v3069 = vunpack.c.l.b16 %v3037
      %v3070 = vunpack.c.l.b16 %v3038
      %v3071 = vunpack.c.l.b16 %v3039
      %v3072 = vunpack.c.l.b16 %v3040
      %v3073 = vunpack.c.l.b16 %v3041
      %v3074 = vunpack.c.l.b16 %v3042
      %v3075 = vpack.c.b16 %v3060, %v3059
      %v3076 = vpack.c.b16 %v3062, %v3061
      %v3077 = vpack.c.b16 %v3064, %v3063
      %v3078 = vpack.c.b16 %v3066, %v3065
      %v3079 = vpack.c.b16 %v3068, %v3067
      %v3080 = vpack.c.b16 %v3070, %v3069
      %v3081 = vpack.c.b16 %v3072, %v3071
      %v3082 = vpack.c.b16 %v3074, %v3073
      %3091 = vmatpush.bf16.msra.mxu0 %v3082
      %3092 = vmatpush.bf16.msra.mxu0 %v3081
      %3093 = vmatpush.bf16.msra.mxu0 %v3080
      %3094 = vmatpush.bf16.msra.mxu0 %v3079
      %3095 = vmatpush.bf16.msra.mxu0 %v3078
      %3096 = vmatpush.bf16.msra.mxu0 %v3077
      %3097 = vmatpush.bf16.msra.mxu0 %v3076
      %3098 = vmatpush.bf16.msra.mxu0 %v3075
      %3099 = vmatmul.bf16.gmra.mxu0 %v3002
      %v3100 = vpop.f32.mrf.mxu0
      %v3101 = vadd.f32 0.0, %v3100
      %v3102 = vpop.f32.mrf.mxu0
      %v3103 = vadd.f32 0.0, %v3102
      %3104 = vmatmul.bf16.gmra.mxu0 %v3003
      %v3105 = vpop.f32.mrf.mxu0
      %v3106 = vadd.f32 0.0, %v3105
      %v3107 = vpop.f32.mrf.mxu0
      %v3108 = vadd.f32 0.0, %v3107
      %3109 = vmatmul.bf16.gmra.mxu0 %v3004
      %v3110 = vpop.f32.mrf.mxu0
      %v3111 = vadd.f32 0.0, %v3110
      %v3112 = vpop.f32.mrf.mxu0
      %v3113 = vadd.f32 0.0, %v3112
      %3114 = vmatmul.bf16.gmra.mxu0 %v3005
      %v3115 = vpop.f32.mrf.mxu0
      %v3116 = vadd.f32 0.0, %v3115
      %v3117 = vpop.f32.mrf.mxu0
      %v3118 = vadd.f32 0.0, %v3117
      %3119 = vmatmul.bf16.gmra.mxu0 %v3006
      %v3120 = vpop.f32.mrf.mxu0
      %v3121 = vadd.f32 0.0, %v3120
      %v3122 = vpop.f32.mrf.mxu0
      %v3123 = vadd.f32 0.0, %v3122
      %3124 = vmatmul.bf16.gmra.mxu0 %v3007
      %v3125 = vpop.f32.mrf.mxu0
      %v3126 = vadd.f32 0.0, %v3125
      %v3127 = vpop.f32.mrf.mxu0
      %v3128 = vadd.f32 0.0, %v3127
      %3129 = vmatmul.bf16.gmra.mxu0 %v3008
      %v3130 = vpop.f32.mrf.mxu0
      %v3131 = vadd.f32 0.0, %v3130
      %v3132 = vpop.f32.mrf.mxu0
      %v3133 = vadd.f32 0.0, %v3132
      %3134 = vmatmul.bf16.gmra.mxu0 %v3009
      %v3135 = vpop.f32.mrf.mxu0
      %v3136 = vadd.f32 0.0, %v3135
      %v3137 = vpop.f32.mrf.mxu0
      %v3138 = vadd.f32 0.0, %v3137
      %3139 = vmatmul.bf16.gmra.mxu0 %v3010
      %v3140 = vpop.f32.mrf.mxu0
      %v3141 = vadd.f32 0.0, %v3140
      %v3142 = vpop.f32.mrf.mxu0
      %v3143 = vadd.f32 0.0, %v3142
      %3144 = vmatmul.bf16.gmra.mxu0 %v3011
      %v3145 = vpop.f32.mrf.mxu0
      %v3146 = vadd.f32 0.0, %v3145
      %v3147 = vpop.f32.mrf.mxu0
      %v3148 = vadd.f32 0.0, %v3147
      %3149 = vmatmul.bf16.gmra.mxu0 %v3012
      %v3150 = vpop.f32.mrf.mxu0
      %v3151 = vadd.f32 0.0, %v3150
      %v3152 = vpop.f32.mrf.mxu0
      %v3153 = vadd.f32 0.0, %v3152
      %3154 = vmatmul.bf16.gmra.mxu0 %v3013
      %v3155 = vpop.f32.mrf.mxu0
      %v3156 = vadd.f32 0.0, %v3155
      %v3157 = vpop.f32.mrf.mxu0
      %v3158 = vadd.f32 0.0, %v3157
      %3159 = vmatmul.bf16.gmra.mxu0 %v3014
      %v3160 = vpop.f32.mrf.mxu0
      %v3161 = vadd.f32 0.0, %v3160
      %v3162 = vpop.f32.mrf.mxu0
      %v3163 = vadd.f32 0.0, %v3162
      %3164 = vmatmul.bf16.gmra.mxu0 %v3015
      %v3165 = vpop.f32.mrf.mxu0
      %v3166 = vadd.f32 0.0, %v3165
      %v3167 = vpop.f32.mrf.mxu0
      %v3168 = vadd.f32 0.0, %v3167
      %3169 = vmatmul.bf16.gmra.mxu0 %v3016
      %v3170 = vpop.f32.mrf.mxu0
      %v3171 = vadd.f32 0.0, %v3170
      %v3172 = vpop.f32.mrf.mxu0
      %v3173 = vadd.f32 0.0, %v3172
      %3174 = vmatmul.bf16.gmra.mxu0 %v3017
      %v3175 = vpop.f32.mrf.mxu0
      %v3176 = vadd.f32 0.0, %v3175
      %v3177 = vpop.f32.mrf.mxu0
      %v3178 = vadd.f32 0.0, %v3177
      %3179 = vmatmul.bf16.gmra.mxu0 %v3018
      %v3180 = vpop.f32.mrf.mxu0
      %v3181 = vadd.f32 0.0, %v3180
      %v3182 = vpop.f32.mrf.mxu0
      %v3183 = vadd.f32 0.0, %v3182
      %3184 = vmatmul.bf16.gmra.mxu0 %v3019
      %v3185 = vpop.f32.mrf.mxu0
      %v3186 = vadd.f32 0.0, %v3185
      %v3187 = vpop.f32.mrf.mxu0
      %v3188 = vadd.f32 0.0, %v3187
      %3189 = vmatmul.bf16.gmra.mxu0 %v3020
      %v3190 = vpop.f32.mrf.mxu0
      %v3191 = vadd.f32 0.0, %v3190
      %v3192 = vpop.f32.mrf.mxu0
      %v3193 = vadd.f32 0.0, %v3192
      %3194 = vmatmul.bf16.gmra.mxu0 %v3021
      %v3195 = vpop.f32.mrf.mxu0
      %v3196 = vadd.f32 0.0, %v3195
      %v3197 = vpop.f32.mrf.mxu0
      %v3198 = vadd.f32 0.0, %v3197
      %3199 = vmatmul.bf16.gmra.mxu0 %v3022
      %v3200 = vpop.f32.mrf.mxu0
      %v3201 = vadd.f32 0.0, %v3200
      %v3202 = vpop.f32.mrf.mxu0
      %v3203 = vadd.f32 0.0, %v3202
      %3204 = vmatmul.bf16.gmra.mxu0 %v3023
      %v3205 = vpop.f32.mrf.mxu0
      %v3206 = vadd.f32 0.0, %v3205
      %v3207 = vpop.f32.mrf.mxu0
      %v3208 = vadd.f32 0.0, %v3207
      %3209 = vmatmul.bf16.gmra.mxu0 %v3024
      %v3210 = vpop.f32.mrf.mxu0
      %v3211 = vadd.f32 0.0, %v3210
      %v3212 = vpop.f32.mrf.mxu0
      %v3213 = vadd.f32 0.0, %v3212
      %3214 = vmatmul.bf16.gmra.mxu0 %v3025
      %v3215 = vpop.f32.mrf.mxu0
      %v3216 = vadd.f32 0.0, %v3215
      %v3217 = vpop.f32.mrf.mxu0
      %v3218 = vadd.f32 0.0, %v3217
      %3219 = vdwg.mxu0
      %v3220 = vadd.f32 %v2906, %v3101
      %v3221 = vadd.f32 %v2907, %v3103
      %v3222 = vadd.f32 %v2908, %v3106
      %v3223 = vadd.f32 %v2909, %v3108
      %v3224 = vadd.f32 %v2910, %v3111
      %v3225 = vadd.f32 %v2911, %v3113
      %v3226 = vadd.f32 %v2912, %v3116
      %v3227 = vadd.f32 %v2913, %v3118
      %v3228 = vadd.f32 %v2914, %v3121
      %v3229 = vadd.f32 %v2915, %v3123
      %v3230 = vadd.f32 %v2916, %v3126
      %v3231 = vadd.f32 %v2917, %v3128
      %v3232 = vadd.f32 %v2918, %v3131
      %v3233 = vadd.f32 %v2919, %v3133
      %v3234 = vadd.f32 %v2920, %v3136
      %v3235 = vadd.f32 %v2921, %v3138
      %v3236 = vadd.f32 %v2922, %v3141
      %v3237 = vadd.f32 %v2923, %v3143
      %v3238 = vadd.f32 %v2924, %v3146
      %v3239 = vadd.f32 %v2925, %v3148
      %v3240 = vadd.f32 %v2926, %v3151
      %v3241 = vadd.f32 %v2927, %v3153
      %v3242 = vadd.f32 %v2928, %v3156
      %v3243 = vadd.f32 %v2929, %v3158
      %v3244 = vadd.f32 %v2930, %v3161
      %v3245 = vadd.f32 %v2931, %v3163
      %v3246 = vadd.f32 %v2932, %v3166
      %v3247 = vadd.f32 %v2933, %v3168
      %v3248 = vadd.f32 %v2934, %v3171
      %v3249 = vadd.f32 %v2935, %v3173
      %v3250 = vadd.f32 %v2936, %v3176
      %v3251 = vadd.f32 %v2937, %v3178
      %v3252 = vadd.f32 %v2938, %v3181
      %v3253 = vadd.f32 %v2939, %v3183
      %v3254 = vadd.f32 %v2940, %v3186
      %v3255 = vadd.f32 %v2941, %v3188
      %v3256 = vadd.f32 %v2942, %v3191
      %v3257 = vadd.f32 %v2943, %v3193
      %v3258 = vadd.f32 %v2944, %v3196
      %v3259 = vadd.f32 %v2945, %v3198
      %v3260 = vadd.f32 %v2946, %v3201
      %v3261 = vadd.f32 %v2947, %v3203
      %v3262 = vadd.f32 %v2948, %v3206
      %v3263 = vadd.f32 %v2949, %v3208
      %v3264 = vadd.f32 %v2950, %v3211
      %v3265 = vadd.f32 %v2951, %v3213
      %v3266 = vadd.f32 %v2952, %v3216
      %v3267 = vadd.f32 %v2953, %v3218
      %v3268 = vld [vmem:[#allocation2 + $0x50] sm:$0xff]
      %v3269 = vld [vmem:[#allocation2 + $0x58] sm:$0xff]
      %v3270 = vld [vmem:[#allocation2 + $0x60] sm:$0xff]
      %v3271 = vld [vmem:[#allocation2 + $0x68] sm:$0xff]
      %v3272 = vld [vmem:[#allocation2 + $0x70] sm:$0xff]
      %v3273 = vld [vmem:[#allocation2 + $0x78] sm:$0xff]
      %v3274 = vld [vmem:[#allocation2 + $0x80] sm:$0xff]
      %v3275 = vld [vmem:[#allocation2 + $0x88] sm:$0xff]
      %v3276 = vld [vmem:[#allocation2 + $0x90] sm:$0xff]
      %v3277 = vld [vmem:[#allocation2 + $0x98] sm:$0xff]
      %v3278 = vld [vmem:[#allocation2 + $0xa0] sm:$0xff]
      %v3279 = vld [vmem:[#allocation2 + $0xa8] sm:$0xff]
      %v3280 = vld [vmem:[#allocation2 + $0xb0] sm:$0xff]
      %v3281 = vld [vmem:[#allocation2 + $0xb8] sm:$0xff]
      %v3282 = vld [vmem:[#allocation2 + $0xc0] sm:$0xff]
      %v3283 = vld [vmem:[#allocation2 + $0xc8] sm:$0xff]
      %v3284 = vld [vmem:[#allocation2 + $0xd0] sm:$0xff]
      %v3285 = vld [vmem:[#allocation2 + $0xd8] sm:$0xff]
      %v3286 = vld [vmem:[#allocation2 + $0xe0] sm:$0xff]
      %v3287 = vld [vmem:[#allocation2 + $0xe8] sm:$0xff]
      %v3288 = vld [vmem:[#allocation2 + $0xf0] sm:$0xff]
      %v3289 = vld [vmem:[#allocation2 + $0xf8] sm:$0xff]
      %v3290 = vld [vmem:[#allocation2 + $0x100] sm:$0xff]
      %v3291 = vld [vmem:[#allocation2 + $0x108] sm:$0xff]
      %v3292 = vld [vmem:[#allocation2 + $0x110] sm:$0xff]
      %v3293 = vld [vmem:[#allocation2 + $0x118] sm:$0xff]
      %v3294 = vld [vmem:[#allocation2 + $0x120] sm:$0xff]
      %v3295 = vld [vmem:[#allocation2 + $0x128] sm:$0xff]
      %v3296 = vld [vmem:[#allocation2 + $0x130] sm:$0xff]
      %v3297 = vld [vmem:[#allocation2 + $0x138] sm:$0xff]
      %v3298 = vld [vmem:[#allocation2 + $0x140] sm:$0xff]
      %v3299 = vld [vmem:[#allocation2 + $0x148] sm:$0xff]
      %v3300 = vld [vmem:[#allocation2 + $0x150] sm:$0xff]
      %v3301 = vld [vmem:[#allocation2 + $0x158] sm:$0xff]
      %v3302 = vld [vmem:[#allocation2 + $0x160] sm:$0xff]
      %v3303 = vld [vmem:[#allocation2 + $0x168] sm:$0xff]
      %v3304 = vld [vmem:[#allocation2 + $0x170] sm:$0xff]
      %v3305 = vld [vmem:[#allocation2 + $0x178] sm:$0xff]
      %v3306 = vld [vmem:[#allocation2 + $0x180] sm:$0xff]
      %v3307 = vld [vmem:[#allocation2 + $0x188] sm:$0xff]
      %v3308 = vld [vmem:[#allocation2 + $0x190] sm:$0xff]
      %v3309 = vld [vmem:[#allocation2 + $0x198] sm:$0xff]
      %v3310 = vld [vmem:[#allocation2 + $0x1a0] sm:$0xff]
      %v3311 = vld [vmem:[#allocation2 + $0x1a8] sm:$0xff]
      %v3312 = vld [vmem:[#allocation2 + $0x1b0] sm:$0xff]
      %v3313 = vld [vmem:[#allocation2 + $0x1b8] sm:$0xff]
      %v3314 = vld [vmem:[#allocation2 + $0x1c0] sm:$0xff]
      %v3315 = vld [vmem:[#allocation2 + $0x1c8] sm:$0xff]
      %v3316 = vpack.c.bf16 %v3269, %v3268
      %v3317 = vpack.c.bf16 %v3271, %v3270
      %v3318 = vpack.c.bf16 %v3273, %v3272
      %v3319 = vpack.c.bf16 %v3275, %v3274
      %v3320 = vpack.c.bf16 %v3277, %v3276
      %v3321 = vpack.c.bf16 %v3279, %v3278
      %v3322 = vpack.c.bf16 %v3281, %v3280
      %v3323 = vpack.c.bf16 %v3283, %v3282
      %v3324 = vpack.c.bf16 %v3285, %v3284
      %v3325 = vpack.c.bf16 %v3287, %v3286
      %v3326 = vpack.c.bf16 %v3289, %v3288
      %v3327 = vpack.c.bf16 %v3291, %v3290
      %v3328 = vpack.c.bf16 %v3293, %v3292
      %v3329 = vpack.c.bf16 %v3295, %v3294
      %v3330 = vpack.c.bf16 %v3297, %v3296
      %v3331 = vpack.c.bf16 %v3299, %v3298
      %v3332 = vpack.c.bf16 %v3301, %v3300
      %v3333 = vpack.c.bf16 %v3303, %v3302
      %v3334 = vpack.c.bf16 %v3305, %v3304
      %v3335 = vpack.c.bf16 %v3307, %v3306
      %v3336 = vpack.c.bf16 %v3309, %v3308
      %v3337 = vpack.c.bf16 %v3311, %v3310
      %v3338 = vpack.c.bf16 %v3313, %v3312
      %v3339 = vpack.c.bf16 %v3315, %v3314
      %s3340 = scalar_lea.vmem %s3, 448
      %v3341 = vld [vmem:[%s3340] sm:$0xf]
      %v3342 = vld [vmem:[%s3340 + $0x4] sm:$0xf]
      %v3343 = vld [vmem:[%s3340 + $0x8] sm:$0xf]
      %v3344 = vld [vmem:[%s3340 + $0xc] sm:$0xf]
      %v3345 = vld [vmem:[%s3340 + $0x10] sm:$0xf]
      %v3346 = vld [vmem:[%s3340 + $0x14] sm:$0xf]
      %v3347 = vld [vmem:[%s3340 + $0x18] sm:$0xf]
      %v3348 = vld [vmem:[%s3340 + $0x1c] sm:$0xf]
      %v3349 = vld [vmem:[%s3340 + $0x20] sm:$0xf]
      %v3350 = vld [vmem:[%s3340 + $0x24] sm:$0xf]
      %v3351 = vld [vmem:[%s3340 + $0x28] sm:$0xf]
      %v3352 = vld [vmem:[%s3340 + $0x2c] sm:$0xf]
      %v3353 = vld [vmem:[%s3340 + $0x30] sm:$0xf]
      %v3354 = vld [vmem:[%s3340 + $0x34] sm:$0xf]
      %v3355 = vld [vmem:[%s3340 + $0x38] sm:$0xf]
      %v3356 = vld [vmem:[%s3340 + $0x3c] sm:$0xf]
      %v3373 = vunpack.c.l.b16 %v3341
      %v3374 = vunpack.c.l.b16 %v3342
      %v3375 = vunpack.c.l.b16 %v3343
      %v3376 = vunpack.c.l.b16 %v3344
      %v3377 = vunpack.c.l.b16 %v3345
      %v3378 = vunpack.c.l.b16 %v3346
      %v3379 = vunpack.c.l.b16 %v3347
      %v3380 = vunpack.c.l.b16 %v3348
      %v3381 = vunpack.c.l.b16 %v3349
      %v3382 = vunpack.c.l.b16 %v3350
      %v3383 = vunpack.c.l.b16 %v3351
      %v3384 = vunpack.c.l.b16 %v3352
      %v3385 = vunpack.c.l.b16 %v3353
      %v3386 = vunpack.c.l.b16 %v3354
      %v3387 = vunpack.c.l.b16 %v3355
      %v3388 = vunpack.c.l.b16 %v3356
      %v3389 = vpack.c.b16 %v3374, %v3373
      %v3390 = vpack.c.b16 %v3376, %v3375
      %v3391 = vpack.c.b16 %v3378, %v3377
      %v3392 = vpack.c.b16 %v3380, %v3379
      %v3393 = vpack.c.b16 %v3382, %v3381
      %v3394 = vpack.c.b16 %v3384, %v3383
      %v3395 = vpack.c.b16 %v3386, %v3385
      %v3396 = vpack.c.b16 %v3388, %v3387
      %3405 = vmatpush.bf16.msra.mxu0 %v3396
      %3406 = vmatpush.bf16.msra.mxu0 %v3395
      %3407 = vmatpush.bf16.msra.mxu0 %v3394
      %3408 = vmatpush.bf16.msra.mxu0 %v3393
      %3409 = vmatpush.bf16.msra.mxu0 %v3392
      %3410 = vmatpush.bf16.msra.mxu0 %v3391
      %3411 = vmatpush.bf16.msra.mxu0 %v3390
      %3412 = vmatpush.bf16.msra.mxu0 %v3389
      %3413 = vmatmul.bf16.gmra.mxu0 %v3316
      %v3414 = vpop.f32.mrf.mxu0
      %v3415 = vadd.f32 0.0, %v3414
      %v3416 = vpop.f32.mrf.mxu0
      %v3417 = vadd.f32 0.0, %v3416
      %3418 = vmatmul.bf16.gmra.mxu0 %v3317
      %v3419 = vpop.f32.mrf.mxu0
      %v3420 = vadd.f32 0.0, %v3419
      %v3421 = vpop.f32.mrf.mxu0
      %v3422 = vadd.f32 0.0, %v3421
      %3423 = vmatmul.bf16.gmra.mxu0 %v3318
      %v3424 = vpop.f32.mrf.mxu0
      %v3425 = vadd.f32 0.0, %v3424
      %v3426 = vpop.f32.mrf.mxu0
      %v3427 = vadd.f32 0.0, %v3426
      %3428 = vmatmul.bf16.gmra.mxu0 %v3319
      %v3429 = vpop.f32.mrf.mxu0
      %v3430 = vadd.f32 0.0, %v3429
      %v3431 = vpop.f32.mrf.mxu0
      %v3432 = vadd.f32 0.0, %v3431
      %3433 = vmatmul.bf16.gmra.mxu0 %v3320
      %v3434 = vpop.f32.mrf.mxu0
      %v3435 = vadd.f32 0.0, %v3434
      %v3436 = vpop.f32.mrf.mxu0
      %v3437 = vadd.f32 0.0, %v3436
      %3438 = vmatmul.bf16.gmra.mxu0 %v3321
      %v3439 = vpop.f32.mrf.mxu0
      %v3440 = vadd.f32 0.0, %v3439
      %v3441 = vpop.f32.mrf.mxu0
      %v3442 = vadd.f32 0.0, %v3441
      %3443 = vmatmul.bf16.gmra.mxu0 %v3322
      %v3444 = vpop.f32.mrf.mxu0
      %v3445 = vadd.f32 0.0, %v3444
      %v3446 = vpop.f32.mrf.mxu0
      %v3447 = vadd.f32 0.0, %v3446
      %3448 = vmatmul.bf16.gmra.mxu0 %v3323
      %v3449 = vpop.f32.mrf.mxu0
      %v3450 = vadd.f32 0.0, %v3449
      %v3451 = vpop.f32.mrf.mxu0
      %v3452 = vadd.f32 0.0, %v3451
      %3453 = vmatmul.bf16.gmra.mxu0 %v3324
      %v3454 = vpop.f32.mrf.mxu0
      %v3455 = vadd.f32 0.0, %v3454
      %v3456 = vpop.f32.mrf.mxu0
      %v3457 = vadd.f32 0.0, %v3456
      %3458 = vmatmul.bf16.gmra.mxu0 %v3325
      %v3459 = vpop.f32.mrf.mxu0
      %v3460 = vadd.f32 0.0, %v3459
      %v3461 = vpop.f32.mrf.mxu0
      %v3462 = vadd.f32 0.0, %v3461
      %3463 = vmatmul.bf16.gmra.mxu0 %v3326
      %v3464 = vpop.f32.mrf.mxu0
      %v3465 = vadd.f32 0.0, %v3464
      %v3466 = vpop.f32.mrf.mxu0
      %v3467 = vadd.f32 0.0, %v3466
      %3468 = vmatmul.bf16.gmra.mxu0 %v3327
      %v3469 = vpop.f32.mrf.mxu0
      %v3470 = vadd.f32 0.0, %v3469
      %v3471 = vpop.f32.mrf.mxu0
      %v3472 = vadd.f32 0.0, %v3471
      %3473 = vmatmul.bf16.gmra.mxu0 %v3328
      %v3474 = vpop.f32.mrf.mxu0
      %v3475 = vadd.f32 0.0, %v3474
      %v3476 = vpop.f32.mrf.mxu0
      %v3477 = vadd.f32 0.0, %v3476
      %3478 = vmatmul.bf16.gmra.mxu0 %v3329
      %v3479 = vpop.f32.mrf.mxu0
      %v3480 = vadd.f32 0.0, %v3479
      %v3481 = vpop.f32.mrf.mxu0
      %v3482 = vadd.f32 0.0, %v3481
      %3483 = vmatmul.bf16.gmra.mxu0 %v3330
      %v3484 = vpop.f32.mrf.mxu0
      %v3485 = vadd.f32 0.0, %v3484
      %v3486 = vpop.f32.mrf.mxu0
      %v3487 = vadd.f32 0.0, %v3486
      %3488 = vmatmul.bf16.gmra.mxu0 %v3331
      %v3489 = vpop.f32.mrf.mxu0
      %v3490 = vadd.f32 0.0, %v3489
      %v3491 = vpop.f32.mrf.mxu0
      %v3492 = vadd.f32 0.0, %v3491
      %3493 = vmatmul.bf16.gmra.mxu0 %v3332
      %v3494 = vpop.f32.mrf.mxu0
      %v3495 = vadd.f32 0.0, %v3494
      %v3496 = vpop.f32.mrf.mxu0
      %v3497 = vadd.f32 0.0, %v3496
      %3498 = vmatmul.bf16.gmra.mxu0 %v3333
      %v3499 = vpop.f32.mrf.mxu0
      %v3500 = vadd.f32 0.0, %v3499
      %v3501 = vpop.f32.mrf.mxu0
      %v3502 = vadd.f32 0.0, %v3501
      %3503 = vmatmul.bf16.gmra.mxu0 %v3334
      %v3504 = vpop.f32.mrf.mxu0
      %v3505 = vadd.f32 0.0, %v3504
      %v3506 = vpop.f32.mrf.mxu0
      %v3507 = vadd.f32 0.0, %v3506
      %3508 = vmatmul.bf16.gmra.mxu0 %v3335
      %v3509 = vpop.f32.mrf.mxu0
      %v3510 = vadd.f32 0.0, %v3509
      %v3511 = vpop.f32.mrf.mxu0
      %v3512 = vadd.f32 0.0, %v3511
      %3513 = vmatmul.bf16.gmra.mxu0 %v3336
      %v3514 = vpop.f32.mrf.mxu0
      %v3515 = vadd.f32 0.0, %v3514
      %v3516 = vpop.f32.mrf.mxu0
      %v3517 = vadd.f32 0.0, %v3516
      %3518 = vmatmul.bf16.gmra.mxu0 %v3337
      %v3519 = vpop.f32.mrf.mxu0
      %v3520 = vadd.f32 0.0, %v3519
      %v3521 = vpop.f32.mrf.mxu0
      %v3522 = vadd.f32 0.0, %v3521
      %3523 = vmatmul.bf16.gmra.mxu0 %v3338
      %v3524 = vpop.f32.mrf.mxu0
      %v3525 = vadd.f32 0.0, %v3524
      %v3526 = vpop.f32.mrf.mxu0
      %v3527 = vadd.f32 0.0, %v3526
      %3528 = vmatmul.bf16.gmra.mxu0 %v3339
      %v3529 = vpop.f32.mrf.mxu0
      %v3530 = vadd.f32 0.0, %v3529
      %v3531 = vpop.f32.mrf.mxu0
      %v3532 = vadd.f32 0.0, %v3531
      %3533 = vdwg.mxu0
      %v3534 = vadd.f32 %v3220, %v3415
      %v3535 = vadd.f32 %v3221, %v3417
      %v3536 = vadd.f32 %v3222, %v3420
      %v3537 = vadd.f32 %v3223, %v3422
      %v3538 = vadd.f32 %v3224, %v3425
      %v3539 = vadd.f32 %v3225, %v3427
      %v3540 = vadd.f32 %v3226, %v3430
      %v3541 = vadd.f32 %v3227, %v3432
      %v3542 = vadd.f32 %v3228, %v3435
      %v3543 = vadd.f32 %v3229, %v3437
      %v3544 = vadd.f32 %v3230, %v3440
      %v3545 = vadd.f32 %v3231, %v3442
      %v3546 = vadd.f32 %v3232, %v3445
      %v3547 = vadd.f32 %v3233, %v3447
      %v3548 = vadd.f32 %v3234, %v3450
      %v3549 = vadd.f32 %v3235, %v3452
      %v3550 = vadd.f32 %v3236, %v3455
      %v3551 = vadd.f32 %v3237, %v3457
      %v3552 = vadd.f32 %v3238, %v3460
      %v3553 = vadd.f32 %v3239, %v3462
      %v3554 = vadd.f32 %v3240, %v3465
      %v3555 = vadd.f32 %v3241, %v3467
      %v3556 = vadd.f32 %v3242, %v3470
      %v3557 = vadd.f32 %v3243, %v3472
      %v3558 = vadd.f32 %v3244, %v3475
      %v3559 = vadd.f32 %v3245, %v3477
      %v3560 = vadd.f32 %v3246, %v3480
      %v3561 = vadd.f32 %v3247, %v3482
      %v3562 = vadd.f32 %v3248, %v3485
      %v3563 = vadd.f32 %v3249, %v3487
      %v3564 = vadd.f32 %v3250, %v3490
      %v3565 = vadd.f32 %v3251, %v3492
      %v3566 = vadd.f32 %v3252, %v3495
      %v3567 = vadd.f32 %v3253, %v3497
      %v3568 = vadd.f32 %v3254, %v3500
      %v3569 = vadd.f32 %v3255, %v3502
      %v3570 = vadd.f32 %v3256, %v3505
      %v3571 = vadd.f32 %v3257, %v3507
      %v3572 = vadd.f32 %v3258, %v3510
      %v3573 = vadd.f32 %v3259, %v3512
      %v3574 = vadd.f32 %v3260, %v3515
      %v3575 = vadd.f32 %v3261, %v3517
      %v3576 = vadd.f32 %v3262, %v3520
      %v3577 = vadd.f32 %v3263, %v3522
      %v3578 = vadd.f32 %v3264, %v3525
      %v3579 = vadd.f32 %v3265, %v3527
      %v3580 = vadd.f32 %v3266, %v3530
      %v3581 = vadd.f32 %v3267, %v3532
      %v3582 = vld [vmem:[#allocation2 + $0x51] sm:$0xff]
      %v3583 = vld [vmem:[#allocation2 + $0x59] sm:$0xff]
      %v3584 = vld [vmem:[#allocation2 + $0x61] sm:$0xff]
      %v3585 = vld [vmem:[#allocation2 + $0x69] sm:$0xff]
      %v3586 = vld [vmem:[#allocation2 + $0x71] sm:$0xff]
      %v3587 = vld [vmem:[#allocation2 + $0x79] sm:$0xff]
      %v3588 = vld [vmem:[#allocation2 + $0x81] sm:$0xff]
      %v3589 = vld [vmem:[#allocation2 + $0x89] sm:$0xff]
      %v3590 = vld [vmem:[#allocation2 + $0x91] sm:$0xff]
      %v3591 = vld [vmem:[#allocation2 + $0x99] sm:$0xff]
      %v3592 = vld [vmem:[#allocation2 + $0xa1] sm:$0xff]
      %v3593 = vld [vmem:[#allocation2 + $0xa9] sm:$0xff]
      %v3594 = vld [vmem:[#allocation2 + $0xb1] sm:$0xff]
      %v3595 = vld [vmem:[#allocation2 + $0xb9] sm:$0xff]
      %v3596 = vld [vmem:[#allocation2 + $0xc1] sm:$0xff]
      %v3597 = vld [vmem:[#allocation2 + $0xc9] sm:$0xff]
      %v3598 = vld [vmem:[#allocation2 + $0xd1] sm:$0xff]
      %v3599 = vld [vmem:[#allocation2 + $0xd9] sm:$0xff]
      %v3600 = vld [vmem:[#allocation2 + $0xe1] sm:$0xff]
      %v3601 = vld [vmem:[#allocation2 + $0xe9] sm:$0xff]
      %v3602 = vld [vmem:[#allocation2 + $0xf1] sm:$0xff]
      %v3603 = vld [vmem:[#allocation2 + $0xf9] sm:$0xff]
      %v3604 = vld [vmem:[#allocation2 + $0x101] sm:$0xff]
      %v3605 = vld [vmem:[#allocation2 + $0x109] sm:$0xff]
      %v3606 = vld [vmem:[#allocation2 + $0x111] sm:$0xff]
      %v3607 = vld [vmem:[#allocation2 + $0x119] sm:$0xff]
      %v3608 = vld [vmem:[#allocation2 + $0x121] sm:$0xff]
      %v3609 = vld [vmem:[#allocation2 + $0x129] sm:$0xff]
      %v3610 = vld [vmem:[#allocation2 + $0x131] sm:$0xff]
      %v3611 = vld [vmem:[#allocation2 + $0x139] sm:$0xff]
      %v3612 = vld [vmem:[#allocation2 + $0x141] sm:$0xff]
      %v3613 = vld [vmem:[#allocation2 + $0x149] sm:$0xff]
      %v3614 = vld [vmem:[#allocation2 + $0x151] sm:$0xff]
      %v3615 = vld [vmem:[#allocation2 + $0x159] sm:$0xff]
      %v3616 = vld [vmem:[#allocation2 + $0x161] sm:$0xff]
      %v3617 = vld [vmem:[#allocation2 + $0x169] sm:$0xff]
      %v3618 = vld [vmem:[#allocation2 + $0x171] sm:$0xff]
      %v3619 = vld [vmem:[#allocation2 + $0x179] sm:$0xff]
      %v3620 = vld [vmem:[#allocation2 + $0x181] sm:$0xff]
      %v3621 = vld [vmem:[#allocation2 + $0x189] sm:$0xff]
      %v3622 = vld [vmem:[#allocation2 + $0x191] sm:$0xff]
      %v3623 = vld [vmem:[#allocation2 + $0x199] sm:$0xff]
      %v3624 = vld [vmem:[#allocation2 + $0x1a1] sm:$0xff]
      %v3625 = vld [vmem:[#allocation2 + $0x1a9] sm:$0xff]
      %v3626 = vld [vmem:[#allocation2 + $0x1b1] sm:$0xff]
      %v3627 = vld [vmem:[#allocation2 + $0x1b9] sm:$0xff]
      %v3628 = vld [vmem:[#allocation2 + $0x1c1] sm:$0xff]
      %v3629 = vld [vmem:[#allocation2 + $0x1c9] sm:$0xff]
      %v3630 = vpack.c.bf16 %v3583, %v3582
      %v3631 = vpack.c.bf16 %v3585, %v3584
      %v3632 = vpack.c.bf16 %v3587, %v3586
      %v3633 = vpack.c.bf16 %v3589, %v3588
      %v3634 = vpack.c.bf16 %v3591, %v3590
      %v3635 = vpack.c.bf16 %v3593, %v3592
      %v3636 = vpack.c.bf16 %v3595, %v3594
      %v3637 = vpack.c.bf16 %v3597, %v3596
      %v3638 = vpack.c.bf16 %v3599, %v3598
      %v3639 = vpack.c.bf16 %v3601, %v3600
      %v3640 = vpack.c.bf16 %v3603, %v3602
      %v3641 = vpack.c.bf16 %v3605, %v3604
      %v3642 = vpack.c.bf16 %v3607, %v3606
      %v3643 = vpack.c.bf16 %v3609, %v3608
      %v3644 = vpack.c.bf16 %v3611, %v3610
      %v3645 = vpack.c.bf16 %v3613, %v3612
      %v3646 = vpack.c.bf16 %v3615, %v3614
      %v3647 = vpack.c.bf16 %v3617, %v3616
      %v3648 = vpack.c.bf16 %v3619, %v3618
      %v3649 = vpack.c.bf16 %v3621, %v3620
      %v3650 = vpack.c.bf16 %v3623, %v3622
      %v3651 = vpack.c.bf16 %v3625, %v3624
      %v3652 = vpack.c.bf16 %v3627, %v3626
      %v3653 = vpack.c.bf16 %v3629, %v3628
      %s3654 = scalar_lea.vmem %s3, 512
      %v3655 = vld [vmem:[%s3654] sm:$0xf]
      %v3656 = vld [vmem:[%s3654 + $0x4] sm:$0xf]
      %v3657 = vld [vmem:[%s3654 + $0x8] sm:$0xf]
      %v3658 = vld [vmem:[%s3654 + $0xc] sm:$0xf]
      %v3659 = vld [vmem:[%s3654 + $0x10] sm:$0xf]
      %v3660 = vld [vmem:[%s3654 + $0x14] sm:$0xf]
      %v3661 = vld [vmem:[%s3654 + $0x18] sm:$0xf]
      %v3662 = vld [vmem:[%s3654 + $0x1c] sm:$0xf]
      %v3663 = vld [vmem:[%s3654 + $0x20] sm:$0xf]
      %v3664 = vld [vmem:[%s3654 + $0x24] sm:$0xf]
      %v3665 = vld [vmem:[%s3654 + $0x28] sm:$0xf]
      %v3666 = vld [vmem:[%s3654 + $0x2c] sm:$0xf]
      %v3667 = vld [vmem:[%s3654 + $0x30] sm:$0xf]
      %v3668 = vld [vmem:[%s3654 + $0x34] sm:$0xf]
      %v3669 = vld [vmem:[%s3654 + $0x38] sm:$0xf]
      %v3670 = vld [vmem:[%s3654 + $0x3c] sm:$0xf]
      %v3687 = vunpack.c.l.b16 %v3655
      %v3688 = vunpack.c.l.b16 %v3656
      %v3689 = vunpack.c.l.b16 %v3657
      %v3690 = vunpack.c.l.b16 %v3658
      %v3691 = vunpack.c.l.b16 %v3659
      %v3692 = vunpack.c.l.b16 %v3660
      %v3693 = vunpack.c.l.b16 %v3661
      %v3694 = vunpack.c.l.b16 %v3662
      %v3695 = vunpack.c.l.b16 %v3663
      %v3696 = vunpack.c.l.b16 %v3664
      %v3697 = vunpack.c.l.b16 %v3665
      %v3698 = vunpack.c.l.b16 %v3666
      %v3699 = vunpack.c.l.b16 %v3667
      %v3700 = vunpack.c.l.b16 %v3668
      %v3701 = vunpack.c.l.b16 %v3669
      %v3702 = vunpack.c.l.b16 %v3670
      %v3703 = vpack.c.b16 %v3688, %v3687
      %v3704 = vpack.c.b16 %v3690, %v3689
      %v3705 = vpack.c.b16 %v3692, %v3691
      %v3706 = vpack.c.b16 %v3694, %v3693
      %v3707 = vpack.c.b16 %v3696, %v3695
      %v3708 = vpack.c.b16 %v3698, %v3697
      %v3709 = vpack.c.b16 %v3700, %v3699
      %v3710 = vpack.c.b16 %v3702, %v3701
      %3719 = vmatpush.bf16.msra.mxu0 %v3710
      %3720 = vmatpush.bf16.msra.mxu0 %v3709
      %3721 = vmatpush.bf16.msra.mxu0 %v3708
      %3722 = vmatpush.bf16.msra.mxu0 %v3707
      %3723 = vmatpush.bf16.msra.mxu0 %v3706
      %3724 = vmatpush.bf16.msra.mxu0 %v3705
      %3725 = vmatpush.bf16.msra.mxu0 %v3704
      %3726 = vmatpush.bf16.msra.mxu0 %v3703
      %3727 = vmatmul.bf16.gmra.mxu0 %v3630
      %v3728 = vpop.f32.mrf.mxu0
      %v3729 = vadd.f32 0.0, %v3728
      %v3730 = vpop.f32.mrf.mxu0
      %v3731 = vadd.f32 0.0, %v3730
      %3732 = vmatmul.bf16.gmra.mxu0 %v3631
      %v3733 = vpop.f32.mrf.mxu0
      %v3734 = vadd.f32 0.0, %v3733
      %v3735 = vpop.f32.mrf.mxu0
      %v3736 = vadd.f32 0.0, %v3735
      %3737 = vmatmul.bf16.gmra.mxu0 %v3632
      %v3738 = vpop.f32.mrf.mxu0
      %v3739 = vadd.f32 0.0, %v3738
      %v3740 = vpop.f32.mrf.mxu0
      %v3741 = vadd.f32 0.0, %v3740
      %3742 = vmatmul.bf16.gmra.mxu0 %v3633
      %v3743 = vpop.f32.mrf.mxu0
      %v3744 = vadd.f32 0.0, %v3743
      %v3745 = vpop.f32.mrf.mxu0
      %v3746 = vadd.f32 0.0, %v3745
      %3747 = vmatmul.bf16.gmra.mxu0 %v3634
      %v3748 = vpop.f32.mrf.mxu0
      %v3749 = vadd.f32 0.0, %v3748
      %v3750 = vpop.f32.mrf.mxu0
      %v3751 = vadd.f32 0.0, %v3750
      %3752 = vmatmul.bf16.gmra.mxu0 %v3635
      %v3753 = vpop.f32.mrf.mxu0
      %v3754 = vadd.f32 0.0, %v3753
      %v3755 = vpop.f32.mrf.mxu0
      %v3756 = vadd.f32 0.0, %v3755
      %3757 = vmatmul.bf16.gmra.mxu0 %v3636
      %v3758 = vpop.f32.mrf.mxu0
      %v3759 = vadd.f32 0.0, %v3758
      %v3760 = vpop.f32.mrf.mxu0
      %v3761 = vadd.f32 0.0, %v3760
      %3762 = vmatmul.bf16.gmra.mxu0 %v3637
      %v3763 = vpop.f32.mrf.mxu0
      %v3764 = vadd.f32 0.0, %v3763
      %v3765 = vpop.f32.mrf.mxu0
      %v3766 = vadd.f32 0.0, %v3765
      %3767 = vmatmul.bf16.gmra.mxu0 %v3638
      %v3768 = vpop.f32.mrf.mxu0
      %v3769 = vadd.f32 0.0, %v3768
      %v3770 = vpop.f32.mrf.mxu0
      %v3771 = vadd.f32 0.0, %v3770
      %3772 = vmatmul.bf16.gmra.mxu0 %v3639
      %v3773 = vpop.f32.mrf.mxu0
      %v3774 = vadd.f32 0.0, %v3773
      %v3775 = vpop.f32.mrf.mxu0
      %v3776 = vadd.f32 0.0, %v3775
      %3777 = vmatmul.bf16.gmra.mxu0 %v3640
      %v3778 = vpop.f32.mrf.mxu0
      %v3779 = vadd.f32 0.0, %v3778
      %v3780 = vpop.f32.mrf.mxu0
      %v3781 = vadd.f32 0.0, %v3780
      %3782 = vmatmul.bf16.gmra.mxu0 %v3641
      %v3783 = vpop.f32.mrf.mxu0
      %v3784 = vadd.f32 0.0, %v3783
      %v3785 = vpop.f32.mrf.mxu0
      %v3786 = vadd.f32 0.0, %v3785
      %3787 = vmatmul.bf16.gmra.mxu0 %v3642
      %v3788 = vpop.f32.mrf.mxu0
      %v3789 = vadd.f32 0.0, %v3788
      %v3790 = vpop.f32.mrf.mxu0
      %v3791 = vadd.f32 0.0, %v3790
      %3792 = vmatmul.bf16.gmra.mxu0 %v3643
      %v3793 = vpop.f32.mrf.mxu0
      %v3794 = vadd.f32 0.0, %v3793
      %v3795 = vpop.f32.mrf.mxu0
      %v3796 = vadd.f32 0.0, %v3795
      %3797 = vmatmul.bf16.gmra.mxu0 %v3644
      %v3798 = vpop.f32.mrf.mxu0
      %v3799 = vadd.f32 0.0, %v3798
      %v3800 = vpop.f32.mrf.mxu0
      %v3801 = vadd.f32 0.0, %v3800
      %3802 = vmatmul.bf16.gmra.mxu0 %v3645
      %v3803 = vpop.f32.mrf.mxu0
      %v3804 = vadd.f32 0.0, %v3803
      %v3805 = vpop.f32.mrf.mxu0
      %v3806 = vadd.f32 0.0, %v3805
      %3807 = vmatmul.bf16.gmra.mxu0 %v3646
      %v3808 = vpop.f32.mrf.mxu0
      %v3809 = vadd.f32 0.0, %v3808
      %v3810 = vpop.f32.mrf.mxu0
      %v3811 = vadd.f32 0.0, %v3810
      %3812 = vmatmul.bf16.gmra.mxu0 %v3647
      %v3813 = vpop.f32.mrf.mxu0
      %v3814 = vadd.f32 0.0, %v3813
      %v3815 = vpop.f32.mrf.mxu0
      %v3816 = vadd.f32 0.0, %v3815
      %3817 = vmatmul.bf16.gmra.mxu0 %v3648
      %v3818 = vpop.f32.mrf.mxu0
      %v3819 = vadd.f32 0.0, %v3818
      %v3820 = vpop.f32.mrf.mxu0
      %v3821 = vadd.f32 0.0, %v3820
      %3822 = vmatmul.bf16.gmra.mxu0 %v3649
      %v3823 = vpop.f32.mrf.mxu0
      %v3824 = vadd.f32 0.0, %v3823
      %v3825 = vpop.f32.mrf.mxu0
      %v3826 = vadd.f32 0.0, %v3825
      %3827 = vmatmul.bf16.gmra.mxu0 %v3650
      %v3828 = vpop.f32.mrf.mxu0
      %v3829 = vadd.f32 0.0, %v3828
      %v3830 = vpop.f32.mrf.mxu0
      %v3831 = vadd.f32 0.0, %v3830
      %3832 = vmatmul.bf16.gmra.mxu0 %v3651
      %v3833 = vpop.f32.mrf.mxu0
      %v3834 = vadd.f32 0.0, %v3833
      %v3835 = vpop.f32.mrf.mxu0
      %v3836 = vadd.f32 0.0, %v3835
      %3837 = vmatmul.bf16.gmra.mxu0 %v3652
      %v3838 = vpop.f32.mrf.mxu0
      %v3839 = vadd.f32 0.0, %v3838
      %v3840 = vpop.f32.mrf.mxu0
      %v3841 = vadd.f32 0.0, %v3840
      %3842 = vmatmul.bf16.gmra.mxu0 %v3653
      %v3843 = vpop.f32.mrf.mxu0
      %v3844 = vadd.f32 0.0, %v3843
      %v3845 = vpop.f32.mrf.mxu0
      %v3846 = vadd.f32 0.0, %v3845
      %3847 = vdwg.mxu0
      %v3848 = vadd.f32 %v3534, %v3729
      %v3849 = vadd.f32 %v3535, %v3731
      %v3850 = vadd.f32 %v3536, %v3734
      %v3851 = vadd.f32 %v3537, %v3736
      %v3852 = vadd.f32 %v3538, %v3739
      %v3853 = vadd.f32 %v3539, %v3741
      %v3854 = vadd.f32 %v3540, %v3744
      %v3855 = vadd.f32 %v3541, %v3746
      %v3856 = vadd.f32 %v3542, %v3749
      %v3857 = vadd.f32 %v3543, %v3751
      %v3858 = vadd.f32 %v3544, %v3754
      %v3859 = vadd.f32 %v3545, %v3756
      %v3860 = vadd.f32 %v3546, %v3759
      %v3861 = vadd.f32 %v3547, %v3761
      %v3862 = vadd.f32 %v3548, %v3764
      %v3863 = vadd.f32 %v3549, %v3766
      %v3864 = vadd.f32 %v3550, %v3769
      %v3865 = vadd.f32 %v3551, %v3771
      %v3866 = vadd.f32 %v3552, %v3774
      %v3867 = vadd.f32 %v3553, %v3776
      %v3868 = vadd.f32 %v3554, %v3779
      %v3869 = vadd.f32 %v3555, %v3781
      %v3870 = vadd.f32 %v3556, %v3784
      %v3871 = vadd.f32 %v3557, %v3786
      %v3872 = vadd.f32 %v3558, %v3789
      %v3873 = vadd.f32 %v3559, %v3791
      %v3874 = vadd.f32 %v3560, %v3794
      %v3875 = vadd.f32 %v3561, %v3796
      %v3876 = vadd.f32 %v3562, %v3799
      %v3877 = vadd.f32 %v3563, %v3801
      %v3878 = vadd.f32 %v3564, %v3804
      %v3879 = vadd.f32 %v3565, %v3806
      %v3880 = vadd.f32 %v3566, %v3809
      %v3881 = vadd.f32 %v3567, %v3811
      %v3882 = vadd.f32 %v3568, %v3814
      %v3883 = vadd.f32 %v3569, %v3816
      %v3884 = vadd.f32 %v3570, %v3819
      %v3885 = vadd.f32 %v3571, %v3821
      %v3886 = vadd.f32 %v3572, %v3824
      %v3887 = vadd.f32 %v3573, %v3826
      %v3888 = vadd.f32 %v3574, %v3829
      %v3889 = vadd.f32 %v3575, %v3831
      %v3890 = vadd.f32 %v3576, %v3834
      %v3891 = vadd.f32 %v3577, %v3836
      %v3892 = vadd.f32 %v3578, %v3839
      %v3893 = vadd.f32 %v3579, %v3841
      %v3894 = vadd.f32 %v3580, %v3844
      %v3895 = vadd.f32 %v3581, %v3846
      %v3896 = vld [vmem:[#allocation2 + $0x6] sm:$0xff]
      %v3897 = vld [vmem:[#allocation2 + $0xe] sm:$0xff]
      %v3898 = vld [vmem:[#allocation2 + $0x16] sm:$0xff]
      %v3899 = vld [vmem:[#allocation2 + $0x1e] sm:$0xff]
      %v3900 = vld [vmem:[#allocation2 + $0x26] sm:$0xff]
      %v3901 = vld [vmem:[#allocation2 + $0x2e] sm:$0xff]
      %v3902 = vld [vmem:[#allocation2 + $0x36] sm:$0xff]
      %v3903 = vld [vmem:[#allocation2 + $0x3e] sm:$0xff]
      %v3904 = vld [vmem:[#allocation2 + $0x46] sm:$0xff]
      %v3905 = vld [vmem:[#allocation2 + $0x4e] sm:$0xff]
      %v3906 = vld [vmem:[#allocation2 + $0x56] sm:$0xff]
      %v3907 = vld [vmem:[#allocation2 + $0x5e] sm:$0xff]
      %v3908 = vld [vmem:[#allocation2 + $0x66] sm:$0xff]
      %v3909 = vld [vmem:[#allocation2 + $0x6e] sm:$0xff]
      %v3910 = vld [vmem:[#allocation2 + $0x76] sm:$0xff]
      %v3911 = vld [vmem:[#allocation2 + $0x7e] sm:$0xff]
      %v3912 = vld [vmem:[#allocation2 + $0x86] sm:$0xff]
      %v3913 = vld [vmem:[#allocation2 + $0x8e] sm:$0xff]
      %v3914 = vld [vmem:[#allocation2 + $0x96] sm:$0xff]
      %v3915 = vld [vmem:[#allocation2 + $0x9e] sm:$0xff]
      %v3916 = vld [vmem:[#allocation2 + $0xa6] sm:$0xff]
      %v3917 = vld [vmem:[#allocation2 + $0xae] sm:$0xff]
      %v3918 = vld [vmem:[#allocation2 + $0xb6] sm:$0xff]
      %v3919 = vld [vmem:[#allocation2 + $0xbe] sm:$0xff]
      %v3920 = vld [vmem:[#allocation2 + $0xc6] sm:$0xff]
      %v3921 = vld [vmem:[#allocation2 + $0xce] sm:$0xff]
      %v3922 = vld [vmem:[#allocation2 + $0xd6] sm:$0xff]
      %v3923 = vld [vmem:[#allocation2 + $0xde] sm:$0xff]
      %v3924 = vld [vmem:[#allocation2 + $0xe6] sm:$0xff]
      %v3925 = vld [vmem:[#allocation2 + $0xee] sm:$0xff]
      %v3926 = vld [vmem:[#allocation2 + $0xf6] sm:$0xff]
      %v3927 = vld [vmem:[#allocation2 + $0xfe] sm:$0xff]
      %v3928 = vld [vmem:[#allocation2 + $0x106] sm:$0xff]
      %v3929 = vld [vmem:[#allocation2 + $0x10e] sm:$0xff]
      %v3930 = vld [vmem:[#allocation2 + $0x116] sm:$0xff]
      %v3931 = vld [vmem:[#allocation2 + $0x11e] sm:$0xff]
      %v3932 = vld [vmem:[#allocation2 + $0x126] sm:$0xff]
      %v3933 = vld [vmem:[#allocation2 + $0x12e] sm:$0xff]
      %v3934 = vld [vmem:[#allocation2 + $0x136] sm:$0xff]
      %v3935 = vld [vmem:[#allocation2 + $0x13e] sm:$0xff]
      %v3936 = vld [vmem:[#allocation2 + $0x146] sm:$0xff]
      %v3937 = vld [vmem:[#allocation2 + $0x14e] sm:$0xff]
      %v3938 = vld [vmem:[#allocation2 + $0x156] sm:$0xff]
      %v3939 = vld [vmem:[#allocation2 + $0x15e] sm:$0xff]
      %v3940 = vld [vmem:[#allocation2 + $0x166] sm:$0xff]
      %v3941 = vld [vmem:[#allocation2 + $0x16e] sm:$0xff]
      %v3942 = vld [vmem:[#allocation2 + $0x176] sm:$0xff]
      %v3943 = vld [vmem:[#allocation2 + $0x17e] sm:$0xff]
      %v3944 = vpack.c.bf16 %v3897, %v3896
      %v3945 = vpack.c.bf16 %v3899, %v3898
      %v3946 = vpack.c.bf16 %v3901, %v3900
      %v3947 = vpack.c.bf16 %v3903, %v3902
      %v3948 = vpack.c.bf16 %v3905, %v3904
      %v3949 = vpack.c.bf16 %v3907, %v3906
      %v3950 = vpack.c.bf16 %v3909, %v3908
      %v3951 = vpack.c.bf16 %v3911, %v3910
      %v3952 = vpack.c.bf16 %v3913, %v3912
      %v3953 = vpack.c.bf16 %v3915, %v3914
      %v3954 = vpack.c.bf16 %v3917, %v3916
      %v3955 = vpack.c.bf16 %v3919, %v3918
      %v3956 = vpack.c.bf16 %v3921, %v3920
      %v3957 = vpack.c.bf16 %v3923, %v3922
      %v3958 = vpack.c.bf16 %v3925, %v3924
      %v3959 = vpack.c.bf16 %v3927, %v3926
      %v3960 = vpack.c.bf16 %v3929, %v3928
      %v3961 = vpack.c.bf16 %v3931, %v3930
      %v3962 = vpack.c.bf16 %v3933, %v3932
      %v3963 = vpack.c.bf16 %v3935, %v3934
      %v3964 = vpack.c.bf16 %v3937, %v3936
      %v3965 = vpack.c.bf16 %v3939, %v3938
      %v3966 = vpack.c.bf16 %v3941, %v3940
      %v3967 = vpack.c.bf16 %v3943, %v3942
      %v3968 = vld [vmem:[%s4] sm:$0xf]
      %v3969 = vld [vmem:[%s4 + $0x4] sm:$0xf]
      %v3970 = vld [vmem:[%s4 + $0x8] sm:$0xf]
      %v3971 = vld [vmem:[%s4 + $0xc] sm:$0xf]
      %v3972 = vld [vmem:[%s4 + $0x10] sm:$0xf]
      %v3973 = vld [vmem:[%s4 + $0x14] sm:$0xf]
      %v3974 = vld [vmem:[%s4 + $0x18] sm:$0xf]
      %v3975 = vld [vmem:[%s4 + $0x1c] sm:$0xf]
      %v3976 = vld [vmem:[%s4 + $0x20] sm:$0xf]
      %v3977 = vld [vmem:[%s4 + $0x24] sm:$0xf]
      %v3978 = vld [vmem:[%s4 + $0x28] sm:$0xf]
      %v3979 = vld [vmem:[%s4 + $0x2c] sm:$0xf]
      %v3980 = vld [vmem:[%s4 + $0x30] sm:$0xf]
      %v3981 = vld [vmem:[%s4 + $0x34] sm:$0xf]
      %v3982 = vld [vmem:[%s4 + $0x38] sm:$0xf]
      %v3983 = vld [vmem:[%s4 + $0x3c] sm:$0xf]
      %v4000 = vunpack.c.l.b16 %v3968
      %v4001 = vunpack.c.l.b16 %v3969
      %v4002 = vunpack.c.l.b16 %v3970
      %v4003 = vunpack.c.l.b16 %v3971
      %v4004 = vunpack.c.l.b16 %v3972
      %v4005 = vunpack.c.l.b16 %v3973
      %v4006 = vunpack.c.l.b16 %v3974
      %v4007 = vunpack.c.l.b16 %v3975
      %v4008 = vunpack.c.l.b16 %v3976
      %v4009 = vunpack.c.l.b16 %v3977
      %v4010 = vunpack.c.l.b16 %v3978
      %v4011 = vunpack.c.l.b16 %v3979
      %v4012 = vunpack.c.l.b16 %v3980
      %v4013 = vunpack.c.l.b16 %v3981
      %v4014 = vunpack.c.l.b16 %v3982
      %v4015 = vunpack.c.l.b16 %v3983
      %v4016 = vpack.c.b16 %v4001, %v4000
      %v4017 = vpack.c.b16 %v4003, %v4002
      %v4018 = vpack.c.b16 %v4005, %v4004
      %v4019 = vpack.c.b16 %v4007, %v4006
      %v4020 = vpack.c.b16 %v4009, %v4008
      %v4021 = vpack.c.b16 %v4011, %v4010
      %v4022 = vpack.c.b16 %v4013, %v4012
      %v4023 = vpack.c.b16 %v4015, %v4014
      %4032 = vmatpush.bf16.msra.mxu0 %v4023
      %4033 = vmatpush.bf16.msra.mxu0 %v4022
      %4034 = vmatpush.bf16.msra.mxu0 %v4021
      %4035 = vmatpush.bf16.msra.mxu0 %v4020
      %4036 = vmatpush.bf16.msra.mxu0 %v4019
      %4037 = vmatpush.bf16.msra.mxu0 %v4018
      %4038 = vmatpush.bf16.msra.mxu0 %v4017
      %4039 = vmatpush.bf16.msra.mxu0 %v4016
      %4040 = vmatmul.bf16.gmra.mxu0 %v3944
      %v4041 = vpop.f32.mrf.mxu0
      %v4042 = vadd.f32 0.0, %v4041
      %v4043 = vpop.f32.mrf.mxu0
      %v4044 = vadd.f32 0.0, %v4043
      %4045 = vmatmul.bf16.gmra.mxu0 %v3945
      %v4046 = vpop.f32.mrf.mxu0
      %v4047 = vadd.f32 0.0, %v4046
      %v4048 = vpop.f32.mrf.mxu0
      %v4049 = vadd.f32 0.0, %v4048
      %4050 = vmatmul.bf16.gmra.mxu0 %v3946
      %v4051 = vpop.f32.mrf.mxu0
      %v4052 = vadd.f32 0.0, %v4051
      %v4053 = vpop.f32.mrf.mxu0
      %v4054 = vadd.f32 0.0, %v4053
      %4055 = vmatmul.bf16.gmra.mxu0 %v3947
      %v4056 = vpop.f32.mrf.mxu0
      %v4057 = vadd.f32 0.0, %v4056
      %v4058 = vpop.f32.mrf.mxu0
      %v4059 = vadd.f32 0.0, %v4058
      %4060 = vmatmul.bf16.gmra.mxu0 %v3948
      %v4061 = vpop.f32.mrf.mxu0
      %v4062 = vadd.f32 0.0, %v4061
      %v4063 = vpop.f32.mrf.mxu0
      %v4064 = vadd.f32 0.0, %v4063
      %4065 = vmatmul.bf16.gmra.mxu0 %v3949
      %v4066 = vpop.f32.mrf.mxu0
      %v4067 = vadd.f32 0.0, %v4066
      %v4068 = vpop.f32.mrf.mxu0
      %v4069 = vadd.f32 0.0, %v4068
      %4070 = vmatmul.bf16.gmra.mxu0 %v3950
      %v4071 = vpop.f32.mrf.mxu0
      %v4072 = vadd.f32 0.0, %v4071
      %v4073 = vpop.f32.mrf.mxu0
      %v4074 = vadd.f32 0.0, %v4073
      %4075 = vmatmul.bf16.gmra.mxu0 %v3951
      %v4076 = vpop.f32.mrf.mxu0
      %v4077 = vadd.f32 0.0, %v4076
      %v4078 = vpop.f32.mrf.mxu0
      %v4079 = vadd.f32 0.0, %v4078
      %4080 = vmatmul.bf16.gmra.mxu0 %v3952
      %v4081 = vpop.f32.mrf.mxu0
      %v4082 = vadd.f32 0.0, %v4081
      %v4083 = vpop.f32.mrf.mxu0
      %v4084 = vadd.f32 0.0, %v4083
      %4085 = vmatmul.bf16.gmra.mxu0 %v3953
      %v4086 = vpop.f32.mrf.mxu0
      %v4087 = vadd.f32 0.0, %v4086
      %v4088 = vpop.f32.mrf.mxu0
      %v4089 = vadd.f32 0.0, %v4088
      %4090 = vmatmul.bf16.gmra.mxu0 %v3954
      %v4091 = vpop.f32.mrf.mxu0
      %v4092 = vadd.f32 0.0, %v4091
      %v4093 = vpop.f32.mrf.mxu0
      %v4094 = vadd.f32 0.0, %v4093
      %4095 = vmatmul.bf16.gmra.mxu0 %v3955
      %v4096 = vpop.f32.mrf.mxu0
      %v4097 = vadd.f32 0.0, %v4096
      %v4098 = vpop.f32.mrf.mxu0
      %v4099 = vadd.f32 0.0, %v4098
      %4100 = vmatmul.bf16.gmra.mxu0 %v3956
      %v4101 = vpop.f32.mrf.mxu0
      %v4102 = vadd.f32 0.0, %v4101
      %v4103 = vpop.f32.mrf.mxu0
      %v4104 = vadd.f32 0.0, %v4103
      %4105 = vmatmul.bf16.gmra.mxu0 %v3957
      %v4106 = vpop.f32.mrf.mxu0
      %v4107 = vadd.f32 0.0, %v4106
      %v4108 = vpop.f32.mrf.mxu0
      %v4109 = vadd.f32 0.0, %v4108
      %4110 = vmatmul.bf16.gmra.mxu0 %v3958
      %v4111 = vpop.f32.mrf.mxu0
      %v4112 = vadd.f32 0.0, %v4111
      %v4113 = vpop.f32.mrf.mxu0
      %v4114 = vadd.f32 0.0, %v4113
      %4115 = vmatmul.bf16.gmra.mxu0 %v3959
      %v4116 = vpop.f32.mrf.mxu0
      %v4117 = vadd.f32 0.0, %v4116
      %v4118 = vpop.f32.mrf.mxu0
      %v4119 = vadd.f32 0.0, %v4118
      %4120 = vmatmul.bf16.gmra.mxu0 %v3960
      %v4121 = vpop.f32.mrf.mxu0
      %v4122 = vadd.f32 0.0, %v4121
      %v4123 = vpop.f32.mrf.mxu0
      %v4124 = vadd.f32 0.0, %v4123
      %4125 = vmatmul.bf16.gmra.mxu0 %v3961
      %v4126 = vpop.f32.mrf.mxu0
      %v4127 = vadd.f32 0.0, %v4126
      %v4128 = vpop.f32.mrf.mxu0
      %v4129 = vadd.f32 0.0, %v4128
      %4130 = vmatmul.bf16.gmra.mxu0 %v3962
      %v4131 = vpop.f32.mrf.mxu0
      %v4132 = vadd.f32 0.0, %v4131
      %v4133 = vpop.f32.mrf.mxu0
      %v4134 = vadd.f32 0.0, %v4133
      %4135 = vmatmul.bf16.gmra.mxu0 %v3963
      %v4136 = vpop.f32.mrf.mxu0
      %v4137 = vadd.f32 0.0, %v4136
      %v4138 = vpop.f32.mrf.mxu0
      %v4139 = vadd.f32 0.0, %v4138
      %4140 = vmatmul.bf16.gmra.mxu0 %v3964
      %v4141 = vpop.f32.mrf.mxu0
      %v4142 = vadd.f32 0.0, %v4141
      %v4143 = vpop.f32.mrf.mxu0
      %v4144 = vadd.f32 0.0, %v4143
      %4145 = vmatmul.bf16.gmra.mxu0 %v3965
      %v4146 = vpop.f32.mrf.mxu0
      %v4147 = vadd.f32 0.0, %v4146
      %v4148 = vpop.f32.mrf.mxu0
      %v4149 = vadd.f32 0.0, %v4148
      %4150 = vmatmul.bf16.gmra.mxu0 %v3966
      %v4151 = vpop.f32.mrf.mxu0
      %v4152 = vadd.f32 0.0, %v4151
      %v4153 = vpop.f32.mrf.mxu0
      %v4154 = vadd.f32 0.0, %v4153
      %4155 = vmatmul.bf16.gmra.mxu0 %v3967
      %v4156 = vpop.f32.mrf.mxu0
      %v4157 = vadd.f32 0.0, %v4156
      %v4158 = vpop.f32.mrf.mxu0
      %v4159 = vadd.f32 0.0, %v4158
      %4160 = vdwg.mxu0
      %v4161 = vadd.f32 %v3848, %v4042
      %v4162 = vadd.f32 %v3849, %v4044
      %v4163 = vadd.f32 %v3850, %v4047
      %v4164 = vadd.f32 %v3851, %v4049
      %v4165 = vadd.f32 %v3852, %v4052
      %v4166 = vadd.f32 %v3853, %v4054
      %v4167 = vadd.f32 %v3854, %v4057
      %v4168 = vadd.f32 %v3855, %v4059
      %v4169 = vadd.f32 %v3856, %v4062
      %v4170 = vadd.f32 %v3857, %v4064
      %v4171 = vadd.f32 %v3858, %v4067
      %v4172 = vadd.f32 %v3859, %v4069
      %v4173 = vadd.f32 %v3860, %v4072
      %v4174 = vadd.f32 %v3861, %v4074
      %v4175 = vadd.f32 %v3862, %v4077
      %v4176 = vadd.f32 %v3863, %v4079
      %v4177 = vadd.f32 %v3864, %v4082
      %v4178 = vadd.f32 %v3865, %v4084
      %v4179 = vadd.f32 %v3866, %v4087
      %v4180 = vadd.f32 %v3867, %v4089
      %v4181 = vadd.f32 %v3868, %v4092
      %v4182 = vadd.f32 %v3869, %v4094
      %v4183 = vadd.f32 %v3870, %v4097
      %v4184 = vadd.f32 %v3871, %v4099
      %v4185 = vadd.f32 %v3872, %v4102
      %v4186 = vadd.f32 %v3873, %v4104
      %v4187 = vadd.f32 %v3874, %v4107
      %v4188 = vadd.f32 %v3875, %v4109
      %v4189 = vadd.f32 %v3876, %v4112
      %v4190 = vadd.f32 %v3877, %v4114
      %v4191 = vadd.f32 %v3878, %v4117
      %v4192 = vadd.f32 %v3879, %v4119
      %v4193 = vadd.f32 %v3880, %v4122
      %v4194 = vadd.f32 %v3881, %v4124
      %v4195 = vadd.f32 %v3882, %v4127
      %v4196 = vadd.f32 %v3883, %v4129
      %v4197 = vadd.f32 %v3884, %v4132
      %v4198 = vadd.f32 %v3885, %v4134
      %v4199 = vadd.f32 %v3886, %v4137
      %v4200 = vadd.f32 %v3887, %v4139
      %v4201 = vadd.f32 %v3888, %v4142
      %v4202 = vadd.f32 %v3889, %v4144
      %v4203 = vadd.f32 %v3890, %v4147
      %v4204 = vadd.f32 %v3891, %v4149
      %v4205 = vadd.f32 %v3892, %v4152
      %v4206 = vadd.f32 %v3893, %v4154
      %v4207 = vadd.f32 %v3894, %v4157
      %v4208 = vadd.f32 %v3895, %v4159
      %v4209 = vld [vmem:[#allocation2 + $0x8] sm:$0xff]
      %v4210 = vld [vmem:[#allocation2 + $0x10] sm:$0xff]
      %v4211 = vld [vmem:[#allocation2 + $0x18] sm:$0xff]
      %v4212 = vld [vmem:[#allocation2 + $0x20] sm:$0xff]
      %v4213 = vld [vmem:[#allocation2 + $0x28] sm:$0xff]
      %v4214 = vld [vmem:[#allocation2 + $0x30] sm:$0xff]
      %v4215 = vld [vmem:[#allocation2 + $0x38] sm:$0xff]
      %v4216 = vld [vmem:[#allocation2 + $0x40] sm:$0xff]
      %v4217 = vld [vmem:[#allocation2 + $0x48] sm:$0xff]
      %v4218 = vld [vmem:[#allocation2 + $0x50] sm:$0xff]
      %v4219 = vld [vmem:[#allocation2 + $0x58] sm:$0xff]
      %v4220 = vld [vmem:[#allocation2 + $0x60] sm:$0xff]
      %v4221 = vld [vmem:[#allocation2 + $0x68] sm:$0xff]
      %v4222 = vld [vmem:[#allocation2 + $0x70] sm:$0xff]
      %v4223 = vld [vmem:[#allocation2 + $0x78] sm:$0xff]
      %v4224 = vld [vmem:[#allocation2 + $0x80] sm:$0xff]
      %v4225 = vld [vmem:[#allocation2 + $0x88] sm:$0xff]
      %v4226 = vld [vmem:[#allocation2 + $0x90] sm:$0xff]
      %v4227 = vld [vmem:[#allocation2 + $0x98] sm:$0xff]
      %v4228 = vld [vmem:[#allocation2 + $0xa0] sm:$0xff]
      %v4229 = vld [vmem:[#allocation2 + $0xa8] sm:$0xff]
      %v4230 = vld [vmem:[#allocation2 + $0xb0] sm:$0xff]
      %v4231 = vld [vmem:[#allocation2 + $0xb8] sm:$0xff]
      %v4232 = vld [vmem:[#allocation2 + $0xc0] sm:$0xff]
      %v4233 = vld [vmem:[#allocation2 + $0xc8] sm:$0xff]
      %v4234 = vld [vmem:[#allocation2 + $0xd0] sm:$0xff]
      %v4235 = vld [vmem:[#allocation2 + $0xd8] sm:$0xff]
      %v4236 = vld [vmem:[#allocation2 + $0xe0] sm:$0xff]
      %v4237 = vld [vmem:[#allocation2 + $0xe8] sm:$0xff]
      %v4238 = vld [vmem:[#allocation2 + $0xf0] sm:$0xff]
      %v4239 = vld [vmem:[#allocation2 + $0xf8] sm:$0xff]
      %v4240 = vld [vmem:[#allocation2 + $0x100] sm:$0xff]
      %v4241 = vld [vmem:[#allocation2 + $0x108] sm:$0xff]
      %v4242 = vld [vmem:[#allocation2 + $0x110] sm:$0xff]
      %v4243 = vld [vmem:[#allocation2 + $0x118] sm:$0xff]
      %v4244 = vld [vmem:[#allocation2 + $0x120] sm:$0xff]
      %v4245 = vld [vmem:[#allocation2 + $0x128] sm:$0xff]
      %v4246 = vld [vmem:[#allocation2 + $0x130] sm:$0xff]
      %v4247 = vld [vmem:[#allocation2 + $0x138] sm:$0xff]
      %v4248 = vld [vmem:[#allocation2 + $0x140] sm:$0xff]
      %v4249 = vld [vmem:[#allocation2 + $0x148] sm:$0xff]
      %v4250 = vld [vmem:[#allocation2 + $0x150] sm:$0xff]
      %v4251 = vld [vmem:[#allocation2 + $0x158] sm:$0xff]
      %v4252 = vld [vmem:[#allocation2 + $0x160] sm:$0xff]
      %v4253 = vld [vmem:[#allocation2 + $0x168] sm:$0xff]
      %v4254 = vld [vmem:[#allocation2 + $0x170] sm:$0xff]
      %v4255 = vld [vmem:[#allocation2 + $0x178] sm:$0xff]
      %v4256 = vld [vmem:[#allocation2 + $0x180] sm:$0xff]
      %v4257 = vpack.c.bf16 %v4210, %v4209
      %v4258 = vpack.c.bf16 %v4212, %v4211
      %v4259 = vpack.c.bf16 %v4214, %v4213
      %v4260 = vpack.c.bf16 %v4216, %v4215
      %v4261 = vpack.c.bf16 %v4218, %v4217
      %v4262 = vpack.c.bf16 %v4220, %v4219
      %v4263 = vpack.c.bf16 %v4222, %v4221
      %v4264 = vpack.c.bf16 %v4224, %v4223
      %v4265 = vpack.c.bf16 %v4226, %v4225
      %v4266 = vpack.c.bf16 %v4228, %v4227
      %v4267 = vpack.c.bf16 %v4230, %v4229
      %v4268 = vpack.c.bf16 %v4232, %v4231
      %v4269 = vpack.c.bf16 %v4234, %v4233
      %v4270 = vpack.c.bf16 %v4236, %v4235
      %v4271 = vpack.c.bf16 %v4238, %v4237
      %v4272 = vpack.c.bf16 %v4240, %v4239
      %v4273 = vpack.c.bf16 %v4242, %v4241
      %v4274 = vpack.c.bf16 %v4244, %v4243
      %v4275 = vpack.c.bf16 %v4246, %v4245
      %v4276 = vpack.c.bf16 %v4248, %v4247
      %v4277 = vpack.c.bf16 %v4250, %v4249
      %v4278 = vpack.c.bf16 %v4252, %v4251
      %v4279 = vpack.c.bf16 %v4254, %v4253
      %v4280 = vpack.c.bf16 %v4256, %v4255
      %s4281 = scalar_lea.vmem %s4, 64
      %v4282 = vld [vmem:[%s4281] sm:$0xf]
      %v4283 = vld [vmem:[%s4281 + $0x4] sm:$0xf]
      %v4284 = vld [vmem:[%s4281 + $0x8] sm:$0xf]
      %v4285 = vld [vmem:[%s4281 + $0xc] sm:$0xf]
      %v4286 = vld [vmem:[%s4281 + $0x10] sm:$0xf]
      %v4287 = vld [vmem:[%s4281 + $0x14] sm:$0xf]
      %v4288 = vld [vmem:[%s4281 + $0x18] sm:$0xf]
      %v4289 = vld [vmem:[%s4281 + $0x1c] sm:$0xf]
      %v4290 = vld [vmem:[%s4281 + $0x20] sm:$0xf]
      %v4291 = vld [vmem:[%s4281 + $0x24] sm:$0xf]
      %v4292 = vld [vmem:[%s4281 + $0x28] sm:$0xf]
      %v4293 = vld [vmem:[%s4281 + $0x2c] sm:$0xf]
      %v4294 = vld [vmem:[%s4281 + $0x30] sm:$0xf]
      %v4295 = vld [vmem:[%s4281 + $0x34] sm:$0xf]
      %v4296 = vld [vmem:[%s4281 + $0x38] sm:$0xf]
      %v4297 = vld [vmem:[%s4281 + $0x3c] sm:$0xf]
      %v4314 = vunpack.c.l.b16 %v4282
      %v4315 = vunpack.c.l.b16 %v4283
      %v4316 = vunpack.c.l.b16 %v4284
      %v4317 = vunpack.c.l.b16 %v4285
      %v4318 = vunpack.c.l.b16 %v4286
      %v4319 = vunpack.c.l.b16 %v4287
      %v4320 = vunpack.c.l.b16 %v4288
      %v4321 = vunpack.c.l.b16 %v4289
      %v4322 = vunpack.c.l.b16 %v4290
      %v4323 = vunpack.c.l.b16 %v4291
      %v4324 = vunpack.c.l.b16 %v4292
      %v4325 = vunpack.c.l.b16 %v4293
      %v4326 = vunpack.c.l.b16 %v4294
      %v4327 = vunpack.c.l.b16 %v4295
      %v4328 = vunpack.c.l.b16 %v4296
      %v4329 = vunpack.c.l.b16 %v4297
      %v4330 = vpack.c.b16 %v4315, %v4314
      %v4331 = vpack.c.b16 %v4317, %v4316
      %v4332 = vpack.c.b16 %v4319, %v4318
      %v4333 = vpack.c.b16 %v4321, %v4320
      %v4334 = vpack.c.b16 %v4323, %v4322
      %v4335 = vpack.c.b16 %v4325, %v4324
      %v4336 = vpack.c.b16 %v4327, %v4326
      %v4337 = vpack.c.b16 %v4329, %v4328
      %4346 = vmatpush.bf16.msra.mxu0 %v4337
      %4347 = vmatpush.bf16.msra.mxu0 %v4336
      %4348 = vmatpush.bf16.msra.mxu0 %v4335
      %4349 = vmatpush.bf16.msra.mxu0 %v4334
      %4350 = vmatpush.bf16.msra.mxu0 %v4333
      %4351 = vmatpush.bf16.msra.mxu0 %v4332
      %4352 = vmatpush.bf16.msra.mxu0 %v4331
      %4353 = vmatpush.bf16.msra.mxu0 %v4330
      %4354 = vmatmul.bf16.gmra.mxu0 %v4257
      %v4355 = vpop.f32.mrf.mxu0
      %v4356 = vadd.f32 0.0, %v4355
      %v4357 = vpop.f32.mrf.mxu0
      %v4358 = vadd.f32 0.0, %v4357
      %4359 = vmatmul.bf16.gmra.mxu0 %v4258
      %v4360 = vpop.f32.mrf.mxu0
      %v4361 = vadd.f32 0.0, %v4360
      %v4362 = vpop.f32.mrf.mxu0
      %v4363 = vadd.f32 0.0, %v4362
      %4364 = vmatmul.bf16.gmra.mxu0 %v4259
      %v4365 = vpop.f32.mrf.mxu0
      %v4366 = vadd.f32 0.0, %v4365
      %v4367 = vpop.f32.mrf.mxu0
      %v4368 = vadd.f32 0.0, %v4367
      %4369 = vmatmul.bf16.gmra.mxu0 %v4260
      %v4370 = vpop.f32.mrf.mxu0
      %v4371 = vadd.f32 0.0, %v4370
      %v4372 = vpop.f32.mrf.mxu0
      %v4373 = vadd.f32 0.0, %v4372
      %4374 = vmatmul.bf16.gmra.mxu0 %v4261
      %v4375 = vpop.f32.mrf.mxu0
      %v4376 = vadd.f32 0.0, %v4375
      %v4377 = vpop.f32.mrf.mxu0
      %v4378 = vadd.f32 0.0, %v4377
      %4379 = vmatmul.bf16.gmra.mxu0 %v4262
      %v4380 = vpop.f32.mrf.mxu0
      %v4381 = vadd.f32 0.0, %v4380
      %v4382 = vpop.f32.mrf.mxu0
      %v4383 = vadd.f32 0.0, %v4382
      %4384 = vmatmul.bf16.gmra.mxu0 %v4263
      %v4385 = vpop.f32.mrf.mxu0
      %v4386 = vadd.f32 0.0, %v4385
      %v4387 = vpop.f32.mrf.mxu0
      %v4388 = vadd.f32 0.0, %v4387
      %4389 = vmatmul.bf16.gmra.mxu0 %v4264
      %v4390 = vpop.f32.mrf.mxu0
      %v4391 = vadd.f32 0.0, %v4390
      %v4392 = vpop.f32.mrf.mxu0
      %v4393 = vadd.f32 0.0, %v4392
      %4394 = vmatmul.bf16.gmra.mxu0 %v4265
      %v4395 = vpop.f32.mrf.mxu0
      %v4396 = vadd.f32 0.0, %v4395
      %v4397 = vpop.f32.mrf.mxu0
      %v4398 = vadd.f32 0.0, %v4397
      %4399 = vmatmul.bf16.gmra.mxu0 %v4266
      %v4400 = vpop.f32.mrf.mxu0
      %v4401 = vadd.f32 0.0, %v4400
      %v4402 = vpop.f32.mrf.mxu0
      %v4403 = vadd.f32 0.0, %v4402
      %4404 = vmatmul.bf16.gmra.mxu0 %v4267
      %v4405 = vpop.f32.mrf.mxu0
      %v4406 = vadd.f32 0.0, %v4405
      %v4407 = vpop.f32.mrf.mxu0
      %v4408 = vadd.f32 0.0, %v4407
      %4409 = vmatmul.bf16.gmra.mxu0 %v4268
      %v4410 = vpop.f32.mrf.mxu0
      %v4411 = vadd.f32 0.0, %v4410
      %v4412 = vpop.f32.mrf.mxu0
      %v4413 = vadd.f32 0.0, %v4412
      %4414 = vmatmul.bf16.gmra.mxu0 %v4269
      %v4415 = vpop.f32.mrf.mxu0
      %v4416 = vadd.f32 0.0, %v4415
      %v4417 = vpop.f32.mrf.mxu0
      %v4418 = vadd.f32 0.0, %v4417
      %4419 = vmatmul.bf16.gmra.mxu0 %v4270
      %v4420 = vpop.f32.mrf.mxu0
      %v4421 = vadd.f32 0.0, %v4420
      %v4422 = vpop.f32.mrf.mxu0
      %v4423 = vadd.f32 0.0, %v4422
      %4424 = vmatmul.bf16.gmra.mxu0 %v4271
      %v4425 = vpop.f32.mrf.mxu0
      %v4426 = vadd.f32 0.0, %v4425
      %v4427 = vpop.f32.mrf.mxu0
      %v4428 = vadd.f32 0.0, %v4427
      %4429 = vmatmul.bf16.gmra.mxu0 %v4272
      %v4430 = vpop.f32.mrf.mxu0
      %v4431 = vadd.f32 0.0, %v4430
      %v4432 = vpop.f32.mrf.mxu0
      %v4433 = vadd.f32 0.0, %v4432
      %4434 = vmatmul.bf16.gmra.mxu0 %v4273
      %v4435 = vpop.f32.mrf.mxu0
      %v4436 = vadd.f32 0.0, %v4435
      %v4437 = vpop.f32.mrf.mxu0
      %v4438 = vadd.f32 0.0, %v4437
      %4439 = vmatmul.bf16.gmra.mxu0 %v4274
      %v4440 = vpop.f32.mrf.mxu0
      %v4441 = vadd.f32 0.0, %v4440
      %v4442 = vpop.f32.mrf.mxu0
      %v4443 = vadd.f32 0.0, %v4442
      %4444 = vmatmul.bf16.gmra.mxu0 %v4275
      %v4445 = vpop.f32.mrf.mxu0
      %v4446 = vadd.f32 0.0, %v4445
      %v4447 = vpop.f32.mrf.mxu0
      %v4448 = vadd.f32 0.0, %v4447
      %4449 = vmatmul.bf16.gmra.mxu0 %v4276
      %v4450 = vpop.f32.mrf.mxu0
      %v4451 = vadd.f32 0.0, %v4450
      %v4452 = vpop.f32.mrf.mxu0
      %v4453 = vadd.f32 0.0, %v4452
      %4454 = vmatmul.bf16.gmra.mxu0 %v4277
      %v4455 = vpop.f32.mrf.mxu0
      %v4456 = vadd.f32 0.0, %v4455
      %v4457 = vpop.f32.mrf.mxu0
      %v4458 = vadd.f32 0.0, %v4457
      %4459 = vmatmul.bf16.gmra.mxu0 %v4278
      %v4460 = vpop.f32.mrf.mxu0
      %v4461 = vadd.f32 0.0, %v4460
      %v4462 = vpop.f32.mrf.mxu0
      %v4463 = vadd.f32 0.0, %v4462
      %4464 = vmatmul.bf16.gmra.mxu0 %v4279
      %v4465 = vpop.f32.mrf.mxu0
      %v4466 = vadd.f32 0.0, %v4465
      %v4467 = vpop.f32.mrf.mxu0
      %v4468 = vadd.f32 0.0, %v4467
      %4469 = vmatmul.bf16.gmra.mxu0 %v4280
      %v4470 = vpop.f32.mrf.mxu0
      %v4471 = vadd.f32 0.0, %v4470
      %v4472 = vpop.f32.mrf.mxu0
      %v4473 = vadd.f32 0.0, %v4472
      %4474 = vdwg.mxu0
      %v4475 = vadd.f32 %v4161, %v4356
      %v4476 = vadd.f32 %v4162, %v4358
      %v4477 = vadd.f32 %v4163, %v4361
      %v4478 = vadd.f32 %v4164, %v4363
      %v4479 = vadd.f32 %v4165, %v4366
      %v4480 = vadd.f32 %v4166, %v4368
      %v4481 = vadd.f32 %v4167, %v4371
      %v4482 = vadd.f32 %v4168, %v4373
      %v4483 = vadd.f32 %v4169, %v4376
      %v4484 = vadd.f32 %v4170, %v4378
      %v4485 = vadd.f32 %v4171, %v4381
      %v4486 = vadd.f32 %v4172, %v4383
      %v4487 = vadd.f32 %v4173, %v4386
      %v4488 = vadd.f32 %v4174, %v4388
      %v4489 = vadd.f32 %v4175, %v4391
      %v4490 = vadd.f32 %v4176, %v4393
      %v4491 = vadd.f32 %v4177, %v4396
      %v4492 = vadd.f32 %v4178, %v4398
      %v4493 = vadd.f32 %v4179, %v4401
      %v4494 = vadd.f32 %v4180, %v4403
      %v4495 = vadd.f32 %v4181, %v4406
      %v4496 = vadd.f32 %v4182, %v4408
      %v4497 = vadd.f32 %v4183, %v4411
      %v4498 = vadd.f32 %v4184, %v4413
      %v4499 = vadd.f32 %v4185, %v4416
      %v4500 = vadd.f32 %v4186, %v4418
      %v4501 = vadd.f32 %v4187, %v4421
      %v4502 = vadd.f32 %v4188, %v4423
      %v4503 = vadd.f32 %v4189, %v4426
      %v4504 = vadd.f32 %v4190, %v4428
      %v4505 = vadd.f32 %v4191, %v4431
      %v4506 = vadd.f32 %v4192, %v4433
      %v4507 = vadd.f32 %v4193, %v4436
      %v4508 = vadd.f32 %v4194, %v4438
      %v4509 = vadd.f32 %v4195, %v4441
      %v4510 = vadd.f32 %v4196, %v4443
      %v4511 = vadd.f32 %v4197, %v4446
      %v4512 = vadd.f32 %v4198, %v4448
      %v4513 = vadd.f32 %v4199, %v4451
      %v4514 = vadd.f32 %v4200, %v4453
      %v4515 = vadd.f32 %v4201, %v4456
      %v4516 = vadd.f32 %v4202, %v4458
      %v4517 = vadd.f32 %v4203, %v4461
      %v4518 = vadd.f32 %v4204, %v4463
      %v4519 = vadd.f32 %v4205, %v4466
      %v4520 = vadd.f32 %v4206, %v4468
      %v4521 = vadd.f32 %v4207, %v4471
      %v4522 = vadd.f32 %v4208, %v4473
      %v4523 = vld [vmem:[#allocation2 + $0xa] sm:$0xff]
      %v4524 = vld [vmem:[#allocation2 + $0x12] sm:$0xff]
      %v4525 = vld [vmem:[#allocation2 + $0x1a] sm:$0xff]
      %v4526 = vld [vmem:[#allocation2 + $0x22] sm:$0xff]
      %v4527 = vld [vmem:[#allocation2 + $0x2a] sm:$0xff]
      %v4528 = vld [vmem:[#allocation2 + $0x32] sm:$0xff]
      %v4529 = vld [vmem:[#allocation2 + $0x3a] sm:$0xff]
      %v4530 = vld [vmem:[#allocation2 + $0x42] sm:$0xff]
      %v4531 = vld [vmem:[#allocation2 + $0x4a] sm:$0xff]
      %v4532 = vld [vmem:[#allocation2 + $0x52] sm:$0xff]
      %v4533 = vld [vmem:[#allocation2 + $0x5a] sm:$0xff]
      %v4534 = vld [vmem:[#allocation2 + $0x62] sm:$0xff]
      %v4535 = vld [vmem:[#allocation2 + $0x6a] sm:$0xff]
      %v4536 = vld [vmem:[#allocation2 + $0x72] sm:$0xff]
      %v4537 = vld [vmem:[#allocation2 + $0x7a] sm:$0xff]
      %v4538 = vld [vmem:[#allocation2 + $0x82] sm:$0xff]
      %v4539 = vld [vmem:[#allocation2 + $0x8a] sm:$0xff]
      %v4540 = vld [vmem:[#allocation2 + $0x92] sm:$0xff]
      %v4541 = vld [vmem:[#allocation2 + $0x9a] sm:$0xff]
      %v4542 = vld [vmem:[#allocation2 + $0xa2] sm:$0xff]
      %v4543 = vld [vmem:[#allocation2 + $0xaa] sm:$0xff]
      %v4544 = vld [vmem:[#allocation2 + $0xb2] sm:$0xff]
      %v4545 = vld [vmem:[#allocation2 + $0xba] sm:$0xff]
      %v4546 = vld [vmem:[#allocation2 + $0xc2] sm:$0xff]
      %v4547 = vld [vmem:[#allocation2 + $0xca] sm:$0xff]
      %v4548 = vld [vmem:[#allocation2 + $0xd2] sm:$0xff]
      %v4549 = vld [vmem:[#allocation2 + $0xda] sm:$0xff]
      %v4550 = vld [vmem:[#allocation2 + $0xe2] sm:$0xff]
      %v4551 = vld [vmem:[#allocation2 + $0xea] sm:$0xff]
      %v4552 = vld [vmem:[#allocation2 + $0xf2] sm:$0xff]
      %v4553 = vld [vmem:[#allocation2 + $0xfa] sm:$0xff]
      %v4554 = vld [vmem:[#allocation2 + $0x102] sm:$0xff]
      %v4555 = vld [vmem:[#allocation2 + $0x10a] sm:$0xff]
      %v4556 = vld [vmem:[#allocation2 + $0x112] sm:$0xff]
      %v4557 = vld [vmem:[#allocation2 + $0x11a] sm:$0xff]
      %v4558 = vld [vmem:[#allocation2 + $0x122] sm:$0xff]
      %v4559 = vld [vmem:[#allocation2 + $0x12a] sm:$0xff]
      %v4560 = vld [vmem:[#allocation2 + $0x132] sm:$0xff]
      %v4561 = vld [vmem:[#allocation2 + $0x13a] sm:$0xff]
      %v4562 = vld [vmem:[#allocation2 + $0x142] sm:$0xff]
      %v4563 = vld [vmem:[#allocation2 + $0x14a] sm:$0xff]
      %v4564 = vld [vmem:[#allocation2 + $0x152] sm:$0xff]
      %v4565 = vld [vmem:[#allocation2 + $0x15a] sm:$0xff]
      %v4566 = vld [vmem:[#allocation2 + $0x162] sm:$0xff]
      %v4567 = vld [vmem:[#allocation2 + $0x16a] sm:$0xff]
      %v4568 = vld [vmem:[#allocation2 + $0x172] sm:$0xff]
      %v4569 = vld [vmem:[#allocation2 + $0x17a] sm:$0xff]
      %v4570 = vld [vmem:[#allocation2 + $0x182] sm:$0xff]
      %v4571 = vpack.c.bf16 %v4524, %v4523
      %v4572 = vpack.c.bf16 %v4526, %v4525
      %v4573 = vpack.c.bf16 %v4528, %v4527
      %v4574 = vpack.c.bf16 %v4530, %v4529
      %v4575 = vpack.c.bf16 %v4532, %v4531
      %v4576 = vpack.c.bf16 %v4534, %v4533
      %v4577 = vpack.c.bf16 %v4536, %v4535
      %v4578 = vpack.c.bf16 %v4538, %v4537
      %v4579 = vpack.c.bf16 %v4540, %v4539
      %v4580 = vpack.c.bf16 %v4542, %v4541
      %v4581 = vpack.c.bf16 %v4544, %v4543
      %v4582 = vpack.c.bf16 %v4546, %v4545
      %v4583 = vpack.c.bf16 %v4548, %v4547
      %v4584 = vpack.c.bf16 %v4550, %v4549
      %v4585 = vpack.c.bf16 %v4552, %v4551
      %v4586 = vpack.c.bf16 %v4554, %v4553
      %v4587 = vpack.c.bf16 %v4556, %v4555
      %v4588 = vpack.c.bf16 %v4558, %v4557
      %v4589 = vpack.c.bf16 %v4560, %v4559
      %v4590 = vpack.c.bf16 %v4562, %v4561
      %v4591 = vpack.c.bf16 %v4564, %v4563
      %v4592 = vpack.c.bf16 %v4566, %v4565
      %v4593 = vpack.c.bf16 %v4568, %v4567
      %v4594 = vpack.c.bf16 %v4570, %v4569
      %s4595 = scalar_lea.vmem %s4, 128
      %v4596 = vld [vmem:[%s4595] sm:$0xf]
      %v4597 = vld [vmem:[%s4595 + $0x4] sm:$0xf]
      %v4598 = vld [vmem:[%s4595 + $0x8] sm:$0xf]
      %v4599 = vld [vmem:[%s4595 + $0xc] sm:$0xf]
      %v4600 = vld [vmem:[%s4595 + $0x10] sm:$0xf]
      %v4601 = vld [vmem:[%s4595 + $0x14] sm:$0xf]
      %v4602 = vld [vmem:[%s4595 + $0x18] sm:$0xf]
      %v4603 = vld [vmem:[%s4595 + $0x1c] sm:$0xf]
      %v4604 = vld [vmem:[%s4595 + $0x20] sm:$0xf]
      %v4605 = vld [vmem:[%s4595 + $0x24] sm:$0xf]
      %v4606 = vld [vmem:[%s4595 + $0x28] sm:$0xf]
      %v4607 = vld [vmem:[%s4595 + $0x2c] sm:$0xf]
      %v4608 = vld [vmem:[%s4595 + $0x30] sm:$0xf]
      %v4609 = vld [vmem:[%s4595 + $0x34] sm:$0xf]
      %v4610 = vld [vmem:[%s4595 + $0x38] sm:$0xf]
      %v4611 = vld [vmem:[%s4595 + $0x3c] sm:$0xf]
      %v4628 = vunpack.c.l.b16 %v4596
      %v4629 = vunpack.c.l.b16 %v4597
      %v4630 = vunpack.c.l.b16 %v4598
      %v4631 = vunpack.c.l.b16 %v4599
      %v4632 = vunpack.c.l.b16 %v4600
      %v4633 = vunpack.c.l.b16 %v4601
      %v4634 = vunpack.c.l.b16 %v4602
      %v4635 = vunpack.c.l.b16 %v4603
      %v4636 = vunpack.c.l.b16 %v4604
      %v4637 = vunpack.c.l.b16 %v4605
      %v4638 = vunpack.c.l.b16 %v4606
      %v4639 = vunpack.c.l.b16 %v4607
      %v4640 = vunpack.c.l.b16 %v4608
      %v4641 = vunpack.c.l.b16 %v4609
      %v4642 = vunpack.c.l.b16 %v4610
      %v4643 = vunpack.c.l.b16 %v4611
      %v4644 = vpack.c.b16 %v4629, %v4628
      %v4645 = vpack.c.b16 %v4631, %v4630
      %v4646 = vpack.c.b16 %v4633, %v4632
      %v4647 = vpack.c.b16 %v4635, %v4634
      %v4648 = vpack.c.b16 %v4637, %v4636
      %v4649 = vpack.c.b16 %v4639, %v4638
      %v4650 = vpack.c.b16 %v4641, %v4640
      %v4651 = vpack.c.b16 %v4643, %v4642
      %4660 = vmatpush.bf16.msra.mxu0 %v4651
      %4661 = vmatpush.bf16.msra.mxu0 %v4650
      %4662 = vmatpush.bf16.msra.mxu0 %v4649
      %4663 = vmatpush.bf16.msra.mxu0 %v4648
      %4664 = vmatpush.bf16.msra.mxu0 %v4647
      %4665 = vmatpush.bf16.msra.mxu0 %v4646
      %4666 = vmatpush.bf16.msra.mxu0 %v4645
      %4667 = vmatpush.bf16.msra.mxu0 %v4644
      %4668 = vmatmul.bf16.gmra.mxu0 %v4571
      %v4669 = vpop.f32.mrf.mxu0
      %v4670 = vadd.f32 0.0, %v4669
      %v4671 = vpop.f32.mrf.mxu0
      %v4672 = vadd.f32 0.0, %v4671
      %4673 = vmatmul.bf16.gmra.mxu0 %v4572
      %v4674 = vpop.f32.mrf.mxu0
      %v4675 = vadd.f32 0.0, %v4674
      %v4676 = vpop.f32.mrf.mxu0
      %v4677 = vadd.f32 0.0, %v4676
      %4678 = vmatmul.bf16.gmra.mxu0 %v4573
      %v4679 = vpop.f32.mrf.mxu0
      %v4680 = vadd.f32 0.0, %v4679
      %v4681 = vpop.f32.mrf.mxu0
      %v4682 = vadd.f32 0.0, %v4681
      %4683 = vmatmul.bf16.gmra.mxu0 %v4574
      %v4684 = vpop.f32.mrf.mxu0
      %v4685 = vadd.f32 0.0, %v4684
      %v4686 = vpop.f32.mrf.mxu0
      %v4687 = vadd.f32 0.0, %v4686
      %4688 = vmatmul.bf16.gmra.mxu0 %v4575
      %v4689 = vpop.f32.mrf.mxu0
      %v4690 = vadd.f32 0.0, %v4689
      %v4691 = vpop.f32.mrf.mxu0
      %v4692 = vadd.f32 0.0, %v4691
      %4693 = vmatmul.bf16.gmra.mxu0 %v4576
      %v4694 = vpop.f32.mrf.mxu0
      %v4695 = vadd.f32 0.0, %v4694
      %v4696 = vpop.f32.mrf.mxu0
      %v4697 = vadd.f32 0.0, %v4696
      %4698 = vmatmul.bf16.gmra.mxu0 %v4577
      %v4699 = vpop.f32.mrf.mxu0
      %v4700 = vadd.f32 0.0, %v4699
      %v4701 = vpop.f32.mrf.mxu0
      %v4702 = vadd.f32 0.0, %v4701
      %4703 = vmatmul.bf16.gmra.mxu0 %v4578
      %v4704 = vpop.f32.mrf.mxu0
      %v4705 = vadd.f32 0.0, %v4704
      %v4706 = vpop.f32.mrf.mxu0
      %v4707 = vadd.f32 0.0, %v4706
      %4708 = vmatmul.bf16.gmra.mxu0 %v4579
      %v4709 = vpop.f32.mrf.mxu0
      %v4710 = vadd.f32 0.0, %v4709
      %v4711 = vpop.f32.mrf.mxu0
      %v4712 = vadd.f32 0.0, %v4711
      %4713 = vmatmul.bf16.gmra.mxu0 %v4580
      %v4714 = vpop.f32.mrf.mxu0
      %v4715 = vadd.f32 0.0, %v4714
      %v4716 = vpop.f32.mrf.mxu0
      %v4717 = vadd.f32 0.0, %v4716
      %4718 = vmatmul.bf16.gmra.mxu0 %v4581
      %v4719 = vpop.f32.mrf.mxu0
      %v4720 = vadd.f32 0.0, %v4719
      %v4721 = vpop.f32.mrf.mxu0
      %v4722 = vadd.f32 0.0, %v4721
      %4723 = vmatmul.bf16.gmra.mxu0 %v4582
      %v4724 = vpop.f32.mrf.mxu0
      %v4725 = vadd.f32 0.0, %v4724
      %v4726 = vpop.f32.mrf.mxu0
      %v4727 = vadd.f32 0.0, %v4726
      %4728 = vmatmul.bf16.gmra.mxu0 %v4583
      %v4729 = vpop.f32.mrf.mxu0
      %v4730 = vadd.f32 0.0, %v4729
      %v4731 = vpop.f32.mrf.mxu0
      %v4732 = vadd.f32 0.0, %v4731
      %4733 = vmatmul.bf16.gmra.mxu0 %v4584
      %v4734 = vpop.f32.mrf.mxu0
      %v4735 = vadd.f32 0.0, %v4734
      %v4736 = vpop.f32.mrf.mxu0
      %v4737 = vadd.f32 0.0, %v4736
      %4738 = vmatmul.bf16.gmra.mxu0 %v4585
      %v4739 = vpop.f32.mrf.mxu0
      %v4740 = vadd.f32 0.0, %v4739
      %v4741 = vpop.f32.mrf.mxu0
      %v4742 = vadd.f32 0.0, %v4741
      %4743 = vmatmul.bf16.gmra.mxu0 %v4586
      %v4744 = vpop.f32.mrf.mxu0
      %v4745 = vadd.f32 0.0, %v4744
      %v4746 = vpop.f32.mrf.mxu0
      %v4747 = vadd.f32 0.0, %v4746
      %4748 = vmatmul.bf16.gmra.mxu0 %v4587
      %v4749 = vpop.f32.mrf.mxu0
      %v4750 = vadd.f32 0.0, %v4749
      %v4751 = vpop.f32.mrf.mxu0
      %v4752 = vadd.f32 0.0, %v4751
      %4753 = vmatmul.bf16.gmra.mxu0 %v4588
      %v4754 = vpop.f32.mrf.mxu0
      %v4755 = vadd.f32 0.0, %v4754
      %v4756 = vpop.f32.mrf.mxu0
      %v4757 = vadd.f32 0.0, %v4756
      %4758 = vmatmul.bf16.gmra.mxu0 %v4589
      %v4759 = vpop.f32.mrf.mxu0
      %v4760 = vadd.f32 0.0, %v4759
      %v4761 = vpop.f32.mrf.mxu0
      %v4762 = vadd.f32 0.0, %v4761
      %4763 = vmatmul.bf16.gmra.mxu0 %v4590
      %v4764 = vpop.f32.mrf.mxu0
      %v4765 = vadd.f32 0.0, %v4764
      %v4766 = vpop.f32.mrf.mxu0
      %v4767 = vadd.f32 0.0, %v4766
      %4768 = vmatmul.bf16.gmra.mxu0 %v4591
      %v4769 = vpop.f32.mrf.mxu0
      %v4770 = vadd.f32 0.0, %v4769
      %v4771 = vpop.f32.mrf.mxu0
      %v4772 = vadd.f32 0.0, %v4771
      %4773 = vmatmul.bf16.gmra.mxu0 %v4592
      %v4774 = vpop.f32.mrf.mxu0
      %v4775 = vadd.f32 0.0, %v4774
      %v4776 = vpop.f32.mrf.mxu0
      %v4777 = vadd.f32 0.0, %v4776
      %4778 = vmatmul.bf16.gmra.mxu0 %v4593
      %v4779 = vpop.f32.mrf.mxu0
      %v4780 = vadd.f32 0.0, %v4779
      %v4781 = vpop.f32.mrf.mxu0
      %v4782 = vadd.f32 0.0, %v4781
      %4783 = vmatmul.bf16.gmra.mxu0 %v4594
      %v4784 = vpop.f32.mrf.mxu0
      %v4785 = vadd.f32 0.0, %v4784
      %v4786 = vpop.f32.mrf.mxu0
      %v4787 = vadd.f32 0.0, %v4786
      %4788 = vdwg.mxu0
      %v4789 = vadd.f32 %v4475, %v4670
      %v4790 = vadd.f32 %v4476, %v4672
      %v4791 = vadd.f32 %v4477, %v4675
      %v4792 = vadd.f32 %v4478, %v4677
      %v4793 = vadd.f32 %v4479, %v4680
      %v4794 = vadd.f32 %v4480, %v4682
      %v4795 = vadd.f32 %v4481, %v4685
      %v4796 = vadd.f32 %v4482, %v4687
      %v4797 = vadd.f32 %v4483, %v4690
      %v4798 = vadd.f32 %v4484, %v4692
      %v4799 = vadd.f32 %v4485, %v4695
      %v4800 = vadd.f32 %v4486, %v4697
      %v4801 = vadd.f32 %v4487, %v4700
      %v4802 = vadd.f32 %v4488, %v4702
      %v4803 = vadd.f32 %v4489, %v4705
      %v4804 = vadd.f32 %v4490, %v4707
      %v4805 = vadd.f32 %v4491, %v4710
      %v4806 = vadd.f32 %v4492, %v4712
      %v4807 = vadd.f32 %v4493, %v4715
      %v4808 = vadd.f32 %v4494, %v4717
      %v4809 = vadd.f32 %v4495, %v4720
      %v4810 = vadd.f32 %v4496, %v4722
      %v4811 = vadd.f32 %v4497, %v4725
      %v4812 = vadd.f32 %v4498, %v4727
      %v4813 = vadd.f32 %v4499, %v4730
      %v4814 = vadd.f32 %v4500, %v4732
      %v4815 = vadd.f32 %v4501, %v4735
      %v4816 = vadd.f32 %v4502, %v4737
      %v4817 = vadd.f32 %v4503, %v4740
      %v4818 = vadd.f32 %v4504, %v4742
      %v4819 = vadd.f32 %v4505, %v4745
      %v4820 = vadd.f32 %v4506, %v4747
      %v4821 = vadd.f32 %v4507, %v4750
      %v4822 = vadd.f32 %v4508, %v4752
      %v4823 = vadd.f32 %v4509, %v4755
      %v4824 = vadd.f32 %v4510, %v4757
      %v4825 = vadd.f32 %v4511, %v4760
      %v4826 = vadd.f32 %v4512, %v4762
      %v4827 = vadd.f32 %v4513, %v4765
      %v4828 = vadd.f32 %v4514, %v4767
      %v4829 = vadd.f32 %v4515, %v4770
      %v4830 = vadd.f32 %v4516, %v4772
      %v4831 = vadd.f32 %v4517, %v4775
      %v4832 = vadd.f32 %v4518, %v4777
      %v4833 = vadd.f32 %v4519, %v4780
      %v4834 = vadd.f32 %v4520, %v4782
      %v4835 = vadd.f32 %v4521, %v4785
      %v4836 = vadd.f32 %v4522, %v4787
      %v4837 = vld [vmem:[#allocation2 + $0x36] sm:$0xff]
      %v4838 = vld [vmem:[#allocation2 + $0x3e] sm:$0xff]
      %v4839 = vld [vmem:[#allocation2 + $0x46] sm:$0xff]
      %v4840 = vld [vmem:[#allocation2 + $0x4e] sm:$0xff]
      %v4841 = vld [vmem:[#allocation2 + $0x56] sm:$0xff]
      %v4842 = vld [vmem:[#allocation2 + $0x5e] sm:$0xff]
      %v4843 = vld [vmem:[#allocation2 + $0x66] sm:$0xff]
      %v4844 = vld [vmem:[#allocation2 + $0x6e] sm:$0xff]
      %v4845 = vld [vmem:[#allocation2 + $0x76] sm:$0xff]
      %v4846 = vld [vmem:[#allocation2 + $0x7e] sm:$0xff]
      %v4847 = vld [vmem:[#allocation2 + $0x86] sm:$0xff]
      %v4848 = vld [vmem:[#allocation2 + $0x8e] sm:$0xff]
      %v4849 = vld [vmem:[#allocation2 + $0x96] sm:$0xff]
      %v4850 = vld [vmem:[#allocation2 + $0x9e] sm:$0xff]
      %v4851 = vld [vmem:[#allocation2 + $0xa6] sm:$0xff]
      %v4852 = vld [vmem:[#allocation2 + $0xae] sm:$0xff]
      %v4853 = vld [vmem:[#allocation2 + $0xb6] sm:$0xff]
      %v4854 = vld [vmem:[#allocation2 + $0xbe] sm:$0xff]
      %v4855 = vld [vmem:[#allocation2 + $0xc6] sm:$0xff]
      %v4856 = vld [vmem:[#allocation2 + $0xce] sm:$0xff]
      %v4857 = vld [vmem:[#allocation2 + $0xd6] sm:$0xff]
      %v4858 = vld [vmem:[#allocation2 + $0xde] sm:$0xff]
      %v4859 = vld [vmem:[#allocation2 + $0xe6] sm:$0xff]
      %v4860 = vld [vmem:[#allocation2 + $0xee] sm:$0xff]
      %v4861 = vld [vmem:[#allocation2 + $0xf6] sm:$0xff]
      %v4862 = vld [vmem:[#allocation2 + $0xfe] sm:$0xff]
      %v4863 = vld [vmem:[#allocation2 + $0x106] sm:$0xff]
      %v4864 = vld [vmem:[#allocation2 + $0x10e] sm:$0xff]
      %v4865 = vld [vmem:[#allocation2 + $0x116] sm:$0xff]
      %v4866 = vld [vmem:[#allocation2 + $0x11e] sm:$0xff]
      %v4867 = vld [vmem:[#allocation2 + $0x126] sm:$0xff]
      %v4868 = vld [vmem:[#allocation2 + $0x12e] sm:$0xff]
      %v4869 = vld [vmem:[#allocation2 + $0x136] sm:$0xff]
      %v4870 = vld [vmem:[#allocation2 + $0x13e] sm:$0xff]
      %v4871 = vld [vmem:[#allocation2 + $0x146] sm:$0xff]
      %v4872 = vld [vmem:[#allocation2 + $0x14e] sm:$0xff]
      %v4873 = vld [vmem:[#allocation2 + $0x156] sm:$0xff]
      %v4874 = vld [vmem:[#allocation2 + $0x15e] sm:$0xff]
      %v4875 = vld [vmem:[#allocation2 + $0x166] sm:$0xff]
      %v4876 = vld [vmem:[#allocation2 + $0x16e] sm:$0xff]
      %v4877 = vld [vmem:[#allocation2 + $0x176] sm:$0xff]
      %v4878 = vld [vmem:[#allocation2 + $0x17e] sm:$0xff]
      %v4879 = vld [vmem:[#allocation2 + $0x186] sm:$0xff]
      %v4880 = vld [vmem:[#allocation2 + $0x18e] sm:$0xff]
      %v4881 = vld [vmem:[#allocation2 + $0x196] sm:$0xff]
      %v4882 = vld [vmem:[#allocation2 + $0x19e] sm:$0xff]
      %v4883 = vld [vmem:[#allocation2 + $0x1a6] sm:$0xff]
      %v4884 = vld [vmem:[#allocation2 + $0x1ae] sm:$0xff]
      %v4885 = vpack.c.bf16 %v4838, %v4837
      %v4886 = vpack.c.bf16 %v4840, %v4839
      %v4887 = vpack.c.bf16 %v4842, %v4841
      %v4888 = vpack.c.bf16 %v4844, %v4843
      %v4889 = vpack.c.bf16 %v4846, %v4845
      %v4890 = vpack.c.bf16 %v4848, %v4847
      %v4891 = vpack.c.bf16 %v4850, %v4849
      %v4892 = vpack.c.bf16 %v4852, %v4851
      %v4893 = vpack.c.bf16 %v4854, %v4853
      %v4894 = vpack.c.bf16 %v4856, %v4855
      %v4895 = vpack.c.bf16 %v4858, %v4857
      %v4896 = vpack.c.bf16 %v4860, %v4859
      %v4897 = vpack.c.bf16 %v4862, %v4861
      %v4898 = vpack.c.bf16 %v4864, %v4863
      %v4899 = vpack.c.bf16 %v4866, %v4865
      %v4900 = vpack.c.bf16 %v4868, %v4867
      %v4901 = vpack.c.bf16 %v4870, %v4869
      %v4902 = vpack.c.bf16 %v4872, %v4871
      %v4903 = vpack.c.bf16 %v4874, %v4873
      %v4904 = vpack.c.bf16 %v4876, %v4875
      %v4905 = vpack.c.bf16 %v4878, %v4877
      %v4906 = vpack.c.bf16 %v4880, %v4879
      %v4907 = vpack.c.bf16 %v4882, %v4881
      %v4908 = vpack.c.bf16 %v4884, %v4883
      %s4909 = scalar_lea.vmem %s4, 192
      %v4910 = vld [vmem:[%s4909] sm:$0xf]
      %v4911 = vld [vmem:[%s4909 + $0x4] sm:$0xf]
      %v4912 = vld [vmem:[%s4909 + $0x8] sm:$0xf]
      %v4913 = vld [vmem:[%s4909 + $0xc] sm:$0xf]
      %v4914 = vld [vmem:[%s4909 + $0x10] sm:$0xf]
      %v4915 = vld [vmem:[%s4909 + $0x14] sm:$0xf]
      %v4916 = vld [vmem:[%s4909 + $0x18] sm:$0xf]
      %v4917 = vld [vmem:[%s4909 + $0x1c] sm:$0xf]
      %v4918 = vld [vmem:[%s4909 + $0x20] sm:$0xf]
      %v4919 = vld [vmem:[%s4909 + $0x24] sm:$0xf]
      %v4920 = vld [vmem:[%s4909 + $0x28] sm:$0xf]
      %v4921 = vld [vmem:[%s4909 + $0x2c] sm:$0xf]
      %v4922 = vld [vmem:[%s4909 + $0x30] sm:$0xf]
      %v4923 = vld [vmem:[%s4909 + $0x34] sm:$0xf]
      %v4924 = vld [vmem:[%s4909 + $0x38] sm:$0xf]
      %v4925 = vld [vmem:[%s4909 + $0x3c] sm:$0xf]
      %v4942 = vunpack.c.l.b16 %v4910
      %v4943 = vunpack.c.l.b16 %v4911
      %v4944 = vunpack.c.l.b16 %v4912
      %v4945 = vunpack.c.l.b16 %v4913
      %v4946 = vunpack.c.l.b16 %v4914
      %v4947 = vunpack.c.l.b16 %v4915
      %v4948 = vunpack.c.l.b16 %v4916
      %v4949 = vunpack.c.l.b16 %v4917
      %v4950 = vunpack.c.l.b16 %v4918
      %v4951 = vunpack.c.l.b16 %v4919
      %v4952 = vunpack.c.l.b16 %v4920
      %v4953 = vunpack.c.l.b16 %v4921
      %v4954 = vunpack.c.l.b16 %v4922
      %v4955 = vunpack.c.l.b16 %v4923
      %v4956 = vunpack.c.l.b16 %v4924
      %v4957 = vunpack.c.l.b16 %v4925
      %v4958 = vpack.c.b16 %v4943, %v4942
      %v4959 = vpack.c.b16 %v4945, %v4944
      %v4960 = vpack.c.b16 %v4947, %v4946
      %v4961 = vpack.c.b16 %v4949, %v4948
      %v4962 = vpack.c.b16 %v4951, %v4950
      %v4963 = vpack.c.b16 %v4953, %v4952
      %v4964 = vpack.c.b16 %v4955, %v4954
      %v4965 = vpack.c.b16 %v4957, %v4956
      %4974 = vmatpush.bf16.msra.mxu0 %v4965
      %4975 = vmatpush.bf16.msra.mxu0 %v4964
      %4976 = vmatpush.bf16.msra.mxu0 %v4963
      %4977 = vmatpush.bf16.msra.mxu0 %v4962
      %4978 = vmatpush.bf16.msra.mxu0 %v4961
      %4979 = vmatpush.bf16.msra.mxu0 %v4960
      %4980 = vmatpush.bf16.msra.mxu0 %v4959
      %4981 = vmatpush.bf16.msra.mxu0 %v4958
      %4982 = vmatmul.bf16.gmra.mxu0 %v4885
      %v4983 = vpop.f32.mrf.mxu0
      %v4984 = vadd.f32 0.0, %v4983
      %v4985 = vpop.f32.mrf.mxu0
      %v4986 = vadd.f32 0.0, %v4985
      %4987 = vmatmul.bf16.gmra.mxu0 %v4886
      %v4988 = vpop.f32.mrf.mxu0
      %v4989 = vadd.f32 0.0, %v4988
      %v4990 = vpop.f32.mrf.mxu0
      %v4991 = vadd.f32 0.0, %v4990
      %4992 = vmatmul.bf16.gmra.mxu0 %v4887
      %v4993 = vpop.f32.mrf.mxu0
      %v4994 = vadd.f32 0.0, %v4993
      %v4995 = vpop.f32.mrf.mxu0
      %v4996 = vadd.f32 0.0, %v4995
      %4997 = vmatmul.bf16.gmra.mxu0 %v4888
      %v4998 = vpop.f32.mrf.mxu0
      %v4999 = vadd.f32 0.0, %v4998
      %v5000 = vpop.f32.mrf.mxu0
      %v5001 = vadd.f32 0.0, %v5000
      %5002 = vmatmul.bf16.gmra.mxu0 %v4889
      %v5003 = vpop.f32.mrf.mxu0
      %v5004 = vadd.f32 0.0, %v5003
      %v5005 = vpop.f32.mrf.mxu0
      %v5006 = vadd.f32 0.0, %v5005
      %5007 = vmatmul.bf16.gmra.mxu0 %v4890
      %v5008 = vpop.f32.mrf.mxu0
      %v5009 = vadd.f32 0.0, %v5008
      %v5010 = vpop.f32.mrf.mxu0
      %v5011 = vadd.f32 0.0, %v5010
      %5012 = vmatmul.bf16.gmra.mxu0 %v4891
      %v5013 = vpop.f32.mrf.mxu0
      %v5014 = vadd.f32 0.0, %v5013
      %v5015 = vpop.f32.mrf.mxu0
      %v5016 = vadd.f32 0.0, %v5015
      %5017 = vmatmul.bf16.gmra.mxu0 %v4892
      %v5018 = vpop.f32.mrf.mxu0
      %v5019 = vadd.f32 0.0, %v5018
      %v5020 = vpop.f32.mrf.mxu0
      %v5021 = vadd.f32 0.0, %v5020
      %5022 = vmatmul.bf16.gmra.mxu0 %v4893
      %v5023 = vpop.f32.mrf.mxu0
      %v5024 = vadd.f32 0.0, %v5023
      %v5025 = vpop.f32.mrf.mxu0
      %v5026 = vadd.f32 0.0, %v5025
      %5027 = vmatmul.bf16.gmra.mxu0 %v4894
      %v5028 = vpop.f32.mrf.mxu0
      %v5029 = vadd.f32 0.0, %v5028
      %v5030 = vpop.f32.mrf.mxu0
      %v5031 = vadd.f32 0.0, %v5030
      %5032 = vmatmul.bf16.gmra.mxu0 %v4895
      %v5033 = vpop.f32.mrf.mxu0
      %v5034 = vadd.f32 0.0, %v5033
      %v5035 = vpop.f32.mrf.mxu0
      %v5036 = vadd.f32 0.0, %v5035
      %5037 = vmatmul.bf16.gmra.mxu0 %v4896
      %v5038 = vpop.f32.mrf.mxu0
      %v5039 = vadd.f32 0.0, %v5038
      %v5040 = vpop.f32.mrf.mxu0
      %v5041 = vadd.f32 0.0, %v5040
      %5042 = vmatmul.bf16.gmra.mxu0 %v4897
      %v5043 = vpop.f32.mrf.mxu0
      %v5044 = vadd.f32 0.0, %v5043
      %v5045 = vpop.f32.mrf.mxu0
      %v5046 = vadd.f32 0.0, %v5045
      %5047 = vmatmul.bf16.gmra.mxu0 %v4898
      %v5048 = vpop.f32.mrf.mxu0
      %v5049 = vadd.f32 0.0, %v5048
      %v5050 = vpop.f32.mrf.mxu0
      %v5051 = vadd.f32 0.0, %v5050
      %5052 = vmatmul.bf16.gmra.mxu0 %v4899
      %v5053 = vpop.f32.mrf.mxu0
      %v5054 = vadd.f32 0.0, %v5053
      %v5055 = vpop.f32.mrf.mxu0
      %v5056 = vadd.f32 0.0, %v5055
      %5057 = vmatmul.bf16.gmra.mxu0 %v4900
      %v5058 = vpop.f32.mrf.mxu0
      %v5059 = vadd.f32 0.0, %v5058
      %v5060 = vpop.f32.mrf.mxu0
      %v5061 = vadd.f32 0.0, %v5060
      %5062 = vmatmul.bf16.gmra.mxu0 %v4901
      %v5063 = vpop.f32.mrf.mxu0
      %v5064 = vadd.f32 0.0, %v5063
      %v5065 = vpop.f32.mrf.mxu0
      %v5066 = vadd.f32 0.0, %v5065
      %5067 = vmatmul.bf16.gmra.mxu0 %v4902
      %v5068 = vpop.f32.mrf.mxu0
      %v5069 = vadd.f32 0.0, %v5068
      %v5070 = vpop.f32.mrf.mxu0
      %v5071 = vadd.f32 0.0, %v5070
      %5072 = vmatmul.bf16.gmra.mxu0 %v4903
      %v5073 = vpop.f32.mrf.mxu0
      %v5074 = vadd.f32 0.0, %v5073
      %v5075 = vpop.f32.mrf.mxu0
      %v5076 = vadd.f32 0.0, %v5075
      %5077 = vmatmul.bf16.gmra.mxu0 %v4904
      %v5078 = vpop.f32.mrf.mxu0
      %v5079 = vadd.f32 0.0, %v5078
      %v5080 = vpop.f32.mrf.mxu0
      %v5081 = vadd.f32 0.0, %v5080
      %5082 = vmatmul.bf16.gmra.mxu0 %v4905
      %v5083 = vpop.f32.mrf.mxu0
      %v5084 = vadd.f32 0.0, %v5083
      %v5085 = vpop.f32.mrf.mxu0
      %v5086 = vadd.f32 0.0, %v5085
      %5087 = vmatmul.bf16.gmra.mxu0 %v4906
      %v5088 = vpop.f32.mrf.mxu0
      %v5089 = vadd.f32 0.0, %v5088
      %v5090 = vpop.f32.mrf.mxu0
      %v5091 = vadd.f32 0.0, %v5090
      %5092 = vmatmul.bf16.gmra.mxu0 %v4907
      %v5093 = vpop.f32.mrf.mxu0
      %v5094 = vadd.f32 0.0, %v5093
      %v5095 = vpop.f32.mrf.mxu0
      %v5096 = vadd.f32 0.0, %v5095
      %5097 = vmatmul.bf16.gmra.mxu0 %v4908
      %v5098 = vpop.f32.mrf.mxu0
      %v5099 = vadd.f32 0.0, %v5098
      %v5100 = vpop.f32.mrf.mxu0
      %v5101 = vadd.f32 0.0, %v5100
      %5102 = vdwg.mxu0
      %v5103 = vadd.f32 %v4789, %v4984
      %v5104 = vadd.f32 %v4790, %v4986
      %v5105 = vadd.f32 %v4791, %v4989
      %v5106 = vadd.f32 %v4792, %v4991
      %v5107 = vadd.f32 %v4793, %v4994
      %v5108 = vadd.f32 %v4794, %v4996
      %v5109 = vadd.f32 %v4795, %v4999
      %v5110 = vadd.f32 %v4796, %v5001
      %v5111 = vadd.f32 %v4797, %v5004
      %v5112 = vadd.f32 %v4798, %v5006
      %v5113 = vadd.f32 %v4799, %v5009
      %v5114 = vadd.f32 %v4800, %v5011
      %v5115 = vadd.f32 %v4801, %v5014
      %v5116 = vadd.f32 %v4802, %v5016
      %v5117 = vadd.f32 %v4803, %v5019
      %v5118 = vadd.f32 %v4804, %v5021
      %v5119 = vadd.f32 %v4805, %v5024
      %v5120 = vadd.f32 %v4806, %v5026
      %v5121 = vadd.f32 %v4807, %v5029
      %v5122 = vadd.f32 %v4808, %v5031
      %v5123 = vadd.f32 %v4809, %v5034
      %v5124 = vadd.f32 %v4810, %v5036
      %v5125 = vadd.f32 %v4811, %v5039
      %v5126 = vadd.f32 %v4812, %v5041
      %v5127 = vadd.f32 %v4813, %v5044
      %v5128 = vadd.f32 %v4814, %v5046
      %v5129 = vadd.f32 %v4815, %v5049
      %v5130 = vadd.f32 %v4816, %v5051
      %v5131 = vadd.f32 %v4817, %v5054
      %v5132 = vadd.f32 %v4818, %v5056
      %v5133 = vadd.f32 %v4819, %v5059
      %v5134 = vadd.f32 %v4820, %v5061
      %v5135 = vadd.f32 %v4821, %v5064
      %v5136 = vadd.f32 %v4822, %v5066
      %v5137 = vadd.f32 %v4823, %v5069
      %v5138 = vadd.f32 %v4824, %v5071
      %v5139 = vadd.f32 %v4825, %v5074
      %v5140 = vadd.f32 %v4826, %v5076
      %v5141 = vadd.f32 %v4827, %v5079
      %v5142 = vadd.f32 %v4828, %v5081
      %v5143 = vadd.f32 %v4829, %v5084
      %v5144 = vadd.f32 %v4830, %v5086
      %v5145 = vadd.f32 %v4831, %v5089
      %v5146 = vadd.f32 %v4832, %v5091
      %v5147 = vadd.f32 %v4833, %v5094
      %v5148 = vadd.f32 %v4834, %v5096
      %v5149 = vadd.f32 %v4835, %v5099
      %v5150 = vadd.f32 %v4836, %v5101
      %s5151 = scalar_lea.vmem %s4, 256
      %v5152 = vld [vmem:[%s5151] sm:$0xf]
      %v5153 = vld [vmem:[%s5151 + $0x4] sm:$0xf]
      %v5154 = vld [vmem:[%s5151 + $0x8] sm:$0xf]
      %v5155 = vld [vmem:[%s5151 + $0xc] sm:$0xf]
      %v5156 = vld [vmem:[%s5151 + $0x10] sm:$0xf]
      %v5157 = vld [vmem:[%s5151 + $0x14] sm:$0xf]
      %v5158 = vld [vmem:[%s5151 + $0x18] sm:$0xf]
      %v5159 = vld [vmem:[%s5151 + $0x1c] sm:$0xf]
      %v5160 = vld [vmem:[%s5151 + $0x20] sm:$0xf]
      %v5161 = vld [vmem:[%s5151 + $0x24] sm:$0xf]
      %v5162 = vld [vmem:[%s5151 + $0x28] sm:$0xf]
      %v5163 = vld [vmem:[%s5151 + $0x2c] sm:$0xf]
      %v5164 = vld [vmem:[%s5151 + $0x30] sm:$0xf]
      %v5165 = vld [vmem:[%s5151 + $0x34] sm:$0xf]
      %v5166 = vld [vmem:[%s5151 + $0x38] sm:$0xf]
      %v5167 = vld [vmem:[%s5151 + $0x3c] sm:$0xf]
      %v5184 = vunpack.c.l.b16 %v5152
      %v5185 = vunpack.c.l.b16 %v5153
      %v5186 = vunpack.c.l.b16 %v5154
      %v5187 = vunpack.c.l.b16 %v5155
      %v5188 = vunpack.c.l.b16 %v5156
      %v5189 = vunpack.c.l.b16 %v5157
      %v5190 = vunpack.c.l.b16 %v5158
      %v5191 = vunpack.c.l.b16 %v5159
      %v5192 = vunpack.c.l.b16 %v5160
      %v5193 = vunpack.c.l.b16 %v5161
      %v5194 = vunpack.c.l.b16 %v5162
      %v5195 = vunpack.c.l.b16 %v5163
      %v5196 = vunpack.c.l.b16 %v5164
      %v5197 = vunpack.c.l.b16 %v5165
      %v5198 = vunpack.c.l.b16 %v5166
      %v5199 = vunpack.c.l.b16 %v5167
      %v5200 = vpack.c.b16 %v5185, %v5184
      %v5201 = vpack.c.b16 %v5187, %v5186
      %v5202 = vpack.c.b16 %v5189, %v5188
      %v5203 = vpack.c.b16 %v5191, %v5190
      %v5204 = vpack.c.b16 %v5193, %v5192
      %v5205 = vpack.c.b16 %v5195, %v5194
      %v5206 = vpack.c.b16 %v5197, %v5196
      %v5207 = vpack.c.b16 %v5199, %v5198
      %5216 = vmatpush.bf16.msra.mxu0 %v5207
      %5217 = vmatpush.bf16.msra.mxu0 %v5206
      %5218 = vmatpush.bf16.msra.mxu0 %v5205
      %5219 = vmatpush.bf16.msra.mxu0 %v5204
      %5220 = vmatpush.bf16.msra.mxu0 %v5203
      %5221 = vmatpush.bf16.msra.mxu0 %v5202
      %5222 = vmatpush.bf16.msra.mxu0 %v5201
      %5223 = vmatpush.bf16.msra.mxu0 %v5200
      %5224 = vmatmul.bf16.gmra.mxu0 %v2374
      %v5225 = vpop.f32.mrf.mxu0
      %v5226 = vadd.f32 0.0, %v5225
      %v5227 = vpop.f32.mrf.mxu0
      %v5228 = vadd.f32 0.0, %v5227
      %5229 = vmatmul.bf16.gmra.mxu0 %v2375
      %v5230 = vpop.f32.mrf.mxu0
      %v5231 = vadd.f32 0.0, %v5230
      %v5232 = vpop.f32.mrf.mxu0
      %v5233 = vadd.f32 0.0, %v5232
      %5234 = vmatmul.bf16.gmra.mxu0 %v2376
      %v5235 = vpop.f32.mrf.mxu0
      %v5236 = vadd.f32 0.0, %v5235
      %v5237 = vpop.f32.mrf.mxu0
      %v5238 = vadd.f32 0.0, %v5237
      %5239 = vmatmul.bf16.gmra.mxu0 %v2377
      %v5240 = vpop.f32.mrf.mxu0
      %v5241 = vadd.f32 0.0, %v5240
      %v5242 = vpop.f32.mrf.mxu0
      %v5243 = vadd.f32 0.0, %v5242
      %5244 = vmatmul.bf16.gmra.mxu0 %v2378
      %v5245 = vpop.f32.mrf.mxu0
      %v5246 = vadd.f32 0.0, %v5245
      %v5247 = vpop.f32.mrf.mxu0
      %v5248 = vadd.f32 0.0, %v5247
      %5249 = vmatmul.bf16.gmra.mxu0 %v2379
      %v5250 = vpop.f32.mrf.mxu0
      %v5251 = vadd.f32 0.0, %v5250
      %v5252 = vpop.f32.mrf.mxu0
      %v5253 = vadd.f32 0.0, %v5252
      %5254 = vmatmul.bf16.gmra.mxu0 %v2380
      %v5255 = vpop.f32.mrf.mxu0
      %v5256 = vadd.f32 0.0, %v5255
      %v5257 = vpop.f32.mrf.mxu0
      %v5258 = vadd.f32 0.0, %v5257
      %5259 = vmatmul.bf16.gmra.mxu0 %v2381
      %v5260 = vpop.f32.mrf.mxu0
      %v5261 = vadd.f32 0.0, %v5260
      %v5262 = vpop.f32.mrf.mxu0
      %v5263 = vadd.f32 0.0, %v5262
      %5264 = vmatmul.bf16.gmra.mxu0 %v2382
      %v5265 = vpop.f32.mrf.mxu0
      %v5266 = vadd.f32 0.0, %v5265
      %v5267 = vpop.f32.mrf.mxu0
      %v5268 = vadd.f32 0.0, %v5267
      %5269 = vmatmul.bf16.gmra.mxu0 %v2383
      %v5270 = vpop.f32.mrf.mxu0
      %v5271 = vadd.f32 0.0, %v5270
      %v5272 = vpop.f32.mrf.mxu0
      %v5273 = vadd.f32 0.0, %v5272
      %5274 = vmatmul.bf16.gmra.mxu0 %v2384
      %v5275 = vpop.f32.mrf.mxu0
      %v5276 = vadd.f32 0.0, %v5275
      %v5277 = vpop.f32.mrf.mxu0
      %v5278 = vadd.f32 0.0, %v5277
      %5279 = vmatmul.bf16.gmra.mxu0 %v2385
      %v5280 = vpop.f32.mrf.mxu0
      %v5281 = vadd.f32 0.0, %v5280
      %v5282 = vpop.f32.mrf.mxu0
      %v5283 = vadd.f32 0.0, %v5282
      %5284 = vmatmul.bf16.gmra.mxu0 %v2386
      %v5285 = vpop.f32.mrf.mxu0
      %v5286 = vadd.f32 0.0, %v5285
      %v5287 = vpop.f32.mrf.mxu0
      %v5288 = vadd.f32 0.0, %v5287
      %5289 = vmatmul.bf16.gmra.mxu0 %v2387
      %v5290 = vpop.f32.mrf.mxu0
      %v5291 = vadd.f32 0.0, %v5290
      %v5292 = vpop.f32.mrf.mxu0
      %v5293 = vadd.f32 0.0, %v5292
      %5294 = vmatmul.bf16.gmra.mxu0 %v2388
      %v5295 = vpop.f32.mrf.mxu0
      %v5296 = vadd.f32 0.0, %v5295
      %v5297 = vpop.f32.mrf.mxu0
      %v5298 = vadd.f32 0.0, %v5297
      %5299 = vmatmul.bf16.gmra.mxu0 %v2389
      %v5300 = vpop.f32.mrf.mxu0
      %v5301 = vadd.f32 0.0, %v5300
      %v5302 = vpop.f32.mrf.mxu0
      %v5303 = vadd.f32 0.0, %v5302
      %5304 = vmatmul.bf16.gmra.mxu0 %v2390
      %v5305 = vpop.f32.mrf.mxu0
      %v5306 = vadd.f32 0.0, %v5305
      %v5307 = vpop.f32.mrf.mxu0
      %v5308 = vadd.f32 0.0, %v5307
      %5309 = vmatmul.bf16.gmra.mxu0 %v2391
      %v5310 = vpop.f32.mrf.mxu0
      %v5311 = vadd.f32 0.0, %v5310
      %v5312 = vpop.f32.mrf.mxu0
      %v5313 = vadd.f32 0.0, %v5312
      %5314 = vmatmul.bf16.gmra.mxu0 %v2392
      %v5315 = vpop.f32.mrf.mxu0
      %v5316 = vadd.f32 0.0, %v5315
      %v5317 = vpop.f32.mrf.mxu0
      %v5318 = vadd.f32 0.0, %v5317
      %5319 = vmatmul.bf16.gmra.mxu0 %v2393
      %v5320 = vpop.f32.mrf.mxu0
      %v5321 = vadd.f32 0.0, %v5320
      %v5322 = vpop.f32.mrf.mxu0
      %v5323 = vadd.f32 0.0, %v5322
      %5324 = vmatmul.bf16.gmra.mxu0 %v2394
      %v5325 = vpop.f32.mrf.mxu0
      %v5326 = vadd.f32 0.0, %v5325
      %v5327 = vpop.f32.mrf.mxu0
      %v5328 = vadd.f32 0.0, %v5327
      %5329 = vmatmul.bf16.gmra.mxu0 %v2395
      %v5330 = vpop.f32.mrf.mxu0
      %v5331 = vadd.f32 0.0, %v5330
      %v5332 = vpop.f32.mrf.mxu0
      %v5333 = vadd.f32 0.0, %v5332
      %5334 = vmatmul.bf16.gmra.mxu0 %v2396
      %v5335 = vpop.f32.mrf.mxu0
      %v5336 = vadd.f32 0.0, %v5335
      %v5337 = vpop.f32.mrf.mxu0
      %v5338 = vadd.f32 0.0, %v5337
      %5339 = vmatmul.bf16.gmra.mxu0 %v2397
      %v5340 = vpop.f32.mrf.mxu0
      %v5341 = vadd.f32 0.0, %v5340
      %v5342 = vpop.f32.mrf.mxu0
      %v5343 = vadd.f32 0.0, %v5342
      %5344 = vdwg.mxu0
      %v5345 = vadd.f32 %v5103, %v5226
      %v5346 = vadd.f32 %v5104, %v5228
      %v5347 = vadd.f32 %v5105, %v5231
      %v5348 = vadd.f32 %v5106, %v5233
      %v5349 = vadd.f32 %v5107, %v5236
      %v5350 = vadd.f32 %v5108, %v5238
      %v5351 = vadd.f32 %v5109, %v5241
      %v5352 = vadd.f32 %v5110, %v5243
      %v5353 = vadd.f32 %v5111, %v5246
      %v5354 = vadd.f32 %v5112, %v5248
      %v5355 = vadd.f32 %v5113, %v5251
      %v5356 = vadd.f32 %v5114, %v5253
      %v5357 = vadd.f32 %v5115, %v5256
      %v5358 = vadd.f32 %v5116, %v5258
      %v5359 = vadd.f32 %v5117, %v5261
      %v5360 = vadd.f32 %v5118, %v5263
      %v5361 = vadd.f32 %v5119, %v5266
      %v5362 = vadd.f32 %v5120, %v5268
      %v5363 = vadd.f32 %v5121, %v5271
      %v5364 = vadd.f32 %v5122, %v5273
      %v5365 = vadd.f32 %v5123, %v5276
      %v5366 = vadd.f32 %v5124, %v5278
      %v5367 = vadd.f32 %v5125, %v5281
      %v5368 = vadd.f32 %v5126, %v5283
      %v5369 = vadd.f32 %v5127, %v5286
      %v5370 = vadd.f32 %v5128, %v5288
      %v5371 = vadd.f32 %v5129, %v5291
      %v5372 = vadd.f32 %v5130, %v5293
      %v5373 = vadd.f32 %v5131, %v5296
      %v5374 = vadd.f32 %v5132, %v5298
      %v5375 = vadd.f32 %v5133, %v5301
      %v5376 = vadd.f32 %v5134, %v5303
      %v5377 = vadd.f32 %v5135, %v5306
      %v5378 = vadd.f32 %v5136, %v5308
      %v5379 = vadd.f32 %v5137, %v5311
      %v5380 = vadd.f32 %v5138, %v5313
      %v5381 = vadd.f32 %v5139, %v5316
      %v5382 = vadd.f32 %v5140, %v5318
      %v5383 = vadd.f32 %v5141, %v5321
      %v5384 = vadd.f32 %v5142, %v5323
      %v5385 = vadd.f32 %v5143, %v5326
      %v5386 = vadd.f32 %v5144, %v5328
      %v5387 = vadd.f32 %v5145, %v5331
      %v5388 = vadd.f32 %v5146, %v5333
      %v5389 = vadd.f32 %v5147, %v5336
      %v5390 = vadd.f32 %v5148, %v5338
      %v5391 = vadd.f32 %v5149, %v5341
      %v5392 = vadd.f32 %v5150, %v5343
      %v5393 = vld [vmem:[#allocation2 + $0x3a] sm:$0xff]
      %v5394 = vld [vmem:[#allocation2 + $0x42] sm:$0xff]
      %v5395 = vld [vmem:[#allocation2 + $0x4a] sm:$0xff]
      %v5396 = vld [vmem:[#allocation2 + $0x52] sm:$0xff]
      %v5397 = vld [vmem:[#allocation2 + $0x5a] sm:$0xff]
      %v5398 = vld [vmem:[#allocation2 + $0x62] sm:$0xff]
      %v5399 = vld [vmem:[#allocation2 + $0x6a] sm:$0xff]
      %v5400 = vld [vmem:[#allocation2 + $0x72] sm:$0xff]
      %v5401 = vld [vmem:[#allocation2 + $0x7a] sm:$0xff]
      %v5402 = vld [vmem:[#allocation2 + $0x82] sm:$0xff]
      %v5403 = vld [vmem:[#allocation2 + $0x8a] sm:$0xff]
      %v5404 = vld [vmem:[#allocation2 + $0x92] sm:$0xff]
      %v5405 = vld [vmem:[#allocation2 + $0x9a] sm:$0xff]
      %v5406 = vld [vmem:[#allocation2 + $0xa2] sm:$0xff]
      %v5407 = vld [vmem:[#allocation2 + $0xaa] sm:$0xff]
      %v5408 = vld [vmem:[#allocation2 + $0xb2] sm:$0xff]
      %v5409 = vld [vmem:[#allocation2 + $0xba] sm:$0xff]
      %v5410 = vld [vmem:[#allocation2 + $0xc2] sm:$0xff]
      %v5411 = vld [vmem:[#allocation2 + $0xca] sm:$0xff]
      %v5412 = vld [vmem:[#allocation2 + $0xd2] sm:$0xff]
      %v5413 = vld [vmem:[#allocation2 + $0xda] sm:$0xff]
      %v5414 = vld [vmem:[#allocation2 + $0xe2] sm:$0xff]
      %v5415 = vld [vmem:[#allocation2 + $0xea] sm:$0xff]
      %v5416 = vld [vmem:[#allocation2 + $0xf2] sm:$0xff]
      %v5417 = vld [vmem:[#allocation2 + $0xfa] sm:$0xff]
      %v5418 = vld [vmem:[#allocation2 + $0x102] sm:$0xff]
      %v5419 = vld [vmem:[#allocation2 + $0x10a] sm:$0xff]
      %v5420 = vld [vmem:[#allocation2 + $0x112] sm:$0xff]
      %v5421 = vld [vmem:[#allocation2 + $0x11a] sm:$0xff]
      %v5422 = vld [vmem:[#allocation2 + $0x122] sm:$0xff]
      %v5423 = vld [vmem:[#allocation2 + $0x12a] sm:$0xff]
      %v5424 = vld [vmem:[#allocation2 + $0x132] sm:$0xff]
      %v5425 = vld [vmem:[#allocation2 + $0x13a] sm:$0xff]
      %v5426 = vld [vmem:[#allocation2 + $0x142] sm:$0xff]
      %v5427 = vld [vmem:[#allocation2 + $0x14a] sm:$0xff]
      %v5428 = vld [vmem:[#allocation2 + $0x152] sm:$0xff]
      %v5429 = vld [vmem:[#allocation2 + $0x15a] sm:$0xff]
      %v5430 = vld [vmem:[#allocation2 + $0x162] sm:$0xff]
      %v5431 = vld [vmem:[#allocation2 + $0x16a] sm:$0xff]
      %v5432 = vld [vmem:[#allocation2 + $0x172] sm:$0xff]
      %v5433 = vld [vmem:[#allocation2 + $0x17a] sm:$0xff]
      %v5434 = vld [vmem:[#allocation2 + $0x182] sm:$0xff]
      %v5435 = vld [vmem:[#allocation2 + $0x18a] sm:$0xff]
      %v5436 = vld [vmem:[#allocation2 + $0x192] sm:$0xff]
      %v5437 = vld [vmem:[#allocation2 + $0x19a] sm:$0xff]
      %v5438 = vld [vmem:[#allocation2 + $0x1a2] sm:$0xff]
      %v5439 = vld [vmem:[#allocation2 + $0x1aa] sm:$0xff]
      %v5440 = vld [vmem:[#allocation2 + $0x1b2] sm:$0xff]
      %v5441 = vpack.c.bf16 %v5394, %v5393
      %v5442 = vpack.c.bf16 %v5396, %v5395
      %v5443 = vpack.c.bf16 %v5398, %v5397
      %v5444 = vpack.c.bf16 %v5400, %v5399
      %v5445 = vpack.c.bf16 %v5402, %v5401
      %v5446 = vpack.c.bf16 %v5404, %v5403
      %v5447 = vpack.c.bf16 %v5406, %v5405
      %v5448 = vpack.c.bf16 %v5408, %v5407
      %v5449 = vpack.c.bf16 %v5410, %v5409
      %v5450 = vpack.c.bf16 %v5412, %v5411
      %v5451 = vpack.c.bf16 %v5414, %v5413
      %v5452 = vpack.c.bf16 %v5416, %v5415
      %v5453 = vpack.c.bf16 %v5418, %v5417
      %v5454 = vpack.c.bf16 %v5420, %v5419
      %v5455 = vpack.c.bf16 %v5422, %v5421
      %v5456 = vpack.c.bf16 %v5424, %v5423
      %v5457 = vpack.c.bf16 %v5426, %v5425
      %v5458 = vpack.c.bf16 %v5428, %v5427
      %v5459 = vpack.c.bf16 %v5430, %v5429
      %v5460 = vpack.c.bf16 %v5432, %v5431
      %v5461 = vpack.c.bf16 %v5434, %v5433
      %v5462 = vpack.c.bf16 %v5436, %v5435
      %v5463 = vpack.c.bf16 %v5438, %v5437
      %v5464 = vpack.c.bf16 %v5440, %v5439
      %s5465 = scalar_lea.vmem %s4, 320
      %v5466 = vld [vmem:[%s5465] sm:$0xf]
      %v5467 = vld [vmem:[%s5465 + $0x4] sm:$0xf]
      %v5468 = vld [vmem:[%s5465 + $0x8] sm:$0xf]
      %v5469 = vld [vmem:[%s5465 + $0xc] sm:$0xf]
      %v5470 = vld [vmem:[%s5465 + $0x10] sm:$0xf]
      %v5471 = vld [vmem:[%s5465 + $0x14] sm:$0xf]
      %v5472 = vld [vmem:[%s5465 + $0x18] sm:$0xf]
      %v5473 = vld [vmem:[%s5465 + $0x1c] sm:$0xf]
      %v5474 = vld [vmem:[%s5465 + $0x20] sm:$0xf]
      %v5475 = vld [vmem:[%s5465 + $0x24] sm:$0xf]
      %v5476 = vld [vmem:[%s5465 + $0x28] sm:$0xf]
      %v5477 = vld [vmem:[%s5465 + $0x2c] sm:$0xf]
      %v5478 = vld [vmem:[%s5465 + $0x30] sm:$0xf]
      %v5479 = vld [vmem:[%s5465 + $0x34] sm:$0xf]
      %v5480 = vld [vmem:[%s5465 + $0x38] sm:$0xf]
      %v5481 = vld [vmem:[%s5465 + $0x3c] sm:$0xf]
      %v5498 = vunpack.c.l.b16 %v5466
      %v5499 = vunpack.c.l.b16 %v5467
      %v5500 = vunpack.c.l.b16 %v5468
      %v5501 = vunpack.c.l.b16 %v5469
      %v5502 = vunpack.c.l.b16 %v5470
      %v5503 = vunpack.c.l.b16 %v5471
      %v5504 = vunpack.c.l.b16 %v5472
      %v5505 = vunpack.c.l.b16 %v5473
      %v5506 = vunpack.c.l.b16 %v5474
      %v5507 = vunpack.c.l.b16 %v5475
      %v5508 = vunpack.c.l.b16 %v5476
      %v5509 = vunpack.c.l.b16 %v5477
      %v5510 = vunpack.c.l.b16 %v5478
      %v5511 = vunpack.c.l.b16 %v5479
      %v5512 = vunpack.c.l.b16 %v5480
      %v5513 = vunpack.c.l.b16 %v5481
      %v5514 = vpack.c.b16 %v5499, %v5498
      %v5515 = vpack.c.b16 %v5501, %v5500
      %v5516 = vpack.c.b16 %v5503, %v5502
      %v5517 = vpack.c.b16 %v5505, %v5504
      %v5518 = vpack.c.b16 %v5507, %v5506
      %v5519 = vpack.c.b16 %v5509, %v5508
      %v5520 = vpack.c.b16 %v5511, %v5510
      %v5521 = vpack.c.b16 %v5513, %v5512
      %5530 = vmatpush.bf16.msra.mxu0 %v5521
      %5531 = vmatpush.bf16.msra.mxu0 %v5520
      %5532 = vmatpush.bf16.msra.mxu0 %v5519
      %5533 = vmatpush.bf16.msra.mxu0 %v5518
      %5534 = vmatpush.bf16.msra.mxu0 %v5517
      %5535 = vmatpush.bf16.msra.mxu0 %v5516
      %5536 = vmatpush.bf16.msra.mxu0 %v5515
      %5537 = vmatpush.bf16.msra.mxu0 %v5514
      %5538 = vmatmul.bf16.gmra.mxu0 %v5441
      %v5539 = vpop.f32.mrf.mxu0
      %v5540 = vadd.f32 0.0, %v5539
      %v5541 = vpop.f32.mrf.mxu0
      %v5542 = vadd.f32 0.0, %v5541
      %5543 = vmatmul.bf16.gmra.mxu0 %v5442
      %v5544 = vpop.f32.mrf.mxu0
      %v5545 = vadd.f32 0.0, %v5544
      %v5546 = vpop.f32.mrf.mxu0
      %v5547 = vadd.f32 0.0, %v5546
      %5548 = vmatmul.bf16.gmra.mxu0 %v5443
      %v5549 = vpop.f32.mrf.mxu0
      %v5550 = vadd.f32 0.0, %v5549
      %v5551 = vpop.f32.mrf.mxu0
      %v5552 = vadd.f32 0.0, %v5551
      %5553 = vmatmul.bf16.gmra.mxu0 %v5444
      %v5554 = vpop.f32.mrf.mxu0
      %v5555 = vadd.f32 0.0, %v5554
      %v5556 = vpop.f32.mrf.mxu0
      %v5557 = vadd.f32 0.0, %v5556
      %5558 = vmatmul.bf16.gmra.mxu0 %v5445
      %v5559 = vpop.f32.mrf.mxu0
      %v5560 = vadd.f32 0.0, %v5559
      %v5561 = vpop.f32.mrf.mxu0
      %v5562 = vadd.f32 0.0, %v5561
      %5563 = vmatmul.bf16.gmra.mxu0 %v5446
      %v5564 = vpop.f32.mrf.mxu0
      %v5565 = vadd.f32 0.0, %v5564
      %v5566 = vpop.f32.mrf.mxu0
      %v5567 = vadd.f32 0.0, %v5566
      %5568 = vmatmul.bf16.gmra.mxu0 %v5447
      %v5569 = vpop.f32.mrf.mxu0
      %v5570 = vadd.f32 0.0, %v5569
      %v5571 = vpop.f32.mrf.mxu0
      %v5572 = vadd.f32 0.0, %v5571
      %5573 = vmatmul.bf16.gmra.mxu0 %v5448
      %v5574 = vpop.f32.mrf.mxu0
      %v5575 = vadd.f32 0.0, %v5574
      %v5576 = vpop.f32.mrf.mxu0
      %v5577 = vadd.f32 0.0, %v5576
      %5578 = vmatmul.bf16.gmra.mxu0 %v5449
      %v5579 = vpop.f32.mrf.mxu0
      %v5580 = vadd.f32 0.0, %v5579
      %v5581 = vpop.f32.mrf.mxu0
      %v5582 = vadd.f32 0.0, %v5581
      %5583 = vmatmul.bf16.gmra.mxu0 %v5450
      %v5584 = vpop.f32.mrf.mxu0
      %v5585 = vadd.f32 0.0, %v5584
      %v5586 = vpop.f32.mrf.mxu0
      %v5587 = vadd.f32 0.0, %v5586
      %5588 = vmatmul.bf16.gmra.mxu0 %v5451
      %v5589 = vpop.f32.mrf.mxu0
      %v5590 = vadd.f32 0.0, %v5589
      %v5591 = vpop.f32.mrf.mxu0
      %v5592 = vadd.f32 0.0, %v5591
      %5593 = vmatmul.bf16.gmra.mxu0 %v5452
      %v5594 = vpop.f32.mrf.mxu0
      %v5595 = vadd.f32 0.0, %v5594
      %v5596 = vpop.f32.mrf.mxu0
      %v5597 = vadd.f32 0.0, %v5596
      %5598 = vmatmul.bf16.gmra.mxu0 %v5453
      %v5599 = vpop.f32.mrf.mxu0
      %v5600 = vadd.f32 0.0, %v5599
      %v5601 = vpop.f32.mrf.mxu0
      %v5602 = vadd.f32 0.0, %v5601
      %5603 = vmatmul.bf16.gmra.mxu0 %v5454
      %v5604 = vpop.f32.mrf.mxu0
      %v5605 = vadd.f32 0.0, %v5604
      %v5606 = vpop.f32.mrf.mxu0
      %v5607 = vadd.f32 0.0, %v5606
      %5608 = vmatmul.bf16.gmra.mxu0 %v5455
      %v5609 = vpop.f32.mrf.mxu0
      %v5610 = vadd.f32 0.0, %v5609
      %v5611 = vpop.f32.mrf.mxu0
      %v5612 = vadd.f32 0.0, %v5611
      %5613 = vmatmul.bf16.gmra.mxu0 %v5456
      %v5614 = vpop.f32.mrf.mxu0
      %v5615 = vadd.f32 0.0, %v5614
      %v5616 = vpop.f32.mrf.mxu0
      %v5617 = vadd.f32 0.0, %v5616
      %5618 = vmatmul.bf16.gmra.mxu0 %v5457
      %v5619 = vpop.f32.mrf.mxu0
      %v5620 = vadd.f32 0.0, %v5619
      %v5621 = vpop.f32.mrf.mxu0
      %v5622 = vadd.f32 0.0, %v5621
      %5623 = vmatmul.bf16.gmra.mxu0 %v5458
      %v5624 = vpop.f32.mrf.mxu0
      %v5625 = vadd.f32 0.0, %v5624
      %v5626 = vpop.f32.mrf.mxu0
      %v5627 = vadd.f32 0.0, %v5626
      %5628 = vmatmul.bf16.gmra.mxu0 %v5459
      %v5629 = vpop.f32.mrf.mxu0
      %v5630 = vadd.f32 0.0, %v5629
      %v5631 = vpop.f32.mrf.mxu0
      %v5632 = vadd.f32 0.0, %v5631
      %5633 = vmatmul.bf16.gmra.mxu0 %v5460
      %v5634 = vpop.f32.mrf.mxu0
      %v5635 = vadd.f32 0.0, %v5634
      %v5636 = vpop.f32.mrf.mxu0
      %v5637 = vadd.f32 0.0, %v5636
      %5638 = vmatmul.bf16.gmra.mxu0 %v5461
      %v5639 = vpop.f32.mrf.mxu0
      %v5640 = vadd.f32 0.0, %v5639
      %v5641 = vpop.f32.mrf.mxu0
      %v5642 = vadd.f32 0.0, %v5641
      %5643 = vmatmul.bf16.gmra.mxu0 %v5462
      %v5644 = vpop.f32.mrf.mxu0
      %v5645 = vadd.f32 0.0, %v5644
      %v5646 = vpop.f32.mrf.mxu0
      %v5647 = vadd.f32 0.0, %v5646
      %5648 = vmatmul.bf16.gmra.mxu0 %v5463
      %v5649 = vpop.f32.mrf.mxu0
      %v5650 = vadd.f32 0.0, %v5649
      %v5651 = vpop.f32.mrf.mxu0
      %v5652 = vadd.f32 0.0, %v5651
      %5653 = vmatmul.bf16.gmra.mxu0 %v5464
      %v5654 = vpop.f32.mrf.mxu0
      %v5655 = vadd.f32 0.0, %v5654
      %v5656 = vpop.f32.mrf.mxu0
      %v5657 = vadd.f32 0.0, %v5656
      %5658 = vdwg.mxu0
      %v5659 = vadd.f32 %v5345, %v5540
      %v5660 = vadd.f32 %v5346, %v5542
      %v5661 = vadd.f32 %v5347, %v5545
      %v5662 = vadd.f32 %v5348, %v5547
      %v5663 = vadd.f32 %v5349, %v5550
      %v5664 = vadd.f32 %v5350, %v5552
      %v5665 = vadd.f32 %v5351, %v5555
      %v5666 = vadd.f32 %v5352, %v5557
      %v5667 = vadd.f32 %v5353, %v5560
      %v5668 = vadd.f32 %v5354, %v5562
      %v5669 = vadd.f32 %v5355, %v5565
      %v5670 = vadd.f32 %v5356, %v5567
      %v5671 = vadd.f32 %v5357, %v5570
      %v5672 = vadd.f32 %v5358, %v5572
      %v5673 = vadd.f32 %v5359, %v5575
      %v5674 = vadd.f32 %v5360, %v5577
      %v5675 = vadd.f32 %v5361, %v5580
      %v5676 = vadd.f32 %v5362, %v5582
      %v5677 = vadd.f32 %v5363, %v5585
      %v5678 = vadd.f32 %v5364, %v5587
      %v5679 = vadd.f32 %v5365, %v5590
      %v5680 = vadd.f32 %v5366, %v5592
      %v5681 = vadd.f32 %v5367, %v5595
      %v5682 = vadd.f32 %v5368, %v5597
      %v5683 = vadd.f32 %v5369, %v5600
      %v5684 = vadd.f32 %v5370, %v5602
      %v5685 = vadd.f32 %v5371, %v5605
      %v5686 = vadd.f32 %v5372, %v5607
      %v5687 = vadd.f32 %v5373, %v5610
      %v5688 = vadd.f32 %v5374, %v5612
      %v5689 = vadd.f32 %v5375, %v5615
      %v5690 = vadd.f32 %v5376, %v5617
      %v5691 = vadd.f32 %v5377, %v5620
      %v5692 = vadd.f32 %v5378, %v5622
      %v5693 = vadd.f32 %v5379, %v5625
      %v5694 = vadd.f32 %v5380, %v5627
      %v5695 = vadd.f32 %v5381, %v5630
      %v5696 = vadd.f32 %v5382, %v5632
      %v5697 = vadd.f32 %v5383, %v5635
      %v5698 = vadd.f32 %v5384, %v5637
      %v5699 = vadd.f32 %v5385, %v5640
      %v5700 = vadd.f32 %v5386, %v5642
      %v5701 = vadd.f32 %v5387, %v5645
      %v5702 = vadd.f32 %v5388, %v5647
      %v5703 = vadd.f32 %v5389, %v5650
      %v5704 = vadd.f32 %v5390, %v5652
      %v5705 = vadd.f32 %v5391, %v5655
      %v5706 = vadd.f32 %v5392, %v5657
      %v5707 = vld [vmem:[#allocation2 + $0x66] sm:$0xff]
      %v5708 = vld [vmem:[#allocation2 + $0x6e] sm:$0xff]
      %v5709 = vld [vmem:[#allocation2 + $0x76] sm:$0xff]
      %v5710 = vld [vmem:[#allocation2 + $0x7e] sm:$0xff]
      %v5711 = vld [vmem:[#allocation2 + $0x86] sm:$0xff]
      %v5712 = vld [vmem:[#allocation2 + $0x8e] sm:$0xff]
      %v5713 = vld [vmem:[#allocation2 + $0x96] sm:$0xff]
      %v5714 = vld [vmem:[#allocation2 + $0x9e] sm:$0xff]
      %v5715 = vld [vmem:[#allocation2 + $0xa6] sm:$0xff]
      %v5716 = vld [vmem:[#allocation2 + $0xae] sm:$0xff]
      %v5717 = vld [vmem:[#allocation2 + $0xb6] sm:$0xff]
      %v5718 = vld [vmem:[#allocation2 + $0xbe] sm:$0xff]
      %v5719 = vld [vmem:[#allocation2 + $0xc6] sm:$0xff]
      %v5720 = vld [vmem:[#allocation2 + $0xce] sm:$0xff]
      %v5721 = vld [vmem:[#allocation2 + $0xd6] sm:$0xff]
      %v5722 = vld [vmem:[#allocation2 + $0xde] sm:$0xff]
      %v5723 = vld [vmem:[#allocation2 + $0xe6] sm:$0xff]
      %v5724 = vld [vmem:[#allocation2 + $0xee] sm:$0xff]
      %v5725 = vld [vmem:[#allocation2 + $0xf6] sm:$0xff]
      %v5726 = vld [vmem:[#allocation2 + $0xfe] sm:$0xff]
      %v5727 = vld [vmem:[#allocation2 + $0x106] sm:$0xff]
      %v5728 = vld [vmem:[#allocation2 + $0x10e] sm:$0xff]
      %v5729 = vld [vmem:[#allocation2 + $0x116] sm:$0xff]
      %v5730 = vld [vmem:[#allocation2 + $0x11e] sm:$0xff]
      %v5731 = vld [vmem:[#allocation2 + $0x126] sm:$0xff]
      %v5732 = vld [vmem:[#allocation2 + $0x12e] sm:$0xff]
      %v5733 = vld [vmem:[#allocation2 + $0x136] sm:$0xff]
      %v5734 = vld [vmem:[#allocation2 + $0x13e] sm:$0xff]
      %v5735 = vld [vmem:[#allocation2 + $0x146] sm:$0xff]
      %v5736 = vld [vmem:[#allocation2 + $0x14e] sm:$0xff]
      %v5737 = vld [vmem:[#allocation2 + $0x156] sm:$0xff]
      %v5738 = vld [vmem:[#allocation2 + $0x15e] sm:$0xff]
      %v5739 = vld [vmem:[#allocation2 + $0x166] sm:$0xff]
      %v5740 = vld [vmem:[#allocation2 + $0x16e] sm:$0xff]
      %v5741 = vld [vmem:[#allocation2 + $0x176] sm:$0xff]
      %v5742 = vld [vmem:[#allocation2 + $0x17e] sm:$0xff]
      %v5743 = vld [vmem:[#allocation2 + $0x186] sm:$0xff]
      %v5744 = vld [vmem:[#allocation2 + $0x18e] sm:$0xff]
      %v5745 = vld [vmem:[#allocation2 + $0x196] sm:$0xff]
      %v5746 = vld [vmem:[#allocation2 + $0x19e] sm:$0xff]
      %v5747 = vld [vmem:[#allocation2 + $0x1a6] sm:$0xff]
      %v5748 = vld [vmem:[#allocation2 + $0x1ae] sm:$0xff]
      %v5749 = vld [vmem:[#allocation2 + $0x1b6] sm:$0xff]
      %v5750 = vld [vmem:[#allocation2 + $0x1be] sm:$0xff]
      %v5751 = vld [vmem:[#allocation2 + $0x1c6] sm:$0xff]
      %v5752 = vld [vmem:[#allocation2 + $0x1ce] sm:$0xff]
      %v5753 = vld [vmem:[#allocation2 + $0x1d6] sm:$0xff]
      %v5754 = vld [vmem:[#allocation2 + $0x1de] sm:$0xff]
      %v5755 = vpack.c.bf16 %v5708, %v5707
      %v5756 = vpack.c.bf16 %v5710, %v5709
      %v5757 = vpack.c.bf16 %v5712, %v5711
      %v5758 = vpack.c.bf16 %v5714, %v5713
      %v5759 = vpack.c.bf16 %v5716, %v5715
      %v5760 = vpack.c.bf16 %v5718, %v5717
      %v5761 = vpack.c.bf16 %v5720, %v5719
      %v5762 = vpack.c.bf16 %v5722, %v5721
      %v5763 = vpack.c.bf16 %v5724, %v5723
      %v5764 = vpack.c.bf16 %v5726, %v5725
      %v5765 = vpack.c.bf16 %v5728, %v5727
      %v5766 = vpack.c.bf16 %v5730, %v5729
      %v5767 = vpack.c.bf16 %v5732, %v5731
      %v5768 = vpack.c.bf16 %v5734, %v5733
      %v5769 = vpack.c.bf16 %v5736, %v5735
      %v5770 = vpack.c.bf16 %v5738, %v5737
      %v5771 = vpack.c.bf16 %v5740, %v5739
      %v5772 = vpack.c.bf16 %v5742, %v5741
      %v5773 = vpack.c.bf16 %v5744, %v5743
      %v5774 = vpack.c.bf16 %v5746, %v5745
      %v5775 = vpack.c.bf16 %v5748, %v5747
      %v5776 = vpack.c.bf16 %v5750, %v5749
      %v5777 = vpack.c.bf16 %v5752, %v5751
      %v5778 = vpack.c.bf16 %v5754, %v5753
      %s5779 = scalar_lea.vmem %s4, 384
      %v5780 = vld [vmem:[%s5779] sm:$0xf]
      %v5781 = vld [vmem:[%s5779 + $0x4] sm:$0xf]
      %v5782 = vld [vmem:[%s5779 + $0x8] sm:$0xf]
      %v5783 = vld [vmem:[%s5779 + $0xc] sm:$0xf]
      %v5784 = vld [vmem:[%s5779 + $0x10] sm:$0xf]
      %v5785 = vld [vmem:[%s5779 + $0x14] sm:$0xf]
      %v5786 = vld [vmem:[%s5779 + $0x18] sm:$0xf]
      %v5787 = vld [vmem:[%s5779 + $0x1c] sm:$0xf]
      %v5788 = vld [vmem:[%s5779 + $0x20] sm:$0xf]
      %v5789 = vld [vmem:[%s5779 + $0x24] sm:$0xf]
      %v5790 = vld [vmem:[%s5779 + $0x28] sm:$0xf]
      %v5791 = vld [vmem:[%s5779 + $0x2c] sm:$0xf]
      %v5792 = vld [vmem:[%s5779 + $0x30] sm:$0xf]
      %v5793 = vld [vmem:[%s5779 + $0x34] sm:$0xf]
      %v5794 = vld [vmem:[%s5779 + $0x38] sm:$0xf]
      %v5795 = vld [vmem:[%s5779 + $0x3c] sm:$0xf]
      %v5812 = vunpack.c.l.b16 %v5780
      %v5813 = vunpack.c.l.b16 %v5781
      %v5814 = vunpack.c.l.b16 %v5782
      %v5815 = vunpack.c.l.b16 %v5783
      %v5816 = vunpack.c.l.b16 %v5784
      %v5817 = vunpack.c.l.b16 %v5785
      %v5818 = vunpack.c.l.b16 %v5786
      %v5819 = vunpack.c.l.b16 %v5787
      %v5820 = vunpack.c.l.b16 %v5788
      %v5821 = vunpack.c.l.b16 %v5789
      %v5822 = vunpack.c.l.b16 %v5790
      %v5823 = vunpack.c.l.b16 %v5791
      %v5824 = vunpack.c.l.b16 %v5792
      %v5825 = vunpack.c.l.b16 %v5793
      %v5826 = vunpack.c.l.b16 %v5794
      %v5827 = vunpack.c.l.b16 %v5795
      %v5828 = vpack.c.b16 %v5813, %v5812
      %v5829 = vpack.c.b16 %v5815, %v5814
      %v5830 = vpack.c.b16 %v5817, %v5816
      %v5831 = vpack.c.b16 %v5819, %v5818
      %v5832 = vpack.c.b16 %v5821, %v5820
      %v5833 = vpack.c.b16 %v5823, %v5822
      %v5834 = vpack.c.b16 %v5825, %v5824
      %v5835 = vpack.c.b16 %v5827, %v5826
      %5844 = vmatpush.bf16.msra.mxu0 %v5835
      %5845 = vmatpush.bf16.msra.mxu0 %v5834
      %5846 = vmatpush.bf16.msra.mxu0 %v5833
      %5847 = vmatpush.bf16.msra.mxu0 %v5832
      %5848 = vmatpush.bf16.msra.mxu0 %v5831
      %5849 = vmatpush.bf16.msra.mxu0 %v5830
      %5850 = vmatpush.bf16.msra.mxu0 %v5829
      %5851 = vmatpush.bf16.msra.mxu0 %v5828
      %5852 = vmatmul.bf16.gmra.mxu0 %v5755
      %v5853 = vpop.f32.mrf.mxu0
      %v5854 = vadd.f32 0.0, %v5853
      %v5855 = vpop.f32.mrf.mxu0
      %v5856 = vadd.f32 0.0, %v5855
      %5857 = vmatmul.bf16.gmra.mxu0 %v5756
      %v5858 = vpop.f32.mrf.mxu0
      %v5859 = vadd.f32 0.0, %v5858
      %v5860 = vpop.f32.mrf.mxu0
      %v5861 = vadd.f32 0.0, %v5860
      %5862 = vmatmul.bf16.gmra.mxu0 %v5757
      %v5863 = vpop.f32.mrf.mxu0
      %v5864 = vadd.f32 0.0, %v5863
      %v5865 = vpop.f32.mrf.mxu0
      %v5866 = vadd.f32 0.0, %v5865
      %5867 = vmatmul.bf16.gmra.mxu0 %v5758
      %v5868 = vpop.f32.mrf.mxu0
      %v5869 = vadd.f32 0.0, %v5868
      %v5870 = vpop.f32.mrf.mxu0
      %v5871 = vadd.f32 0.0, %v5870
      %5872 = vmatmul.bf16.gmra.mxu0 %v5759
      %v5873 = vpop.f32.mrf.mxu0
      %v5874 = vadd.f32 0.0, %v5873
      %v5875 = vpop.f32.mrf.mxu0
      %v5876 = vadd.f32 0.0, %v5875
      %5877 = vmatmul.bf16.gmra.mxu0 %v5760
      %v5878 = vpop.f32.mrf.mxu0
      %v5879 = vadd.f32 0.0, %v5878
      %v5880 = vpop.f32.mrf.mxu0
      %v5881 = vadd.f32 0.0, %v5880
      %5882 = vmatmul.bf16.gmra.mxu0 %v5761
      %v5883 = vpop.f32.mrf.mxu0
      %v5884 = vadd.f32 0.0, %v5883
      %v5885 = vpop.f32.mrf.mxu0
      %v5886 = vadd.f32 0.0, %v5885
      %5887 = vmatmul.bf16.gmra.mxu0 %v5762
      %v5888 = vpop.f32.mrf.mxu0
      %v5889 = vadd.f32 0.0, %v5888
      %v5890 = vpop.f32.mrf.mxu0
      %v5891 = vadd.f32 0.0, %v5890
      %5892 = vmatmul.bf16.gmra.mxu0 %v5763
      %v5893 = vpop.f32.mrf.mxu0
      %v5894 = vadd.f32 0.0, %v5893
      %v5895 = vpop.f32.mrf.mxu0
      %v5896 = vadd.f32 0.0, %v5895
      %5897 = vmatmul.bf16.gmra.mxu0 %v5764
      %v5898 = vpop.f32.mrf.mxu0
      %v5899 = vadd.f32 0.0, %v5898
      %v5900 = vpop.f32.mrf.mxu0
      %v5901 = vadd.f32 0.0, %v5900
      %5902 = vmatmul.bf16.gmra.mxu0 %v5765
      %v5903 = vpop.f32.mrf.mxu0
      %v5904 = vadd.f32 0.0, %v5903
      %v5905 = vpop.f32.mrf.mxu0
      %v5906 = vadd.f32 0.0, %v5905
      %5907 = vmatmul.bf16.gmra.mxu0 %v5766
      %v5908 = vpop.f32.mrf.mxu0
      %v5909 = vadd.f32 0.0, %v5908
      %v5910 = vpop.f32.mrf.mxu0
      %v5911 = vadd.f32 0.0, %v5910
      %5912 = vmatmul.bf16.gmra.mxu0 %v5767
      %v5913 = vpop.f32.mrf.mxu0
      %v5914 = vadd.f32 0.0, %v5913
      %v5915 = vpop.f32.mrf.mxu0
      %v5916 = vadd.f32 0.0, %v5915
      %5917 = vmatmul.bf16.gmra.mxu0 %v5768
      %v5918 = vpop.f32.mrf.mxu0
      %v5919 = vadd.f32 0.0, %v5918
      %v5920 = vpop.f32.mrf.mxu0
      %v5921 = vadd.f32 0.0, %v5920
      %5922 = vmatmul.bf16.gmra.mxu0 %v5769
      %v5923 = vpop.f32.mrf.mxu0
      %v5924 = vadd.f32 0.0, %v5923
      %v5925 = vpop.f32.mrf.mxu0
      %v5926 = vadd.f32 0.0, %v5925
      %5927 = vmatmul.bf16.gmra.mxu0 %v5770
      %v5928 = vpop.f32.mrf.mxu0
      %v5929 = vadd.f32 0.0, %v5928
      %v5930 = vpop.f32.mrf.mxu0
      %v5931 = vadd.f32 0.0, %v5930
      %5932 = vmatmul.bf16.gmra.mxu0 %v5771
      %v5933 = vpop.f32.mrf.mxu0
      %v5934 = vadd.f32 0.0, %v5933
      %v5935 = vpop.f32.mrf.mxu0
      %v5936 = vadd.f32 0.0, %v5935
      %5937 = vmatmul.bf16.gmra.mxu0 %v5772
      %v5938 = vpop.f32.mrf.mxu0
      %v5939 = vadd.f32 0.0, %v5938
      %v5940 = vpop.f32.mrf.mxu0
      %v5941 = vadd.f32 0.0, %v5940
      %5942 = vmatmul.bf16.gmra.mxu0 %v5773
      %v5943 = vpop.f32.mrf.mxu0
      %v5944 = vadd.f32 0.0, %v5943
      %v5945 = vpop.f32.mrf.mxu0
      %v5946 = vadd.f32 0.0, %v5945
      %5947 = vmatmul.bf16.gmra.mxu0 %v5774
      %v5948 = vpop.f32.mrf.mxu0
      %v5949 = vadd.f32 0.0, %v5948
      %v5950 = vpop.f32.mrf.mxu0
      %v5951 = vadd.f32 0.0, %v5950
      %5952 = vmatmul.bf16.gmra.mxu0 %v5775
      %v5953 = vpop.f32.mrf.mxu0
      %v5954 = vadd.f32 0.0, %v5953
      %v5955 = vpop.f32.mrf.mxu0
      %v5956 = vadd.f32 0.0, %v5955
      %5957 = vmatmul.bf16.gmra.mxu0 %v5776
      %v5958 = vpop.f32.mrf.mxu0
      %v5959 = vadd.f32 0.0, %v5958
      %v5960 = vpop.f32.mrf.mxu0
      %v5961 = vadd.f32 0.0, %v5960
      %5962 = vmatmul.bf16.gmra.mxu0 %v5777
      %v5963 = vpop.f32.mrf.mxu0
      %v5964 = vadd.f32 0.0, %v5963
      %v5965 = vpop.f32.mrf.mxu0
      %v5966 = vadd.f32 0.0, %v5965
      %5967 = vmatmul.bf16.gmra.mxu0 %v5778
      %v5968 = vpop.f32.mrf.mxu0
      %v5969 = vadd.f32 0.0, %v5968
      %v5970 = vpop.f32.mrf.mxu0
      %v5971 = vadd.f32 0.0, %v5970
      %5972 = vdwg.mxu0
      %v5973 = vadd.f32 %v5659, %v5854
      %v5974 = vadd.f32 %v5660, %v5856
      %v5975 = vadd.f32 %v5661, %v5859
      %v5976 = vadd.f32 %v5662, %v5861
      %v5977 = vadd.f32 %v5663, %v5864
      %v5978 = vadd.f32 %v5664, %v5866
      %v5979 = vadd.f32 %v5665, %v5869
      %v5980 = vadd.f32 %v5666, %v5871
      %v5981 = vadd.f32 %v5667, %v5874
      %v5982 = vadd.f32 %v5668, %v5876
      %v5983 = vadd.f32 %v5669, %v5879
      %v5984 = vadd.f32 %v5670, %v5881
      %v5985 = vadd.f32 %v5671, %v5884
      %v5986 = vadd.f32 %v5672, %v5886
      %v5987 = vadd.f32 %v5673, %v5889
      %v5988 = vadd.f32 %v5674, %v5891
      %v5989 = vadd.f32 %v5675, %v5894
      %v5990 = vadd.f32 %v5676, %v5896
      %v5991 = vadd.f32 %v5677, %v5899
      %v5992 = vadd.f32 %v5678, %v5901
      %v5993 = vadd.f32 %v5679, %v5904
      %v5994 = vadd.f32 %v5680, %v5906
      %v5995 = vadd.f32 %v5681, %v5909
      %v5996 = vadd.f32 %v5682, %v5911
      %v5997 = vadd.f32 %v5683, %v5914
      %v5998 = vadd.f32 %v5684, %v5916
      %v5999 = vadd.f32 %v5685, %v5919
      %v6000 = vadd.f32 %v5686, %v5921
      %v6001 = vadd.f32 %v5687, %v5924
      %v6002 = vadd.f32 %v5688, %v5926
      %v6003 = vadd.f32 %v5689, %v5929
      %v6004 = vadd.f32 %v5690, %v5931
      %v6005 = vadd.f32 %v5691, %v5934
      %v6006 = vadd.f32 %v5692, %v5936
      %v6007 = vadd.f32 %v5693, %v5939
      %v6008 = vadd.f32 %v5694, %v5941
      %v6009 = vadd.f32 %v5695, %v5944
      %v6010 = vadd.f32 %v5696, %v5946
      %v6011 = vadd.f32 %v5697, %v5949
      %v6012 = vadd.f32 %v5698, %v5951
      %v6013 = vadd.f32 %v5699, %v5954
      %v6014 = vadd.f32 %v5700, %v5956
      %v6015 = vadd.f32 %v5701, %v5959
      %v6016 = vadd.f32 %v5702, %v5961
      %v6017 = vadd.f32 %v5703, %v5964
      %v6018 = vadd.f32 %v5704, %v5966
      %v6019 = vadd.f32 %v5705, %v5969
      %v6020 = vadd.f32 %v5706, %v5971
      %v6021 = vld [vmem:[#allocation2 + $0x68] sm:$0xff]
      %v6022 = vld [vmem:[#allocation2 + $0x70] sm:$0xff]
      %v6023 = vld [vmem:[#allocation2 + $0x78] sm:$0xff]
      %v6024 = vld [vmem:[#allocation2 + $0x80] sm:$0xff]
      %v6025 = vld [vmem:[#allocation2 + $0x88] sm:$0xff]
      %v6026 = vld [vmem:[#allocation2 + $0x90] sm:$0xff]
      %v6027 = vld [vmem:[#allocation2 + $0x98] sm:$0xff]
      %v6028 = vld [vmem:[#allocation2 + $0xa0] sm:$0xff]
      %v6029 = vld [vmem:[#allocation2 + $0xa8] sm:$0xff]
      %v6030 = vld [vmem:[#allocation2 + $0xb0] sm:$0xff]
      %v6031 = vld [vmem:[#allocation2 + $0xb8] sm:$0xff]
      %v6032 = vld [vmem:[#allocation2 + $0xc0] sm:$0xff]
      %v6033 = vld [vmem:[#allocation2 + $0xc8] sm:$0xff]
      %v6034 = vld [vmem:[#allocation2 + $0xd0] sm:$0xff]
      %v6035 = vld [vmem:[#allocation2 + $0xd8] sm:$0xff]
      %v6036 = vld [vmem:[#allocation2 + $0xe0] sm:$0xff]
      %v6037 = vld [vmem:[#allocation2 + $0xe8] sm:$0xff]
      %v6038 = vld [vmem:[#allocation2 + $0xf0] sm:$0xff]
      %v6039 = vld [vmem:[#allocation2 + $0xf8] sm:$0xff]
      %v6040 = vld [vmem:[#allocation2 + $0x100] sm:$0xff]
      %v6041 = vld [vmem:[#allocation2 + $0x108] sm:$0xff]
      %v6042 = vld [vmem:[#allocation2 + $0x110] sm:$0xff]
      %v6043 = vld [vmem:[#allocation2 + $0x118] sm:$0xff]
      %v6044 = vld [vmem:[#allocation2 + $0x120] sm:$0xff]
      %v6045 = vld [vmem:[#allocation2 + $0x128] sm:$0xff]
      %v6046 = vld [vmem:[#allocation2 + $0x130] sm:$0xff]
      %v6047 = vld [vmem:[#allocation2 + $0x138] sm:$0xff]
      %v6048 = vld [vmem:[#allocation2 + $0x140] sm:$0xff]
      %v6049 = vld [vmem:[#allocation2 + $0x148] sm:$0xff]
      %v6050 = vld [vmem:[#allocation2 + $0x150] sm:$0xff]
      %v6051 = vld [vmem:[#allocation2 + $0x158] sm:$0xff]
      %v6052 = vld [vmem:[#allocation2 + $0x160] sm:$0xff]
      %v6053 = vld [vmem:[#allocation2 + $0x168] sm:$0xff]
      %v6054 = vld [vmem:[#allocation2 + $0x170] sm:$0xff]
      %v6055 = vld [vmem:[#allocation2 + $0x178] sm:$0xff]
      %v6056 = vld [vmem:[#allocation2 + $0x180] sm:$0xff]
      %v6057 = vld [vmem:[#allocation2 + $0x188] sm:$0xff]
      %v6058 = vld [vmem:[#allocation2 + $0x190] sm:$0xff]
      %v6059 = vld [vmem:[#allocation2 + $0x198] sm:$0xff]
      %v6060 = vld [vmem:[#allocation2 + $0x1a0] sm:$0xff]
      %v6061 = vld [vmem:[#allocation2 + $0x1a8] sm:$0xff]
      %v6062 = vld [vmem:[#allocation2 + $0x1b0] sm:$0xff]
      %v6063 = vld [vmem:[#allocation2 + $0x1b8] sm:$0xff]
      %v6064 = vld [vmem:[#allocation2 + $0x1c0] sm:$0xff]
      %v6065 = vld [vmem:[#allocation2 + $0x1c8] sm:$0xff]
      %v6066 = vld [vmem:[#allocation2 + $0x1d0] sm:$0xff]
      %v6067 = vld [vmem:[#allocation2 + $0x1d8] sm:$0xff]
      %v6068 = vld [vmem:[#allocation2 + $0x1e0] sm:$0xff]
      %v6069 = vpack.c.bf16 %v6022, %v6021
      %v6070 = vpack.c.bf16 %v6024, %v6023
      %v6071 = vpack.c.bf16 %v6026, %v6025
      %v6072 = vpack.c.bf16 %v6028, %v6027
      %v6073 = vpack.c.bf16 %v6030, %v6029
      %v6074 = vpack.c.bf16 %v6032, %v6031
      %v6075 = vpack.c.bf16 %v6034, %v6033
      %v6076 = vpack.c.bf16 %v6036, %v6035
      %v6077 = vpack.c.bf16 %v6038, %v6037
      %v6078 = vpack.c.bf16 %v6040, %v6039
      %v6079 = vpack.c.bf16 %v6042, %v6041
      %v6080 = vpack.c.bf16 %v6044, %v6043
      %v6081 = vpack.c.bf16 %v6046, %v6045
      %v6082 = vpack.c.bf16 %v6048, %v6047
      %v6083 = vpack.c.bf16 %v6050, %v6049
      %v6084 = vpack.c.bf16 %v6052, %v6051
      %v6085 = vpack.c.bf16 %v6054, %v6053
      %v6086 = vpack.c.bf16 %v6056, %v6055
      %v6087 = vpack.c.bf16 %v6058, %v6057
      %v6088 = vpack.c.bf16 %v6060, %v6059
      %v6089 = vpack.c.bf16 %v6062, %v6061
      %v6090 = vpack.c.bf16 %v6064, %v6063
      %v6091 = vpack.c.bf16 %v6066, %v6065
      %v6092 = vpack.c.bf16 %v6068, %v6067
      %s6093 = scalar_lea.vmem %s4, 448
      %v6094 = vld [vmem:[%s6093] sm:$0xf]
      %v6095 = vld [vmem:[%s6093 + $0x4] sm:$0xf]
      %v6096 = vld [vmem:[%s6093 + $0x8] sm:$0xf]
      %v6097 = vld [vmem:[%s6093 + $0xc] sm:$0xf]
      %v6098 = vld [vmem:[%s6093 + $0x10] sm:$0xf]
      %v6099 = vld [vmem:[%s6093 + $0x14] sm:$0xf]
      %v6100 = vld [vmem:[%s6093 + $0x18] sm:$0xf]
      %v6101 = vld [vmem:[%s6093 + $0x1c] sm:$0xf]
      %v6102 = vld [vmem:[%s6093 + $0x20] sm:$0xf]
      %v6103 = vld [vmem:[%s6093 + $0x24] sm:$0xf]
      %v6104 = vld [vmem:[%s6093 + $0x28] sm:$0xf]
      %v6105 = vld [vmem:[%s6093 + $0x2c] sm:$0xf]
      %v6106 = vld [vmem:[%s6093 + $0x30] sm:$0xf]
      %v6107 = vld [vmem:[%s6093 + $0x34] sm:$0xf]
      %v6108 = vld [vmem:[%s6093 + $0x38] sm:$0xf]
      %v6109 = vld [vmem:[%s6093 + $0x3c] sm:$0xf]
      %v6126 = vunpack.c.l.b16 %v6094
      %v6127 = vunpack.c.l.b16 %v6095
      %v6128 = vunpack.c.l.b16 %v6096
      %v6129 = vunpack.c.l.b16 %v6097
      %v6130 = vunpack.c.l.b16 %v6098
      %v6131 = vunpack.c.l.b16 %v6099
      %v6132 = vunpack.c.l.b16 %v6100
      %v6133 = vunpack.c.l.b16 %v6101
      %v6134 = vunpack.c.l.b16 %v6102
      %v6135 = vunpack.c.l.b16 %v6103
      %v6136 = vunpack.c.l.b16 %v6104
      %v6137 = vunpack.c.l.b16 %v6105
      %v6138 = vunpack.c.l.b16 %v6106
      %v6139 = vunpack.c.l.b16 %v6107
      %v6140 = vunpack.c.l.b16 %v6108
      %v6141 = vunpack.c.l.b16 %v6109
      %v6142 = vpack.c.b16 %v6127, %v6126
      %v6143 = vpack.c.b16 %v6129, %v6128
      %v6144 = vpack.c.b16 %v6131, %v6130
      %v6145 = vpack.c.b16 %v6133, %v6132
      %v6146 = vpack.c.b16 %v6135, %v6134
      %v6147 = vpack.c.b16 %v6137, %v6136
      %v6148 = vpack.c.b16 %v6139, %v6138
      %v6149 = vpack.c.b16 %v6141, %v6140
      %6158 = vmatpush.bf16.msra.mxu0 %v6149
      %6159 = vmatpush.bf16.msra.mxu0 %v6148
      %6160 = vmatpush.bf16.msra.mxu0 %v6147
      %6161 = vmatpush.bf16.msra.mxu0 %v6146
      %6162 = vmatpush.bf16.msra.mxu0 %v6145
      %6163 = vmatpush.bf16.msra.mxu0 %v6144
      %6164 = vmatpush.bf16.msra.mxu0 %v6143
      %6165 = vmatpush.bf16.msra.mxu0 %v6142
      %6166 = vmatmul.bf16.gmra.mxu0 %v6069
      %v6167 = vpop.f32.mrf.mxu0
      %v6168 = vadd.f32 0.0, %v6167
      %v6169 = vpop.f32.mrf.mxu0
      %v6170 = vadd.f32 0.0, %v6169
      %6171 = vmatmul.bf16.gmra.mxu0 %v6070
      %v6172 = vpop.f32.mrf.mxu0
      %v6173 = vadd.f32 0.0, %v6172
      %v6174 = vpop.f32.mrf.mxu0
      %v6175 = vadd.f32 0.0, %v6174
      %6176 = vmatmul.bf16.gmra.mxu0 %v6071
      %v6177 = vpop.f32.mrf.mxu0
      %v6178 = vadd.f32 0.0, %v6177
      %v6179 = vpop.f32.mrf.mxu0
      %v6180 = vadd.f32 0.0, %v6179
      %6181 = vmatmul.bf16.gmra.mxu0 %v6072
      %v6182 = vpop.f32.mrf.mxu0
      %v6183 = vadd.f32 0.0, %v6182
      %v6184 = vpop.f32.mrf.mxu0
      %v6185 = vadd.f32 0.0, %v6184
      %6186 = vmatmul.bf16.gmra.mxu0 %v6073
      %v6187 = vpop.f32.mrf.mxu0
      %v6188 = vadd.f32 0.0, %v6187
      %v6189 = vpop.f32.mrf.mxu0
      %v6190 = vadd.f32 0.0, %v6189
      %6191 = vmatmul.bf16.gmra.mxu0 %v6074
      %v6192 = vpop.f32.mrf.mxu0
      %v6193 = vadd.f32 0.0, %v6192
      %v6194 = vpop.f32.mrf.mxu0
      %v6195 = vadd.f32 0.0, %v6194
      %6196 = vmatmul.bf16.gmra.mxu0 %v6075
      %v6197 = vpop.f32.mrf.mxu0
      %v6198 = vadd.f32 0.0, %v6197
      %v6199 = vpop.f32.mrf.mxu0
      %v6200 = vadd.f32 0.0, %v6199
      %6201 = vmatmul.bf16.gmra.mxu0 %v6076
      %v6202 = vpop.f32.mrf.mxu0
      %v6203 = vadd.f32 0.0, %v6202
      %v6204 = vpop.f32.mrf.mxu0
      %v6205 = vadd.f32 0.0, %v6204
      %6206 = vmatmul.bf16.gmra.mxu0 %v6077
      %v6207 = vpop.f32.mrf.mxu0
      %v6208 = vadd.f32 0.0, %v6207
      %v6209 = vpop.f32.mrf.mxu0
      %v6210 = vadd.f32 0.0, %v6209
      %6211 = vmatmul.bf16.gmra.mxu0 %v6078
      %v6212 = vpop.f32.mrf.mxu0
      %v6213 = vadd.f32 0.0, %v6212
      %v6214 = vpop.f32.mrf.mxu0
      %v6215 = vadd.f32 0.0, %v6214
      %6216 = vmatmul.bf16.gmra.mxu0 %v6079
      %v6217 = vpop.f32.mrf.mxu0
      %v6218 = vadd.f32 0.0, %v6217
      %v6219 = vpop.f32.mrf.mxu0
      %v6220 = vadd.f32 0.0, %v6219
      %6221 = vmatmul.bf16.gmra.mxu0 %v6080
      %v6222 = vpop.f32.mrf.mxu0
      %v6223 = vadd.f32 0.0, %v6222
      %v6224 = vpop.f32.mrf.mxu0
      %v6225 = vadd.f32 0.0, %v6224
      %6226 = vmatmul.bf16.gmra.mxu0 %v6081
      %v6227 = vpop.f32.mrf.mxu0
      %v6228 = vadd.f32 0.0, %v6227
      %v6229 = vpop.f32.mrf.mxu0
      %v6230 = vadd.f32 0.0, %v6229
      %6231 = vmatmul.bf16.gmra.mxu0 %v6082
      %v6232 = vpop.f32.mrf.mxu0
      %v6233 = vadd.f32 0.0, %v6232
      %v6234 = vpop.f32.mrf.mxu0
      %v6235 = vadd.f32 0.0, %v6234
      %6236 = vmatmul.bf16.gmra.mxu0 %v6083
      %v6237 = vpop.f32.mrf.mxu0
      %v6238 = vadd.f32 0.0, %v6237
      %v6239 = vpop.f32.mrf.mxu0
      %v6240 = vadd.f32 0.0, %v6239
      %6241 = vmatmul.bf16.gmra.mxu0 %v6084
      %v6242 = vpop.f32.mrf.mxu0
      %v6243 = vadd.f32 0.0, %v6242
      %v6244 = vpop.f32.mrf.mxu0
      %v6245 = vadd.f32 0.0, %v6244
      %6246 = vmatmul.bf16.gmra.mxu0 %v6085
      %v6247 = vpop.f32.mrf.mxu0
      %v6248 = vadd.f32 0.0, %v6247
      %v6249 = vpop.f32.mrf.mxu0
      %v6250 = vadd.f32 0.0, %v6249
      %6251 = vmatmul.bf16.gmra.mxu0 %v6086
      %v6252 = vpop.f32.mrf.mxu0
      %v6253 = vadd.f32 0.0, %v6252
      %v6254 = vpop.f32.mrf.mxu0
      %v6255 = vadd.f32 0.0, %v6254
      %6256 = vmatmul.bf16.gmra.mxu0 %v6087
      %v6257 = vpop.f32.mrf.mxu0
      %v6258 = vadd.f32 0.0, %v6257
      %v6259 = vpop.f32.mrf.mxu0
      %v6260 = vadd.f32 0.0, %v6259
      %6261 = vmatmul.bf16.gmra.mxu0 %v6088
      %v6262 = vpop.f32.mrf.mxu0
      %v6263 = vadd.f32 0.0, %v6262
      %v6264 = vpop.f32.mrf.mxu0
      %v6265 = vadd.f32 0.0, %v6264
      %6266 = vmatmul.bf16.gmra.mxu0 %v6089
      %v6267 = vpop.f32.mrf.mxu0
      %v6268 = vadd.f32 0.0, %v6267
      %v6269 = vpop.f32.mrf.mxu0
      %v6270 = vadd.f32 0.0, %v6269
      %6271 = vmatmul.bf16.gmra.mxu0 %v6090
      %v6272 = vpop.f32.mrf.mxu0
      %v6273 = vadd.f32 0.0, %v6272
      %v6274 = vpop.f32.mrf.mxu0
      %v6275 = vadd.f32 0.0, %v6274
      %6276 = vmatmul.bf16.gmra.mxu0 %v6091
      %v6277 = vpop.f32.mrf.mxu0
      %v6278 = vadd.f32 0.0, %v6277
      %v6279 = vpop.f32.mrf.mxu0
      %v6280 = vadd.f32 0.0, %v6279
      %6281 = vmatmul.bf16.gmra.mxu0 %v6092
      %v6282 = vpop.f32.mrf.mxu0
      %v6283 = vadd.f32 0.0, %v6282
      %v6284 = vpop.f32.mrf.mxu0
      %v6285 = vadd.f32 0.0, %v6284
      %6286 = vdwg.mxu0
      %v6287 = vadd.f32 %v5973, %v6168
      %v6288 = vadd.f32 %v5974, %v6170
      %v6289 = vadd.f32 %v5975, %v6173
      %v6290 = vadd.f32 %v5976, %v6175
      %v6291 = vadd.f32 %v5977, %v6178
      %v6292 = vadd.f32 %v5978, %v6180
      %v6293 = vadd.f32 %v5979, %v6183
      %v6294 = vadd.f32 %v5980, %v6185
      %v6295 = vadd.f32 %v5981, %v6188
      %v6296 = vadd.f32 %v5982, %v6190
      %v6297 = vadd.f32 %v5983, %v6193
      %v6298 = vadd.f32 %v5984, %v6195
      %v6299 = vadd.f32 %v5985, %v6198
      %v6300 = vadd.f32 %v5986, %v6200
      %v6301 = vadd.f32 %v5987, %v6203
      %v6302 = vadd.f32 %v5988, %v6205
      %v6303 = vadd.f32 %v5989, %v6208
      %v6304 = vadd.f32 %v5990, %v6210
      %v6305 = vadd.f32 %v5991, %v6213
      %v6306 = vadd.f32 %v5992, %v6215
      %v6307 = vadd.f32 %v5993, %v6218
      %v6308 = vadd.f32 %v5994, %v6220
      %v6309 = vadd.f32 %v5995, %v6223
      %v6310 = vadd.f32 %v5996, %v6225
      %v6311 = vadd.f32 %v5997, %v6228
      %v6312 = vadd.f32 %v5998, %v6230
      %v6313 = vadd.f32 %v5999, %v6233
      %v6314 = vadd.f32 %v6000, %v6235
      %v6315 = vadd.f32 %v6001, %v6238
      %v6316 = vadd.f32 %v6002, %v6240
      %v6317 = vadd.f32 %v6003, %v6243
      %v6318 = vadd.f32 %v6004, %v6245
      %v6319 = vadd.f32 %v6005, %v6248
      %v6320 = vadd.f32 %v6006, %v6250
      %v6321 = vadd.f32 %v6007, %v6253
      %v6322 = vadd.f32 %v6008, %v6255
      %v6323 = vadd.f32 %v6009, %v6258
      %v6324 = vadd.f32 %v6010, %v6260
      %v6325 = vadd.f32 %v6011, %v6263
      %v6326 = vadd.f32 %v6012, %v6265
      %v6327 = vadd.f32 %v6013, %v6268
      %v6328 = vadd.f32 %v6014, %v6270
      %v6329 = vadd.f32 %v6015, %v6273
      %v6330 = vadd.f32 %v6016, %v6275
      %v6331 = vadd.f32 %v6017, %v6278
      %v6332 = vadd.f32 %v6018, %v6280
      %v6333 = vadd.f32 %v6019, %v6283
      %v6334 = vadd.f32 %v6020, %v6285
      %v6335 = vld [vmem:[#allocation2 + $0x6a] sm:$0xff]
      %v6336 = vld [vmem:[#allocation2 + $0x72] sm:$0xff]
      %v6337 = vld [vmem:[#allocation2 + $0x7a] sm:$0xff]
      %v6338 = vld [vmem:[#allocation2 + $0x82] sm:$0xff]
      %v6339 = vld [vmem:[#allocation2 + $0x8a] sm:$0xff]
      %v6340 = vld [vmem:[#allocation2 + $0x92] sm:$0xff]
      %v6341 = vld [vmem:[#allocation2 + $0x9a] sm:$0xff]
      %v6342 = vld [vmem:[#allocation2 + $0xa2] sm:$0xff]
      %v6343 = vld [vmem:[#allocation2 + $0xaa] sm:$0xff]
      %v6344 = vld [vmem:[#allocation2 + $0xb2] sm:$0xff]
      %v6345 = vld [vmem:[#allocation2 + $0xba] sm:$0xff]
      %v6346 = vld [vmem:[#allocation2 + $0xc2] sm:$0xff]
      %v6347 = vld [vmem:[#allocation2 + $0xca] sm:$0xff]
      %v6348 = vld [vmem:[#allocation2 + $0xd2] sm:$0xff]
      %v6349 = vld [vmem:[#allocation2 + $0xda] sm:$0xff]
      %v6350 = vld [vmem:[#allocation2 + $0xe2] sm:$0xff]
      %v6351 = vld [vmem:[#allocation2 + $0xea] sm:$0xff]
      %v6352 = vld [vmem:[#allocation2 + $0xf2] sm:$0xff]
      %v6353 = vld [vmem:[#allocation2 + $0xfa] sm:$0xff]
      %v6354 = vld [vmem:[#allocation2 + $0x102] sm:$0xff]
      %v6355 = vld [vmem:[#allocation2 + $0x10a] sm:$0xff]
      %v6356 = vld [vmem:[#allocation2 + $0x112] sm:$0xff]
      %v6357 = vld [vmem:[#allocation2 + $0x11a] sm:$0xff]
      %v6358 = vld [vmem:[#allocation2 + $0x122] sm:$0xff]
      %v6359 = vld [vmem:[#allocation2 + $0x12a] sm:$0xff]
      %v6360 = vld [vmem:[#allocation2 + $0x132] sm:$0xff]
      %v6361 = vld [vmem:[#allocation2 + $0x13a] sm:$0xff]
      %v6362 = vld [vmem:[#allocation2 + $0x142] sm:$0xff]
      %v6363 = vld [vmem:[#allocation2 + $0x14a] sm:$0xff]
      %v6364 = vld [vmem:[#allocation2 + $0x152] sm:$0xff]
      %v6365 = vld [vmem:[#allocation2 + $0x15a] sm:$0xff]
      %v6366 = vld [vmem:[#allocation2 + $0x162] sm:$0xff]
      %v6367 = vld [vmem:[#allocation2 + $0x16a] sm:$0xff]
      %v6368 = vld [vmem:[#allocation2 + $0x172] sm:$0xff]
      %v6369 = vld [vmem:[#allocation2 + $0x17a] sm:$0xff]
      %v6370 = vld [vmem:[#allocation2 + $0x182] sm:$0xff]
      %v6371 = vld [vmem:[#allocation2 + $0x18a] sm:$0xff]
      %v6372 = vld [vmem:[#allocation2 + $0x192] sm:$0xff]
      %v6373 = vld [vmem:[#allocation2 + $0x19a] sm:$0xff]
      %v6374 = vld [vmem:[#allocation2 + $0x1a2] sm:$0xff]
      %v6375 = vld [vmem:[#allocation2 + $0x1aa] sm:$0xff]
      %v6376 = vld [vmem:[#allocation2 + $0x1b2] sm:$0xff]
      %v6377 = vld [vmem:[#allocation2 + $0x1ba] sm:$0xff]
      %v6378 = vld [vmem:[#allocation2 + $0x1c2] sm:$0xff]
      %v6379 = vld [vmem:[#allocation2 + $0x1ca] sm:$0xff]
      %v6380 = vld [vmem:[#allocation2 + $0x1d2] sm:$0xff]
      %v6381 = vld [vmem:[#allocation2 + $0x1da] sm:$0xff]
      %v6382 = vld [vmem:[#allocation2 + $0x1e2] sm:$0xff]
      %v6383 = vpack.c.bf16 %v6336, %v6335
      %v6384 = vpack.c.bf16 %v6338, %v6337
      %v6385 = vpack.c.bf16 %v6340, %v6339
      %v6386 = vpack.c.bf16 %v6342, %v6341
      %v6387 = vpack.c.bf16 %v6344, %v6343
      %v6388 = vpack.c.bf16 %v6346, %v6345
      %v6389 = vpack.c.bf16 %v6348, %v6347
      %v6390 = vpack.c.bf16 %v6350, %v6349
      %v6391 = vpack.c.bf16 %v6352, %v6351
      %v6392 = vpack.c.bf16 %v6354, %v6353
      %v6393 = vpack.c.bf16 %v6356, %v6355
      %v6394 = vpack.c.bf16 %v6358, %v6357
      %v6395 = vpack.c.bf16 %v6360, %v6359
      %v6396 = vpack.c.bf16 %v6362, %v6361
      %v6397 = vpack.c.bf16 %v6364, %v6363
      %v6398 = vpack.c.bf16 %v6366, %v6365
      %v6399 = vpack.c.bf16 %v6368, %v6367
      %v6400 = vpack.c.bf16 %v6370, %v6369
      %v6401 = vpack.c.bf16 %v6372, %v6371
      %v6402 = vpack.c.bf16 %v6374, %v6373
      %v6403 = vpack.c.bf16 %v6376, %v6375
      %v6404 = vpack.c.bf16 %v6378, %v6377
      %v6405 = vpack.c.bf16 %v6380, %v6379
      %v6406 = vpack.c.bf16 %v6382, %v6381
      %s6407 = scalar_lea.vmem %s4, 512
      %v6408 = vld [vmem:[%s6407] sm:$0xf]
      %v6409 = vld [vmem:[%s6407 + $0x4] sm:$0xf]
      %v6410 = vld [vmem:[%s6407 + $0x8] sm:$0xf]
      %v6411 = vld [vmem:[%s6407 + $0xc] sm:$0xf]
      %v6412 = vld [vmem:[%s6407 + $0x10] sm:$0xf]
      %v6413 = vld [vmem:[%s6407 + $0x14] sm:$0xf]
      %v6414 = vld [vmem:[%s6407 + $0x18] sm:$0xf]
      %v6415 = vld [vmem:[%s6407 + $0x1c] sm:$0xf]
      %v6416 = vld [vmem:[%s6407 + $0x20] sm:$0xf]
      %v6417 = vld [vmem:[%s6407 + $0x24] sm:$0xf]
      %v6418 = vld [vmem:[%s6407 + $0x28] sm:$0xf]
      %v6419 = vld [vmem:[%s6407 + $0x2c] sm:$0xf]
      %v6420 = vld [vmem:[%s6407 + $0x30] sm:$0xf]
      %v6421 = vld [vmem:[%s6407 + $0x34] sm:$0xf]
      %v6422 = vld [vmem:[%s6407 + $0x38] sm:$0xf]
      %v6423 = vld [vmem:[%s6407 + $0x3c] sm:$0xf]
      %v6440 = vunpack.c.l.b16 %v6408
      %v6441 = vunpack.c.l.b16 %v6409
      %v6442 = vunpack.c.l.b16 %v6410
      %v6443 = vunpack.c.l.b16 %v6411
      %v6444 = vunpack.c.l.b16 %v6412
      %v6445 = vunpack.c.l.b16 %v6413
      %v6446 = vunpack.c.l.b16 %v6414
      %v6447 = vunpack.c.l.b16 %v6415
      %v6448 = vunpack.c.l.b16 %v6416
      %v6449 = vunpack.c.l.b16 %v6417
      %v6450 = vunpack.c.l.b16 %v6418
      %v6451 = vunpack.c.l.b16 %v6419
      %v6452 = vunpack.c.l.b16 %v6420
      %v6453 = vunpack.c.l.b16 %v6421
      %v6454 = vunpack.c.l.b16 %v6422
      %v6455 = vunpack.c.l.b16 %v6423
      %v6456 = vpack.c.b16 %v6441, %v6440
      %v6457 = vpack.c.b16 %v6443, %v6442
      %v6458 = vpack.c.b16 %v6445, %v6444
      %v6459 = vpack.c.b16 %v6447, %v6446
      %v6460 = vpack.c.b16 %v6449, %v6448
      %v6461 = vpack.c.b16 %v6451, %v6450
      %v6462 = vpack.c.b16 %v6453, %v6452
      %v6463 = vpack.c.b16 %v6455, %v6454
      %6472 = vmatpush.bf16.msra.mxu0 %v6463
      %6473 = vmatpush.bf16.msra.mxu0 %v6462
      %6474 = vmatpush.bf16.msra.mxu0 %v6461
      %6475 = vmatpush.bf16.msra.mxu0 %v6460
      %6476 = vmatpush.bf16.msra.mxu0 %v6459
      %6477 = vmatpush.bf16.msra.mxu0 %v6458
      %6478 = vmatpush.bf16.msra.mxu0 %v6457
      %6479 = vmatpush.bf16.msra.mxu0 %v6456
      %6480 = vmatmul.bf16.gmra.mxu0 %v6383
      %v6481 = vpop.f32.mrf.mxu0
      %v6482 = vadd.f32 0.0, %v6481
      %v6483 = vpop.f32.mrf.mxu0
      %v6484 = vadd.f32 0.0, %v6483
      %6485 = vmatmul.bf16.gmra.mxu0 %v6384
      %v6486 = vpop.f32.mrf.mxu0
      %v6487 = vadd.f32 0.0, %v6486
      %v6488 = vpop.f32.mrf.mxu0
      %v6489 = vadd.f32 0.0, %v6488
      %6490 = vmatmul.bf16.gmra.mxu0 %v6385
      %v6491 = vpop.f32.mrf.mxu0
      %v6492 = vadd.f32 0.0, %v6491
      %v6493 = vpop.f32.mrf.mxu0
      %v6494 = vadd.f32 0.0, %v6493
      %6495 = vmatmul.bf16.gmra.mxu0 %v6386
      %v6496 = vpop.f32.mrf.mxu0
      %v6497 = vadd.f32 0.0, %v6496
      %v6498 = vpop.f32.mrf.mxu0
      %v6499 = vadd.f32 0.0, %v6498
      %6500 = vmatmul.bf16.gmra.mxu0 %v6387
      %v6501 = vpop.f32.mrf.mxu0
      %v6502 = vadd.f32 0.0, %v6501
      %v6503 = vpop.f32.mrf.mxu0
      %v6504 = vadd.f32 0.0, %v6503
      %6505 = vmatmul.bf16.gmra.mxu0 %v6388
      %v6506 = vpop.f32.mrf.mxu0
      %v6507 = vadd.f32 0.0, %v6506
      %v6508 = vpop.f32.mrf.mxu0
      %v6509 = vadd.f32 0.0, %v6508
      %6510 = vmatmul.bf16.gmra.mxu0 %v6389
      %v6511 = vpop.f32.mrf.mxu0
      %v6512 = vadd.f32 0.0, %v6511
      %v6513 = vpop.f32.mrf.mxu0
      %v6514 = vadd.f32 0.0, %v6513
      %6515 = vmatmul.bf16.gmra.mxu0 %v6390
      %v6516 = vpop.f32.mrf.mxu0
      %v6517 = vadd.f32 0.0, %v6516
      %v6518 = vpop.f32.mrf.mxu0
      %v6519 = vadd.f32 0.0, %v6518
      %6520 = vmatmul.bf16.gmra.mxu0 %v6391
      %v6521 = vpop.f32.mrf.mxu0
      %v6522 = vadd.f32 0.0, %v6521
      %v6523 = vpop.f32.mrf.mxu0
      %v6524 = vadd.f32 0.0, %v6523
      %6525 = vmatmul.bf16.gmra.mxu0 %v6392
      %v6526 = vpop.f32.mrf.mxu0
      %v6527 = vadd.f32 0.0, %v6526
      %v6528 = vpop.f32.mrf.mxu0
      %v6529 = vadd.f32 0.0, %v6528
      %6530 = vmatmul.bf16.gmra.mxu0 %v6393
      %v6531 = vpop.f32.mrf.mxu0
      %v6532 = vadd.f32 0.0, %v6531
      %v6533 = vpop.f32.mrf.mxu0
      %v6534 = vadd.f32 0.0, %v6533
      %6535 = vmatmul.bf16.gmra.mxu0 %v6394
      %v6536 = vpop.f32.mrf.mxu0
      %v6537 = vadd.f32 0.0, %v6536
      %v6538 = vpop.f32.mrf.mxu0
      %v6539 = vadd.f32 0.0, %v6538
      %6540 = vmatmul.bf16.gmra.mxu0 %v6395
      %v6541 = vpop.f32.mrf.mxu0
      %v6542 = vadd.f32 0.0, %v6541
      %v6543 = vpop.f32.mrf.mxu0
      %v6544 = vadd.f32 0.0, %v6543
      %6545 = vmatmul.bf16.gmra.mxu0 %v6396
      %v6546 = vpop.f32.mrf.mxu0
      %v6547 = vadd.f32 0.0, %v6546
      %v6548 = vpop.f32.mrf.mxu0
      %v6549 = vadd.f32 0.0, %v6548
      %6550 = vmatmul.bf16.gmra.mxu0 %v6397
      %v6551 = vpop.f32.mrf.mxu0
      %v6552 = vadd.f32 0.0, %v6551
      %v6553 = vpop.f32.mrf.mxu0
      %v6554 = vadd.f32 0.0, %v6553
      %6555 = vmatmul.bf16.gmra.mxu0 %v6398
      %v6556 = vpop.f32.mrf.mxu0
      %v6557 = vadd.f32 0.0, %v6556
      %v6558 = vpop.f32.mrf.mxu0
      %v6559 = vadd.f32 0.0, %v6558
      %6560 = vmatmul.bf16.gmra.mxu0 %v6399
      %v6561 = vpop.f32.mrf.mxu0
      %v6562 = vadd.f32 0.0, %v6561
      %v6563 = vpop.f32.mrf.mxu0
      %v6564 = vadd.f32 0.0, %v6563
      %6565 = vmatmul.bf16.gmra.mxu0 %v6400
      %v6566 = vpop.f32.mrf.mxu0
      %v6567 = vadd.f32 0.0, %v6566
      %v6568 = vpop.f32.mrf.mxu0
      %v6569 = vadd.f32 0.0, %v6568
      %6570 = vmatmul.bf16.gmra.mxu0 %v6401
      %v6571 = vpop.f32.mrf.mxu0
      %v6572 = vadd.f32 0.0, %v6571
      %v6573 = vpop.f32.mrf.mxu0
      %v6574 = vadd.f32 0.0, %v6573
      %6575 = vmatmul.bf16.gmra.mxu0 %v6402
      %v6576 = vpop.f32.mrf.mxu0
      %v6577 = vadd.f32 0.0, %v6576
      %v6578 = vpop.f32.mrf.mxu0
      %v6579 = vadd.f32 0.0, %v6578
      %6580 = vmatmul.bf16.gmra.mxu0 %v6403
      %v6581 = vpop.f32.mrf.mxu0
      %v6582 = vadd.f32 0.0, %v6581
      %v6583 = vpop.f32.mrf.mxu0
      %v6584 = vadd.f32 0.0, %v6583
      %6585 = vmatmul.bf16.gmra.mxu0 %v6404
      %v6586 = vpop.f32.mrf.mxu0
      %v6587 = vadd.f32 0.0, %v6586
      %v6588 = vpop.f32.mrf.mxu0
      %v6589 = vadd.f32 0.0, %v6588
      %6590 = vmatmul.bf16.gmra.mxu0 %v6405
      %v6591 = vpop.f32.mrf.mxu0
      %v6592 = vadd.f32 0.0, %v6591
      %v6593 = vpop.f32.mrf.mxu0
      %v6594 = vadd.f32 0.0, %v6593
      %6595 = vmatmul.bf16.gmra.mxu0 %v6406
      %v6596 = vpop.f32.mrf.mxu0
      %v6597 = vadd.f32 0.0, %v6596
      %v6598 = vpop.f32.mrf.mxu0
      %v6599 = vadd.f32 0.0, %v6598
      %6600 = vdwg.mxu0
      %v6601 = vadd.f32 %v6287, %v6482
      %v6602 = vadd.f32 %v6288, %v6484
      %v6603 = vadd.f32 %v6289, %v6487
      %v6604 = vadd.f32 %v6290, %v6489
      %v6605 = vadd.f32 %v6291, %v6492
      %v6606 = vadd.f32 %v6292, %v6494
      %v6607 = vadd.f32 %v6293, %v6497
      %v6608 = vadd.f32 %v6294, %v6499
      %v6609 = vadd.f32 %v6295, %v6502
      %v6610 = vadd.f32 %v6296, %v6504
      %v6611 = vadd.f32 %v6297, %v6507
      %v6612 = vadd.f32 %v6298, %v6509
      %v6613 = vadd.f32 %v6299, %v6512
      %v6614 = vadd.f32 %v6300, %v6514
      %v6615 = vadd.f32 %v6301, %v6517
      %v6616 = vadd.f32 %v6302, %v6519
      %v6617 = vadd.f32 %v6303, %v6522
      %v6618 = vadd.f32 %v6304, %v6524
      %v6619 = vadd.f32 %v6305, %v6527
      %v6620 = vadd.f32 %v6306, %v6529
      %v6621 = vadd.f32 %v6307, %v6532
      %v6622 = vadd.f32 %v6308, %v6534
      %v6623 = vadd.f32 %v6309, %v6537
      %v6624 = vadd.f32 %v6310, %v6539
      %v6625 = vadd.f32 %v6311, %v6542
      %v6626 = vadd.f32 %v6312, %v6544
      %v6627 = vadd.f32 %v6313, %v6547
      %v6628 = vadd.f32 %v6314, %v6549
      %v6629 = vadd.f32 %v6315, %v6552
      %v6630 = vadd.f32 %v6316, %v6554
      %v6631 = vadd.f32 %v6317, %v6557
      %v6632 = vadd.f32 %v6318, %v6559
      %v6633 = vadd.f32 %v6319, %v6562
      %v6634 = vadd.f32 %v6320, %v6564
      %v6635 = vadd.f32 %v6321, %v6567
      %v6636 = vadd.f32 %v6322, %v6569
      %v6637 = vadd.f32 %v6323, %v6572
      %v6638 = vadd.f32 %v6324, %v6574
      %v6639 = vadd.f32 %v6325, %v6577
      %v6640 = vadd.f32 %v6326, %v6579
      %v6641 = vadd.f32 %v6327, %v6582
      %v6642 = vadd.f32 %v6328, %v6584
      %v6643 = vadd.f32 %v6329, %v6587
      %v6644 = vadd.f32 %v6330, %v6589
      %v6645 = vadd.f32 %v6331, %v6592
      %v6646 = vadd.f32 %v6332, %v6594
      %v6647 = vadd.f32 %v6333, %v6597
      %v6648 = vadd.f32 %v6334, %v6599
      %v6649 = vmax.f32 %v6601, 0.0
      %v6650 = vmax.f32 %v6602, 0.0
      %v6651 = vmax.f32 %v6603, 0.0
      %v6652 = vmax.f32 %v6604, 0.0
      %v6653 = vmax.f32 %v6605, 0.0
      %v6654 = vmax.f32 %v6606, 0.0
      %v6655 = vmax.f32 %v6607, 0.0
      %v6656 = vmax.f32 %v6608, 0.0
      %v6657 = vmax.f32 %v6609, 0.0
      %v6658 = vmax.f32 %v6610, 0.0
      %v6659 = vmax.f32 %v6611, 0.0
      %v6660 = vmax.f32 %v6612, 0.0
      %v6661 = vmax.f32 %v6613, 0.0
      %v6662 = vmax.f32 %v6614, 0.0
      %v6663 = vmax.f32 %v6615, 0.0
      %v6664 = vmax.f32 %v6616, 0.0
      %v6665 = vmax.f32 %v6617, 0.0
      %v6666 = vmax.f32 %v6618, 0.0
      %v6667 = vmax.f32 %v6619, 0.0
      %v6668 = vmax.f32 %v6620, 0.0
      %v6669 = vmax.f32 %v6621, 0.0
      %v6670 = vmax.f32 %v6622, 0.0
      %v6671 = vmax.f32 %v6623, 0.0
      %v6672 = vmax.f32 %v6624, 0.0
      %v6673 = vmax.f32 %v6625, 0.0
      %v6674 = vmax.f32 %v6626, 0.0
      %v6675 = vmax.f32 %v6627, 0.0
      %v6676 = vmax.f32 %v6628, 0.0
      %v6677 = vmax.f32 %v6629, 0.0
      %v6678 = vmax.f32 %v6630, 0.0
      %v6679 = vmax.f32 %v6631, 0.0
      %v6680 = vmax.f32 %v6632, 0.0
      %v6681 = vmax.f32 %v6633, 0.0
      %v6682 = vmax.f32 %v6634, 0.0
      %v6683 = vmax.f32 %v6635, 0.0
      %v6684 = vmax.f32 %v6636, 0.0
      %v6685 = vmax.f32 %v6637, 0.0
      %v6686 = vmax.f32 %v6638, 0.0
      %v6687 = vmax.f32 %v6639, 0.0
      %v6688 = vmax.f32 %v6640, 0.0
      %v6689 = vmax.f32 %v6641, 0.0
      %v6690 = vmax.f32 %v6642, 0.0
      %v6691 = vmax.f32 %v6643, 0.0
      %v6692 = vmax.f32 %v6644, 0.0
      %v6693 = vmax.f32 %v6645, 0.0
      %v6694 = vmax.f32 %v6646, 0.0
      %v6695 = vmax.f32 %v6647, 0.0
      %v6696 = vmax.f32 %v6648, 0.0
      %v6697 = vld [vmem:[%s6] sm:$0xff]
      %v6698 = vld [vmem:[%s6 + $0x8] sm:$0xff]
      %v6699 = vld [vmem:[%s6 + $0x10] sm:$0xff]
      %v6700 = vld [vmem:[%s6 + $0x18] sm:$0xff]
      %v6701 = vld [vmem:[%s6 + $0x20] sm:$0xff]
      %v6702 = vld [vmem:[%s6 + $0x28] sm:$0xff]
      %v6703 = vld [vmem:[%s6 + $0x30] sm:$0xff]
      %v6704 = vld [vmem:[%s6 + $0x38] sm:$0xff]
      %v6705 = vld [vmem:[%s6 + $0x40] sm:$0xff]
      %v6706 = vld [vmem:[%s6 + $0x48] sm:$0xff]
      %v6707 = vld [vmem:[%s6 + $0x50] sm:$0xff]
      %v6708 = vld [vmem:[%s6 + $0x58] sm:$0xff]
      %v6709 = vld [vmem:[%s6 + $0x60] sm:$0xff]
      %v6710 = vld [vmem:[%s6 + $0x68] sm:$0xff]
      %v6711 = vld [vmem:[%s6 + $0x70] sm:$0xff]
      %v6712 = vld [vmem:[%s6 + $0x78] sm:$0xff]
      %v6713 = vld [vmem:[%s6 + $0x80] sm:$0xff]
      %v6714 = vld [vmem:[%s6 + $0x88] sm:$0xff]
      %v6715 = vld [vmem:[%s6 + $0x90] sm:$0xff]
      %v6716 = vld [vmem:[%s6 + $0x98] sm:$0xff]
      %v6717 = vld [vmem:[%s6 + $0xa0] sm:$0xff]
      %v6718 = vld [vmem:[%s6 + $0xa8] sm:$0xff]
      %v6719 = vld [vmem:[%s6 + $0xb0] sm:$0xff]
      %v6720 = vld [vmem:[%s6 + $0xb8] sm:$0xff]
      %v6721 = vld [vmem:[%s6 + $0xc0] sm:$0xff]
      %v6722 = vld [vmem:[%s6 + $0xc8] sm:$0xff]
      %v6723 = vld [vmem:[%s6 + $0xd0] sm:$0xff]
      %v6724 = vld [vmem:[%s6 + $0xd8] sm:$0xff]
      %v6725 = vld [vmem:[%s6 + $0xe0] sm:$0xff]
      %v6726 = vld [vmem:[%s6 + $0xe8] sm:$0xff]
      %v6727 = vld [vmem:[%s6 + $0xf0] sm:$0xff]
      %v6728 = vld [vmem:[%s6 + $0xf8] sm:$0xff]
      %v6729 = vld [vmem:[%s6 + $0x100] sm:$0xff]
      %v6730 = vld [vmem:[%s6 + $0x108] sm:$0xff]
      %v6731 = vld [vmem:[%s6 + $0x110] sm:$0xff]
      %v6732 = vld [vmem:[%s6 + $0x118] sm:$0xff]
      %v6733 = vld [vmem:[%s6 + $0x120] sm:$0xff]
      %v6734 = vld [vmem:[%s6 + $0x128] sm:$0xff]
      %v6735 = vld [vmem:[%s6 + $0x130] sm:$0xff]
      %v6736 = vld [vmem:[%s6 + $0x138] sm:$0xff]
      %v6737 = vld [vmem:[%s6 + $0x140] sm:$0xff]
      %v6738 = vld [vmem:[%s6 + $0x148] sm:$0xff]
      %v6739 = vld [vmem:[%s6 + $0x150] sm:$0xff]
      %v6740 = vld [vmem:[%s6 + $0x158] sm:$0xff]
      %v6741 = vld [vmem:[%s6 + $0x160] sm:$0xff]
      %v6742 = vld [vmem:[%s6 + $0x168] sm:$0xff]
      %v6743 = vld [vmem:[%s6 + $0x170] sm:$0xff]
      %v6744 = vld [vmem:[%s6 + $0x178] sm:$0xff]
      %6746 = vset.pattern.permute.xlu0 0
      %6747 = vperm.xlu0 %6746, %v6697
      %v6748 = vpop.permute.xlu0 %6747
      %6751 = vset.pattern.permute.xlu0 0
      %6752 = vperm.xlu0 %6751, %v6698
      %v6753 = vpop.permute.xlu0 %6752
      %6756 = vset.pattern.permute.xlu0 0
      %6757 = vperm.xlu0 %6756, %v6699
      %v6758 = vpop.permute.xlu0 %6757
      %6761 = vset.pattern.permute.xlu0 0
      %6762 = vperm.xlu0 %6761, %v6700
      %v6763 = vpop.permute.xlu0 %6762
      %6766 = vset.pattern.permute.xlu0 0
      %6767 = vperm.xlu0 %6766, %v6701
      %v6768 = vpop.permute.xlu0 %6767
      %6771 = vset.pattern.permute.xlu0 0
      %6772 = vperm.xlu0 %6771, %v6702
      %v6773 = vpop.permute.xlu0 %6772
      %6776 = vset.pattern.permute.xlu0 0
      %6777 = vperm.xlu0 %6776, %v6703
      %v6778 = vpop.permute.xlu0 %6777
      %6781 = vset.pattern.permute.xlu0 0
      %6782 = vperm.xlu0 %6781, %v6704
      %v6783 = vpop.permute.xlu0 %6782
      %6786 = vset.pattern.permute.xlu0 0
      %6787 = vperm.xlu0 %6786, %v6705
      %v6788 = vpop.permute.xlu0 %6787
      %6791 = vset.pattern.permute.xlu0 0
      %6792 = vperm.xlu0 %6791, %v6706
      %v6793 = vpop.permute.xlu0 %6792
      %6796 = vset.pattern.permute.xlu0 0
      %6797 = vperm.xlu0 %6796, %v6707
      %v6798 = vpop.permute.xlu0 %6797
      %6801 = vset.pattern.permute.xlu0 0
      %6802 = vperm.xlu0 %6801, %v6708
      %v6803 = vpop.permute.xlu0 %6802
      %6806 = vset.pattern.permute.xlu0 0
      %6807 = vperm.xlu0 %6806, %v6709
      %v6808 = vpop.permute.xlu0 %6807
      %6811 = vset.pattern.permute.xlu0 0
      %6812 = vperm.xlu0 %6811, %v6710
      %v6813 = vpop.permute.xlu0 %6812
      %6816 = vset.pattern.permute.xlu0 0
      %6817 = vperm.xlu0 %6816, %v6711
      %v6818 = vpop.permute.xlu0 %6817
      %6821 = vset.pattern.permute.xlu0 0
      %6822 = vperm.xlu0 %6821, %v6712
      %v6823 = vpop.permute.xlu0 %6822
      %6826 = vset.pattern.permute.xlu0 0
      %6827 = vperm.xlu0 %6826, %v6713
      %v6828 = vpop.permute.xlu0 %6827
      %6831 = vset.pattern.permute.xlu0 0
      %6832 = vperm.xlu0 %6831, %v6714
      %v6833 = vpop.permute.xlu0 %6832
      %6836 = vset.pattern.permute.xlu0 0
      %6837 = vperm.xlu0 %6836, %v6715
      %v6838 = vpop.permute.xlu0 %6837
      %6841 = vset.pattern.permute.xlu0 0
      %6842 = vperm.xlu0 %6841, %v6716
      %v6843 = vpop.permute.xlu0 %6842
      %6846 = vset.pattern.permute.xlu0 0
      %6847 = vperm.xlu0 %6846, %v6717
      %v6848 = vpop.permute.xlu0 %6847
      %6851 = vset.pattern.permute.xlu0 0
      %6852 = vperm.xlu0 %6851, %v6718
      %v6853 = vpop.permute.xlu0 %6852
      %6856 = vset.pattern.permute.xlu0 0
      %6857 = vperm.xlu0 %6856, %v6719
      %v6858 = vpop.permute.xlu0 %6857
      %6861 = vset.pattern.permute.xlu0 0
      %6862 = vperm.xlu0 %6861, %v6720
      %v6863 = vpop.permute.xlu0 %6862
      %6866 = vset.pattern.permute.xlu0 0
      %6867 = vperm.xlu0 %6866, %v6721
      %v6868 = vpop.permute.xlu0 %6867
      %6871 = vset.pattern.permute.xlu0 0
      %6872 = vperm.xlu0 %6871, %v6722
      %v6873 = vpop.permute.xlu0 %6872
      %6876 = vset.pattern.permute.xlu0 0
      %6877 = vperm.xlu0 %6876, %v6723
      %v6878 = vpop.permute.xlu0 %6877
      %6881 = vset.pattern.permute.xlu0 0
      %6882 = vperm.xlu0 %6881, %v6724
      %v6883 = vpop.permute.xlu0 %6882
      %6886 = vset.pattern.permute.xlu0 0
      %6887 = vperm.xlu0 %6886, %v6725
      %v6888 = vpop.permute.xlu0 %6887
      %6891 = vset.pattern.permute.xlu0 0
      %6892 = vperm.xlu0 %6891, %v6726
      %v6893 = vpop.permute.xlu0 %6892
      %6896 = vset.pattern.permute.xlu0 0
      %6897 = vperm.xlu0 %6896, %v6727
      %v6898 = vpop.permute.xlu0 %6897
      %6901 = vset.pattern.permute.xlu0 0
      %6902 = vperm.xlu0 %6901, %v6728
      %v6903 = vpop.permute.xlu0 %6902
      %6906 = vset.pattern.permute.xlu0 0
      %6907 = vperm.xlu0 %6906, %v6729
      %v6908 = vpop.permute.xlu0 %6907
      %6911 = vset.pattern.permute.xlu0 0
      %6912 = vperm.xlu0 %6911, %v6730
      %v6913 = vpop.permute.xlu0 %6912
      %6916 = vset.pattern.permute.xlu0 0
      %6917 = vperm.xlu0 %6916, %v6731
      %v6918 = vpop.permute.xlu0 %6917
      %6921 = vset.pattern.permute.xlu0 0
      %6922 = vperm.xlu0 %6921, %v6732
      %v6923 = vpop.permute.xlu0 %6922
      %6926 = vset.pattern.permute.xlu0 0
      %6927 = vperm.xlu0 %6926, %v6733
      %v6928 = vpop.permute.xlu0 %6927
      %6931 = vset.pattern.permute.xlu0 0
      %6932 = vperm.xlu0 %6931, %v6734
      %v6933 = vpop.permute.xlu0 %6932
      %6936 = vset.pattern.permute.xlu0 0
      %6937 = vperm.xlu0 %6936, %v6735
      %v6938 = vpop.permute.xlu0 %6937
      %6941 = vset.pattern.permute.xlu0 0
      %6942 = vperm.xlu0 %6941, %v6736
      %v6943 = vpop.permute.xlu0 %6942
      %6946 = vset.pattern.permute.xlu0 0
      %6947 = vperm.xlu0 %6946, %v6737
      %v6948 = vpop.permute.xlu0 %6947
      %6951 = vset.pattern.permute.xlu0 0
      %6952 = vperm.xlu0 %6951, %v6738
      %v6953 = vpop.permute.xlu0 %6952
      %6956 = vset.pattern.permute.xlu0 0
      %6957 = vperm.xlu0 %6956, %v6739
      %v6958 = vpop.permute.xlu0 %6957
      %6961 = vset.pattern.permute.xlu0 0
      %6962 = vperm.xlu0 %6961, %v6740
      %v6963 = vpop.permute.xlu0 %6962
      %6966 = vset.pattern.permute.xlu0 0
      %6967 = vperm.xlu0 %6966, %v6741
      %v6968 = vpop.permute.xlu0 %6967
      %6971 = vset.pattern.permute.xlu0 0
      %6972 = vperm.xlu0 %6971, %v6742
      %v6973 = vpop.permute.xlu0 %6972
      %6976 = vset.pattern.permute.xlu0 0
      %6977 = vperm.xlu0 %6976, %v6743
      %v6978 = vpop.permute.xlu0 %6977
      %6981 = vset.pattern.permute.xlu0 0
      %6982 = vperm.xlu0 %6981, %v6744
      %v6983 = vpop.permute.xlu0 %6982
      %v6985 = vmul.f32 %v6649, %v6748
      %v6986 = vmul.f32 %v6650, %v6753
      %v6987 = vmul.f32 %v6651, %v6758
      %v6988 = vmul.f32 %v6652, %v6763
      %v6989 = vmul.f32 %v6653, %v6768
      %v6990 = vmul.f32 %v6654, %v6773
      %v6991 = vmul.f32 %v6655, %v6778
      %v6992 = vmul.f32 %v6656, %v6783
      %v6993 = vmul.f32 %v6657, %v6788
      %v6994 = vmul.f32 %v6658, %v6793
      %v6995 = vmul.f32 %v6659, %v6798
      %v6996 = vmul.f32 %v6660, %v6803
      %v6997 = vmul.f32 %v6661, %v6808
      %v6998 = vmul.f32 %v6662, %v6813
      %v6999 = vmul.f32 %v6663, %v6818
      %v7000 = vmul.f32 %v6664, %v6823
      %v7001 = vmul.f32 %v6665, %v6828
      %v7002 = vmul.f32 %v6666, %v6833
      %v7003 = vmul.f32 %v6667, %v6838
      %v7004 = vmul.f32 %v6668, %v6843
      %v7005 = vmul.f32 %v6669, %v6848
      %v7006 = vmul.f32 %v6670, %v6853
      %v7007 = vmul.f32 %v6671, %v6858
      %v7008 = vmul.f32 %v6672, %v6863
      %v7009 = vmul.f32 %v6673, %v6868
      %v7010 = vmul.f32 %v6674, %v6873
      %v7011 = vmul.f32 %v6675, %v6878
      %v7012 = vmul.f32 %v6676, %v6883
      %v7013 = vmul.f32 %v6677, %v6888
      %v7014 = vmul.f32 %v6678, %v6893
      %v7015 = vmul.f32 %v6679, %v6898
      %v7016 = vmul.f32 %v6680, %v6903
      %v7017 = vmul.f32 %v6681, %v6908
      %v7018 = vmul.f32 %v6682, %v6913
      %v7019 = vmul.f32 %v6683, %v6918
      %v7020 = vmul.f32 %v6684, %v6923
      %v7021 = vmul.f32 %v6685, %v6928
      %v7022 = vmul.f32 %v6686, %v6933
      %v7023 = vmul.f32 %v6687, %v6938
      %v7024 = vmul.f32 %v6688, %v6943
      %v7025 = vmul.f32 %v6689, %v6948
      %v7026 = vmul.f32 %v6690, %v6953
      %v7027 = vmul.f32 %v6691, %v6958
      %v7028 = vmul.f32 %v6692, %v6963
      %v7029 = vmul.f32 %v6693, %v6968
      %v7030 = vmul.f32 %v6694, %v6973
      %v7031 = vmul.f32 %v6695, %v6978
      %v7032 = vmul.f32 %v6696, %v6983
      %7033 = vst [vmem:[#allocation2 + $0x38] sm:$0xff] %v6985
      %7034 = vst [vmem:[#allocation2 + $0x40] sm:$0xff] %v6986
      %7035 = vst [vmem:[#allocation2 + $0x48] sm:$0xff] %v6987
      %7036 = vst [vmem:[#allocation2 + $0x50] sm:$0xff] %v6988
      %7037 = vst [vmem:[#allocation2 + $0x58] sm:$0xff] %v6989
      %7038 = vst [vmem:[#allocation2 + $0x60] sm:$0xff] %v6990
      %7039 = vst [vmem:[#allocation2 + $0x68] sm:$0xff] %v6991
      %7040 = vst [vmem:[#allocation2 + $0x70] sm:$0xff] %v6992
      %7041 = vst [vmem:[#allocation2 + $0x78] sm:$0xff] %v6993
      %7042 = vst [vmem:[#allocation2 + $0x80] sm:$0xff] %v6994
      %7043 = vst [vmem:[#allocation2 + $0x88] sm:$0xff] %v6995
      %7044 = vst [vmem:[#allocation2 + $0x90] sm:$0xff] %v6996
      %7045 = vst [vmem:[#allocation2 + $0x98] sm:$0xff] %v6997
      %7046 = vst [vmem:[#allocation2 + $0xa0] sm:$0xff] %v6998
      %7047 = vst [vmem:[#allocation2 + $0xa8] sm:$0xff] %v6999
      %7048 = vst [vmem:[#allocation2 + $0xb0] sm:$0xff] %v7000
      %7049 = vst [vmem:[#allocation2 + $0xb8] sm:$0xff] %v7001
      %7050 = vst [vmem:[#allocation2 + $0xc0] sm:$0xff] %v7002
      %7051 = vst [vmem:[#allocation2 + $0xc8] sm:$0xff] %v7003
      %7052 = vst [vmem:[#allocation2 + $0xd0] sm:$0xff] %v7004
      %7053 = vst [vmem:[#allocation2 + $0xd8] sm:$0xff] %v7005
      %7054 = vst [vmem:[#allocation2 + $0xe0] sm:$0xff] %v7006
      %7055 = vst [vmem:[#allocation2 + $0xe8] sm:$0xff] %v7007
      %7056 = vst [vmem:[#allocation2 + $0xf0] sm:$0xff] %v7008
      %7057 = vst [vmem:[#allocation2 + $0xf8] sm:$0xff] %v7009
      %7058 = vst [vmem:[#allocation2 + $0x100] sm:$0xff] %v7010
      %7059 = vst [vmem:[#allocation2 + $0x108] sm:$0xff] %v7011
      %7060 = vst [vmem:[#allocation2 + $0x110] sm:$0xff] %v7012
      %7061 = vst [vmem:[#allocation2 + $0x118] sm:$0xff] %v7013
      %7062 = vst [vmem:[#allocation2 + $0x120] sm:$0xff] %v7014
      %7063 = vst [vmem:[#allocation2 + $0x128] sm:$0xff] %v7015
      %7064 = vst [vmem:[#allocation2 + $0x130] sm:$0xff] %v7016
      %7065 = vst [vmem:[#allocation2 + $0x138] sm:$0xff] %v7017
      %7066 = vst [vmem:[#allocation2 + $0x140] sm:$0xff] %v7018
      %7067 = vst [vmem:[#allocation2 + $0x148] sm:$0xff] %v7019
      %7068 = vst [vmem:[#allocation2 + $0x150] sm:$0xff] %v7020
      %7069 = vst [vmem:[#allocation2 + $0x158] sm:$0xff] %v7021
      %7070 = vst [vmem:[#allocation2 + $0x160] sm:$0xff] %v7022
      %7071 = vst [vmem:[#allocation2 + $0x168] sm:$0xff] %v7023
      %7072 = vst [vmem:[#allocation2 + $0x170] sm:$0xff] %v7024
      %7073 = vst [vmem:[#allocation2 + $0x178] sm:$0xff] %v7025
      %7074 = vst [vmem:[#allocation2 + $0x180] sm:$0xff] %v7026
      %7075 = vst [vmem:[#allocation2 + $0x188] sm:$0xff] %v7027
      %7076 = vst [vmem:[#allocation2 + $0x190] sm:$0xff] %v7028
      %7077 = vst [vmem:[#allocation2 + $0x198] sm:$0xff] %v7029
      %7078 = vst [vmem:[#allocation2 + $0x1a0] sm:$0xff] %v7030
      %7079 = vst [vmem:[#allocation2 + $0x1a8] sm:$0xff] %v7031
      %7080 = vst [vmem:[#allocation2 + $0x1b0] sm:$0xff] %v7032
      %v7081 = vld [vmem:[#allocation2 + $0x1f] sm:$0xff]
      %v7082 = vld [vmem:[#allocation2 + $0x27] sm:$0xff]
      %v7083 = vld [vmem:[#allocation2 + $0x2f] sm:$0xff]
      %v7084 = vld [vmem:[#allocation2 + $0x37] sm:$0xff]
      %v7085 = vld [vmem:[#allocation2 + $0x3f] sm:$0xff]
      %v7086 = vld [vmem:[#allocation2 + $0x47] sm:$0xff]
      %v7087 = vld [vmem:[#allocation2 + $0x4f] sm:$0xff]
      %v7088 = vld [vmem:[#allocation2 + $0x57] sm:$0xff]
      %v7089 = vld [vmem:[#allocation2 + $0x5f] sm:$0xff]
      %v7090 = vld [vmem:[#allocation2 + $0x67] sm:$0xff]
      %v7091 = vld [vmem:[#allocation2 + $0x6f] sm:$0xff]
      %v7092 = vld [vmem:[#allocation2 + $0x77] sm:$0xff]
      %v7093 = vld [vmem:[#allocation2 + $0x7f] sm:$0xff]
      %v7094 = vld [vmem:[#allocation2 + $0x87] sm:$0xff]
      %v7095 = vld [vmem:[#allocation2 + $0x8f] sm:$0xff]
      %v7096 = vld [vmem:[#allocation2 + $0x97] sm:$0xff]
      %v7097 = vld [vmem:[#allocation2 + $0x9f] sm:$0xff]
      %v7098 = vld [vmem:[#allocation2 + $0xa7] sm:$0xff]
      %v7099 = vld [vmem:[#allocation2 + $0xaf] sm:$0xff]
      %v7100 = vld [vmem:[#allocation2 + $0xb7] sm:$0xff]
      %v7101 = vld [vmem:[#allocation2 + $0xbf] sm:$0xff]
      %v7102 = vld [vmem:[#allocation2 + $0xc7] sm:$0xff]
      %v7103 = vld [vmem:[#allocation2 + $0xcf] sm:$0xff]
      %v7104 = vld [vmem:[#allocation2 + $0xd7] sm:$0xff]
      %v7105 = vld [vmem:[#allocation2 + $0xdf] sm:$0xff]
      %v7106 = vld [vmem:[#allocation2 + $0xe7] sm:$0xff]
      %v7107 = vld [vmem:[#allocation2 + $0xef] sm:$0xff]
      %v7108 = vld [vmem:[#allocation2 + $0xf7] sm:$0xff]
      %v7109 = vld [vmem:[#allocation2 + $0xff] sm:$0xff]
      %v7110 = vld [vmem:[#allocation2 + $0x107] sm:$0xff]
      %v7111 = vld [vmem:[#allocation2 + $0x10f] sm:$0xff]
      %v7112 = vld [vmem:[#allocation2 + $0x117] sm:$0xff]
      %v7113 = vld [vmem:[#allocation2 + $0x11f] sm:$0xff]
      %v7114 = vld [vmem:[#allocation2 + $0x127] sm:$0xff]
      %v7115 = vld [vmem:[#allocation2 + $0x12f] sm:$0xff]
      %v7116 = vld [vmem:[#allocation2 + $0x137] sm:$0xff]
      %v7117 = vld [vmem:[#allocation2 + $0x13f] sm:$0xff]
      %v7118 = vld [vmem:[#allocation2 + $0x147] sm:$0xff]
      %v7119 = vld [vmem:[#allocation2 + $0x14f] sm:$0xff]
      %v7120 = vld [vmem:[#allocation2 + $0x157] sm:$0xff]
      %v7121 = vld [vmem:[#allocation2 + $0x15f] sm:$0xff]
      %v7122 = vld [vmem:[#allocation2 + $0x167] sm:$0xff]
      %v7123 = vld [vmem:[#allocation2 + $0x16f] sm:$0xff]
      %v7124 = vld [vmem:[#allocation2 + $0x177] sm:$0xff]
      %v7125 = vld [vmem:[#allocation2 + $0x17f] sm:$0xff]
      %v7126 = vld [vmem:[#allocation2 + $0x187] sm:$0xff]
      %v7127 = vld [vmem:[#allocation2 + $0x18f] sm:$0xff]
      %v7128 = vld [vmem:[#allocation2 + $0x197] sm:$0xff]
      %v7129 = vpack.c.bf16 %v7082, %v7081
      %v7130 = vpack.c.bf16 %v7084, %v7083
      %v7131 = vpack.c.bf16 %v7086, %v7085
      %v7132 = vpack.c.bf16 %v7088, %v7087
      %v7133 = vpack.c.bf16 %v7090, %v7089
      %v7134 = vpack.c.bf16 %v7092, %v7091
      %v7135 = vpack.c.bf16 %v7094, %v7093
      %v7136 = vpack.c.bf16 %v7096, %v7095
      %v7137 = vpack.c.bf16 %v7098, %v7097
      %v7138 = vpack.c.bf16 %v7100, %v7099
      %v7139 = vpack.c.bf16 %v7102, %v7101
      %v7140 = vpack.c.bf16 %v7104, %v7103
      %v7141 = vpack.c.bf16 %v7106, %v7105
      %v7142 = vpack.c.bf16 %v7108, %v7107
      %v7143 = vpack.c.bf16 %v7110, %v7109
      %v7144 = vpack.c.bf16 %v7112, %v7111
      %v7145 = vpack.c.bf16 %v7114, %v7113
      %v7146 = vpack.c.bf16 %v7116, %v7115
      %v7147 = vpack.c.bf16 %v7118, %v7117
      %v7148 = vpack.c.bf16 %v7120, %v7119
      %v7149 = vpack.c.bf16 %v7122, %v7121
      %v7150 = vpack.c.bf16 %v7124, %v7123
      %v7151 = vpack.c.bf16 %v7126, %v7125
      %v7152 = vpack.c.bf16 %v7128, %v7127
      %v7153 = vld [vmem:[%s5] sm:$0xf]
      %v7154 = vld [vmem:[%s5 + $0x4] sm:$0xf]
      %v7155 = vld [vmem:[%s5 + $0x8] sm:$0xf]
      %v7156 = vld [vmem:[%s5 + $0xc] sm:$0xf]
      %v7157 = vld [vmem:[%s5 + $0x10] sm:$0xf]
      %v7158 = vld [vmem:[%s5 + $0x14] sm:$0xf]
      %v7159 = vld [vmem:[%s5 + $0x18] sm:$0xf]
      %v7160 = vld [vmem:[%s5 + $0x1c] sm:$0xf]
      %v7161 = vld [vmem:[%s5 + $0x20] sm:$0xf]
      %v7162 = vld [vmem:[%s5 + $0x24] sm:$0xf]
      %v7163 = vld [vmem:[%s5 + $0x28] sm:$0xf]
      %v7164 = vld [vmem:[%s5 + $0x2c] sm:$0xf]
      %v7165 = vld [vmem:[%s5 + $0x30] sm:$0xf]
      %v7166 = vld [vmem:[%s5 + $0x34] sm:$0xf]
      %v7167 = vld [vmem:[%s5 + $0x38] sm:$0xf]
      %v7168 = vld [vmem:[%s5 + $0x3c] sm:$0xf]
      %v7169 = vld [vmem:[#allocation2 + $0x20] sm:$0xff]
      %v7170 = vld [vmem:[#allocation2 + $0x28] sm:$0xff]
      %v7171 = vld [vmem:[#allocation2 + $0x30] sm:$0xff]
      %v7172 = vld [vmem:[#allocation2 + $0x38] sm:$0xff]
      %v7173 = vld [vmem:[#allocation2 + $0x40] sm:$0xff]
      %v7174 = vld [vmem:[#allocation2 + $0x48] sm:$0xff]
      %v7175 = vld [vmem:[#allocation2 + $0x50] sm:$0xff]
      %v7176 = vld [vmem:[#allocation2 + $0x58] sm:$0xff]
      %v7177 = vld [vmem:[#allocation2 + $0x60] sm:$0xff]
      %v7178 = vld [vmem:[#allocation2 + $0x68] sm:$0xff]
      %v7179 = vld [vmem:[#allocation2 + $0x70] sm:$0xff]
      %v7180 = vld [vmem:[#allocation2 + $0x78] sm:$0xff]
      %v7181 = vld [vmem:[#allocation2 + $0x80] sm:$0xff]
      %v7182 = vld [vmem:[#allocation2 + $0x88] sm:$0xff]
      %v7183 = vld [vmem:[#allocation2 + $0x90] sm:$0xff]
      %v7184 = vld [vmem:[#allocation2 + $0x98] sm:$0xff]
      %v7185 = vld [vmem:[#allocation2 + $0xa0] sm:$0xff]
      %v7186 = vld [vmem:[#allocation2 + $0xa8] sm:$0xff]
      %v7187 = vld [vmem:[#allocation2 + $0xb0] sm:$0xff]
      %v7188 = vld [vmem:[#allocation2 + $0xb8] sm:$0xff]
      %v7189 = vld [vmem:[#allocation2 + $0xc0] sm:$0xff]
      %v7190 = vld [vmem:[#allocation2 + $0xc8] sm:$0xff]
      %v7191 = vld [vmem:[#allocation2 + $0xd0] sm:$0xff]
      %v7192 = vld [vmem:[#allocation2 + $0xd8] sm:$0xff]
      %v7193 = vld [vmem:[#allocation2 + $0xe0] sm:$0xff]
      %v7194 = vld [vmem:[#allocation2 + $0xe8] sm:$0xff]
      %v7195 = vld [vmem:[#allocation2 + $0xf0] sm:$0xff]
      %v7196 = vld [vmem:[#allocation2 + $0xf8] sm:$0xff]
      %v7197 = vld [vmem:[#allocation2 + $0x100] sm:$0xff]
      %v7198 = vld [vmem:[#allocation2 + $0x108] sm:$0xff]
      %v7199 = vld [vmem:[#allocation2 + $0x110] sm:$0xff]
      %v7200 = vld [vmem:[#allocation2 + $0x118] sm:$0xff]
      %v7201 = vld [vmem:[#allocation2 + $0x120] sm:$0xff]
      %v7202 = vld [vmem:[#allocation2 + $0x128] sm:$0xff]
      %v7203 = vld [vmem:[#allocation2 + $0x130] sm:$0xff]
      %v7204 = vld [vmem:[#allocation2 + $0x138] sm:$0xff]
      %v7205 = vld [vmem:[#allocation2 + $0x140] sm:$0xff]
      %v7206 = vld [vmem:[#allocation2 + $0x148] sm:$0xff]
      %v7207 = vld [vmem:[#allocation2 + $0x150] sm:$0xff]
      %v7208 = vld [vmem:[#allocation2 + $0x158] sm:$0xff]
      %v7209 = vld [vmem:[#allocation2 + $0x160] sm:$0xff]
      %v7210 = vld [vmem:[#allocation2 + $0x168] sm:$0xff]
      %v7211 = vld [vmem:[#allocation2 + $0x170] sm:$0xff]
      %v7212 = vld [vmem:[#allocation2 + $0x178] sm:$0xff]
      %v7213 = vld [vmem:[#allocation2 + $0x180] sm:$0xff]
      %v7214 = vld [vmem:[#allocation2 + $0x188] sm:$0xff]
      %v7215 = vld [vmem:[#allocation2 + $0x190] sm:$0xff]
      %v7216 = vld [vmem:[#allocation2 + $0x198] sm:$0xff]
      %v7217 = vpack.c.bf16 %v7170, %v7169
      %v7218 = vpack.c.bf16 %v7172, %v7171
      %v7219 = vpack.c.bf16 %v7174, %v7173
      %v7220 = vpack.c.bf16 %v7176, %v7175
      %v7221 = vpack.c.bf16 %v7178, %v7177
      %v7222 = vpack.c.bf16 %v7180, %v7179
      %v7223 = vpack.c.bf16 %v7182, %v7181
      %v7224 = vpack.c.bf16 %v7184, %v7183
      %v7225 = vpack.c.bf16 %v7186, %v7185
      %v7226 = vpack.c.bf16 %v7188, %v7187
      %v7227 = vpack.c.bf16 %v7190, %v7189
      %v7228 = vpack.c.bf16 %v7192, %v7191
      %v7229 = vpack.c.bf16 %v7194, %v7193
      %v7230 = vpack.c.bf16 %v7196, %v7195
      %v7231 = vpack.c.bf16 %v7198, %v7197
      %v7232 = vpack.c.bf16 %v7200, %v7199
      %v7233 = vpack.c.bf16 %v7202, %v7201
      %v7234 = vpack.c.bf16 %v7204, %v7203
      %v7235 = vpack.c.bf16 %v7206, %v7205
      %v7236 = vpack.c.bf16 %v7208, %v7207
      %v7237 = vpack.c.bf16 %v7210, %v7209
      %v7238 = vpack.c.bf16 %v7212, %v7211
      %v7239 = vpack.c.bf16 %v7214, %v7213
      %v7240 = vpack.c.bf16 %v7216, %v7215
      %s7241 = scalar_lea.vmem %s5, 64
      %v7242 = vld [vmem:[%s7241] sm:$0xf]
      %v7243 = vld [vmem:[%s7241 + $0x4] sm:$0xf]
      %v7244 = vld [vmem:[%s7241 + $0x8] sm:$0xf]
      %v7245 = vld [vmem:[%s7241 + $0xc] sm:$0xf]
      %v7246 = vld [vmem:[%s7241 + $0x10] sm:$0xf]
      %v7247 = vld [vmem:[%s7241 + $0x14] sm:$0xf]
      %v7248 = vld [vmem:[%s7241 + $0x18] sm:$0xf]
      %v7249 = vld [vmem:[%s7241 + $0x1c] sm:$0xf]
      %v7250 = vld [vmem:[%s7241 + $0x20] sm:$0xf]
      %v7251 = vld [vmem:[%s7241 + $0x24] sm:$0xf]
      %v7252 = vld [vmem:[%s7241 + $0x28] sm:$0xf]
      %v7253 = vld [vmem:[%s7241 + $0x2c] sm:$0xf]
      %v7254 = vld [vmem:[%s7241 + $0x30] sm:$0xf]
      %v7255 = vld [vmem:[%s7241 + $0x34] sm:$0xf]
      %v7256 = vld [vmem:[%s7241 + $0x38] sm:$0xf]
      %v7257 = vld [vmem:[%s7241 + $0x3c] sm:$0xf]
      %v7274 = vunpack.c.l.b16 %v7242
      %v7275 = vunpack.c.l.b16 %v7243
      %v7276 = vunpack.c.l.b16 %v7244
      %v7277 = vunpack.c.l.b16 %v7245
      %v7278 = vunpack.c.l.b16 %v7246
      %v7279 = vunpack.c.l.b16 %v7247
      %v7280 = vunpack.c.l.b16 %v7248
      %v7281 = vunpack.c.l.b16 %v7249
      %v7282 = vunpack.c.l.b16 %v7250
      %v7283 = vunpack.c.l.b16 %v7251
      %v7284 = vunpack.c.l.b16 %v7252
      %v7285 = vunpack.c.l.b16 %v7253
      %v7286 = vunpack.c.l.b16 %v7254
      %v7287 = vunpack.c.l.b16 %v7255
      %v7288 = vunpack.c.l.b16 %v7256
      %v7289 = vunpack.c.l.b16 %v7257
      %v7290 = vpack.c.b16 %v7275, %v7274
      %v7291 = vpack.c.b16 %v7277, %v7276
      %v7292 = vpack.c.b16 %v7279, %v7278
      %v7293 = vpack.c.b16 %v7281, %v7280
      %v7294 = vpack.c.b16 %v7283, %v7282
      %v7295 = vpack.c.b16 %v7285, %v7284
      %v7296 = vpack.c.b16 %v7287, %v7286
      %v7297 = vpack.c.b16 %v7289, %v7288
      %7306 = vmatpush.bf16.msra.mxu0 %v7297
      %7307 = vmatpush.bf16.msra.mxu0 %v7296
      %7308 = vmatpush.bf16.msra.mxu0 %v7295
      %7309 = vmatpush.bf16.msra.mxu0 %v7294
      %7310 = vmatpush.bf16.msra.mxu0 %v7293
      %7311 = vmatpush.bf16.msra.mxu0 %v7292
      %7312 = vmatpush.bf16.msra.mxu0 %v7291
      %7313 = vmatpush.bf16.msra.mxu0 %v7290
      %7314 = vmatmul.bf16.gmra.mxu0 %v7217
      %v7315 = vpop.f32.mrf.mxu0
      %v7316 = vadd.f32 0.0, %v7315
      %v7317 = vpop.f32.mrf.mxu0
      %v7318 = vadd.f32 0.0, %v7317
      %7319 = vmatmul.bf16.gmra.mxu0 %v7218
      %v7320 = vpop.f32.mrf.mxu0
      %v7321 = vadd.f32 0.0, %v7320
      %v7322 = vpop.f32.mrf.mxu0
      %v7323 = vadd.f32 0.0, %v7322
      %7324 = vmatmul.bf16.gmra.mxu0 %v7219
      %v7325 = vpop.f32.mrf.mxu0
      %v7326 = vadd.f32 0.0, %v7325
      %v7327 = vpop.f32.mrf.mxu0
      %v7328 = vadd.f32 0.0, %v7327
      %7329 = vmatmul.bf16.gmra.mxu0 %v7220
      %v7330 = vpop.f32.mrf.mxu0
      %v7331 = vadd.f32 0.0, %v7330
      %v7332 = vpop.f32.mrf.mxu0
      %v7333 = vadd.f32 0.0, %v7332
      %7334 = vmatmul.bf16.gmra.mxu0 %v7221
      %v7335 = vpop.f32.mrf.mxu0
      %v7336 = vadd.f32 0.0, %v7335
      %v7337 = vpop.f32.mrf.mxu0
      %v7338 = vadd.f32 0.0, %v7337
      %7339 = vmatmul.bf16.gmra.mxu0 %v7222
      %v7340 = vpop.f32.mrf.mxu0
      %v7341 = vadd.f32 0.0, %v7340
      %v7342 = vpop.f32.mrf.mxu0
      %v7343 = vadd.f32 0.0, %v7342
      %7344 = vmatmul.bf16.gmra.mxu0 %v7223
      %v7345 = vpop.f32.mrf.mxu0
      %v7346 = vadd.f32 0.0, %v7345
      %v7347 = vpop.f32.mrf.mxu0
      %v7348 = vadd.f32 0.0, %v7347
      %7349 = vmatmul.bf16.gmra.mxu0 %v7224
      %v7350 = vpop.f32.mrf.mxu0
      %v7351 = vadd.f32 0.0, %v7350
      %v7352 = vpop.f32.mrf.mxu0
      %v7353 = vadd.f32 0.0, %v7352
      %7354 = vmatmul.bf16.gmra.mxu0 %v7225
      %v7355 = vpop.f32.mrf.mxu0
      %v7356 = vadd.f32 0.0, %v7355
      %v7357 = vpop.f32.mrf.mxu0
      %v7358 = vadd.f32 0.0, %v7357
      %7359 = vmatmul.bf16.gmra.mxu0 %v7226
      %v7360 = vpop.f32.mrf.mxu0
      %v7361 = vadd.f32 0.0, %v7360
      %v7362 = vpop.f32.mrf.mxu0
      %v7363 = vadd.f32 0.0, %v7362
      %7364 = vmatmul.bf16.gmra.mxu0 %v7227
      %v7365 = vpop.f32.mrf.mxu0
      %v7366 = vadd.f32 0.0, %v7365
      %v7367 = vpop.f32.mrf.mxu0
      %v7368 = vadd.f32 0.0, %v7367
      %7369 = vmatmul.bf16.gmra.mxu0 %v7228
      %v7370 = vpop.f32.mrf.mxu0
      %v7371 = vadd.f32 0.0, %v7370
      %v7372 = vpop.f32.mrf.mxu0
      %v7373 = vadd.f32 0.0, %v7372
      %7374 = vmatmul.bf16.gmra.mxu0 %v7229
      %v7375 = vpop.f32.mrf.mxu0
      %v7376 = vadd.f32 0.0, %v7375
      %v7377 = vpop.f32.mrf.mxu0
      %v7378 = vadd.f32 0.0, %v7377
      %7379 = vmatmul.bf16.gmra.mxu0 %v7230
      %v7380 = vpop.f32.mrf.mxu0
      %v7381 = vadd.f32 0.0, %v7380
      %v7382 = vpop.f32.mrf.mxu0
      %v7383 = vadd.f32 0.0, %v7382
      %7384 = vmatmul.bf16.gmra.mxu0 %v7231
      %v7385 = vpop.f32.mrf.mxu0
      %v7386 = vadd.f32 0.0, %v7385
      %v7387 = vpop.f32.mrf.mxu0
      %v7388 = vadd.f32 0.0, %v7387
      %7389 = vmatmul.bf16.gmra.mxu0 %v7232
      %v7390 = vpop.f32.mrf.mxu0
      %v7391 = vadd.f32 0.0, %v7390
      %v7392 = vpop.f32.mrf.mxu0
      %v7393 = vadd.f32 0.0, %v7392
      %7394 = vmatmul.bf16.gmra.mxu0 %v7233
      %v7395 = vpop.f32.mrf.mxu0
      %v7396 = vadd.f32 0.0, %v7395
      %v7397 = vpop.f32.mrf.mxu0
      %v7398 = vadd.f32 0.0, %v7397
      %7399 = vmatmul.bf16.gmra.mxu0 %v7234
      %v7400 = vpop.f32.mrf.mxu0
      %v7401 = vadd.f32 0.0, %v7400
      %v7402 = vpop.f32.mrf.mxu0
      %v7403 = vadd.f32 0.0, %v7402
      %7404 = vmatmul.bf16.gmra.mxu0 %v7235
      %v7405 = vpop.f32.mrf.mxu0
      %v7406 = vadd.f32 0.0, %v7405
      %v7407 = vpop.f32.mrf.mxu0
      %v7408 = vadd.f32 0.0, %v7407
      %7409 = vmatmul.bf16.gmra.mxu0 %v7236
      %v7410 = vpop.f32.mrf.mxu0
      %v7411 = vadd.f32 0.0, %v7410
      %v7412 = vpop.f32.mrf.mxu0
      %v7413 = vadd.f32 0.0, %v7412
      %7414 = vmatmul.bf16.gmra.mxu0 %v7237
      %v7415 = vpop.f32.mrf.mxu0
      %v7416 = vadd.f32 0.0, %v7415
      %v7417 = vpop.f32.mrf.mxu0
      %v7418 = vadd.f32 0.0, %v7417
      %7419 = vmatmul.bf16.gmra.mxu0 %v7238
      %v7420 = vpop.f32.mrf.mxu0
      %v7421 = vadd.f32 0.0, %v7420
      %v7422 = vpop.f32.mrf.mxu0
      %v7423 = vadd.f32 0.0, %v7422
      %7424 = vmatmul.bf16.gmra.mxu0 %v7239
      %v7425 = vpop.f32.mrf.mxu0
      %v7426 = vadd.f32 0.0, %v7425
      %v7427 = vpop.f32.mrf.mxu0
      %v7428 = vadd.f32 0.0, %v7427
      %7429 = vmatmul.bf16.gmra.mxu0 %v7240
      %v7430 = vpop.f32.mrf.mxu0
      %v7431 = vadd.f32 0.0, %v7430
      %v7432 = vpop.f32.mrf.mxu0
      %v7433 = vadd.f32 0.0, %v7432
      %7434 = vdwg.mxu0
      %v7451 = vunpack.c.l.b16 %v7153
      %v7452 = vunpack.c.l.b16 %v7154
      %v7453 = vunpack.c.l.b16 %v7155
      %v7454 = vunpack.c.l.b16 %v7156
      %v7455 = vunpack.c.l.b16 %v7157
      %v7456 = vunpack.c.l.b16 %v7158
      %v7457 = vunpack.c.l.b16 %v7159
      %v7458 = vunpack.c.l.b16 %v7160
      %v7459 = vunpack.c.l.b16 %v7161
      %v7460 = vunpack.c.l.b16 %v7162
      %v7461 = vunpack.c.l.b16 %v7163
      %v7462 = vunpack.c.l.b16 %v7164
      %v7463 = vunpack.c.l.b16 %v7165
      %v7464 = vunpack.c.l.b16 %v7166
      %v7465 = vunpack.c.l.b16 %v7167
      %v7466 = vunpack.c.l.b16 %v7168
      %v7467 = vpack.c.b16 %v7452, %v7451
      %v7468 = vpack.c.b16 %v7454, %v7453
      %v7469 = vpack.c.b16 %v7456, %v7455
      %v7470 = vpack.c.b16 %v7458, %v7457
      %v7471 = vpack.c.b16 %v7460, %v7459
      %v7472 = vpack.c.b16 %v7462, %v7461
      %v7473 = vpack.c.b16 %v7464, %v7463
      %v7474 = vpack.c.b16 %v7466, %v7465
      %7483 = vmatpush.bf16.msra.mxu0 %v7474
      %7484 = vmatpush.bf16.msra.mxu0 %v7473
      %7485 = vmatpush.bf16.msra.mxu0 %v7472
      %7486 = vmatpush.bf16.msra.mxu0 %v7471
      %7487 = vmatpush.bf16.msra.mxu0 %v7470
      %7488 = vmatpush.bf16.msra.mxu0 %v7469
      %7489 = vmatpush.bf16.msra.mxu0 %v7468
      %7490 = vmatpush.bf16.msra.mxu0 %v7467
      %7491 = vmatmul.bf16.gmra.mxu0 %v7129
      %v7492 = vpop.f32.mrf.mxu0
      %v7493 = vadd.f32 %v7316, %v7492
      %v7494 = vpop.f32.mrf.mxu0
      %v7495 = vadd.f32 %v7318, %v7494
      %7496 = vmatmul.bf16.gmra.mxu0 %v7130
      %v7497 = vpop.f32.mrf.mxu0
      %v7498 = vadd.f32 %v7321, %v7497
      %v7499 = vpop.f32.mrf.mxu0
      %v7500 = vadd.f32 %v7323, %v7499
      %7501 = vmatmul.bf16.gmra.mxu0 %v7131
      %v7502 = vpop.f32.mrf.mxu0
      %v7503 = vadd.f32 %v7326, %v7502
      %v7504 = vpop.f32.mrf.mxu0
      %v7505 = vadd.f32 %v7328, %v7504
      %7506 = vmatmul.bf16.gmra.mxu0 %v7132
      %v7507 = vpop.f32.mrf.mxu0
      %v7508 = vadd.f32 %v7331, %v7507
      %v7509 = vpop.f32.mrf.mxu0
      %v7510 = vadd.f32 %v7333, %v7509
      %7511 = vmatmul.bf16.gmra.mxu0 %v7133
      %v7512 = vpop.f32.mrf.mxu0
      %v7513 = vadd.f32 %v7336, %v7512
      %v7514 = vpop.f32.mrf.mxu0
      %v7515 = vadd.f32 %v7338, %v7514
      %7516 = vmatmul.bf16.gmra.mxu0 %v7134
      %v7517 = vpop.f32.mrf.mxu0
      %v7518 = vadd.f32 %v7341, %v7517
      %v7519 = vpop.f32.mrf.mxu0
      %v7520 = vadd.f32 %v7343, %v7519
      %7521 = vmatmul.bf16.gmra.mxu0 %v7135
      %v7522 = vpop.f32.mrf.mxu0
      %v7523 = vadd.f32 %v7346, %v7522
      %v7524 = vpop.f32.mrf.mxu0
      %v7525 = vadd.f32 %v7348, %v7524
      %7526 = vmatmul.bf16.gmra.mxu0 %v7136
      %v7527 = vpop.f32.mrf.mxu0
      %v7528 = vadd.f32 %v7351, %v7527
      %v7529 = vpop.f32.mrf.mxu0
      %v7530 = vadd.f32 %v7353, %v7529
      %7531 = vmatmul.bf16.gmra.mxu0 %v7137
      %v7532 = vpop.f32.mrf.mxu0
      %v7533 = vadd.f32 %v7356, %v7532
      %v7534 = vpop.f32.mrf.mxu0
      %v7535 = vadd.f32 %v7358, %v7534
      %7536 = vmatmul.bf16.gmra.mxu0 %v7138
      %v7537 = vpop.f32.mrf.mxu0
      %v7538 = vadd.f32 %v7361, %v7537
      %v7539 = vpop.f32.mrf.mxu0
      %v7540 = vadd.f32 %v7363, %v7539
      %7541 = vmatmul.bf16.gmra.mxu0 %v7139
      %v7542 = vpop.f32.mrf.mxu0
      %v7543 = vadd.f32 %v7366, %v7542
      %v7544 = vpop.f32.mrf.mxu0
      %v7545 = vadd.f32 %v7368, %v7544
      %7546 = vmatmul.bf16.gmra.mxu0 %v7140
      %v7547 = vpop.f32.mrf.mxu0
      %v7548 = vadd.f32 %v7371, %v7547
      %v7549 = vpop.f32.mrf.mxu0
      %v7550 = vadd.f32 %v7373, %v7549
      %7551 = vmatmul.bf16.gmra.mxu0 %v7141
      %v7552 = vpop.f32.mrf.mxu0
      %v7553 = vadd.f32 %v7376, %v7552
      %v7554 = vpop.f32.mrf.mxu0
      %v7555 = vadd.f32 %v7378, %v7554
      %7556 = vmatmul.bf16.gmra.mxu0 %v7142
      %v7557 = vpop.f32.mrf.mxu0
      %v7558 = vadd.f32 %v7381, %v7557
      %v7559 = vpop.f32.mrf.mxu0
      %v7560 = vadd.f32 %v7383, %v7559
      %7561 = vmatmul.bf16.gmra.mxu0 %v7143
      %v7562 = vpop.f32.mrf.mxu0
      %v7563 = vadd.f32 %v7386, %v7562
      %v7564 = vpop.f32.mrf.mxu0
      %v7565 = vadd.f32 %v7388, %v7564
      %7566 = vmatmul.bf16.gmra.mxu0 %v7144
      %v7567 = vpop.f32.mrf.mxu0
      %v7568 = vadd.f32 %v7391, %v7567
      %v7569 = vpop.f32.mrf.mxu0
      %v7570 = vadd.f32 %v7393, %v7569
      %7571 = vmatmul.bf16.gmra.mxu0 %v7145
      %v7572 = vpop.f32.mrf.mxu0
      %v7573 = vadd.f32 %v7396, %v7572
      %v7574 = vpop.f32.mrf.mxu0
      %v7575 = vadd.f32 %v7398, %v7574
      %7576 = vmatmul.bf16.gmra.mxu0 %v7146
      %v7577 = vpop.f32.mrf.mxu0
      %v7578 = vadd.f32 %v7401, %v7577
      %v7579 = vpop.f32.mrf.mxu0
      %v7580 = vadd.f32 %v7403, %v7579
      %7581 = vmatmul.bf16.gmra.mxu0 %v7147
      %v7582 = vpop.f32.mrf.mxu0
      %v7583 = vadd.f32 %v7406, %v7582
      %v7584 = vpop.f32.mrf.mxu0
      %v7585 = vadd.f32 %v7408, %v7584
      %7586 = vmatmul.bf16.gmra.mxu0 %v7148
      %v7587 = vpop.f32.mrf.mxu0
      %v7588 = vadd.f32 %v7411, %v7587
      %v7589 = vpop.f32.mrf.mxu0
      %v7590 = vadd.f32 %v7413, %v7589
      %7591 = vmatmul.bf16.gmra.mxu0 %v7149
      %v7592 = vpop.f32.mrf.mxu0
      %v7593 = vadd.f32 %v7416, %v7592
      %v7594 = vpop.f32.mrf.mxu0
      %v7595 = vadd.f32 %v7418, %v7594
      %7596 = vmatmul.bf16.gmra.mxu0 %v7150
      %v7597 = vpop.f32.mrf.mxu0
      %v7598 = vadd.f32 %v7421, %v7597
      %v7599 = vpop.f32.mrf.mxu0
      %v7600 = vadd.f32 %v7423, %v7599
      %7601 = vmatmul.bf16.gmra.mxu0 %v7151
      %v7602 = vpop.f32.mrf.mxu0
      %v7603 = vadd.f32 %v7426, %v7602
      %v7604 = vpop.f32.mrf.mxu0
      %v7605 = vadd.f32 %v7428, %v7604
      %7606 = vmatmul.bf16.gmra.mxu0 %v7152
      %v7607 = vpop.f32.mrf.mxu0
      %v7608 = vadd.f32 %v7431, %v7607
      %v7609 = vpop.f32.mrf.mxu0
      %v7610 = vadd.f32 %v7433, %v7609
      %7611 = vdwg.mxu0
      %v7612 = vld [vmem:[#allocation2 + $0x21] sm:$0xff]
      %v7613 = vld [vmem:[#allocation2 + $0x29] sm:$0xff]
      %v7614 = vld [vmem:[#allocation2 + $0x31] sm:$0xff]
      %v7615 = vld [vmem:[#allocation2 + $0x39] sm:$0xff]
      %v7616 = vld [vmem:[#allocation2 + $0x41] sm:$0xff]
      %v7617 = vld [vmem:[#allocation2 + $0x49] sm:$0xff]
      %v7618 = vld [vmem:[#allocation2 + $0x51] sm:$0xff]
      %v7619 = vld [vmem:[#allocation2 + $0x59] sm:$0xff]
      %v7620 = vld [vmem:[#allocation2 + $0x61] sm:$0xff]
      %v7621 = vld [vmem:[#allocation2 + $0x69] sm:$0xff]
      %v7622 = vld [vmem:[#allocation2 + $0x71] sm:$0xff]
      %v7623 = vld [vmem:[#allocation2 + $0x79] sm:$0xff]
      %v7624 = vld [vmem:[#allocation2 + $0x81] sm:$0xff]
      %v7625 = vld [vmem:[#allocation2 + $0x89] sm:$0xff]
      %v7626 = vld [vmem:[#allocation2 + $0x91] sm:$0xff]
      %v7627 = vld [vmem:[#allocation2 + $0x99] sm:$0xff]
      %v7628 = vld [vmem:[#allocation2 + $0xa1] sm:$0xff]
      %v7629 = vld [vmem:[#allocation2 + $0xa9] sm:$0xff]
      %v7630 = vld [vmem:[#allocation2 + $0xb1] sm:$0xff]
      %v7631 = vld [vmem:[#allocation2 + $0xb9] sm:$0xff]
      %v7632 = vld [vmem:[#allocation2 + $0xc1] sm:$0xff]
      %v7633 = vld [vmem:[#allocation2 + $0xc9] sm:$0xff]
      %v7634 = vld [vmem:[#allocation2 + $0xd1] sm:$0xff]
      %v7635 = vld [vmem:[#allocation2 + $0xd9] sm:$0xff]
      %v7636 = vld [vmem:[#allocation2 + $0xe1] sm:$0xff]
      %v7637 = vld [vmem:[#allocation2 + $0xe9] sm:$0xff]
      %v7638 = vld [vmem:[#allocation2 + $0xf1] sm:$0xff]
      %v7639 = vld [vmem:[#allocation2 + $0xf9] sm:$0xff]
      %v7640 = vld [vmem:[#allocation2 + $0x101] sm:$0xff]
      %v7641 = vld [vmem:[#allocation2 + $0x109] sm:$0xff]
      %v7642 = vld [vmem:[#allocation2 + $0x111] sm:$0xff]
      %v7643 = vld [vmem:[#allocation2 + $0x119] sm:$0xff]
      %v7644 = vld [vmem:[#allocation2 + $0x121] sm:$0xff]
      %v7645 = vld [vmem:[#allocation2 + $0x129] sm:$0xff]
      %v7646 = vld [vmem:[#allocation2 + $0x131] sm:$0xff]
      %v7647 = vld [vmem:[#allocation2 + $0x139] sm:$0xff]
      %v7648 = vld [vmem:[#allocation2 + $0x141] sm:$0xff]
      %v7649 = vld [vmem:[#allocation2 + $0x149] sm:$0xff]
      %v7650 = vld [vmem:[#allocation2 + $0x151] sm:$0xff]
      %v7651 = vld [vmem:[#allocation2 + $0x159] sm:$0xff]
      %v7652 = vld [vmem:[#allocation2 + $0x161] sm:$0xff]
      %v7653 = vld [vmem:[#allocation2 + $0x169] sm:$0xff]
      %v7654 = vld [vmem:[#allocation2 + $0x171] sm:$0xff]
      %v7655 = vld [vmem:[#allocation2 + $0x179] sm:$0xff]
      %v7656 = vld [vmem:[#allocation2 + $0x181] sm:$0xff]
      %v7657 = vld [vmem:[#allocation2 + $0x189] sm:$0xff]
      %v7658 = vld [vmem:[#allocation2 + $0x191] sm:$0xff]
      %v7659 = vld [vmem:[#allocation2 + $0x199] sm:$0xff]
      %v7660 = vpack.c.bf16 %v7613, %v7612
      %v7661 = vpack.c.bf16 %v7615, %v7614
      %v7662 = vpack.c.bf16 %v7617, %v7616
      %v7663 = vpack.c.bf16 %v7619, %v7618
      %v7664 = vpack.c.bf16 %v7621, %v7620
      %v7665 = vpack.c.bf16 %v7623, %v7622
      %v7666 = vpack.c.bf16 %v7625, %v7624
      %v7667 = vpack.c.bf16 %v7627, %v7626
      %v7668 = vpack.c.bf16 %v7629, %v7628
      %v7669 = vpack.c.bf16 %v7631, %v7630
      %v7670 = vpack.c.bf16 %v7633, %v7632
      %v7671 = vpack.c.bf16 %v7635, %v7634
      %v7672 = vpack.c.bf16 %v7637, %v7636
      %v7673 = vpack.c.bf16 %v7639, %v7638
      %v7674 = vpack.c.bf16 %v7641, %v7640
      %v7675 = vpack.c.bf16 %v7643, %v7642
      %v7676 = vpack.c.bf16 %v7645, %v7644
      %v7677 = vpack.c.bf16 %v7647, %v7646
      %v7678 = vpack.c.bf16 %v7649, %v7648
      %v7679 = vpack.c.bf16 %v7651, %v7650
      %v7680 = vpack.c.bf16 %v7653, %v7652
      %v7681 = vpack.c.bf16 %v7655, %v7654
      %v7682 = vpack.c.bf16 %v7657, %v7656
      %v7683 = vpack.c.bf16 %v7659, %v7658
      %s7684 = scalar_lea.vmem %s5, 128
      %v7685 = vld [vmem:[%s7684] sm:$0xf]
      %v7686 = vld [vmem:[%s7684 + $0x4] sm:$0xf]
      %v7687 = vld [vmem:[%s7684 + $0x8] sm:$0xf]
      %v7688 = vld [vmem:[%s7684 + $0xc] sm:$0xf]
      %v7689 = vld [vmem:[%s7684 + $0x10] sm:$0xf]
      %v7690 = vld [vmem:[%s7684 + $0x14] sm:$0xf]
      %v7691 = vld [vmem:[%s7684 + $0x18] sm:$0xf]
      %v7692 = vld [vmem:[%s7684 + $0x1c] sm:$0xf]
      %v7693 = vld [vmem:[%s7684 + $0x20] sm:$0xf]
      %v7694 = vld [vmem:[%s7684 + $0x24] sm:$0xf]
      %v7695 = vld [vmem:[%s7684 + $0x28] sm:$0xf]
      %v7696 = vld [vmem:[%s7684 + $0x2c] sm:$0xf]
      %v7697 = vld [vmem:[%s7684 + $0x30] sm:$0xf]
      %v7698 = vld [vmem:[%s7684 + $0x34] sm:$0xf]
      %v7699 = vld [vmem:[%s7684 + $0x38] sm:$0xf]
      %v7700 = vld [vmem:[%s7684 + $0x3c] sm:$0xf]
      %v7717 = vunpack.c.l.b16 %v7685
      %v7718 = vunpack.c.l.b16 %v7686
      %v7719 = vunpack.c.l.b16 %v7687
      %v7720 = vunpack.c.l.b16 %v7688
      %v7721 = vunpack.c.l.b16 %v7689
      %v7722 = vunpack.c.l.b16 %v7690
      %v7723 = vunpack.c.l.b16 %v7691
      %v7724 = vunpack.c.l.b16 %v7692
      %v7725 = vunpack.c.l.b16 %v7693
      %v7726 = vunpack.c.l.b16 %v7694
      %v7727 = vunpack.c.l.b16 %v7695
      %v7728 = vunpack.c.l.b16 %v7696
      %v7729 = vunpack.c.l.b16 %v7697
      %v7730 = vunpack.c.l.b16 %v7698
      %v7731 = vunpack.c.l.b16 %v7699
      %v7732 = vunpack.c.l.b16 %v7700
      %v7733 = vpack.c.b16 %v7718, %v7717
      %v7734 = vpack.c.b16 %v7720, %v7719
      %v7735 = vpack.c.b16 %v7722, %v7721
      %v7736 = vpack.c.b16 %v7724, %v7723
      %v7737 = vpack.c.b16 %v7726, %v7725
      %v7738 = vpack.c.b16 %v7728, %v7727
      %v7739 = vpack.c.b16 %v7730, %v7729
      %v7740 = vpack.c.b16 %v7732, %v7731
      %7749 = vmatpush.bf16.msra.mxu0 %v7740
      %7750 = vmatpush.bf16.msra.mxu0 %v7739
      %7751 = vmatpush.bf16.msra.mxu0 %v7738
      %7752 = vmatpush.bf16.msra.mxu0 %v7737
      %7753 = vmatpush.bf16.msra.mxu0 %v7736
      %7754 = vmatpush.bf16.msra.mxu0 %v7735
      %7755 = vmatpush.bf16.msra.mxu0 %v7734
      %7756 = vmatpush.bf16.msra.mxu0 %v7733
      %7757 = vmatmul.bf16.gmra.mxu0 %v7660
      %v7758 = vpop.f32.mrf.mxu0
      %v7759 = vadd.f32 0.0, %v7758
      %v7760 = vpop.f32.mrf.mxu0
      %v7761 = vadd.f32 0.0, %v7760
      %7762 = vmatmul.bf16.gmra.mxu0 %v7661
      %v7763 = vpop.f32.mrf.mxu0
      %v7764 = vadd.f32 0.0, %v7763
      %v7765 = vpop.f32.mrf.mxu0
      %v7766 = vadd.f32 0.0, %v7765
      %7767 = vmatmul.bf16.gmra.mxu0 %v7662
      %v7768 = vpop.f32.mrf.mxu0
      %v7769 = vadd.f32 0.0, %v7768
      %v7770 = vpop.f32.mrf.mxu0
      %v7771 = vadd.f32 0.0, %v7770
      %7772 = vmatmul.bf16.gmra.mxu0 %v7663
      %v7773 = vpop.f32.mrf.mxu0
      %v7774 = vadd.f32 0.0, %v7773
      %v7775 = vpop.f32.mrf.mxu0
      %v7776 = vadd.f32 0.0, %v7775
      %7777 = vmatmul.bf16.gmra.mxu0 %v7664
      %v7778 = vpop.f32.mrf.mxu0
      %v7779 = vadd.f32 0.0, %v7778
      %v7780 = vpop.f32.mrf.mxu0
      %v7781 = vadd.f32 0.0, %v7780
      %7782 = vmatmul.bf16.gmra.mxu0 %v7665
      %v7783 = vpop.f32.mrf.mxu0
      %v7784 = vadd.f32 0.0, %v7783
      %v7785 = vpop.f32.mrf.mxu0
      %v7786 = vadd.f32 0.0, %v7785
      %7787 = vmatmul.bf16.gmra.mxu0 %v7666
      %v7788 = vpop.f32.mrf.mxu0
      %v7789 = vadd.f32 0.0, %v7788
      %v7790 = vpop.f32.mrf.mxu0
      %v7791 = vadd.f32 0.0, %v7790
      %7792 = vmatmul.bf16.gmra.mxu0 %v7667
      %v7793 = vpop.f32.mrf.mxu0
      %v7794 = vadd.f32 0.0, %v7793
      %v7795 = vpop.f32.mrf.mxu0
      %v7796 = vadd.f32 0.0, %v7795
      %7797 = vmatmul.bf16.gmra.mxu0 %v7668
      %v7798 = vpop.f32.mrf.mxu0
      %v7799 = vadd.f32 0.0, %v7798
      %v7800 = vpop.f32.mrf.mxu0
      %v7801 = vadd.f32 0.0, %v7800
      %7802 = vmatmul.bf16.gmra.mxu0 %v7669
      %v7803 = vpop.f32.mrf.mxu0
      %v7804 = vadd.f32 0.0, %v7803
      %v7805 = vpop.f32.mrf.mxu0
      %v7806 = vadd.f32 0.0, %v7805
      %7807 = vmatmul.bf16.gmra.mxu0 %v7670
      %v7808 = vpop.f32.mrf.mxu0
      %v7809 = vadd.f32 0.0, %v7808
      %v7810 = vpop.f32.mrf.mxu0
      %v7811 = vadd.f32 0.0, %v7810
      %7812 = vmatmul.bf16.gmra.mxu0 %v7671
      %v7813 = vpop.f32.mrf.mxu0
      %v7814 = vadd.f32 0.0, %v7813
      %v7815 = vpop.f32.mrf.mxu0
      %v7816 = vadd.f32 0.0, %v7815
      %7817 = vmatmul.bf16.gmra.mxu0 %v7672
      %v7818 = vpop.f32.mrf.mxu0
      %v7819 = vadd.f32 0.0, %v7818
      %v7820 = vpop.f32.mrf.mxu0
      %v7821 = vadd.f32 0.0, %v7820
      %7822 = vmatmul.bf16.gmra.mxu0 %v7673
      %v7823 = vpop.f32.mrf.mxu0
      %v7824 = vadd.f32 0.0, %v7823
      %v7825 = vpop.f32.mrf.mxu0
      %v7826 = vadd.f32 0.0, %v7825
      %7827 = vmatmul.bf16.gmra.mxu0 %v7674
      %v7828 = vpop.f32.mrf.mxu0
      %v7829 = vadd.f32 0.0, %v7828
      %v7830 = vpop.f32.mrf.mxu0
      %v7831 = vadd.f32 0.0, %v7830
      %7832 = vmatmul.bf16.gmra.mxu0 %v7675
      %v7833 = vpop.f32.mrf.mxu0
      %v7834 = vadd.f32 0.0, %v7833
      %v7835 = vpop.f32.mrf.mxu0
      %v7836 = vadd.f32 0.0, %v7835
      %7837 = vmatmul.bf16.gmra.mxu0 %v7676
      %v7838 = vpop.f32.mrf.mxu0
      %v7839 = vadd.f32 0.0, %v7838
      %v7840 = vpop.f32.mrf.mxu0
      %v7841 = vadd.f32 0.0, %v7840
      %7842 = vmatmul.bf16.gmra.mxu0 %v7677
      %v7843 = vpop.f32.mrf.mxu0
      %v7844 = vadd.f32 0.0, %v7843
      %v7845 = vpop.f32.mrf.mxu0
      %v7846 = vadd.f32 0.0, %v7845
      %7847 = vmatmul.bf16.gmra.mxu0 %v7678
      %v7848 = vpop.f32.mrf.mxu0
      %v7849 = vadd.f32 0.0, %v7848
      %v7850 = vpop.f32.mrf.mxu0
      %v7851 = vadd.f32 0.0, %v7850
      %7852 = vmatmul.bf16.gmra.mxu0 %v7679
      %v7853 = vpop.f32.mrf.mxu0
      %v7854 = vadd.f32 0.0, %v7853
      %v7855 = vpop.f32.mrf.mxu0
      %v7856 = vadd.f32 0.0, %v7855
      %7857 = vmatmul.bf16.gmra.mxu0 %v7680
      %v7858 = vpop.f32.mrf.mxu0
      %v7859 = vadd.f32 0.0, %v7858
      %v7860 = vpop.f32.mrf.mxu0
      %v7861 = vadd.f32 0.0, %v7860
      %7862 = vmatmul.bf16.gmra.mxu0 %v7681
      %v7863 = vpop.f32.mrf.mxu0
      %v7864 = vadd.f32 0.0, %v7863
      %v7865 = vpop.f32.mrf.mxu0
      %v7866 = vadd.f32 0.0, %v7865
      %7867 = vmatmul.bf16.gmra.mxu0 %v7682
      %v7868 = vpop.f32.mrf.mxu0
      %v7869 = vadd.f32 0.0, %v7868
      %v7870 = vpop.f32.mrf.mxu0
      %v7871 = vadd.f32 0.0, %v7870
      %7872 = vmatmul.bf16.gmra.mxu0 %v7683
      %v7873 = vpop.f32.mrf.mxu0
      %v7874 = vadd.f32 0.0, %v7873
      %v7875 = vpop.f32.mrf.mxu0
      %v7876 = vadd.f32 0.0, %v7875
      %7877 = vdwg.mxu0
      %v7878 = vadd.f32 %v7493, %v7759
      %v7879 = vadd.f32 %v7495, %v7761
      %v7880 = vadd.f32 %v7498, %v7764
      %v7881 = vadd.f32 %v7500, %v7766
      %v7882 = vadd.f32 %v7503, %v7769
      %v7883 = vadd.f32 %v7505, %v7771
      %v7884 = vadd.f32 %v7508, %v7774
      %v7885 = vadd.f32 %v7510, %v7776
      %v7886 = vadd.f32 %v7513, %v7779
      %v7887 = vadd.f32 %v7515, %v7781
      %v7888 = vadd.f32 %v7518, %v7784
      %v7889 = vadd.f32 %v7520, %v7786
      %v7890 = vadd.f32 %v7523, %v7789
      %v7891 = vadd.f32 %v7525, %v7791
      %v7892 = vadd.f32 %v7528, %v7794
      %v7893 = vadd.f32 %v7530, %v7796
      %v7894 = vadd.f32 %v7533, %v7799
      %v7895 = vadd.f32 %v7535, %v7801
      %v7896 = vadd.f32 %v7538, %v7804
      %v7897 = vadd.f32 %v7540, %v7806
      %v7898 = vadd.f32 %v7543, %v7809
      %v7899 = vadd.f32 %v7545, %v7811
      %v7900 = vadd.f32 %v7548, %v7814
      %v7901 = vadd.f32 %v7550, %v7816
      %v7902 = vadd.f32 %v7553, %v7819
      %v7903 = vadd.f32 %v7555, %v7821
      %v7904 = vadd.f32 %v7558, %v7824
      %v7905 = vadd.f32 %v7560, %v7826
      %v7906 = vadd.f32 %v7563, %v7829
      %v7907 = vadd.f32 %v7565, %v7831
      %v7908 = vadd.f32 %v7568, %v7834
      %v7909 = vadd.f32 %v7570, %v7836
      %v7910 = vadd.f32 %v7573, %v7839
      %v7911 = vadd.f32 %v7575, %v7841
      %v7912 = vadd.f32 %v7578, %v7844
      %v7913 = vadd.f32 %v7580, %v7846
      %v7914 = vadd.f32 %v7583, %v7849
      %v7915 = vadd.f32 %v7585, %v7851
      %v7916 = vadd.f32 %v7588, %v7854
      %v7917 = vadd.f32 %v7590, %v7856
      %v7918 = vadd.f32 %v7593, %v7859
      %v7919 = vadd.f32 %v7595, %v7861
      %v7920 = vadd.f32 %v7598, %v7864
      %v7921 = vadd.f32 %v7600, %v7866
      %v7922 = vadd.f32 %v7603, %v7869
      %v7923 = vadd.f32 %v7605, %v7871
      %v7924 = vadd.f32 %v7608, %v7874
      %v7925 = vadd.f32 %v7610, %v7876
      %v7926 = vld [vmem:[#allocation2 + $0x37] sm:$0xff]
      %v7927 = vld [vmem:[#allocation2 + $0x3f] sm:$0xff]
      %v7928 = vld [vmem:[#allocation2 + $0x47] sm:$0xff]
      %v7929 = vld [vmem:[#allocation2 + $0x4f] sm:$0xff]
      %v7930 = vld [vmem:[#allocation2 + $0x57] sm:$0xff]
      %v7931 = vld [vmem:[#allocation2 + $0x5f] sm:$0xff]
      %v7932 = vld [vmem:[#allocation2 + $0x67] sm:$0xff]
      %v7933 = vld [vmem:[#allocation2 + $0x6f] sm:$0xff]
      %v7934 = vld [vmem:[#allocation2 + $0x77] sm:$0xff]
      %v7935 = vld [vmem:[#allocation2 + $0x7f] sm:$0xff]
      %v7936 = vld [vmem:[#allocation2 + $0x87] sm:$0xff]
      %v7937 = vld [vmem:[#allocation2 + $0x8f] sm:$0xff]
      %v7938 = vld [vmem:[#allocation2 + $0x97] sm:$0xff]
      %v7939 = vld [vmem:[#allocation2 + $0x9f] sm:$0xff]
      %v7940 = vld [vmem:[#allocation2 + $0xa7] sm:$0xff]
      %v7941 = vld [vmem:[#allocation2 + $0xaf] sm:$0xff]
      %v7942 = vld [vmem:[#allocation2 + $0xb7] sm:$0xff]
      %v7943 = vld [vmem:[#allocation2 + $0xbf] sm:$0xff]
      %v7944 = vld [vmem:[#allocation2 + $0xc7] sm:$0xff]
      %v7945 = vld [vmem:[#allocation2 + $0xcf] sm:$0xff]
      %v7946 = vld [vmem:[#allocation2 + $0xd7] sm:$0xff]
      %v7947 = vld [vmem:[#allocation2 + $0xdf] sm:$0xff]
      %v7948 = vld [vmem:[#allocation2 + $0xe7] sm:$0xff]
      %v7949 = vld [vmem:[#allocation2 + $0xef] sm:$0xff]
      %v7950 = vld [vmem:[#allocation2 + $0xf7] sm:$0xff]
      %v7951 = vld [vmem:[#allocation2 + $0xff] sm:$0xff]
      %v7952 = vld [vmem:[#allocation2 + $0x107] sm:$0xff]
      %v7953 = vld [vmem:[#allocation2 + $0x10f] sm:$0xff]
      %v7954 = vld [vmem:[#allocation2 + $0x117] sm:$0xff]
      %v7955 = vld [vmem:[#allocation2 + $0x11f] sm:$0xff]
      %v7956 = vld [vmem:[#allocation2 + $0x127] sm:$0xff]
      %v7957 = vld [vmem:[#allocation2 + $0x12f] sm:$0xff]
      %v7958 = vld [vmem:[#allocation2 + $0x137] sm:$0xff]
      %v7959 = vld [vmem:[#allocation2 + $0x13f] sm:$0xff]
      %v7960 = vld [vmem:[#allocation2 + $0x147] sm:$0xff]
      %v7961 = vld [vmem:[#allocation2 + $0x14f] sm:$0xff]
      %v7962 = vld [vmem:[#allocation2 + $0x157] sm:$0xff]
      %v7963 = vld [vmem:[#allocation2 + $0x15f] sm:$0xff]
      %v7964 = vld [vmem:[#allocation2 + $0x167] sm:$0xff]
      %v7965 = vld [vmem:[#allocation2 + $0x16f] sm:$0xff]
      %v7966 = vld [vmem:[#allocation2 + $0x177] sm:$0xff]
      %v7967 = vld [vmem:[#allocation2 + $0x17f] sm:$0xff]
      %v7968 = vld [vmem:[#allocation2 + $0x187] sm:$0xff]
      %v7969 = vld [vmem:[#allocation2 + $0x18f] sm:$0xff]
      %v7970 = vld [vmem:[#allocation2 + $0x197] sm:$0xff]
      %v7971 = vld [vmem:[#allocation2 + $0x19f] sm:$0xff]
      %v7972 = vld [vmem:[#allocation2 + $0x1a7] sm:$0xff]
      %v7973 = vld [vmem:[#allocation2 + $0x1af] sm:$0xff]
      %v7974 = vpack.c.bf16 %v7927, %v7926
      %v7975 = vpack.c.bf16 %v7929, %v7928
      %v7976 = vpack.c.bf16 %v7931, %v7930
      %v7977 = vpack.c.bf16 %v7933, %v7932
      %v7978 = vpack.c.bf16 %v7935, %v7934
      %v7979 = vpack.c.bf16 %v7937, %v7936
      %v7980 = vpack.c.bf16 %v7939, %v7938
      %v7981 = vpack.c.bf16 %v7941, %v7940
      %v7982 = vpack.c.bf16 %v7943, %v7942
      %v7983 = vpack.c.bf16 %v7945, %v7944
      %v7984 = vpack.c.bf16 %v7947, %v7946
      %v7985 = vpack.c.bf16 %v7949, %v7948
      %v7986 = vpack.c.bf16 %v7951, %v7950
      %v7987 = vpack.c.bf16 %v7953, %v7952
      %v7988 = vpack.c.bf16 %v7955, %v7954
      %v7989 = vpack.c.bf16 %v7957, %v7956
      %v7990 = vpack.c.bf16 %v7959, %v7958
      %v7991 = vpack.c.bf16 %v7961, %v7960
      %v7992 = vpack.c.bf16 %v7963, %v7962
      %v7993 = vpack.c.bf16 %v7965, %v7964
      %v7994 = vpack.c.bf16 %v7967, %v7966
      %v7995 = vpack.c.bf16 %v7969, %v7968
      %v7996 = vpack.c.bf16 %v7971, %v7970
      %v7997 = vpack.c.bf16 %v7973, %v7972
      %s7998 = scalar_lea.vmem %s5, 192
      %v7999 = vld [vmem:[%s7998] sm:$0xf]
      %v8000 = vld [vmem:[%s7998 + $0x4] sm:$0xf]
      %v8001 = vld [vmem:[%s7998 + $0x8] sm:$0xf]
      %v8002 = vld [vmem:[%s7998 + $0xc] sm:$0xf]
      %v8003 = vld [vmem:[%s7998 + $0x10] sm:$0xf]
      %v8004 = vld [vmem:[%s7998 + $0x14] sm:$0xf]
      %v8005 = vld [vmem:[%s7998 + $0x18] sm:$0xf]
      %v8006 = vld [vmem:[%s7998 + $0x1c] sm:$0xf]
      %v8007 = vld [vmem:[%s7998 + $0x20] sm:$0xf]
      %v8008 = vld [vmem:[%s7998 + $0x24] sm:$0xf]
      %v8009 = vld [vmem:[%s7998 + $0x28] sm:$0xf]
      %v8010 = vld [vmem:[%s7998 + $0x2c] sm:$0xf]
      %v8011 = vld [vmem:[%s7998 + $0x30] sm:$0xf]
      %v8012 = vld [vmem:[%s7998 + $0x34] sm:$0xf]
      %v8013 = vld [vmem:[%s7998 + $0x38] sm:$0xf]
      %v8014 = vld [vmem:[%s7998 + $0x3c] sm:$0xf]
      %v8031 = vunpack.c.l.b16 %v7999
      %v8032 = vunpack.c.l.b16 %v8000
      %v8033 = vunpack.c.l.b16 %v8001
      %v8034 = vunpack.c.l.b16 %v8002
      %v8035 = vunpack.c.l.b16 %v8003
      %v8036 = vunpack.c.l.b16 %v8004
      %v8037 = vunpack.c.l.b16 %v8005
      %v8038 = vunpack.c.l.b16 %v8006
      %v8039 = vunpack.c.l.b16 %v8007
      %v8040 = vunpack.c.l.b16 %v8008
      %v8041 = vunpack.c.l.b16 %v8009
      %v8042 = vunpack.c.l.b16 %v8010
      %v8043 = vunpack.c.l.b16 %v8011
      %v8044 = vunpack.c.l.b16 %v8012
      %v8045 = vunpack.c.l.b16 %v8013
      %v8046 = vunpack.c.l.b16 %v8014
      %v8047 = vpack.c.b16 %v8032, %v8031
      %v8048 = vpack.c.b16 %v8034, %v8033
      %v8049 = vpack.c.b16 %v8036, %v8035
      %v8050 = vpack.c.b16 %v8038, %v8037
      %v8051 = vpack.c.b16 %v8040, %v8039
      %v8052 = vpack.c.b16 %v8042, %v8041
      %v8053 = vpack.c.b16 %v8044, %v8043
      %v8054 = vpack.c.b16 %v8046, %v8045
      %8063 = vmatpush.bf16.msra.mxu0 %v8054
      %8064 = vmatpush.bf16.msra.mxu0 %v8053
      %8065 = vmatpush.bf16.msra.mxu0 %v8052
      %8066 = vmatpush.bf16.msra.mxu0 %v8051
      %8067 = vmatpush.bf16.msra.mxu0 %v8050
      %8068 = vmatpush.bf16.msra.mxu0 %v8049
      %8069 = vmatpush.bf16.msra.mxu0 %v8048
      %8070 = vmatpush.bf16.msra.mxu0 %v8047
      %8071 = vmatmul.bf16.gmra.mxu0 %v7974
      %v8072 = vpop.f32.mrf.mxu0
      %v8073 = vadd.f32 0.0, %v8072
      %v8074 = vpop.f32.mrf.mxu0
      %v8075 = vadd.f32 0.0, %v8074
      %8076 = vmatmul.bf16.gmra.mxu0 %v7975
      %v8077 = vpop.f32.mrf.mxu0
      %v8078 = vadd.f32 0.0, %v8077
      %v8079 = vpop.f32.mrf.mxu0
      %v8080 = vadd.f32 0.0, %v8079
      %8081 = vmatmul.bf16.gmra.mxu0 %v7976
      %v8082 = vpop.f32.mrf.mxu0
      %v8083 = vadd.f32 0.0, %v8082
      %v8084 = vpop.f32.mrf.mxu0
      %v8085 = vadd.f32 0.0, %v8084
      %8086 = vmatmul.bf16.gmra.mxu0 %v7977
      %v8087 = vpop.f32.mrf.mxu0
      %v8088 = vadd.f32 0.0, %v8087
      %v8089 = vpop.f32.mrf.mxu0
      %v8090 = vadd.f32 0.0, %v8089
      %8091 = vmatmul.bf16.gmra.mxu0 %v7978
      %v8092 = vpop.f32.mrf.mxu0
      %v8093 = vadd.f32 0.0, %v8092
      %v8094 = vpop.f32.mrf.mxu0
      %v8095 = vadd.f32 0.0, %v8094
      %8096 = vmatmul.bf16.gmra.mxu0 %v7979
      %v8097 = vpop.f32.mrf.mxu0
      %v8098 = vadd.f32 0.0, %v8097
      %v8099 = vpop.f32.mrf.mxu0
      %v8100 = vadd.f32 0.0, %v8099
      %8101 = vmatmul.bf16.gmra.mxu0 %v7980
      %v8102 = vpop.f32.mrf.mxu0
      %v8103 = vadd.f32 0.0, %v8102
      %v8104 = vpop.f32.mrf.mxu0
      %v8105 = vadd.f32 0.0, %v8104
      %8106 = vmatmul.bf16.gmra.mxu0 %v7981
      %v8107 = vpop.f32.mrf.mxu0
      %v8108 = vadd.f32 0.0, %v8107
      %v8109 = vpop.f32.mrf.mxu0
      %v8110 = vadd.f32 0.0, %v8109
      %8111 = vmatmul.bf16.gmra.mxu0 %v7982
      %v8112 = vpop.f32.mrf.mxu0
      %v8113 = vadd.f32 0.0, %v8112
      %v8114 = vpop.f32.mrf.mxu0
      %v8115 = vadd.f32 0.0, %v8114
      %8116 = vmatmul.bf16.gmra.mxu0 %v7983
      %v8117 = vpop.f32.mrf.mxu0
      %v8118 = vadd.f32 0.0, %v8117
      %v8119 = vpop.f32.mrf.mxu0
      %v8120 = vadd.f32 0.0, %v8119
      %8121 = vmatmul.bf16.gmra.mxu0 %v7984
      %v8122 = vpop.f32.mrf.mxu0
      %v8123 = vadd.f32 0.0, %v8122
      %v8124 = vpop.f32.mrf.mxu0
      %v8125 = vadd.f32 0.0, %v8124
      %8126 = vmatmul.bf16.gmra.mxu0 %v7985
      %v8127 = vpop.f32.mrf.mxu0
      %v8128 = vadd.f32 0.0, %v8127
      %v8129 = vpop.f32.mrf.mxu0
      %v8130 = vadd.f32 0.0, %v8129
      %8131 = vmatmul.bf16.gmra.mxu0 %v7986
      %v8132 = vpop.f32.mrf.mxu0
      %v8133 = vadd.f32 0.0, %v8132
      %v8134 = vpop.f32.mrf.mxu0
      %v8135 = vadd.f32 0.0, %v8134
      %8136 = vmatmul.bf16.gmra.mxu0 %v7987
      %v8137 = vpop.f32.mrf.mxu0
      %v8138 = vadd.f32 0.0, %v8137
      %v8139 = vpop.f32.mrf.mxu0
      %v8140 = vadd.f32 0.0, %v8139
      %8141 = vmatmul.bf16.gmra.mxu0 %v7988
      %v8142 = vpop.f32.mrf.mxu0
      %v8143 = vadd.f32 0.0, %v8142
      %v8144 = vpop.f32.mrf.mxu0
      %v8145 = vadd.f32 0.0, %v8144
      %8146 = vmatmul.bf16.gmra.mxu0 %v7989
      %v8147 = vpop.f32.mrf.mxu0
      %v8148 = vadd.f32 0.0, %v8147
      %v8149 = vpop.f32.mrf.mxu0
      %v8150 = vadd.f32 0.0, %v8149
      %8151 = vmatmul.bf16.gmra.mxu0 %v7990
      %v8152 = vpop.f32.mrf.mxu0
      %v8153 = vadd.f32 0.0, %v8152
      %v8154 = vpop.f32.mrf.mxu0
      %v8155 = vadd.f32 0.0, %v8154
      %8156 = vmatmul.bf16.gmra.mxu0 %v7991
      %v8157 = vpop.f32.mrf.mxu0
      %v8158 = vadd.f32 0.0, %v8157
      %v8159 = vpop.f32.mrf.mxu0
      %v8160 = vadd.f32 0.0, %v8159
      %8161 = vmatmul.bf16.gmra.mxu0 %v7992
      %v8162 = vpop.f32.mrf.mxu0
      %v8163 = vadd.f32 0.0, %v8162
      %v8164 = vpop.f32.mrf.mxu0
      %v8165 = vadd.f32 0.0, %v8164
      %8166 = vmatmul.bf16.gmra.mxu0 %v7993
      %v8167 = vpop.f32.mrf.mxu0
      %v8168 = vadd.f32 0.0, %v8167
      %v8169 = vpop.f32.mrf.mxu0
      %v8170 = vadd.f32 0.0, %v8169
      %8171 = vmatmul.bf16.gmra.mxu0 %v7994
      %v8172 = vpop.f32.mrf.mxu0
      %v8173 = vadd.f32 0.0, %v8172
      %v8174 = vpop.f32.mrf.mxu0
      %v8175 = vadd.f32 0.0, %v8174
      %8176 = vmatmul.bf16.gmra.mxu0 %v7995
      %v8177 = vpop.f32.mrf.mxu0
      %v8178 = vadd.f32 0.0, %v8177
      %v8179 = vpop.f32.mrf.mxu0
      %v8180 = vadd.f32 0.0, %v8179
      %8181 = vmatmul.bf16.gmra.mxu0 %v7996
      %v8182 = vpop.f32.mrf.mxu0
      %v8183 = vadd.f32 0.0, %v8182
      %v8184 = vpop.f32.mrf.mxu0
      %v8185 = vadd.f32 0.0, %v8184
      %8186 = vmatmul.bf16.gmra.mxu0 %v7997
      %v8187 = vpop.f32.mrf.mxu0
      %v8188 = vadd.f32 0.0, %v8187
      %v8189 = vpop.f32.mrf.mxu0
      %v8190 = vadd.f32 0.0, %v8189
      %8191 = vdwg.mxu0
      %v8192 = vadd.f32 %v7878, %v8073
      %v8193 = vadd.f32 %v7879, %v8075
      %v8194 = vadd.f32 %v7880, %v8078
      %v8195 = vadd.f32 %v7881, %v8080
      %v8196 = vadd.f32 %v7882, %v8083
      %v8197 = vadd.f32 %v7883, %v8085
      %v8198 = vadd.f32 %v7884, %v8088
      %v8199 = vadd.f32 %v7885, %v8090
      %v8200 = vadd.f32 %v7886, %v8093
      %v8201 = vadd.f32 %v7887, %v8095
      %v8202 = vadd.f32 %v7888, %v8098
      %v8203 = vadd.f32 %v7889, %v8100
      %v8204 = vadd.f32 %v7890, %v8103
      %v8205 = vadd.f32 %v7891, %v8105
      %v8206 = vadd.f32 %v7892, %v8108
      %v8207 = vadd.f32 %v7893, %v8110
      %v8208 = vadd.f32 %v7894, %v8113
      %v8209 = vadd.f32 %v7895, %v8115
      %v8210 = vadd.f32 %v7896, %v8118
      %v8211 = vadd.f32 %v7897, %v8120
      %v8212 = vadd.f32 %v7898, %v8123
      %v8213 = vadd.f32 %v7899, %v8125
      %v8214 = vadd.f32 %v7900, %v8128
      %v8215 = vadd.f32 %v7901, %v8130
      %v8216 = vadd.f32 %v7902, %v8133
      %v8217 = vadd.f32 %v7903, %v8135
      %v8218 = vadd.f32 %v7904, %v8138
      %v8219 = vadd.f32 %v7905, %v8140
      %v8220 = vadd.f32 %v7906, %v8143
      %v8221 = vadd.f32 %v7907, %v8145
      %v8222 = vadd.f32 %v7908, %v8148
      %v8223 = vadd.f32 %v7909, %v8150
      %v8224 = vadd.f32 %v7910, %v8153
      %v8225 = vadd.f32 %v7911, %v8155
      %v8226 = vadd.f32 %v7912, %v8158
      %v8227 = vadd.f32 %v7913, %v8160
      %v8228 = vadd.f32 %v7914, %v8163
      %v8229 = vadd.f32 %v7915, %v8165
      %v8230 = vadd.f32 %v7916, %v8168
      %v8231 = vadd.f32 %v7917, %v8170
      %v8232 = vadd.f32 %v7918, %v8173
      %v8233 = vadd.f32 %v7919, %v8175
      %v8234 = vadd.f32 %v7920, %v8178
      %v8235 = vadd.f32 %v7921, %v8180
      %v8236 = vadd.f32 %v7922, %v8183
      %v8237 = vadd.f32 %v7923, %v8185
      %v8238 = vadd.f32 %v7924, %v8188
      %v8239 = vadd.f32 %v7925, %v8190
      %v8240 = vld [vmem:[#allocation2 + $0x38] sm:$0xff]
      %v8241 = vld [vmem:[#allocation2 + $0x40] sm:$0xff]
      %v8242 = vld [vmem:[#allocation2 + $0x48] sm:$0xff]
      %v8243 = vld [vmem:[#allocation2 + $0x50] sm:$0xff]
      %v8244 = vld [vmem:[#allocation2 + $0x58] sm:$0xff]
      %v8245 = vld [vmem:[#allocation2 + $0x60] sm:$0xff]
      %v8246 = vld [vmem:[#allocation2 + $0x68] sm:$0xff]
      %v8247 = vld [vmem:[#allocation2 + $0x70] sm:$0xff]
      %v8248 = vld [vmem:[#allocation2 + $0x78] sm:$0xff]
      %v8249 = vld [vmem:[#allocation2 + $0x80] sm:$0xff]
      %v8250 = vld [vmem:[#allocation2 + $0x88] sm:$0xff]
      %v8251 = vld [vmem:[#allocation2 + $0x90] sm:$0xff]
      %v8252 = vld [vmem:[#allocation2 + $0x98] sm:$0xff]
      %v8253 = vld [vmem:[#allocation2 + $0xa0] sm:$0xff]
      %v8254 = vld [vmem:[#allocation2 + $0xa8] sm:$0xff]
      %v8255 = vld [vmem:[#allocation2 + $0xb0] sm:$0xff]
      %v8256 = vld [vmem:[#allocation2 + $0xb8] sm:$0xff]
      %v8257 = vld [vmem:[#allocation2 + $0xc0] sm:$0xff]
      %v8258 = vld [vmem:[#allocation2 + $0xc8] sm:$0xff]
      %v8259 = vld [vmem:[#allocation2 + $0xd0] sm:$0xff]
      %v8260 = vld [vmem:[#allocation2 + $0xd8] sm:$0xff]
      %v8261 = vld [vmem:[#allocation2 + $0xe0] sm:$0xff]
      %v8262 = vld [vmem:[#allocation2 + $0xe8] sm:$0xff]
      %v8263 = vld [vmem:[#allocation2 + $0xf0] sm:$0xff]
      %v8264 = vld [vmem:[#allocation2 + $0xf8] sm:$0xff]
      %v8265 = vld [vmem:[#allocation2 + $0x100] sm:$0xff]
      %v8266 = vld [vmem:[#allocation2 + $0x108] sm:$0xff]
      %v8267 = vld [vmem:[#allocation2 + $0x110] sm:$0xff]
      %v8268 = vld [vmem:[#allocation2 + $0x118] sm:$0xff]
      %v8269 = vld [vmem:[#allocation2 + $0x120] sm:$0xff]
      %v8270 = vld [vmem:[#allocation2 + $0x128] sm:$0xff]
      %v8271 = vld [vmem:[#allocation2 + $0x130] sm:$0xff]
      %v8272 = vld [vmem:[#allocation2 + $0x138] sm:$0xff]
      %v8273 = vld [vmem:[#allocation2 + $0x140] sm:$0xff]
      %v8274 = vld [vmem:[#allocation2 + $0x148] sm:$0xff]
      %v8275 = vld [vmem:[#allocation2 + $0x150] sm:$0xff]
      %v8276 = vld [vmem:[#allocation2 + $0x158] sm:$0xff]
      %v8277 = vld [vmem:[#allocation2 + $0x160] sm:$0xff]
      %v8278 = vld [vmem:[#allocation2 + $0x168] sm:$0xff]
      %v8279 = vld [vmem:[#allocation2 + $0x170] sm:$0xff]
      %v8280 = vld [vmem:[#allocation2 + $0x178] sm:$0xff]
      %v8281 = vld [vmem:[#allocation2 + $0x180] sm:$0xff]
      %v8282 = vld [vmem:[#allocation2 + $0x188] sm:$0xff]
      %v8283 = vld [vmem:[#allocation2 + $0x190] sm:$0xff]
      %v8284 = vld [vmem:[#allocation2 + $0x198] sm:$0xff]
      %v8285 = vld [vmem:[#allocation2 + $0x1a0] sm:$0xff]
      %v8286 = vld [vmem:[#allocation2 + $0x1a8] sm:$0xff]
      %v8287 = vld [vmem:[#allocation2 + $0x1b0] sm:$0xff]
      %v8288 = vpack.c.bf16 %v8241, %v8240
      %v8289 = vpack.c.bf16 %v8243, %v8242
      %v8290 = vpack.c.bf16 %v8245, %v8244
      %v8291 = vpack.c.bf16 %v8247, %v8246
      %v8292 = vpack.c.bf16 %v8249, %v8248
      %v8293 = vpack.c.bf16 %v8251, %v8250
      %v8294 = vpack.c.bf16 %v8253, %v8252
      %v8295 = vpack.c.bf16 %v8255, %v8254
      %v8296 = vpack.c.bf16 %v8257, %v8256
      %v8297 = vpack.c.bf16 %v8259, %v8258
      %v8298 = vpack.c.bf16 %v8261, %v8260
      %v8299 = vpack.c.bf16 %v8263, %v8262
      %v8300 = vpack.c.bf16 %v8265, %v8264
      %v8301 = vpack.c.bf16 %v8267, %v8266
      %v8302 = vpack.c.bf16 %v8269, %v8268
      %v8303 = vpack.c.bf16 %v8271, %v8270
      %v8304 = vpack.c.bf16 %v8273, %v8272
      %v8305 = vpack.c.bf16 %v8275, %v8274
      %v8306 = vpack.c.bf16 %v8277, %v8276
      %v8307 = vpack.c.bf16 %v8279, %v8278
      %v8308 = vpack.c.bf16 %v8281, %v8280
      %v8309 = vpack.c.bf16 %v8283, %v8282
      %v8310 = vpack.c.bf16 %v8285, %v8284
      %v8311 = vpack.c.bf16 %v8287, %v8286
      %s8312 = scalar_lea.vmem %s5, 256
      %v8313 = vld [vmem:[%s8312] sm:$0xf]
      %v8314 = vld [vmem:[%s8312 + $0x4] sm:$0xf]
      %v8315 = vld [vmem:[%s8312 + $0x8] sm:$0xf]
      %v8316 = vld [vmem:[%s8312 + $0xc] sm:$0xf]
      %v8317 = vld [vmem:[%s8312 + $0x10] sm:$0xf]
      %v8318 = vld [vmem:[%s8312 + $0x14] sm:$0xf]
      %v8319 = vld [vmem:[%s8312 + $0x18] sm:$0xf]
      %v8320 = vld [vmem:[%s8312 + $0x1c] sm:$0xf]
      %v8321 = vld [vmem:[%s8312 + $0x20] sm:$0xf]
      %v8322 = vld [vmem:[%s8312 + $0x24] sm:$0xf]
      %v8323 = vld [vmem:[%s8312 + $0x28] sm:$0xf]
      %v8324 = vld [vmem:[%s8312 + $0x2c] sm:$0xf]
      %v8325 = vld [vmem:[%s8312 + $0x30] sm:$0xf]
      %v8326 = vld [vmem:[%s8312 + $0x34] sm:$0xf]
      %v8327 = vld [vmem:[%s8312 + $0x38] sm:$0xf]
      %v8328 = vld [vmem:[%s8312 + $0x3c] sm:$0xf]
      %v8345 = vunpack.c.l.b16 %v8313
      %v8346 = vunpack.c.l.b16 %v8314
      %v8347 = vunpack.c.l.b16 %v8315
      %v8348 = vunpack.c.l.b16 %v8316
      %v8349 = vunpack.c.l.b16 %v8317
      %v8350 = vunpack.c.l.b16 %v8318
      %v8351 = vunpack.c.l.b16 %v8319
      %v8352 = vunpack.c.l.b16 %v8320
      %v8353 = vunpack.c.l.b16 %v8321
      %v8354 = vunpack.c.l.b16 %v8322
      %v8355 = vunpack.c.l.b16 %v8323
      %v8356 = vunpack.c.l.b16 %v8324
      %v8357 = vunpack.c.l.b16 %v8325
      %v8358 = vunpack.c.l.b16 %v8326
      %v8359 = vunpack.c.l.b16 %v8327
      %v8360 = vunpack.c.l.b16 %v8328
      %v8361 = vpack.c.b16 %v8346, %v8345
      %v8362 = vpack.c.b16 %v8348, %v8347
      %v8363 = vpack.c.b16 %v8350, %v8349
      %v8364 = vpack.c.b16 %v8352, %v8351
      %v8365 = vpack.c.b16 %v8354, %v8353
      %v8366 = vpack.c.b16 %v8356, %v8355
      %v8367 = vpack.c.b16 %v8358, %v8357
      %v8368 = vpack.c.b16 %v8360, %v8359
      %8377 = vmatpush.bf16.msra.mxu0 %v8368
      %8378 = vmatpush.bf16.msra.mxu0 %v8367
      %8379 = vmatpush.bf16.msra.mxu0 %v8366
      %8380 = vmatpush.bf16.msra.mxu0 %v8365
      %8381 = vmatpush.bf16.msra.mxu0 %v8364
      %8382 = vmatpush.bf16.msra.mxu0 %v8363
      %8383 = vmatpush.bf16.msra.mxu0 %v8362
      %8384 = vmatpush.bf16.msra.mxu0 %v8361
      %8385 = vmatmul.bf16.gmra.mxu0 %v8288
      %v8386 = vpop.f32.mrf.mxu0
      %v8387 = vadd.f32 0.0, %v8386
      %v8388 = vpop.f32.mrf.mxu0
      %v8389 = vadd.f32 0.0, %v8388
      %8390 = vmatmul.bf16.gmra.mxu0 %v8289
      %v8391 = vpop.f32.mrf.mxu0
      %v8392 = vadd.f32 0.0, %v8391
      %v8393 = vpop.f32.mrf.mxu0
      %v8394 = vadd.f32 0.0, %v8393
      %8395 = vmatmul.bf16.gmra.mxu0 %v8290
      %v8396 = vpop.f32.mrf.mxu0
      %v8397 = vadd.f32 0.0, %v8396
      %v8398 = vpop.f32.mrf.mxu0
      %v8399 = vadd.f32 0.0, %v8398
      %8400 = vmatmul.bf16.gmra.mxu0 %v8291
      %v8401 = vpop.f32.mrf.mxu0
      %v8402 = vadd.f32 0.0, %v8401
      %v8403 = vpop.f32.mrf.mxu0
      %v8404 = vadd.f32 0.0, %v8403
      %8405 = vmatmul.bf16.gmra.mxu0 %v8292
      %v8406 = vpop.f32.mrf.mxu0
      %v8407 = vadd.f32 0.0, %v8406
      %v8408 = vpop.f32.mrf.mxu0
      %v8409 = vadd.f32 0.0, %v8408
      %8410 = vmatmul.bf16.gmra.mxu0 %v8293
      %v8411 = vpop.f32.mrf.mxu0
      %v8412 = vadd.f32 0.0, %v8411
      %v8413 = vpop.f32.mrf.mxu0
      %v8414 = vadd.f32 0.0, %v8413
      %8415 = vmatmul.bf16.gmra.mxu0 %v8294
      %v8416 = vpop.f32.mrf.mxu0
      %v8417 = vadd.f32 0.0, %v8416
      %v8418 = vpop.f32.mrf.mxu0
      %v8419 = vadd.f32 0.0, %v8418
      %8420 = vmatmul.bf16.gmra.mxu0 %v8295
      %v8421 = vpop.f32.mrf.mxu0
      %v8422 = vadd.f32 0.0, %v8421
      %v8423 = vpop.f32.mrf.mxu0
      %v8424 = vadd.f32 0.0, %v8423
      %8425 = vmatmul.bf16.gmra.mxu0 %v8296
      %v8426 = vpop.f32.mrf.mxu0
      %v8427 = vadd.f32 0.0, %v8426
      %v8428 = vpop.f32.mrf.mxu0
      %v8429 = vadd.f32 0.0, %v8428
      %8430 = vmatmul.bf16.gmra.mxu0 %v8297
      %v8431 = vpop.f32.mrf.mxu0
      %v8432 = vadd.f32 0.0, %v8431
      %v8433 = vpop.f32.mrf.mxu0
      %v8434 = vadd.f32 0.0, %v8433
      %8435 = vmatmul.bf16.gmra.mxu0 %v8298
      %v8436 = vpop.f32.mrf.mxu0
      %v8437 = vadd.f32 0.0, %v8436
      %v8438 = vpop.f32.mrf.mxu0
      %v8439 = vadd.f32 0.0, %v8438
      %8440 = vmatmul.bf16.gmra.mxu0 %v8299
      %v8441 = vpop.f32.mrf.mxu0
      %v8442 = vadd.f32 0.0, %v8441
      %v8443 = vpop.f32.mrf.mxu0
      %v8444 = vadd.f32 0.0, %v8443
      %8445 = vmatmul.bf16.gmra.mxu0 %v8300
      %v8446 = vpop.f32.mrf.mxu0
      %v8447 = vadd.f32 0.0, %v8446
      %v8448 = vpop.f32.mrf.mxu0
      %v8449 = vadd.f32 0.0, %v8448
      %8450 = vmatmul.bf16.gmra.mxu0 %v8301
      %v8451 = vpop.f32.mrf.mxu0
      %v8452 = vadd.f32 0.0, %v8451
      %v8453 = vpop.f32.mrf.mxu0
      %v8454 = vadd.f32 0.0, %v8453
      %8455 = vmatmul.bf16.gmra.mxu0 %v8302
      %v8456 = vpop.f32.mrf.mxu0
      %v8457 = vadd.f32 0.0, %v8456
      %v8458 = vpop.f32.mrf.mxu0
      %v8459 = vadd.f32 0.0, %v8458
      %8460 = vmatmul.bf16.gmra.mxu0 %v8303
      %v8461 = vpop.f32.mrf.mxu0
      %v8462 = vadd.f32 0.0, %v8461
      %v8463 = vpop.f32.mrf.mxu0
      %v8464 = vadd.f32 0.0, %v8463
      %8465 = vmatmul.bf16.gmra.mxu0 %v8304
      %v8466 = vpop.f32.mrf.mxu0
      %v8467 = vadd.f32 0.0, %v8466
      %v8468 = vpop.f32.mrf.mxu0
      %v8469 = vadd.f32 0.0, %v8468
      %8470 = vmatmul.bf16.gmra.mxu0 %v8305
      %v8471 = vpop.f32.mrf.mxu0
      %v8472 = vadd.f32 0.0, %v8471
      %v8473 = vpop.f32.mrf.mxu0
      %v8474 = vadd.f32 0.0, %v8473
      %8475 = vmatmul.bf16.gmra.mxu0 %v8306
      %v8476 = vpop.f32.mrf.mxu0
      %v8477 = vadd.f32 0.0, %v8476
      %v8478 = vpop.f32.mrf.mxu0
      %v8479 = vadd.f32 0.0, %v8478
      %8480 = vmatmul.bf16.gmra.mxu0 %v8307
      %v8481 = vpop.f32.mrf.mxu0
      %v8482 = vadd.f32 0.0, %v8481
      %v8483 = vpop.f32.mrf.mxu0
      %v8484 = vadd.f32 0.0, %v8483
      %8485 = vmatmul.bf16.gmra.mxu0 %v8308
      %v8486 = vpop.f32.mrf.mxu0
      %v8487 = vadd.f32 0.0, %v8486
      %v8488 = vpop.f32.mrf.mxu0
      %v8489 = vadd.f32 0.0, %v8488
      %8490 = vmatmul.bf16.gmra.mxu0 %v8309
      %v8491 = vpop.f32.mrf.mxu0
      %v8492 = vadd.f32 0.0, %v8491
      %v8493 = vpop.f32.mrf.mxu0
      %v8494 = vadd.f32 0.0, %v8493
      %8495 = vmatmul.bf16.gmra.mxu0 %v8310
      %v8496 = vpop.f32.mrf.mxu0
      %v8497 = vadd.f32 0.0, %v8496
      %v8498 = vpop.f32.mrf.mxu0
      %v8499 = vadd.f32 0.0, %v8498
      %8500 = vmatmul.bf16.gmra.mxu0 %v8311
      %v8501 = vpop.f32.mrf.mxu0
      %v8502 = vadd.f32 0.0, %v8501
      %v8503 = vpop.f32.mrf.mxu0
      %v8504 = vadd.f32 0.0, %v8503
      %8505 = vdwg.mxu0
      %v8506 = vadd.f32 %v8192, %v8387
      %v8507 = vadd.f32 %v8193, %v8389
      %v8508 = vadd.f32 %v8194, %v8392
      %v8509 = vadd.f32 %v8195, %v8394
      %v8510 = vadd.f32 %v8196, %v8397
      %v8511 = vadd.f32 %v8197, %v8399
      %v8512 = vadd.f32 %v8198, %v8402
      %v8513 = vadd.f32 %v8199, %v8404
      %v8514 = vadd.f32 %v8200, %v8407
      %v8515 = vadd.f32 %v8201, %v8409
      %v8516 = vadd.f32 %v8202, %v8412
      %v8517 = vadd.f32 %v8203, %v8414
      %v8518 = vadd.f32 %v8204, %v8417
      %v8519 = vadd.f32 %v8205, %v8419
      %v8520 = vadd.f32 %v8206, %v8422
      %v8521 = vadd.f32 %v8207, %v8424
      %v8522 = vadd.f32 %v8208, %v8427
      %v8523 = vadd.f32 %v8209, %v8429
      %v8524 = vadd.f32 %v8210, %v8432
      %v8525 = vadd.f32 %v8211, %v8434
      %v8526 = vadd.f32 %v8212, %v8437
      %v8527 = vadd.f32 %v8213, %v8439
      %v8528 = vadd.f32 %v8214, %v8442
      %v8529 = vadd.f32 %v8215, %v8444
      %v8530 = vadd.f32 %v8216, %v8447
      %v8531 = vadd.f32 %v8217, %v8449
      %v8532 = vadd.f32 %v8218, %v8452
      %v8533 = vadd.f32 %v8219, %v8454
      %v8534 = vadd.f32 %v8220, %v8457
      %v8535 = vadd.f32 %v8221, %v8459
      %v8536 = vadd.f32 %v8222, %v8462
      %v8537 = vadd.f32 %v8223, %v8464
      %v8538 = vadd.f32 %v8224, %v8467
      %v8539 = vadd.f32 %v8225, %v8469
      %v8540 = vadd.f32 %v8226, %v8472
      %v8541 = vadd.f32 %v8227, %v8474
      %v8542 = vadd.f32 %v8228, %v8477
      %v8543 = vadd.f32 %v8229, %v8479
      %v8544 = vadd.f32 %v8230, %v8482
      %v8545 = vadd.f32 %v8231, %v8484
      %v8546 = vadd.f32 %v8232, %v8487
      %v8547 = vadd.f32 %v8233, %v8489
      %v8548 = vadd.f32 %v8234, %v8492
      %v8549 = vadd.f32 %v8235, %v8494
      %v8550 = vadd.f32 %v8236, %v8497
      %v8551 = vadd.f32 %v8237, %v8499
      %v8552 = vadd.f32 %v8238, %v8502
      %v8553 = vadd.f32 %v8239, %v8504
      %v8554 = vld [vmem:[#allocation2 + $0x39] sm:$0xff]
      %v8555 = vld [vmem:[#allocation2 + $0x41] sm:$0xff]
      %v8556 = vld [vmem:[#allocation2 + $0x49] sm:$0xff]
      %v8557 = vld [vmem:[#allocation2 + $0x51] sm:$0xff]
      %v8558 = vld [vmem:[#allocation2 + $0x59] sm:$0xff]
      %v8559 = vld [vmem:[#allocation2 + $0x61] sm:$0xff]
      %v8560 = vld [vmem:[#allocation2 + $0x69] sm:$0xff]
      %v8561 = vld [vmem:[#allocation2 + $0x71] sm:$0xff]
      %v8562 = vld [vmem:[#allocation2 + $0x79] sm:$0xff]
      %v8563 = vld [vmem:[#allocation2 + $0x81] sm:$0xff]
      %v8564 = vld [vmem:[#allocation2 + $0x89] sm:$0xff]
      %v8565 = vld [vmem:[#allocation2 + $0x91] sm:$0xff]
      %v8566 = vld [vmem:[#allocation2 + $0x99] sm:$0xff]
      %v8567 = vld [vmem:[#allocation2 + $0xa1] sm:$0xff]
      %v8568 = vld [vmem:[#allocation2 + $0xa9] sm:$0xff]
      %v8569 = vld [vmem:[#allocation2 + $0xb1] sm:$0xff]
      %v8570 = vld [vmem:[#allocation2 + $0xb9] sm:$0xff]
      %v8571 = vld [vmem:[#allocation2 + $0xc1] sm:$0xff]
      %v8572 = vld [vmem:[#allocation2 + $0xc9] sm:$0xff]
      %v8573 = vld [vmem:[#allocation2 + $0xd1] sm:$0xff]
      %v8574 = vld [vmem:[#allocation2 + $0xd9] sm:$0xff]
      %v8575 = vld [vmem:[#allocation2 + $0xe1] sm:$0xff]
      %v8576 = vld [vmem:[#allocation2 + $0xe9] sm:$0xff]
      %v8577 = vld [vmem:[#allocation2 + $0xf1] sm:$0xff]
      %v8578 = vld [vmem:[#allocation2 + $0xf9] sm:$0xff]
      %v8579 = vld [vmem:[#allocation2 + $0x101] sm:$0xff]
      %v8580 = vld [vmem:[#allocation2 + $0x109] sm:$0xff]
      %v8581 = vld [vmem:[#allocation2 + $0x111] sm:$0xff]
      %v8582 = vld [vmem:[#allocation2 + $0x119] sm:$0xff]
      %v8583 = vld [vmem:[#allocation2 + $0x121] sm:$0xff]
      %v8584 = vld [vmem:[#allocation2 + $0x129] sm:$0xff]
      %v8585 = vld [vmem:[#allocation2 + $0x131] sm:$0xff]
      %v8586 = vld [vmem:[#allocation2 + $0x139] sm:$0xff]
      %v8587 = vld [vmem:[#allocation2 + $0x141] sm:$0xff]
      %v8588 = vld [vmem:[#allocation2 + $0x149] sm:$0xff]
      %v8589 = vld [vmem:[#allocation2 + $0x151] sm:$0xff]
      %v8590 = vld [vmem:[#allocation2 + $0x159] sm:$0xff]
      %v8591 = vld [vmem:[#allocation2 + $0x161] sm:$0xff]
      %v8592 = vld [vmem:[#allocation2 + $0x169] sm:$0xff]
      %v8593 = vld [vmem:[#allocation2 + $0x171] sm:$0xff]
      %v8594 = vld [vmem:[#allocation2 + $0x179] sm:$0xff]
      %v8595 = vld [vmem:[#allocation2 + $0x181] sm:$0xff]
      %v8596 = vld [vmem:[#allocation2 + $0x189] sm:$0xff]
      %v8597 = vld [vmem:[#allocation2 + $0x191] sm:$0xff]
      %v8598 = vld [vmem:[#allocation2 + $0x199] sm:$0xff]
      %v8599 = vld [vmem:[#allocation2 + $0x1a1] sm:$0xff]
      %v8600 = vld [vmem:[#allocation2 + $0x1a9] sm:$0xff]
      %v8601 = vld [vmem:[#allocation2 + $0x1b1] sm:$0xff]
      %v8602 = vpack.c.bf16 %v8555, %v8554
      %v8603 = vpack.c.bf16 %v8557, %v8556
      %v8604 = vpack.c.bf16 %v8559, %v8558
      %v8605 = vpack.c.bf16 %v8561, %v8560
      %v8606 = vpack.c.bf16 %v8563, %v8562
      %v8607 = vpack.c.bf16 %v8565, %v8564
      %v8608 = vpack.c.bf16 %v8567, %v8566
      %v8609 = vpack.c.bf16 %v8569, %v8568
      %v8610 = vpack.c.bf16 %v8571, %v8570
      %v8611 = vpack.c.bf16 %v8573, %v8572
      %v8612 = vpack.c.bf16 %v8575, %v8574
      %v8613 = vpack.c.bf16 %v8577, %v8576
      %v8614 = vpack.c.bf16 %v8579, %v8578
      %v8615 = vpack.c.bf16 %v8581, %v8580
      %v8616 = vpack.c.bf16 %v8583, %v8582
      %v8617 = vpack.c.bf16 %v8585, %v8584
      %v8618 = vpack.c.bf16 %v8587, %v8586
      %v8619 = vpack.c.bf16 %v8589, %v8588
      %v8620 = vpack.c.bf16 %v8591, %v8590
      %v8621 = vpack.c.bf16 %v8593, %v8592
      %v8622 = vpack.c.bf16 %v8595, %v8594
      %v8623 = vpack.c.bf16 %v8597, %v8596
      %v8624 = vpack.c.bf16 %v8599, %v8598
      %v8625 = vpack.c.bf16 %v8601, %v8600
      %s8626 = scalar_lea.vmem %s5, 320
      %v8627 = vld [vmem:[%s8626] sm:$0xf]
      %v8628 = vld [vmem:[%s8626 + $0x4] sm:$0xf]
      %v8629 = vld [vmem:[%s8626 + $0x8] sm:$0xf]
      %v8630 = vld [vmem:[%s8626 + $0xc] sm:$0xf]
      %v8631 = vld [vmem:[%s8626 + $0x10] sm:$0xf]
      %v8632 = vld [vmem:[%s8626 + $0x14] sm:$0xf]
      %v8633 = vld [vmem:[%s8626 + $0x18] sm:$0xf]
      %v8634 = vld [vmem:[%s8626 + $0x1c] sm:$0xf]
      %v8635 = vld [vmem:[%s8626 + $0x20] sm:$0xf]
      %v8636 = vld [vmem:[%s8626 + $0x24] sm:$0xf]
      %v8637 = vld [vmem:[%s8626 + $0x28] sm:$0xf]
      %v8638 = vld [vmem:[%s8626 + $0x2c] sm:$0xf]
      %v8639 = vld [vmem:[%s8626 + $0x30] sm:$0xf]
      %v8640 = vld [vmem:[%s8626 + $0x34] sm:$0xf]
      %v8641 = vld [vmem:[%s8626 + $0x38] sm:$0xf]
      %v8642 = vld [vmem:[%s8626 + $0x3c] sm:$0xf]
      %v8659 = vunpack.c.l.b16 %v8627
      %v8660 = vunpack.c.l.b16 %v8628
      %v8661 = vunpack.c.l.b16 %v8629
      %v8662 = vunpack.c.l.b16 %v8630
      %v8663 = vunpack.c.l.b16 %v8631
      %v8664 = vunpack.c.l.b16 %v8632
      %v8665 = vunpack.c.l.b16 %v8633
      %v8666 = vunpack.c.l.b16 %v8634
      %v8667 = vunpack.c.l.b16 %v8635
      %v8668 = vunpack.c.l.b16 %v8636
      %v8669 = vunpack.c.l.b16 %v8637
      %v8670 = vunpack.c.l.b16 %v8638
      %v8671 = vunpack.c.l.b16 %v8639
      %v8672 = vunpack.c.l.b16 %v8640
      %v8673 = vunpack.c.l.b16 %v8641
      %v8674 = vunpack.c.l.b16 %v8642
      %v8675 = vpack.c.b16 %v8660, %v8659
      %v8676 = vpack.c.b16 %v8662, %v8661
      %v8677 = vpack.c.b16 %v8664, %v8663
      %v8678 = vpack.c.b16 %v8666, %v8665
      %v8679 = vpack.c.b16 %v8668, %v8667
      %v8680 = vpack.c.b16 %v8670, %v8669
      %v8681 = vpack.c.b16 %v8672, %v8671
      %v8682 = vpack.c.b16 %v8674, %v8673
      %8691 = vmatpush.bf16.msra.mxu0 %v8682
      %8692 = vmatpush.bf16.msra.mxu0 %v8681
      %8693 = vmatpush.bf16.msra.mxu0 %v8680
      %8694 = vmatpush.bf16.msra.mxu0 %v8679
      %8695 = vmatpush.bf16.msra.mxu0 %v8678
      %8696 = vmatpush.bf16.msra.mxu0 %v8677
      %8697 = vmatpush.bf16.msra.mxu0 %v8676
      %8698 = vmatpush.bf16.msra.mxu0 %v8675
      %8699 = vmatmul.bf16.gmra.mxu0 %v8602
      %v8700 = vpop.f32.mrf.mxu0
      %v8701 = vadd.f32 0.0, %v8700
      %v8702 = vpop.f32.mrf.mxu0
      %v8703 = vadd.f32 0.0, %v8702
      %8704 = vmatmul.bf16.gmra.mxu0 %v8603
      %v8705 = vpop.f32.mrf.mxu0
      %v8706 = vadd.f32 0.0, %v8705
      %v8707 = vpop.f32.mrf.mxu0
      %v8708 = vadd.f32 0.0, %v8707
      %8709 = vmatmul.bf16.gmra.mxu0 %v8604
      %v8710 = vpop.f32.mrf.mxu0
      %v8711 = vadd.f32 0.0, %v8710
      %v8712 = vpop.f32.mrf.mxu0
      %v8713 = vadd.f32 0.0, %v8712
      %8714 = vmatmul.bf16.gmra.mxu0 %v8605
      %v8715 = vpop.f32.mrf.mxu0
      %v8716 = vadd.f32 0.0, %v8715
      %v8717 = vpop.f32.mrf.mxu0
      %v8718 = vadd.f32 0.0, %v8717
      %8719 = vmatmul.bf16.gmra.mxu0 %v8606
      %v8720 = vpop.f32.mrf.mxu0
      %v8721 = vadd.f32 0.0, %v8720
      %v8722 = vpop.f32.mrf.mxu0
      %v8723 = vadd.f32 0.0, %v8722
      %8724 = vmatmul.bf16.gmra.mxu0 %v8607
      %v8725 = vpop.f32.mrf.mxu0
      %v8726 = vadd.f32 0.0, %v8725
      %v8727 = vpop.f32.mrf.mxu0
      %v8728 = vadd.f32 0.0, %v8727
      %8729 = vmatmul.bf16.gmra.mxu0 %v8608
      %v8730 = vpop.f32.mrf.mxu0
      %v8731 = vadd.f32 0.0, %v8730
      %v8732 = vpop.f32.mrf.mxu0
      %v8733 = vadd.f32 0.0, %v8732
      %8734 = vmatmul.bf16.gmra.mxu0 %v8609
      %v8735 = vpop.f32.mrf.mxu0
      %v8736 = vadd.f32 0.0, %v8735
      %v8737 = vpop.f32.mrf.mxu0
      %v8738 = vadd.f32 0.0, %v8737
      %8739 = vmatmul.bf16.gmra.mxu0 %v8610
      %v8740 = vpop.f32.mrf.mxu0
      %v8741 = vadd.f32 0.0, %v8740
      %v8742 = vpop.f32.mrf.mxu0
      %v8743 = vadd.f32 0.0, %v8742
      %8744 = vmatmul.bf16.gmra.mxu0 %v8611
      %v8745 = vpop.f32.mrf.mxu0
      %v8746 = vadd.f32 0.0, %v8745
      %v8747 = vpop.f32.mrf.mxu0
      %v8748 = vadd.f32 0.0, %v8747
      %8749 = vmatmul.bf16.gmra.mxu0 %v8612
      %v8750 = vpop.f32.mrf.mxu0
      %v8751 = vadd.f32 0.0, %v8750
      %v8752 = vpop.f32.mrf.mxu0
      %v8753 = vadd.f32 0.0, %v8752
      %8754 = vmatmul.bf16.gmra.mxu0 %v8613
      %v8755 = vpop.f32.mrf.mxu0
      %v8756 = vadd.f32 0.0, %v8755
      %v8757 = vpop.f32.mrf.mxu0
      %v8758 = vadd.f32 0.0, %v8757
      %8759 = vmatmul.bf16.gmra.mxu0 %v8614
      %v8760 = vpop.f32.mrf.mxu0
      %v8761 = vadd.f32 0.0, %v8760
      %v8762 = vpop.f32.mrf.mxu0
      %v8763 = vadd.f32 0.0, %v8762
      %8764 = vmatmul.bf16.gmra.mxu0 %v8615
      %v8765 = vpop.f32.mrf.mxu0
      %v8766 = vadd.f32 0.0, %v8765
      %v8767 = vpop.f32.mrf.mxu0
      %v8768 = vadd.f32 0.0, %v8767
      %8769 = vmatmul.bf16.gmra.mxu0 %v8616
      %v8770 = vpop.f32.mrf.mxu0
      %v8771 = vadd.f32 0.0, %v8770
      %v8772 = vpop.f32.mrf.mxu0
      %v8773 = vadd.f32 0.0, %v8772
      %8774 = vmatmul.bf16.gmra.mxu0 %v8617
      %v8775 = vpop.f32.mrf.mxu0
      %v8776 = vadd.f32 0.0, %v8775
      %v8777 = vpop.f32.mrf.mxu0
      %v8778 = vadd.f32 0.0, %v8777
      %8779 = vmatmul.bf16.gmra.mxu0 %v8618
      %v8780 = vpop.f32.mrf.mxu0
      %v8781 = vadd.f32 0.0, %v8780
      %v8782 = vpop.f32.mrf.mxu0
      %v8783 = vadd.f32 0.0, %v8782
      %8784 = vmatmul.bf16.gmra.mxu0 %v8619
      %v8785 = vpop.f32.mrf.mxu0
      %v8786 = vadd.f32 0.0, %v8785
      %v8787 = vpop.f32.mrf.mxu0
      %v8788 = vadd.f32 0.0, %v8787
      %8789 = vmatmul.bf16.gmra.mxu0 %v8620
      %v8790 = vpop.f32.mrf.mxu0
      %v8791 = vadd.f32 0.0, %v8790
      %v8792 = vpop.f32.mrf.mxu0
      %v8793 = vadd.f32 0.0, %v8792
      %8794 = vmatmul.bf16.gmra.mxu0 %v8621
      %v8795 = vpop.f32.mrf.mxu0
      %v8796 = vadd.f32 0.0, %v8795
      %v8797 = vpop.f32.mrf.mxu0
      %v8798 = vadd.f32 0.0, %v8797
      %8799 = vmatmul.bf16.gmra.mxu0 %v8622
      %v8800 = vpop.f32.mrf.mxu0
      %v8801 = vadd.f32 0.0, %v8800
      %v8802 = vpop.f32.mrf.mxu0
      %v8803 = vadd.f32 0.0, %v8802
      %8804 = vmatmul.bf16.gmra.mxu0 %v8623
      %v8805 = vpop.f32.mrf.mxu0
      %v8806 = vadd.f32 0.0, %v8805
      %v8807 = vpop.f32.mrf.mxu0
      %v8808 = vadd.f32 0.0, %v8807
      %8809 = vmatmul.bf16.gmra.mxu0 %v8624
      %v8810 = vpop.f32.mrf.mxu0
      %v8811 = vadd.f32 0.0, %v8810
      %v8812 = vpop.f32.mrf.mxu0
      %v8813 = vadd.f32 0.0, %v8812
      %8814 = vmatmul.bf16.gmra.mxu0 %v8625
      %v8815 = vpop.f32.mrf.mxu0
      %v8816 = vadd.f32 0.0, %v8815
      %v8817 = vpop.f32.mrf.mxu0
      %v8818 = vadd.f32 0.0, %v8817
      %8819 = vdwg.mxu0
      %v8820 = vadd.f32 %v8506, %v8701
      %v8821 = vadd.f32 %v8507, %v8703
      %v8822 = vadd.f32 %v8508, %v8706
      %v8823 = vadd.f32 %v8509, %v8708
      %v8824 = vadd.f32 %v8510, %v8711
      %v8825 = vadd.f32 %v8511, %v8713
      %v8826 = vadd.f32 %v8512, %v8716
      %v8827 = vadd.f32 %v8513, %v8718
      %v8828 = vadd.f32 %v8514, %v8721
      %v8829 = vadd.f32 %v8515, %v8723
      %v8830 = vadd.f32 %v8516, %v8726
      %v8831 = vadd.f32 %v8517, %v8728
      %v8832 = vadd.f32 %v8518, %v8731
      %v8833 = vadd.f32 %v8519, %v8733
      %v8834 = vadd.f32 %v8520, %v8736
      %v8835 = vadd.f32 %v8521, %v8738
      %v8836 = vadd.f32 %v8522, %v8741
      %v8837 = vadd.f32 %v8523, %v8743
      %v8838 = vadd.f32 %v8524, %v8746
      %v8839 = vadd.f32 %v8525, %v8748
      %v8840 = vadd.f32 %v8526, %v8751
      %v8841 = vadd.f32 %v8527, %v8753
      %v8842 = vadd.f32 %v8528, %v8756
      %v8843 = vadd.f32 %v8529, %v8758
      %v8844 = vadd.f32 %v8530, %v8761
      %v8845 = vadd.f32 %v8531, %v8763
      %v8846 = vadd.f32 %v8532, %v8766
      %v8847 = vadd.f32 %v8533, %v8768
      %v8848 = vadd.f32 %v8534, %v8771
      %v8849 = vadd.f32 %v8535, %v8773
      %v8850 = vadd.f32 %v8536, %v8776
      %v8851 = vadd.f32 %v8537, %v8778
      %v8852 = vadd.f32 %v8538, %v8781
      %v8853 = vadd.f32 %v8539, %v8783
      %v8854 = vadd.f32 %v8540, %v8786
      %v8855 = vadd.f32 %v8541, %v8788
      %v8856 = vadd.f32 %v8542, %v8791
      %v8857 = vadd.f32 %v8543, %v8793
      %v8858 = vadd.f32 %v8544, %v8796
      %v8859 = vadd.f32 %v8545, %v8798
      %v8860 = vadd.f32 %v8546, %v8801
      %v8861 = vadd.f32 %v8547, %v8803
      %v8862 = vadd.f32 %v8548, %v8806
      %v8863 = vadd.f32 %v8549, %v8808
      %v8864 = vadd.f32 %v8550, %v8811
      %v8865 = vadd.f32 %v8551, %v8813
      %v8866 = vadd.f32 %v8552, %v8816
      %v8867 = vadd.f32 %v8553, %v8818
      %v8868 = vld [vmem:[#allocation2 + $0x4f] sm:$0xff]
      %v8869 = vld [vmem:[#allocation2 + $0x57] sm:$0xff]
      %v8870 = vld [vmem:[#allocation2 + $0x5f] sm:$0xff]
      %v8871 = vld [vmem:[#allocation2 + $0x67] sm:$0xff]
      %v8872 = vld [vmem:[#allocation2 + $0x6f] sm:$0xff]
      %v8873 = vld [vmem:[#allocation2 + $0x77] sm:$0xff]
      %v8874 = vld [vmem:[#allocation2 + $0x7f] sm:$0xff]
      %v8875 = vld [vmem:[#allocation2 + $0x87] sm:$0xff]
      %v8876 = vld [vmem:[#allocation2 + $0x8f] sm:$0xff]
      %v8877 = vld [vmem:[#allocation2 + $0x97] sm:$0xff]
      %v8878 = vld [vmem:[#allocation2 + $0x9f] sm:$0xff]
      %v8879 = vld [vmem:[#allocation2 + $0xa7] sm:$0xff]
      %v8880 = vld [vmem:[#allocation2 + $0xaf] sm:$0xff]
      %v8881 = vld [vmem:[#allocation2 + $0xb7] sm:$0xff]
      %v8882 = vld [vmem:[#allocation2 + $0xbf] sm:$0xff]
      %v8883 = vld [vmem:[#allocation2 + $0xc7] sm:$0xff]
      %v8884 = vld [vmem:[#allocation2 + $0xcf] sm:$0xff]
      %v8885 = vld [vmem:[#allocation2 + $0xd7] sm:$0xff]
      %v8886 = vld [vmem:[#allocation2 + $0xdf] sm:$0xff]
      %v8887 = vld [vmem:[#allocation2 + $0xe7] sm:$0xff]
      %v8888 = vld [vmem:[#allocation2 + $0xef] sm:$0xff]
      %v8889 = vld [vmem:[#allocation2 + $0xf7] sm:$0xff]
      %v8890 = vld [vmem:[#allocation2 + $0xff] sm:$0xff]
      %v8891 = vld [vmem:[#allocation2 + $0x107] sm:$0xff]
      %v8892 = vld [vmem:[#allocation2 + $0x10f] sm:$0xff]
      %v8893 = vld [vmem:[#allocation2 + $0x117] sm:$0xff]
      %v8894 = vld [vmem:[#allocation2 + $0x11f] sm:$0xff]
      %v8895 = vld [vmem:[#allocation2 + $0x127] sm:$0xff]
      %v8896 = vld [vmem:[#allocation2 + $0x12f] sm:$0xff]
      %v8897 = vld [vmem:[#allocation2 + $0x137] sm:$0xff]
      %v8898 = vld [vmem:[#allocation2 + $0x13f] sm:$0xff]
      %v8899 = vld [vmem:[#allocation2 + $0x147] sm:$0xff]
      %v8900 = vld [vmem:[#allocation2 + $0x14f] sm:$0xff]
      %v8901 = vld [vmem:[#allocation2 + $0x157] sm:$0xff]
      %v8902 = vld [vmem:[#allocation2 + $0x15f] sm:$0xff]
      %v8903 = vld [vmem:[#allocation2 + $0x167] sm:$0xff]
      %v8904 = vld [vmem:[#allocation2 + $0x16f] sm:$0xff]
      %v8905 = vld [vmem:[#allocation2 + $0x177] sm:$0xff]
      %v8906 = vld [vmem:[#allocation2 + $0x17f] sm:$0xff]
      %v8907 = vld [vmem:[#allocation2 + $0x187] sm:$0xff]
      %v8908 = vld [vmem:[#allocation2 + $0x18f] sm:$0xff]
      %v8909 = vld [vmem:[#allocation2 + $0x197] sm:$0xff]
      %v8910 = vld [vmem:[#allocation2 + $0x19f] sm:$0xff]
      %v8911 = vld [vmem:[#allocation2 + $0x1a7] sm:$0xff]
      %v8912 = vld [vmem:[#allocation2 + $0x1af] sm:$0xff]
      %v8913 = vld [vmem:[#allocation2 + $0x1b7] sm:$0xff]
      %v8914 = vld [vmem:[#allocation2 + $0x1bf] sm:$0xff]
      %v8915 = vld [vmem:[#allocation2 + $0x1c7] sm:$0xff]
      %v8916 = vpack.c.bf16 %v8869, %v8868
      %v8917 = vpack.c.bf16 %v8871, %v8870
      %v8918 = vpack.c.bf16 %v8873, %v8872
      %v8919 = vpack.c.bf16 %v8875, %v8874
      %v8920 = vpack.c.bf16 %v8877, %v8876
      %v8921 = vpack.c.bf16 %v8879, %v8878
      %v8922 = vpack.c.bf16 %v8881, %v8880
      %v8923 = vpack.c.bf16 %v8883, %v8882
      %v8924 = vpack.c.bf16 %v8885, %v8884
      %v8925 = vpack.c.bf16 %v8887, %v8886
      %v8926 = vpack.c.bf16 %v8889, %v8888
      %v8927 = vpack.c.bf16 %v8891, %v8890
      %v8928 = vpack.c.bf16 %v8893, %v8892
      %v8929 = vpack.c.bf16 %v8895, %v8894
      %v8930 = vpack.c.bf16 %v8897, %v8896
      %v8931 = vpack.c.bf16 %v8899, %v8898
      %v8932 = vpack.c.bf16 %v8901, %v8900
      %v8933 = vpack.c.bf16 %v8903, %v8902
      %v8934 = vpack.c.bf16 %v8905, %v8904
      %v8935 = vpack.c.bf16 %v8907, %v8906
      %v8936 = vpack.c.bf16 %v8909, %v8908
      %v8937 = vpack.c.bf16 %v8911, %v8910
      %v8938 = vpack.c.bf16 %v8913, %v8912
      %v8939 = vpack.c.bf16 %v8915, %v8914
      %s8940 = scalar_lea.vmem %s5, 384
      %v8941 = vld [vmem:[%s8940] sm:$0xf]
      %v8942 = vld [vmem:[%s8940 + $0x4] sm:$0xf]
      %v8943 = vld [vmem:[%s8940 + $0x8] sm:$0xf]
      %v8944 = vld [vmem:[%s8940 + $0xc] sm:$0xf]
      %v8945 = vld [vmem:[%s8940 + $0x10] sm:$0xf]
      %v8946 = vld [vmem:[%s8940 + $0x14] sm:$0xf]
      %v8947 = vld [vmem:[%s8940 + $0x18] sm:$0xf]
      %v8948 = vld [vmem:[%s8940 + $0x1c] sm:$0xf]
      %v8949 = vld [vmem:[%s8940 + $0x20] sm:$0xf]
      %v8950 = vld [vmem:[%s8940 + $0x24] sm:$0xf]
      %v8951 = vld [vmem:[%s8940 + $0x28] sm:$0xf]
      %v8952 = vld [vmem:[%s8940 + $0x2c] sm:$0xf]
      %v8953 = vld [vmem:[%s8940 + $0x30] sm:$0xf]
      %v8954 = vld [vmem:[%s8940 + $0x34] sm:$0xf]
      %v8955 = vld [vmem:[%s8940 + $0x38] sm:$0xf]
      %v8956 = vld [vmem:[%s8940 + $0x3c] sm:$0xf]
      %v8973 = vunpack.c.l.b16 %v8941
      %v8974 = vunpack.c.l.b16 %v8942
      %v8975 = vunpack.c.l.b16 %v8943
      %v8976 = vunpack.c.l.b16 %v8944
      %v8977 = vunpack.c.l.b16 %v8945
      %v8978 = vunpack.c.l.b16 %v8946
      %v8979 = vunpack.c.l.b16 %v8947
      %v8980 = vunpack.c.l.b16 %v8948
      %v8981 = vunpack.c.l.b16 %v8949
      %v8982 = vunpack.c.l.b16 %v8950
      %v8983 = vunpack.c.l.b16 %v8951
      %v8984 = vunpack.c.l.b16 %v8952
      %v8985 = vunpack.c.l.b16 %v8953
      %v8986 = vunpack.c.l.b16 %v8954
      %v8987 = vunpack.c.l.b16 %v8955
      %v8988 = vunpack.c.l.b16 %v8956
      %v8989 = vpack.c.b16 %v8974, %v8973
      %v8990 = vpack.c.b16 %v8976, %v8975
      %v8991 = vpack.c.b16 %v8978, %v8977
      %v8992 = vpack.c.b16 %v8980, %v8979
      %v8993 = vpack.c.b16 %v8982, %v8981
      %v8994 = vpack.c.b16 %v8984, %v8983
      %v8995 = vpack.c.b16 %v8986, %v8985
      %v8996 = vpack.c.b16 %v8988, %v8987
      %9005 = vmatpush.bf16.msra.mxu0 %v8996
      %9006 = vmatpush.bf16.msra.mxu0 %v8995
      %9007 = vmatpush.bf16.msra.mxu0 %v8994
      %9008 = vmatpush.bf16.msra.mxu0 %v8993
      %9009 = vmatpush.bf16.msra.mxu0 %v8992
      %9010 = vmatpush.bf16.msra.mxu0 %v8991
      %9011 = vmatpush.bf16.msra.mxu0 %v8990
      %9012 = vmatpush.bf16.msra.mxu0 %v8989
      %9013 = vmatmul.bf16.gmra.mxu0 %v8916
      %v9014 = vpop.f32.mrf.mxu0
      %v9015 = vadd.f32 0.0, %v9014
      %v9016 = vpop.f32.mrf.mxu0
      %v9017 = vadd.f32 0.0, %v9016
      %9018 = vmatmul.bf16.gmra.mxu0 %v8917
      %v9019 = vpop.f32.mrf.mxu0
      %v9020 = vadd.f32 0.0, %v9019
      %v9021 = vpop.f32.mrf.mxu0
      %v9022 = vadd.f32 0.0, %v9021
      %9023 = vmatmul.bf16.gmra.mxu0 %v8918
      %v9024 = vpop.f32.mrf.mxu0
      %v9025 = vadd.f32 0.0, %v9024
      %v9026 = vpop.f32.mrf.mxu0
      %v9027 = vadd.f32 0.0, %v9026
      %9028 = vmatmul.bf16.gmra.mxu0 %v8919
      %v9029 = vpop.f32.mrf.mxu0
      %v9030 = vadd.f32 0.0, %v9029
      %v9031 = vpop.f32.mrf.mxu0
      %v9032 = vadd.f32 0.0, %v9031
      %9033 = vmatmul.bf16.gmra.mxu0 %v8920
      %v9034 = vpop.f32.mrf.mxu0
      %v9035 = vadd.f32 0.0, %v9034
      %v9036 = vpop.f32.mrf.mxu0
      %v9037 = vadd.f32 0.0, %v9036
      %9038 = vmatmul.bf16.gmra.mxu0 %v8921
      %v9039 = vpop.f32.mrf.mxu0
      %v9040 = vadd.f32 0.0, %v9039
      %v9041 = vpop.f32.mrf.mxu0
      %v9042 = vadd.f32 0.0, %v9041
      %9043 = vmatmul.bf16.gmra.mxu0 %v8922
      %v9044 = vpop.f32.mrf.mxu0
      %v9045 = vadd.f32 0.0, %v9044
      %v9046 = vpop.f32.mrf.mxu0
      %v9047 = vadd.f32 0.0, %v9046
      %9048 = vmatmul.bf16.gmra.mxu0 %v8923
      %v9049 = vpop.f32.mrf.mxu0
      %v9050 = vadd.f32 0.0, %v9049
      %v9051 = vpop.f32.mrf.mxu0
      %v9052 = vadd.f32 0.0, %v9051
      %9053 = vmatmul.bf16.gmra.mxu0 %v8924
      %v9054 = vpop.f32.mrf.mxu0
      %v9055 = vadd.f32 0.0, %v9054
      %v9056 = vpop.f32.mrf.mxu0
      %v9057 = vadd.f32 0.0, %v9056
      %9058 = vmatmul.bf16.gmra.mxu0 %v8925
      %v9059 = vpop.f32.mrf.mxu0
      %v9060 = vadd.f32 0.0, %v9059
      %v9061 = vpop.f32.mrf.mxu0
      %v9062 = vadd.f32 0.0, %v9061
      %9063 = vmatmul.bf16.gmra.mxu0 %v8926
      %v9064 = vpop.f32.mrf.mxu0
      %v9065 = vadd.f32 0.0, %v9064
      %v9066 = vpop.f32.mrf.mxu0
      %v9067 = vadd.f32 0.0, %v9066
      %9068 = vmatmul.bf16.gmra.mxu0 %v8927
      %v9069 = vpop.f32.mrf.mxu0
      %v9070 = vadd.f32 0.0, %v9069
      %v9071 = vpop.f32.mrf.mxu0
      %v9072 = vadd.f32 0.0, %v9071
      %9073 = vmatmul.bf16.gmra.mxu0 %v8928
      %v9074 = vpop.f32.mrf.mxu0
      %v9075 = vadd.f32 0.0, %v9074
      %v9076 = vpop.f32.mrf.mxu0
      %v9077 = vadd.f32 0.0, %v9076
      %9078 = vmatmul.bf16.gmra.mxu0 %v8929
      %v9079 = vpop.f32.mrf.mxu0
      %v9080 = vadd.f32 0.0, %v9079
      %v9081 = vpop.f32.mrf.mxu0
      %v9082 = vadd.f32 0.0, %v9081
      %9083 = vmatmul.bf16.gmra.mxu0 %v8930
      %v9084 = vpop.f32.mrf.mxu0
      %v9085 = vadd.f32 0.0, %v9084
      %v9086 = vpop.f32.mrf.mxu0
      %v9087 = vadd.f32 0.0, %v9086
      %9088 = vmatmul.bf16.gmra.mxu0 %v8931
      %v9089 = vpop.f32.mrf.mxu0
      %v9090 = vadd.f32 0.0, %v9089
      %v9091 = vpop.f32.mrf.mxu0
      %v9092 = vadd.f32 0.0, %v9091
      %9093 = vmatmul.bf16.gmra.mxu0 %v8932
      %v9094 = vpop.f32.mrf.mxu0
      %v9095 = vadd.f32 0.0, %v9094
      %v9096 = vpop.f32.mrf.mxu0
      %v9097 = vadd.f32 0.0, %v9096
      %9098 = vmatmul.bf16.gmra.mxu0 %v8933
      %v9099 = vpop.f32.mrf.mxu0
      %v9100 = vadd.f32 0.0, %v9099
      %v9101 = vpop.f32.mrf.mxu0
      %v9102 = vadd.f32 0.0, %v9101
      %9103 = vmatmul.bf16.gmra.mxu0 %v8934
      %v9104 = vpop.f32.mrf.mxu0
      %v9105 = vadd.f32 0.0, %v9104
      %v9106 = vpop.f32.mrf.mxu0
      %v9107 = vadd.f32 0.0, %v9106
      %9108 = vmatmul.bf16.gmra.mxu0 %v8935
      %v9109 = vpop.f32.mrf.mxu0
      %v9110 = vadd.f32 0.0, %v9109
      %v9111 = vpop.f32.mrf.mxu0
      %v9112 = vadd.f32 0.0, %v9111
      %9113 = vmatmul.bf16.gmra.mxu0 %v8936
      %v9114 = vpop.f32.mrf.mxu0
      %v9115 = vadd.f32 0.0, %v9114
      %v9116 = vpop.f32.mrf.mxu0
      %v9117 = vadd.f32 0.0, %v9116
      %9118 = vmatmul.bf16.gmra.mxu0 %v8937
      %v9119 = vpop.f32.mrf.mxu0
      %v9120 = vadd.f32 0.0, %v9119
      %v9121 = vpop.f32.mrf.mxu0
      %v9122 = vadd.f32 0.0, %v9121
      %9123 = vmatmul.bf16.gmra.mxu0 %v8938
      %v9124 = vpop.f32.mrf.mxu0
      %v9125 = vadd.f32 0.0, %v9124
      %v9126 = vpop.f32.mrf.mxu0
      %v9127 = vadd.f32 0.0, %v9126
      %9128 = vmatmul.bf16.gmra.mxu0 %v8939
      %v9129 = vpop.f32.mrf.mxu0
      %v9130 = vadd.f32 0.0, %v9129
      %v9131 = vpop.f32.mrf.mxu0
      %v9132 = vadd.f32 0.0, %v9131
      %9133 = vdwg.mxu0
      %v9134 = vadd.f32 %v8820, %v9015
      %v9135 = vadd.f32 %v8821, %v9017
      %v9136 = vadd.f32 %v8822, %v9020
      %v9137 = vadd.f32 %v8823, %v9022
      %v9138 = vadd.f32 %v8824, %v9025
      %v9139 = vadd.f32 %v8825, %v9027
      %v9140 = vadd.f32 %v8826, %v9030
      %v9141 = vadd.f32 %v8827, %v9032
      %v9142 = vadd.f32 %v8828, %v9035
      %v9143 = vadd.f32 %v8829, %v9037
      %v9144 = vadd.f32 %v8830, %v9040
      %v9145 = vadd.f32 %v8831, %v9042
      %v9146 = vadd.f32 %v8832, %v9045
      %v9147 = vadd.f32 %v8833, %v9047
      %v9148 = vadd.f32 %v8834, %v9050
      %v9149 = vadd.f32 %v8835, %v9052
      %v9150 = vadd.f32 %v8836, %v9055
      %v9151 = vadd.f32 %v8837, %v9057
      %v9152 = vadd.f32 %v8838, %v9060
      %v9153 = vadd.f32 %v8839, %v9062
      %v9154 = vadd.f32 %v8840, %v9065
      %v9155 = vadd.f32 %v8841, %v9067
      %v9156 = vadd.f32 %v8842, %v9070
      %v9157 = vadd.f32 %v8843, %v9072
      %v9158 = vadd.f32 %v8844, %v9075
      %v9159 = vadd.f32 %v8845, %v9077
      %v9160 = vadd.f32 %v8846, %v9080
      %v9161 = vadd.f32 %v8847, %v9082
      %v9162 = vadd.f32 %v8848, %v9085
      %v9163 = vadd.f32 %v8849, %v9087
      %v9164 = vadd.f32 %v8850, %v9090
      %v9165 = vadd.f32 %v8851, %v9092
      %v9166 = vadd.f32 %v8852, %v9095
      %v9167 = vadd.f32 %v8853, %v9097
      %v9168 = vadd.f32 %v8854, %v9100
      %v9169 = vadd.f32 %v8855, %v9102
      %v9170 = vadd.f32 %v8856, %v9105
      %v9171 = vadd.f32 %v8857, %v9107
      %v9172 = vadd.f32 %v8858, %v9110
      %v9173 = vadd.f32 %v8859, %v9112
      %v9174 = vadd.f32 %v8860, %v9115
      %v9175 = vadd.f32 %v8861, %v9117
      %v9176 = vadd.f32 %v8862, %v9120
      %v9177 = vadd.f32 %v8863, %v9122
      %v9178 = vadd.f32 %v8864, %v9125
      %v9179 = vadd.f32 %v8865, %v9127
      %v9180 = vadd.f32 %v8866, %v9130
      %v9181 = vadd.f32 %v8867, %v9132
      %v9182 = vld [vmem:[#allocation2 + $0x50] sm:$0xff]
      %v9183 = vld [vmem:[#allocation2 + $0x58] sm:$0xff]
      %v9184 = vld [vmem:[#allocation2 + $0x60] sm:$0xff]
      %v9185 = vld [vmem:[#allocation2 + $0x68] sm:$0xff]
      %v9186 = vld [vmem:[#allocation2 + $0x70] sm:$0xff]
      %v9187 = vld [vmem:[#allocation2 + $0x78] sm:$0xff]
      %v9188 = vld [vmem:[#allocation2 + $0x80] sm:$0xff]
      %v9189 = vld [vmem:[#allocation2 + $0x88] sm:$0xff]
      %v9190 = vld [vmem:[#allocation2 + $0x90] sm:$0xff]
      %v9191 = vld [vmem:[#allocation2 + $0x98] sm:$0xff]
      %v9192 = vld [vmem:[#allocation2 + $0xa0] sm:$0xff]
      %v9193 = vld [vmem:[#allocation2 + $0xa8] sm:$0xff]
      %v9194 = vld [vmem:[#allocation2 + $0xb0] sm:$0xff]
      %v9195 = vld [vmem:[#allocation2 + $0xb8] sm:$0xff]
      %v9196 = vld [vmem:[#allocation2 + $0xc0] sm:$0xff]
      %v9197 = vld [vmem:[#allocation2 + $0xc8] sm:$0xff]
      %v9198 = vld [vmem:[#allocation2 + $0xd0] sm:$0xff]
      %v9199 = vld [vmem:[#allocation2 + $0xd8] sm:$0xff]
      %v9200 = vld [vmem:[#allocation2 + $0xe0] sm:$0xff]
      %v9201 = vld [vmem:[#allocation2 + $0xe8] sm:$0xff]
      %v9202 = vld [vmem:[#allocation2 + $0xf0] sm:$0xff]
      %v9203 = vld [vmem:[#allocation2 + $0xf8] sm:$0xff]
      %v9204 = vld [vmem:[#allocation2 + $0x100] sm:$0xff]
      %v9205 = vld [vmem:[#allocation2 + $0x108] sm:$0xff]
      %v9206 = vld [vmem:[#allocation2 + $0x110] sm:$0xff]
      %v9207 = vld [vmem:[#allocation2 + $0x118] sm:$0xff]
      %v9208 = vld [vmem:[#allocation2 + $0x120] sm:$0xff]
      %v9209 = vld [vmem:[#allocation2 + $0x128] sm:$0xff]
      %v9210 = vld [vmem:[#allocation2 + $0x130] sm:$0xff]
      %v9211 = vld [vmem:[#allocation2 + $0x138] sm:$0xff]
      %v9212 = vld [vmem:[#allocation2 + $0x140] sm:$0xff]
      %v9213 = vld [vmem:[#allocation2 + $0x148] sm:$0xff]
      %v9214 = vld [vmem:[#allocation2 + $0x150] sm:$0xff]
      %v9215 = vld [vmem:[#allocation2 + $0x158] sm:$0xff]
      %v9216 = vld [vmem:[#allocation2 + $0x160] sm:$0xff]
      %v9217 = vld [vmem:[#allocation2 + $0x168] sm:$0xff]
      %v9218 = vld [vmem:[#allocation2 + $0x170] sm:$0xff]
      %v9219 = vld [vmem:[#allocation2 + $0x178] sm:$0xff]
      %v9220 = vld [vmem:[#allocation2 + $0x180] sm:$0xff]
      %v9221 = vld [vmem:[#allocation2 + $0x188] sm:$0xff]
      %v9222 = vld [vmem:[#allocation2 + $0x190] sm:$0xff]
      %v9223 = vld [vmem:[#allocation2 + $0x198] sm:$0xff]
      %v9224 = vld [vmem:[#allocation2 + $0x1a0] sm:$0xff]
      %v9225 = vld [vmem:[#allocation2 + $0x1a8] sm:$0xff]
      %v9226 = vld [vmem:[#allocation2 + $0x1b0] sm:$0xff]
      %v9227 = vld [vmem:[#allocation2 + $0x1b8] sm:$0xff]
      %v9228 = vld [vmem:[#allocation2 + $0x1c0] sm:$0xff]
      %v9229 = vld [vmem:[#allocation2 + $0x1c8] sm:$0xff]
      %v9230 = vpack.c.bf16 %v9183, %v9182
      %v9231 = vpack.c.bf16 %v9185, %v9184
      %v9232 = vpack.c.bf16 %v9187, %v9186
      %v9233 = vpack.c.bf16 %v9189, %v9188
      %v9234 = vpack.c.bf16 %v9191, %v9190
      %v9235 = vpack.c.bf16 %v9193, %v9192
      %v9236 = vpack.c.bf16 %v9195, %v9194
      %v9237 = vpack.c.bf16 %v9197, %v9196
      %v9238 = vpack.c.bf16 %v9199, %v9198
      %v9239 = vpack.c.bf16 %v9201, %v9200
      %v9240 = vpack.c.bf16 %v9203, %v9202
      %v9241 = vpack.c.bf16 %v9205, %v9204
      %v9242 = vpack.c.bf16 %v9207, %v9206
      %v9243 = vpack.c.bf16 %v9209, %v9208
      %v9244 = vpack.c.bf16 %v9211, %v9210
      %v9245 = vpack.c.bf16 %v9213, %v9212
      %v9246 = vpack.c.bf16 %v9215, %v9214
      %v9247 = vpack.c.bf16 %v9217, %v9216
      %v9248 = vpack.c.bf16 %v9219, %v9218
      %v9249 = vpack.c.bf16 %v9221, %v9220
      %v9250 = vpack.c.bf16 %v9223, %v9222
      %v9251 = vpack.c.bf16 %v9225, %v9224
      %v9252 = vpack.c.bf16 %v9227, %v9226
      %v9253 = vpack.c.bf16 %v9229, %v9228
      %s9254 = scalar_lea.vmem %s5, 448
      %v9255 = vld [vmem:[%s9254] sm:$0xf]
      %v9256 = vld [vmem:[%s9254 + $0x4] sm:$0xf]
      %v9257 = vld [vmem:[%s9254 + $0x8] sm:$0xf]
      %v9258 = vld [vmem:[%s9254 + $0xc] sm:$0xf]
      %v9259 = vld [vmem:[%s9254 + $0x10] sm:$0xf]
      %v9260 = vld [vmem:[%s9254 + $0x14] sm:$0xf]
      %v9261 = vld [vmem:[%s9254 + $0x18] sm:$0xf]
      %v9262 = vld [vmem:[%s9254 + $0x1c] sm:$0xf]
      %v9263 = vld [vmem:[%s9254 + $0x20] sm:$0xf]
      %v9264 = vld [vmem:[%s9254 + $0x24] sm:$0xf]
      %v9265 = vld [vmem:[%s9254 + $0x28] sm:$0xf]
      %v9266 = vld [vmem:[%s9254 + $0x2c] sm:$0xf]
      %v9267 = vld [vmem:[%s9254 + $0x30] sm:$0xf]
      %v9268 = vld [vmem:[%s9254 + $0x34] sm:$0xf]
      %v9269 = vld [vmem:[%s9254 + $0x38] sm:$0xf]
      %v9270 = vld [vmem:[%s9254 + $0x3c] sm:$0xf]
      %v9287 = vunpack.c.l.b16 %v9255
      %v9288 = vunpack.c.l.b16 %v9256
      %v9289 = vunpack.c.l.b16 %v9257
      %v9290 = vunpack.c.l.b16 %v9258
      %v9291 = vunpack.c.l.b16 %v9259
      %v9292 = vunpack.c.l.b16 %v9260
      %v9293 = vunpack.c.l.b16 %v9261
      %v9294 = vunpack.c.l.b16 %v9262
      %v9295 = vunpack.c.l.b16 %v9263
      %v9296 = vunpack.c.l.b16 %v9264
      %v9297 = vunpack.c.l.b16 %v9265
      %v9298 = vunpack.c.l.b16 %v9266
      %v9299 = vunpack.c.l.b16 %v9267
      %v9300 = vunpack.c.l.b16 %v9268
      %v9301 = vunpack.c.l.b16 %v9269
      %v9302 = vunpack.c.l.b16 %v9270
      %v9303 = vpack.c.b16 %v9288, %v9287
      %v9304 = vpack.c.b16 %v9290, %v9289
      %v9305 = vpack.c.b16 %v9292, %v9291
      %v9306 = vpack.c.b16 %v9294, %v9293
      %v9307 = vpack.c.b16 %v9296, %v9295
      %v9308 = vpack.c.b16 %v9298, %v9297
      %v9309 = vpack.c.b16 %v9300, %v9299
      %v9310 = vpack.c.b16 %v9302, %v9301
      %9319 = vmatpush.bf16.msra.mxu0 %v9310
      %9320 = vmatpush.bf16.msra.mxu0 %v9309
      %9321 = vmatpush.bf16.msra.mxu0 %v9308
      %9322 = vmatpush.bf16.msra.mxu0 %v9307
      %9323 = vmatpush.bf16.msra.mxu0 %v9306
      %9324 = vmatpush.bf16.msra.mxu0 %v9305
      %9325 = vmatpush.bf16.msra.mxu0 %v9304
      %9326 = vmatpush.bf16.msra.mxu0 %v9303
      %9327 = vmatmul.bf16.gmra.mxu0 %v9230
      %v9328 = vpop.f32.mrf.mxu0
      %v9329 = vadd.f32 0.0, %v9328
      %v9330 = vpop.f32.mrf.mxu0
      %v9331 = vadd.f32 0.0, %v9330
      %9332 = vmatmul.bf16.gmra.mxu0 %v9231
      %v9333 = vpop.f32.mrf.mxu0
      %v9334 = vadd.f32 0.0, %v9333
      %v9335 = vpop.f32.mrf.mxu0
      %v9336 = vadd.f32 0.0, %v9335
      %9337 = vmatmul.bf16.gmra.mxu0 %v9232
      %v9338 = vpop.f32.mrf.mxu0
      %v9339 = vadd.f32 0.0, %v9338
      %v9340 = vpop.f32.mrf.mxu0
      %v9341 = vadd.f32 0.0, %v9340
      %9342 = vmatmul.bf16.gmra.mxu0 %v9233
      %v9343 = vpop.f32.mrf.mxu0
      %v9344 = vadd.f32 0.0, %v9343
      %v9345 = vpop.f32.mrf.mxu0
      %v9346 = vadd.f32 0.0, %v9345
      %9347 = vmatmul.bf16.gmra.mxu0 %v9234
      %v9348 = vpop.f32.mrf.mxu0
      %v9349 = vadd.f32 0.0, %v9348
      %v9350 = vpop.f32.mrf.mxu0
      %v9351 = vadd.f32 0.0, %v9350
      %9352 = vmatmul.bf16.gmra.mxu0 %v9235
      %v9353 = vpop.f32.mrf.mxu0
      %v9354 = vadd.f32 0.0, %v9353
      %v9355 = vpop.f32.mrf.mxu0
      %v9356 = vadd.f32 0.0, %v9355
      %9357 = vmatmul.bf16.gmra.mxu0 %v9236
      %v9358 = vpop.f32.mrf.mxu0
      %v9359 = vadd.f32 0.0, %v9358
      %v9360 = vpop.f32.mrf.mxu0
      %v9361 = vadd.f32 0.0, %v9360
      %9362 = vmatmul.bf16.gmra.mxu0 %v9237
      %v9363 = vpop.f32.mrf.mxu0
      %v9364 = vadd.f32 0.0, %v9363
      %v9365 = vpop.f32.mrf.mxu0
      %v9366 = vadd.f32 0.0, %v9365
      %9367 = vmatmul.bf16.gmra.mxu0 %v9238
      %v9368 = vpop.f32.mrf.mxu0
      %v9369 = vadd.f32 0.0, %v9368
      %v9370 = vpop.f32.mrf.mxu0
      %v9371 = vadd.f32 0.0, %v9370
      %9372 = vmatmul.bf16.gmra.mxu0 %v9239
      %v9373 = vpop.f32.mrf.mxu0
      %v9374 = vadd.f32 0.0, %v9373
      %v9375 = vpop.f32.mrf.mxu0
      %v9376 = vadd.f32 0.0, %v9375
      %9377 = vmatmul.bf16.gmra.mxu0 %v9240
      %v9378 = vpop.f32.mrf.mxu0
      %v9379 = vadd.f32 0.0, %v9378
      %v9380 = vpop.f32.mrf.mxu0
      %v9381 = vadd.f32 0.0, %v9380
      %9382 = vmatmul.bf16.gmra.mxu0 %v9241
      %v9383 = vpop.f32.mrf.mxu0
      %v9384 = vadd.f32 0.0, %v9383
      %v9385 = vpop.f32.mrf.mxu0
      %v9386 = vadd.f32 0.0, %v9385
      %9387 = vmatmul.bf16.gmra.mxu0 %v9242
      %v9388 = vpop.f32.mrf.mxu0
      %v9389 = vadd.f32 0.0, %v9388
      %v9390 = vpop.f32.mrf.mxu0
      %v9391 = vadd.f32 0.0, %v9390
      %9392 = vmatmul.bf16.gmra.mxu0 %v9243
      %v9393 = vpop.f32.mrf.mxu0
      %v9394 = vadd.f32 0.0, %v9393
      %v9395 = vpop.f32.mrf.mxu0
      %v9396 = vadd.f32 0.0, %v9395
      %9397 = vmatmul.bf16.gmra.mxu0 %v9244
      %v9398 = vpop.f32.mrf.mxu0
      %v9399 = vadd.f32 0.0, %v9398
      %v9400 = vpop.f32.mrf.mxu0
      %v9401 = vadd.f32 0.0, %v9400
      %9402 = vmatmul.bf16.gmra.mxu0 %v9245
      %v9403 = vpop.f32.mrf.mxu0
      %v9404 = vadd.f32 0.0, %v9403
      %v9405 = vpop.f32.mrf.mxu0
      %v9406 = vadd.f32 0.0, %v9405
      %9407 = vmatmul.bf16.gmra.mxu0 %v9246
      %v9408 = vpop.f32.mrf.mxu0
      %v9409 = vadd.f32 0.0, %v9408
      %v9410 = vpop.f32.mrf.mxu0
      %v9411 = vadd.f32 0.0, %v9410
      %9412 = vmatmul.bf16.gmra.mxu0 %v9247
      %v9413 = vpop.f32.mrf.mxu0
      %v9414 = vadd.f32 0.0, %v9413
      %v9415 = vpop.f32.mrf.mxu0
      %v9416 = vadd.f32 0.0, %v9415
      %9417 = vmatmul.bf16.gmra.mxu0 %v9248
      %v9418 = vpop.f32.mrf.mxu0
      %v9419 = vadd.f32 0.0, %v9418
      %v9420 = vpop.f32.mrf.mxu0
      %v9421 = vadd.f32 0.0, %v9420
      %9422 = vmatmul.bf16.gmra.mxu0 %v9249
      %v9423 = vpop.f32.mrf.mxu0
      %v9424 = vadd.f32 0.0, %v9423
      %v9425 = vpop.f32.mrf.mxu0
      %v9426 = vadd.f32 0.0, %v9425
      %9427 = vmatmul.bf16.gmra.mxu0 %v9250
      %v9428 = vpop.f32.mrf.mxu0
      %v9429 = vadd.f32 0.0, %v9428
      %v9430 = vpop.f32.mrf.mxu0
      %v9431 = vadd.f32 0.0, %v9430
      %9432 = vmatmul.bf16.gmra.mxu0 %v9251
      %v9433 = vpop.f32.mrf.mxu0
      %v9434 = vadd.f32 0.0, %v9433
      %v9435 = vpop.f32.mrf.mxu0
      %v9436 = vadd.f32 0.0, %v9435
      %9437 = vmatmul.bf16.gmra.mxu0 %v9252
      %v9438 = vpop.f32.mrf.mxu0
      %v9439 = vadd.f32 0.0, %v9438
      %v9440 = vpop.f32.mrf.mxu0
      %v9441 = vadd.f32 0.0, %v9440
      %9442 = vmatmul.bf16.gmra.mxu0 %v9253
      %v9443 = vpop.f32.mrf.mxu0
      %v9444 = vadd.f32 0.0, %v9443
      %v9445 = vpop.f32.mrf.mxu0
      %v9446 = vadd.f32 0.0, %v9445
      %9447 = vdwg.mxu0
      %v9448 = vadd.f32 %v9134, %v9329
      %v9449 = vadd.f32 %v9135, %v9331
      %v9450 = vadd.f32 %v9136, %v9334
      %v9451 = vadd.f32 %v9137, %v9336
      %v9452 = vadd.f32 %v9138, %v9339
      %v9453 = vadd.f32 %v9139, %v9341
      %v9454 = vadd.f32 %v9140, %v9344
      %v9455 = vadd.f32 %v9141, %v9346
      %v9456 = vadd.f32 %v9142, %v9349
      %v9457 = vadd.f32 %v9143, %v9351
      %v9458 = vadd.f32 %v9144, %v9354
      %v9459 = vadd.f32 %v9145, %v9356
      %v9460 = vadd.f32 %v9146, %v9359
      %v9461 = vadd.f32 %v9147, %v9361
      %v9462 = vadd.f32 %v9148, %v9364
      %v9463 = vadd.f32 %v9149, %v9366
      %v9464 = vadd.f32 %v9150, %v9369
      %v9465 = vadd.f32 %v9151, %v9371
      %v9466 = vadd.f32 %v9152, %v9374
      %v9467 = vadd.f32 %v9153, %v9376
      %v9468 = vadd.f32 %v9154, %v9379
      %v9469 = vadd.f32 %v9155, %v9381
      %v9470 = vadd.f32 %v9156, %v9384
      %v9471 = vadd.f32 %v9157, %v9386
      %v9472 = vadd.f32 %v9158, %v9389
      %v9473 = vadd.f32 %v9159, %v9391
      %v9474 = vadd.f32 %v9160, %v9394
      %v9475 = vadd.f32 %v9161, %v9396
      %v9476 = vadd.f32 %v9162, %v9399
      %v9477 = vadd.f32 %v9163, %v9401
      %v9478 = vadd.f32 %v9164, %v9404
      %v9479 = vadd.f32 %v9165, %v9406
      %v9480 = vadd.f32 %v9166, %v9409
      %v9481 = vadd.f32 %v9167, %v9411
      %v9482 = vadd.f32 %v9168, %v9414
      %v9483 = vadd.f32 %v9169, %v9416
      %v9484 = vadd.f32 %v9170, %v9419
      %v9485 = vadd.f32 %v9171, %v9421
      %v9486 = vadd.f32 %v9172, %v9424
      %v9487 = vadd.f32 %v9173, %v9426
      %v9488 = vadd.f32 %v9174, %v9429
      %v9489 = vadd.f32 %v9175, %v9431
      %v9490 = vadd.f32 %v9176, %v9434
      %v9491 = vadd.f32 %v9177, %v9436
      %v9492 = vadd.f32 %v9178, %v9439
      %v9493 = vadd.f32 %v9179, %v9441
      %v9494 = vadd.f32 %v9180, %v9444
      %v9495 = vadd.f32 %v9181, %v9446
      %v9496 = vld [vmem:[#allocation2 + $0x51] sm:$0xff]
      %v9497 = vld [vmem:[#allocation2 + $0x59] sm:$0xff]
      %v9498 = vld [vmem:[#allocation2 + $0x61] sm:$0xff]
      %v9499 = vld [vmem:[#allocation2 + $0x69] sm:$0xff]
      %v9500 = vld [vmem:[#allocation2 + $0x71] sm:$0xff]
      %v9501 = vld [vmem:[#allocation2 + $0x79] sm:$0xff]
      %v9502 = vld [vmem:[#allocation2 + $0x81] sm:$0xff]
      %v9503 = vld [vmem:[#allocation2 + $0x89] sm:$0xff]
      %v9504 = vld [vmem:[#allocation2 + $0x91] sm:$0xff]
      %v9505 = vld [vmem:[#allocation2 + $0x99] sm:$0xff]
      %v9506 = vld [vmem:[#allocation2 + $0xa1] sm:$0xff]
      %v9507 = vld [vmem:[#allocation2 + $0xa9] sm:$0xff]
      %v9508 = vld [vmem:[#allocation2 + $0xb1] sm:$0xff]
      %v9509 = vld [vmem:[#allocation2 + $0xb9] sm:$0xff]
      %v9510 = vld [vmem:[#allocation2 + $0xc1] sm:$0xff]
      %v9511 = vld [vmem:[#allocation2 + $0xc9] sm:$0xff]
      %v9512 = vld [vmem:[#allocation2 + $0xd1] sm:$0xff]
      %v9513 = vld [vmem:[#allocation2 + $0xd9] sm:$0xff]
      %v9514 = vld [vmem:[#allocation2 + $0xe1] sm:$0xff]
      %v9515 = vld [vmem:[#allocation2 + $0xe9] sm:$0xff]
      %v9516 = vld [vmem:[#allocation2 + $0xf1] sm:$0xff]
      %v9517 = vld [vmem:[#allocation2 + $0xf9] sm:$0xff]
      %v9518 = vld [vmem:[#allocation2 + $0x101] sm:$0xff]
      %v9519 = vld [vmem:[#allocation2 + $0x109] sm:$0xff]
      %v9520 = vld [vmem:[#allocation2 + $0x111] sm:$0xff]
      %v9521 = vld [vmem:[#allocation2 + $0x119] sm:$0xff]
      %v9522 = vld [vmem:[#allocation2 + $0x121] sm:$0xff]
      %v9523 = vld [vmem:[#allocation2 + $0x129] sm:$0xff]
      %v9524 = vld [vmem:[#allocation2 + $0x131] sm:$0xff]
      %v9525 = vld [vmem:[#allocation2 + $0x139] sm:$0xff]
      %v9526 = vld [vmem:[#allocation2 + $0x141] sm:$0xff]
      %v9527 = vld [vmem:[#allocation2 + $0x149] sm:$0xff]
      %v9528 = vld [vmem:[#allocation2 + $0x151] sm:$0xff]
      %v9529 = vld [vmem:[#allocation2 + $0x159] sm:$0xff]
      %v9530 = vld [vmem:[#allocation2 + $0x161] sm:$0xff]
      %v9531 = vld [vmem:[#allocation2 + $0x169] sm:$0xff]
      %v9532 = vld [vmem:[#allocation2 + $0x171] sm:$0xff]
      %v9533 = vld [vmem:[#allocation2 + $0x179] sm:$0xff]
      %v9534 = vld [vmem:[#allocation2 + $0x181] sm:$0xff]
      %v9535 = vld [vmem:[#allocation2 + $0x189] sm:$0xff]
      %v9536 = vld [vmem:[#allocation2 + $0x191] sm:$0xff]
      %v9537 = vld [vmem:[#allocation2 + $0x199] sm:$0xff]
      %v9538 = vld [vmem:[#allocation2 + $0x1a1] sm:$0xff]
      %v9539 = vld [vmem:[#allocation2 + $0x1a9] sm:$0xff]
      %v9540 = vld [vmem:[#allocation2 + $0x1b1] sm:$0xff]
      %v9541 = vld [vmem:[#allocation2 + $0x1b9] sm:$0xff]
      %v9542 = vld [vmem:[#allocation2 + $0x1c1] sm:$0xff]
      %v9543 = vld [vmem:[#allocation2 + $0x1c9] sm:$0xff]
      %v9544 = vpack.c.bf16 %v9497, %v9496
      %v9545 = vpack.c.bf16 %v9499, %v9498
      %v9546 = vpack.c.bf16 %v9501, %v9500
      %v9547 = vpack.c.bf16 %v9503, %v9502
      %v9548 = vpack.c.bf16 %v9505, %v9504
      %v9549 = vpack.c.bf16 %v9507, %v9506
      %v9550 = vpack.c.bf16 %v9509, %v9508
      %v9551 = vpack.c.bf16 %v9511, %v9510
      %v9552 = vpack.c.bf16 %v9513, %v9512
      %v9553 = vpack.c.bf16 %v9515, %v9514
      %v9554 = vpack.c.bf16 %v9517, %v9516
      %v9555 = vpack.c.bf16 %v9519, %v9518
      %v9556 = vpack.c.bf16 %v9521, %v9520
      %v9557 = vpack.c.bf16 %v9523, %v9522
      %v9558 = vpack.c.bf16 %v9525, %v9524
      %v9559 = vpack.c.bf16 %v9527, %v9526
      %v9560 = vpack.c.bf16 %v9529, %v9528
      %v9561 = vpack.c.bf16 %v9531, %v9530
      %v9562 = vpack.c.bf16 %v9533, %v9532
      %v9563 = vpack.c.bf16 %v9535, %v9534
      %v9564 = vpack.c.bf16 %v9537, %v9536
      %v9565 = vpack.c.bf16 %v9539, %v9538
      %v9566 = vpack.c.bf16 %v9541, %v9540
      %v9567 = vpack.c.bf16 %v9543, %v9542
      %s9568 = scalar_lea.vmem %s5, 512
      %v9569 = vld [vmem:[%s9568] sm:$0xf]
      %v9570 = vld [vmem:[%s9568 + $0x4] sm:$0xf]
      %v9571 = vld [vmem:[%s9568 + $0x8] sm:$0xf]
      %v9572 = vld [vmem:[%s9568 + $0xc] sm:$0xf]
      %v9573 = vld [vmem:[%s9568 + $0x10] sm:$0xf]
      %v9574 = vld [vmem:[%s9568 + $0x14] sm:$0xf]
      %v9575 = vld [vmem:[%s9568 + $0x18] sm:$0xf]
      %v9576 = vld [vmem:[%s9568 + $0x1c] sm:$0xf]
      %v9577 = vld [vmem:[%s9568 + $0x20] sm:$0xf]
      %v9578 = vld [vmem:[%s9568 + $0x24] sm:$0xf]
      %v9579 = vld [vmem:[%s9568 + $0x28] sm:$0xf]
      %v9580 = vld [vmem:[%s9568 + $0x2c] sm:$0xf]
      %v9581 = vld [vmem:[%s9568 + $0x30] sm:$0xf]
      %v9582 = vld [vmem:[%s9568 + $0x34] sm:$0xf]
      %v9583 = vld [vmem:[%s9568 + $0x38] sm:$0xf]
      %v9584 = vld [vmem:[%s9568 + $0x3c] sm:$0xf]
      %v9601 = vunpack.c.l.b16 %v9569
      %v9602 = vunpack.c.l.b16 %v9570
      %v9603 = vunpack.c.l.b16 %v9571
      %v9604 = vunpack.c.l.b16 %v9572
      %v9605 = vunpack.c.l.b16 %v9573
      %v9606 = vunpack.c.l.b16 %v9574
      %v9607 = vunpack.c.l.b16 %v9575
      %v9608 = vunpack.c.l.b16 %v9576
      %v9609 = vunpack.c.l.b16 %v9577
      %v9610 = vunpack.c.l.b16 %v9578
      %v9611 = vunpack.c.l.b16 %v9579
      %v9612 = vunpack.c.l.b16 %v9580
      %v9613 = vunpack.c.l.b16 %v9581
      %v9614 = vunpack.c.l.b16 %v9582
      %v9615 = vunpack.c.l.b16 %v9583
      %v9616 = vunpack.c.l.b16 %v9584
      %v9617 = vpack.c.b16 %v9602, %v9601
      %v9618 = vpack.c.b16 %v9604, %v9603
      %v9619 = vpack.c.b16 %v9606, %v9605
      %v9620 = vpack.c.b16 %v9608, %v9607
      %v9621 = vpack.c.b16 %v9610, %v9609
      %v9622 = vpack.c.b16 %v9612, %v9611
      %v9623 = vpack.c.b16 %v9614, %v9613
      %v9624 = vpack.c.b16 %v9616, %v9615
      %9633 = vmatpush.bf16.msra.mxu0 %v9624
      %9634 = vmatpush.bf16.msra.mxu0 %v9623
      %9635 = vmatpush.bf16.msra.mxu0 %v9622
      %9636 = vmatpush.bf16.msra.mxu0 %v9621
      %9637 = vmatpush.bf16.msra.mxu0 %v9620
      %9638 = vmatpush.bf16.msra.mxu0 %v9619
      %9639 = vmatpush.bf16.msra.mxu0 %v9618
      %9640 = vmatpush.bf16.msra.mxu0 %v9617
      %9641 = vmatmul.bf16.gmra.mxu0 %v9544
      %v9642 = vpop.f32.mrf.mxu0
      %v9643 = vadd.f32 0.0, %v9642
      %v9644 = vpop.f32.mrf.mxu0
      %v9645 = vadd.f32 0.0, %v9644
      %9646 = vmatmul.bf16.gmra.mxu0 %v9545
      %v9647 = vpop.f32.mrf.mxu0
      %v9648 = vadd.f32 0.0, %v9647
      %v9649 = vpop.f32.mrf.mxu0
      %v9650 = vadd.f32 0.0, %v9649
      %9651 = vmatmul.bf16.gmra.mxu0 %v9546
      %v9652 = vpop.f32.mrf.mxu0
      %v9653 = vadd.f32 0.0, %v9652
      %v9654 = vpop.f32.mrf.mxu0
      %v9655 = vadd.f32 0.0, %v9654
      %9656 = vmatmul.bf16.gmra.mxu0 %v9547
      %v9657 = vpop.f32.mrf.mxu0
      %v9658 = vadd.f32 0.0, %v9657
      %v9659 = vpop.f32.mrf.mxu0
      %v9660 = vadd.f32 0.0, %v9659
      %9661 = vmatmul.bf16.gmra.mxu0 %v9548
      %v9662 = vpop.f32.mrf.mxu0
      %v9663 = vadd.f32 0.0, %v9662
      %v9664 = vpop.f32.mrf.mxu0
      %v9665 = vadd.f32 0.0, %v9664
      %9666 = vmatmul.bf16.gmra.mxu0 %v9549
      %v9667 = vpop.f32.mrf.mxu0
      %v9668 = vadd.f32 0.0, %v9667
      %v9669 = vpop.f32.mrf.mxu0
      %v9670 = vadd.f32 0.0, %v9669
      %9671 = vmatmul.bf16.gmra.mxu0 %v9550
      %v9672 = vpop.f32.mrf.mxu0
      %v9673 = vadd.f32 0.0, %v9672
      %v9674 = vpop.f32.mrf.mxu0
      %v9675 = vadd.f32 0.0, %v9674
      %9676 = vmatmul.bf16.gmra.mxu0 %v9551
      %v9677 = vpop.f32.mrf.mxu0
      %v9678 = vadd.f32 0.0, %v9677
      %v9679 = vpop.f32.mrf.mxu0
      %v9680 = vadd.f32 0.0, %v9679
      %9681 = vmatmul.bf16.gmra.mxu0 %v9552
      %v9682 = vpop.f32.mrf.mxu0
      %v9683 = vadd.f32 0.0, %v9682
      %v9684 = vpop.f32.mrf.mxu0
      %v9685 = vadd.f32 0.0, %v9684
      %9686 = vmatmul.bf16.gmra.mxu0 %v9553
      %v9687 = vpop.f32.mrf.mxu0
      %v9688 = vadd.f32 0.0, %v9687
      %v9689 = vpop.f32.mrf.mxu0
      %v9690 = vadd.f32 0.0, %v9689
      %9691 = vmatmul.bf16.gmra.mxu0 %v9554
      %v9692 = vpop.f32.mrf.mxu0
      %v9693 = vadd.f32 0.0, %v9692
      %v9694 = vpop.f32.mrf.mxu0
      %v9695 = vadd.f32 0.0, %v9694
      %9696 = vmatmul.bf16.gmra.mxu0 %v9555
      %v9697 = vpop.f32.mrf.mxu0
      %v9698 = vadd.f32 0.0, %v9697
      %v9699 = vpop.f32.mrf.mxu0
      %v9700 = vadd.f32 0.0, %v9699
      %9701 = vmatmul.bf16.gmra.mxu0 %v9556
      %v9702 = vpop.f32.mrf.mxu0
      %v9703 = vadd.f32 0.0, %v9702
      %v9704 = vpop.f32.mrf.mxu0
      %v9705 = vadd.f32 0.0, %v9704
      %9706 = vmatmul.bf16.gmra.mxu0 %v9557
      %v9707 = vpop.f32.mrf.mxu0
      %v9708 = vadd.f32 0.0, %v9707
      %v9709 = vpop.f32.mrf.mxu0
      %v9710 = vadd.f32 0.0, %v9709
      %9711 = vmatmul.bf16.gmra.mxu0 %v9558
      %v9712 = vpop.f32.mrf.mxu0
      %v9713 = vadd.f32 0.0, %v9712
      %v9714 = vpop.f32.mrf.mxu0
      %v9715 = vadd.f32 0.0, %v9714
      %9716 = vmatmul.bf16.gmra.mxu0 %v9559
      %v9717 = vpop.f32.mrf.mxu0
      %v9718 = vadd.f32 0.0, %v9717
      %v9719 = vpop.f32.mrf.mxu0
      %v9720 = vadd.f32 0.0, %v9719
      %9721 = vmatmul.bf16.gmra.mxu0 %v9560
      %v9722 = vpop.f32.mrf.mxu0
      %v9723 = vadd.f32 0.0, %v9722
      %v9724 = vpop.f32.mrf.mxu0
      %v9725 = vadd.f32 0.0, %v9724
      %9726 = vmatmul.bf16.gmra.mxu0 %v9561
      %v9727 = vpop.f32.mrf.mxu0
      %v9728 = vadd.f32 0.0, %v9727
      %v9729 = vpop.f32.mrf.mxu0
      %v9730 = vadd.f32 0.0, %v9729
      %9731 = vmatmul.bf16.gmra.mxu0 %v9562
      %v9732 = vpop.f32.mrf.mxu0
      %v9733 = vadd.f32 0.0, %v9732
      %v9734 = vpop.f32.mrf.mxu0
      %v9735 = vadd.f32 0.0, %v9734
      %9736 = vmatmul.bf16.gmra.mxu0 %v9563
      %v9737 = vpop.f32.mrf.mxu0
      %v9738 = vadd.f32 0.0, %v9737
      %v9739 = vpop.f32.mrf.mxu0
      %v9740 = vadd.f32 0.0, %v9739
      %9741 = vmatmul.bf16.gmra.mxu0 %v9564
      %v9742 = vpop.f32.mrf.mxu0
      %v9743 = vadd.f32 0.0, %v9742
      %v9744 = vpop.f32.mrf.mxu0
      %v9745 = vadd.f32 0.0, %v9744
      %9746 = vmatmul.bf16.gmra.mxu0 %v9565
      %v9747 = vpop.f32.mrf.mxu0
      %v9748 = vadd.f32 0.0, %v9747
      %v9749 = vpop.f32.mrf.mxu0
      %v9750 = vadd.f32 0.0, %v9749
      %9751 = vmatmul.bf16.gmra.mxu0 %v9566
      %v9752 = vpop.f32.mrf.mxu0
      %v9753 = vadd.f32 0.0, %v9752
      %v9754 = vpop.f32.mrf.mxu0
      %v9755 = vadd.f32 0.0, %v9754
      %9756 = vmatmul.bf16.gmra.mxu0 %v9567
      %v9757 = vpop.f32.mrf.mxu0
      %v9758 = vadd.f32 0.0, %v9757
      %v9759 = vpop.f32.mrf.mxu0
      %v9760 = vadd.f32 0.0, %v9759
      %9761 = vdwg.mxu0
      %v9762 = vadd.f32 %v9448, %v9643
      %v9763 = vadd.f32 %v9449, %v9645
      %v9764 = vadd.f32 %v9450, %v9648
      %v9765 = vadd.f32 %v9451, %v9650
      %v9766 = vadd.f32 %v9452, %v9653
      %v9767 = vadd.f32 %v9453, %v9655
      %v9768 = vadd.f32 %v9454, %v9658
      %v9769 = vadd.f32 %v9455, %v9660
      %v9770 = vadd.f32 %v9456, %v9663
      %v9771 = vadd.f32 %v9457, %v9665
      %v9772 = vadd.f32 %v9458, %v9668
      %v9773 = vadd.f32 %v9459, %v9670
      %v9774 = vadd.f32 %v9460, %v9673
      %v9775 = vadd.f32 %v9461, %v9675
      %v9776 = vadd.f32 %v9462, %v9678
      %v9777 = vadd.f32 %v9463, %v9680
      %v9778 = vadd.f32 %v9464, %v9683
      %v9779 = vadd.f32 %v9465, %v9685
      %v9780 = vadd.f32 %v9466, %v9688
      %v9781 = vadd.f32 %v9467, %v9690
      %v9782 = vadd.f32 %v9468, %v9693
      %v9783 = vadd.f32 %v9469, %v9695
      %v9784 = vadd.f32 %v9470, %v9698
      %v9785 = vadd.f32 %v9471, %v9700
      %v9786 = vadd.f32 %v9472, %v9703
      %v9787 = vadd.f32 %v9473, %v9705
      %v9788 = vadd.f32 %v9474, %v9708
      %v9789 = vadd.f32 %v9475, %v9710
      %v9790 = vadd.f32 %v9476, %v9713
      %v9791 = vadd.f32 %v9477, %v9715
      %v9792 = vadd.f32 %v9478, %v9718
      %v9793 = vadd.f32 %v9479, %v9720
      %v9794 = vadd.f32 %v9480, %v9723
      %v9795 = vadd.f32 %v9481, %v9725
      %v9796 = vadd.f32 %v9482, %v9728
      %v9797 = vadd.f32 %v9483, %v9730
      %v9798 = vadd.f32 %v9484, %v9733
      %v9799 = vadd.f32 %v9485, %v9735
      %v9800 = vadd.f32 %v9486, %v9738
      %v9801 = vadd.f32 %v9487, %v9740
      %v9802 = vadd.f32 %v9488, %v9743
      %v9803 = vadd.f32 %v9489, %v9745
      %v9804 = vadd.f32 %v9490, %v9748
      %v9805 = vadd.f32 %v9491, %v9750
      %v9806 = vadd.f32 %v9492, %v9753
      %v9807 = vadd.f32 %v9493, %v9755
      %v9808 = vadd.f32 %v9494, %v9758
      %v9809 = vadd.f32 %v9495, %v9760
      %v9810 = vld [vmem:[%s278] sm:$0xff]
      %v9811 = vld [vmem:[%s278 + $0x8] sm:$0xff]
      %v9812 = vld [vmem:[%s278 + $0x10] sm:$0xff]
      %v9813 = vld [vmem:[%s278 + $0x18] sm:$0xff]
      %v9814 = vld [vmem:[%s278 + $0x20] sm:$0xff]
      %v9815 = vld [vmem:[%s278 + $0x28] sm:$0xff]
      %v9816 = vld [vmem:[%s278 + $0x30] sm:$0xff]
      %v9817 = vld [vmem:[%s278 + $0x38] sm:$0xff]
      %v9818 = vld [vmem:[%s278 + $0x40] sm:$0xff]
      %v9819 = vld [vmem:[%s278 + $0x48] sm:$0xff]
      %v9820 = vld [vmem:[%s278 + $0x50] sm:$0xff]
      %v9821 = vld [vmem:[%s278 + $0x58] sm:$0xff]
      %v9822 = vld [vmem:[%s278 + $0x60] sm:$0xff]
      %v9823 = vld [vmem:[%s278 + $0x68] sm:$0xff]
      %v9824 = vld [vmem:[%s278 + $0x70] sm:$0xff]
      %v9825 = vld [vmem:[%s278 + $0x78] sm:$0xff]
      %v9826 = vld [vmem:[%s278 + $0x80] sm:$0xff]
      %v9827 = vld [vmem:[%s278 + $0x88] sm:$0xff]
      %v9828 = vld [vmem:[%s278 + $0x90] sm:$0xff]
      %v9829 = vld [vmem:[%s278 + $0x98] sm:$0xff]
      %v9830 = vld [vmem:[%s278 + $0xa0] sm:$0xff]
      %v9831 = vld [vmem:[%s278 + $0xa8] sm:$0xff]
      %v9832 = vld [vmem:[%s278 + $0xb0] sm:$0xff]
      %v9833 = vld [vmem:[%s278 + $0xb8] sm:$0xff]
      %v9834 = vld [vmem:[%s278 + $0xc0] sm:$0xff]
      %v9835 = vld [vmem:[%s278 + $0xc8] sm:$0xff]
      %v9836 = vld [vmem:[%s278 + $0xd0] sm:$0xff]
      %v9837 = vld [vmem:[%s278 + $0xd8] sm:$0xff]
      %v9838 = vld [vmem:[%s278 + $0xe0] sm:$0xff]
      %v9839 = vld [vmem:[%s278 + $0xe8] sm:$0xff]
      %v9840 = vld [vmem:[%s278 + $0xf0] sm:$0xff]
      %v9841 = vld [vmem:[%s278 + $0xf8] sm:$0xff]
      %v9842 = vld [vmem:[%s278 + $0x100] sm:$0xff]
      %v9843 = vld [vmem:[%s278 + $0x108] sm:$0xff]
      %v9844 = vld [vmem:[%s278 + $0x110] sm:$0xff]
      %v9845 = vld [vmem:[%s278 + $0x118] sm:$0xff]
      %v9846 = vld [vmem:[%s278 + $0x120] sm:$0xff]
      %v9847 = vld [vmem:[%s278 + $0x128] sm:$0xff]
      %v9848 = vld [vmem:[%s278 + $0x130] sm:$0xff]
      %v9849 = vld [vmem:[%s278 + $0x138] sm:$0xff]
      %v9850 = vld [vmem:[%s278 + $0x140] sm:$0xff]
      %v9851 = vld [vmem:[%s278 + $0x148] sm:$0xff]
      %v9852 = vld [vmem:[%s278 + $0x150] sm:$0xff]
      %v9853 = vld [vmem:[%s278 + $0x158] sm:$0xff]
      %v9854 = vld [vmem:[%s278 + $0x160] sm:$0xff]
      %v9855 = vld [vmem:[%s278 + $0x168] sm:$0xff]
      %v9856 = vld [vmem:[%s278 + $0x170] sm:$0xff]
      %v9857 = vld [vmem:[%s278 + $0x178] sm:$0xff]
      %v9858 = vadd.f32 %v9810, %v9762
      %v9859 = vadd.f32 %v9811, %v9763
      %v9860 = vadd.f32 %v9812, %v9764
      %v9861 = vadd.f32 %v9813, %v9765
      %v9862 = vadd.f32 %v9814, %v9766
      %v9863 = vadd.f32 %v9815, %v9767
      %v9864 = vadd.f32 %v9816, %v9768
      %v9865 = vadd.f32 %v9817, %v9769
      %v9866 = vadd.f32 %v9818, %v9770
      %v9867 = vadd.f32 %v9819, %v9771
      %v9868 = vadd.f32 %v9820, %v9772
      %v9869 = vadd.f32 %v9821, %v9773
      %v9870 = vadd.f32 %v9822, %v9774
      %v9871 = vadd.f32 %v9823, %v9775
      %v9872 = vadd.f32 %v9824, %v9776
      %v9873 = vadd.f32 %v9825, %v9777
      %v9874 = vadd.f32 %v9826, %v9778
      %v9875 = vadd.f32 %v9827, %v9779
      %v9876 = vadd.f32 %v9828, %v9780
      %v9877 = vadd.f32 %v9829, %v9781
      %v9878 = vadd.f32 %v9830, %v9782
      %v9879 = vadd.f32 %v9831, %v9783
      %v9880 = vadd.f32 %v9832, %v9784
      %v9881 = vadd.f32 %v9833, %v9785
      %v9882 = vadd.f32 %v9834, %v9786
      %v9883 = vadd.f32 %v9835, %v9787
      %v9884 = vadd.f32 %v9836, %v9788
      %v9885 = vadd.f32 %v9837, %v9789
      %v9886 = vadd.f32 %v9838, %v9790
      %v9887 = vadd.f32 %v9839, %v9791
      %v9888 = vadd.f32 %v9840, %v9792
      %v9889 = vadd.f32 %v9841, %v9793
      %v9890 = vadd.f32 %v9842, %v9794
      %v9891 = vadd.f32 %v9843, %v9795
      %v9892 = vadd.f32 %v9844, %v9796
      %v9893 = vadd.f32 %v9845, %v9797
      %v9894 = vadd.f32 %v9846, %v9798
      %v9895 = vadd.f32 %v9847, %v9799
      %v9896 = vadd.f32 %v9848, %v9800
      %v9897 = vadd.f32 %v9849, %v9801
      %v9898 = vadd.f32 %v9850, %v9802
      %v9899 = vadd.f32 %v9851, %v9803
      %v9900 = vadd.f32 %v9852, %v9804
      %v9901 = vadd.f32 %v9853, %v9805
      %v9902 = vadd.f32 %v9854, %v9806
      %v9903 = vadd.f32 %v9855, %v9807
      %v9904 = vadd.f32 %v9856, %v9808
      %v9905 = vadd.f32 %v9857, %v9809
      %9906 = vst [vmem:[%s278] sm:$0xff] %v9858
      %9907 = vst [vmem:[%s278 + $0x8] sm:$0xff] %v9859
      %9908 = vst [vmem:[%s278 + $0x10] sm:$0xff] %v9860
      %9909 = vst [vmem:[%s278 + $0x18] sm:$0xff] %v9861
      %9910 = vst [vmem:[%s278 + $0x20] sm:$0xff] %v9862
      %9911 = vst [vmem:[%s278 + $0x28] sm:$0xff] %v9863
      %9912 = vst [vmem:[%s278 + $0x30] sm:$0xff] %v9864
      %9913 = vst [vmem:[%s278 + $0x38] sm:$0xff] %v9865
      %9914 = vst [vmem:[%s278 + $0x40] sm:$0xff] %v9866
      %9915 = vst [vmem:[%s278 + $0x48] sm:$0xff] %v9867
      %9916 = vst [vmem:[%s278 + $0x50] sm:$0xff] %v9868
      %9917 = vst [vmem:[%s278 + $0x58] sm:$0xff] %v9869
      %9918 = vst [vmem:[%s278 + $0x60] sm:$0xff] %v9870
      %9919 = vst [vmem:[%s278 + $0x68] sm:$0xff] %v9871
      %9920 = vst [vmem:[%s278 + $0x70] sm:$0xff] %v9872
      %9921 = vst [vmem:[%s278 + $0x78] sm:$0xff] %v9873
      %9922 = vst [vmem:[%s278 + $0x80] sm:$0xff] %v9874
      %9923 = vst [vmem:[%s278 + $0x88] sm:$0xff] %v9875
      %9924 = vst [vmem:[%s278 + $0x90] sm:$0xff] %v9876
      %9925 = vst [vmem:[%s278 + $0x98] sm:$0xff] %v9877
      %9926 = vst [vmem:[%s278 + $0xa0] sm:$0xff] %v9878
      %9927 = vst [vmem:[%s278 + $0xa8] sm:$0xff] %v9879
      %9928 = vst [vmem:[%s278 + $0xb0] sm:$0xff] %v9880
      %9929 = vst [vmem:[%s278 + $0xb8] sm:$0xff] %v9881
      %9930 = vst [vmem:[%s278 + $0xc0] sm:$0xff] %v9882
      %9931 = vst [vmem:[%s278 + $0xc8] sm:$0xff] %v9883
      %9932 = vst [vmem:[%s278 + $0xd0] sm:$0xff] %v9884
      %9933 = vst [vmem:[%s278 + $0xd8] sm:$0xff] %v9885
      %9934 = vst [vmem:[%s278 + $0xe0] sm:$0xff] %v9886
      %9935 = vst [vmem:[%s278 + $0xe8] sm:$0xff] %v9887
      %9936 = vst [vmem:[%s278 + $0xf0] sm:$0xff] %v9888
      %9937 = vst [vmem:[%s278 + $0xf8] sm:$0xff] %v9889
      %9938 = vst [vmem:[%s278 + $0x100] sm:$0xff] %v9890
      %9939 = vst [vmem:[%s278 + $0x108] sm:$0xff] %v9891
      %9940 = vst [vmem:[%s278 + $0x110] sm:$0xff] %v9892
      %9941 = vst [vmem:[%s278 + $0x118] sm:$0xff] %v9893
      %9942 = vst [vmem:[%s278 + $0x120] sm:$0xff] %v9894
      %9943 = vst [vmem:[%s278 + $0x128] sm:$0xff] %v9895
      %9944 = vst [vmem:[%s278 + $0x130] sm:$0xff] %v9896
      %9945 = vst [vmem:[%s278 + $0x138] sm:$0xff] %v9897
      %9946 = vst [vmem:[%s278 + $0x140] sm:$0xff] %v9898
      %9947 = vst [vmem:[%s278 + $0x148] sm:$0xff] %v9899
      %9948 = vst [vmem:[%s278 + $0x150] sm:$0xff] %v9900
      %9949 = vst [vmem:[%s278 + $0x158] sm:$0xff] %v9901
      %9950 = vst [vmem:[%s278 + $0x160] sm:$0xff] %v9902
      %9951 = vst [vmem:[%s278 + $0x168] sm:$0xff] %v9903
      %9952 = vst [vmem:[%s278 + $0x170] sm:$0xff] %v9904
      %9953 = vst [vmem:[%s278 + $0x178] sm:$0xff] %v9905
      %p9954 = scmp.lt.s32.totalorder %s18, 1
      %s9955 = scalar_select %p9954, %s18, 1
      %s9956 = smul.addr %s9955, 48
      %s9957 = smul.addr %s9956, 8
      %s9958 = scalar_lea.vmem %s7, %s9957
      // Predicated region
      $region49: #{dmfunit_forward.1} parent=47 // pred_check
        %p9959 = pneg %p188
      $region50: #{dmfunit_forward.1} parent=47 // pred_check_branch
        %9961 = sbr.rel (%p9959) target = $region52
      $region51: #{dmfunit_forward.1} parent=47 // pred_region
        _
      $region52: #{dmfunit_forward.1} parent=47 // pred_fallthru
        _
    $region48: #{dmfunit_forward.1} parent=5 // pred_fallthru
      _
    %p9962 = scmp.le.s32.totalorder 2, %s13
    // Predicated region
    $region53: #{dmfunit_forward.1} parent=5 // pred_check
      %p9963 = pneg %p9962
    $region54: #{dmfunit_forward.1} parent=5 // pred_check_branch
      %9965 = sbr.rel (%p9963) target = $region56
    $region55: #{dmfunit_forward.1} parent=5 // pred_region
      %s9966 = ssub.s32 %s13, 2
      // Predicated region
      $region57: #{dmfunit_forward.1} parent=55 // pred_check
        %p9967 = pneg %p194
      $region58: #{dmfunit_forward.1} parent=55 // pred_check_branch
        %9969 = sbr.rel (%p9967) target = $region60
      $region59: #{dmfunit_forward.1} parent=55 // pred_region
        %p9970 = scmp.lt.s32.totalorder %s19, 1
        %s9971 = scalar_select %p9970, %s19, 1
        %s9972 = smul.addr %s9971, 48
        %s9973 = smul.addr %s9972, 8
        %s9974 = scalar_lea.vmem %s7, %s9973
      $region60: #{dmfunit_forward.1} parent=55 // pred_fallthru
        _
    $region56: #{dmfunit_forward.1} parent=5 // pred_fallthru
      _
  $region6: #{dmfunit_forward.1} parent=0 // loop_footer
    %s17 = sadd.s32 1, %s13
  $region7: #{dmfunit_forward.1} parent=0 // loop_footer_branch
    %12 = sbr.rel target = $region3
  $region8: #{dmfunit_forward.1} parent=0 // loop_exit
    _

</llo_original>
